<compile_context>
chip_gen: v5e
topology: v5e:2x2
jax: 0.10.0
libtpu: 0.0.40
codegen_flags: <defaults>
</compile_context>

<pallas_src>
import functools

import jax
import jax.numpy as jnp
import numpy as np
from jax.experimental import pallas as pl
from jax.experimental.pallas import tpu as pltpu

INPUT_DIM = 9
HEAD_DIMS = (20, 10, 10, 10, 10)
NUM_HEADS = len(HEAD_DIMS)
HEAD_OFFS = tuple(int(np.sum(HEAD_DIMS[:i])) for i in range(NUM_HEADS))  # 0,20,30,40,50

# Padded / fused geometry (all lane dims are multiples of 128).
IN_PAD = 128                      # input features 9 -> 128
S1, S2, S3 = 512, 256, 128        # shared trunk widths
H1, H2 = 64, 32                   # per-head hidden widths
HN1 = 384                         # fused head layer-1 width (5*64=320 -> 384)
HN2 = 256                         # fused head layer-2 width (5*32=160 -> 256)
OUT_W = 128                       # compacted logit/prob block (60 real lanes)
NEG = -1e30                       # mask value baked into padded logit bias
SUB_TILES = 2                     # in-kernel sub-tile unroll factor
VMEM_LIMIT = 48 * 1024 * 1024     # explicit scoped-VMEM budget (v7x safe)


def _round_up(v, m):
    return (v + m - 1) // m * m


def _choose_b_tile(batch, b_tile):
    """Multiple of 32 (bf16 sub-tiles stay 16-row aligned); >=2 grid steps."""
    bt = _round_up(min(b_tile, max(batch, 32)), 32)
    if batch > 32 and _round_up(batch, bt) // bt < 2:
        bt = max(32, _round_up((batch + 1) // 2, 32))
    return bt


# ----------------------------------------------------------------------------
# Kernel
# ----------------------------------------------------------------------------
def iraf_kernel(x_ref,
                ws1_ref, bs1_ref, ws2_ref, bs2_ref, ws3_ref, bs3_ref,
                wh1_ref, bh1_ref, wh2_ref, bh2_ref, wh3_ref, bh3_ref,
                out_ref):
    bt = x_ref.shape[0]
    rows = bt // SUB_TILES

    def linear(a_bf16, w_ref, b_ref, relu):
        # bf16 x bf16 matmul on the MXU, f32 accumulation, f32 epilogue.
        y = jnp.dot(a_bf16, w_ref[...], preferred_element_type=jnp.float32)
        y = y + b_ref[...]
        if relu:
            y = jnp.maximum(y, 0.0)
        return y

    # Per-head lane-segment masks (hoisted: identical for both sub-tiles).
    lane = jax.lax.broadcasted_iota(jnp.int32, (rows, OUT_W), 1)
    masks = [(lane >= off) & (lane < off + hd)
             for off, hd in zip(HEAD_OFFS, HEAD_DIMS)]

    # Two independent sub-tile chains -> MXU matmuls of one half overlap the
    # VPU/XLU/EUP softmax epilogue of the other half.
    for t in range(SUB_TILES):
        r0 = t * rows
        h = x_ref[r0:r0 + rows, :]                                 # bf16 [rows,128]
        # Shared trunk.
        h = linear(h, ws1_ref, bs1_ref, True).astype(jnp.bfloat16)  # [rows,512]
        h = linear(h, ws2_ref, bs2_ref, True).astype(jnp.bfloat16)  # [rows,256]
        h = linear(h, ws3_ref, bs3_ref, True).astype(jnp.bfloat16)  # [rows,128]
        # Fused heads (concat / block-diagonal packed).
        a = linear(h, wh1_ref, bh1_ref, True).astype(jnp.bfloat16)  # [rows,384]
        a = linear(a, wh2_ref, bh2_ref, True).astype(jnp.bfloat16)  # [rows,256]
        logits = linear(a, wh3_ref, bh3_ref, False)                 # [rows,128] f32

        # Segmented per-head softmax inside the single 128-lane block.
        # Padding lanes carry a -1e30 bias -> exp underflows to exactly 0.
        m_lane = jnp.zeros_like(logits)
        for mask in masks:
            m_i = jnp.max(jnp.where(mask, logits, NEG), axis=-1, keepdims=True)
            m_lane = jnp.where(mask, m_i, m_lane)
        e = jnp.exp(logits - m_lane)          # one 128-lane exp per sub-tile
        d_lane = jnp.ones_like(logits)        # padding lanes divide by 1
        for mask in masks:
            s_i = jnp.sum(jnp.where(mask, e, 0.0), axis=-1, keepdims=True)
            d_lane = jnp.where(mask, s_i, d_lane)
        r = pl.reciprocal(d_lane, approx=True)
        r = r * (2.0 - d_lane * r)            # one Newton step (~f32 accuracy)
        out_ref[r0:r0 + rows, :] = e * r      # lane-dense full-block store


# ----------------------------------------------------------------------------
# Wrapper
# ----------------------------------------------------------------------------
def _param_spec(shape, single_buffer):
    if single_buffer:
        # Constant index_map -> weights fetched once; single-buffer to halve
        # their VMEM footprint (headroom for bigger tiles on v7x's 64 MiB).
        return pl.BlockSpec(shape, lambda i: (0, 0),
                            pipeline_mode=pl.Buffered(1))
    return pl.BlockSpec(shape, lambda i: (0, 0))


@functools.partial(jax.jit, static_argnames=("b_tile", "single_buffer"))
def _forward_impl(x, packed, *, b_tile, single_buffer):
    B = x.shape[0]
    B_pad = _round_up(B, b_tile)

    # Pad batch + features 9 -> 128, built directly in bf16 (no f32 temp).
    x_p = jnp.zeros((B_pad, IN_PAD), jnp.bfloat16)
    x_p = x_p.at[:B, :INPUT_DIM].set(x.astype(jnp.bfloat16))

    grid = (B_pad // b_tile,)
    param_specs = [_param_spec(p.shape, single_buffer) for p in packed]
    in_specs = [pl.BlockSpec((b_tile, IN_PAD), lambda i: (i, 0))] + param_specs
    out_spec = pl.BlockSpec((b_tile, OUT_W), lambda i: (i, 0))

    flops = 2 * B_pad * (IN_PAD * S1 + S1 * S2 + S2 * S3
                         + S3 * HN1 + HN1 * HN2 + HN2 * OUT_W)
    bytes_accessed = (B_pad * IN_PAD * 2
                      + sum(int(p.size) * p.dtype.itemsize for p in packed)
                      + B_pad * OUT_W * 4)

    slab = pl.pallas_call(
        iraf_kernel,
        out_shape=jax.ShapeDtypeStruct((B_pad, OUT_W), jnp.float32),
        grid=grid,
        in_specs=in_specs,
        out_specs=out_spec,
        compiler_params=pltpu.CompilerParams(
            dimension_semantics=("parallel",),
            vmem_limit_bytes=VMEM_LIMIT),
        cost_estimate=pl.CostEstimate(
            flops=flops,
            transcendentals=B_pad * OUT_W,
            bytes_accessed=bytes_accessed),
    )(x_p, *packed)

    return [slab[:B, off:off + hd] for off, hd in zip(HEAD_OFFS, HEAD_DIMS)]


def iraf_forward(x, packed, *, b_tile=1024):
    """x: [B, 9] f32, packed: 12 packed weight/bias arrays.

    Returns a list of 5 softmax outputs [B, head_dim]."""
    bt = _choose_b_tile(x.shape[0], b_tile)
    try:
        return _forward_impl(x, packed, b_tile=bt, single_buffer=True)
    except Exception:
        # Installed Pallas rejected pipeline_mode=pl.Buffered(1); default
        # (double-buffered) weight specs are functionally identical.
        return _forward_impl(x, packed, b_tile=bt, single_buffer=False)


# ----------------------------------------------------------------------------
# Parameters (torch nn.Linear-style init) and packing
# ----------------------------------------------------------------------------
def init_params(key):
    """Synthetic params mirroring the PyTorch module; weights as [in, out]."""
    def linear(k, fi, fo):
        kw, kb = jax.random.split(k)
        bound = 1.0 / np.sqrt(fi)
        w = jax.random.uniform(kw, (fi, fo), jnp.float32, -bound, bound)
        b = jax.random.uniform(kb, (fo,), jnp.float32, -bound, bound)
        return w, b

    keys = jax.random.split(key, 3 + NUM_HEADS * 3)
    shared = [linear(keys[0], INPUT_DIM, S1),
              linear(keys[1], S1, S2),
              linear(keys[2], S2, S3)]
    heads, k = [], 3
    for hd in HEAD_DIMS:
        heads.append([linear(keys[k], S3, H1),
                      linear(keys[k + 1], H1, H2),
                      linear(keys[k + 2], H2, hd)])
        k += 3
    return shared, heads


def pack_params(shared, heads):
    """Pad/fuse parameters into the kernel layout (weights bf16, biases f32)."""
    (w1, b1), (w2, b2), (w3, b3) = shared
    ws1 = jnp.zeros((IN_PAD, S1), jnp.float32).at[:INPUT_DIM, :].set(w1)
    bs1 = b1.reshape(1, S1)
    ws2, bs2 = w2, b2.reshape(1, S2)
    ws3, bs3 = w3, b3.reshape(1, S3)

    wh1 = jnp.zeros((S3, HN1), jnp.float32)
    bh1 = jnp.zeros((1, HN1), jnp.float32)
    wh2 = jnp.zeros((HN1, HN2), jnp.float32)
    bh2 = jnp.zeros((1, HN2), jnp.float32)
    wh3 = jnp.zeros((HN2, OUT_W), jnp.float32)
    bh3 = jnp.full((1, OUT_W), NEG, jnp.float32)
    for i, ((fw1, fb1), (fw2, fb2), (fw3, fb3)) in enumerate(heads):
        hd, off = HEAD_DIMS[i], HEAD_OFFS[i]
        wh1 = wh1.at[:, i * H1:(i + 1) * H1].set(fw1)
        bh1 = bh1.at[:, i * H1:(i + 1) * H1].set(fb1)
        wh2 = wh2.at[i * H1:(i + 1) * H1, i * H2:(i + 1) * H2].set(fw2)
        bh2 = bh2.at[:, i * H2:(i + 1) * H2].set(fb2)
        wh3 = wh3.at[i * H2:(i + 1) * H2, off:off + hd].set(fw3)
        bh3 = bh3.at[:, off:off + hd].set(fb3)

    bf16 = lambda w: w.astype(jnp.bfloat16)
    return (bf16(ws1), bs1, bf16(ws2), bs2, bf16(ws3), bs3,
            bf16(wh1), bh1, bf16(wh2), bh2, bf16(wh3), bh3)


# ----------------------------------------------------------------------------
# References
# ----------------------------------------------------------------------------
def reference_packed(x, packed):
    """Pure-JAX reference emulating the exact packed bf16 computation."""
    ws1, bs1, ws2, bs2, ws3, bs3, wh1, bh1, wh2, bh2, wh3, bh3 = packed
    B = x.shape[0]
    xp = jnp.zeros((B, IN_PAD), jnp.bfloat16).at[:, :INPUT_DIM].set(
        x.astype(jnp.bfloat16))

    def lin(a, w, b, relu):
        y = jnp.dot(a, w, preferred_element_type=jnp.float32) + b
        return jnp.maximum(y, 0.0) if relu else y

    h = lin(xp, ws1, bs1, True).astype(jnp.bfloat16)
    h = lin(h, ws2, bs2, True).astype(jnp.bfloat16)
    h = lin(h, ws3, bs3, True).astype(jnp.bfloat16)
    a = lin(h, wh1, bh1, True).astype(jnp.bfloat16)
    a = lin(a, wh2, bh2, True).astype(jnp.bfloat16)
    logits = lin(a, wh3, bh3, False)
    return [jax.nn.softmax(logits[:, off:off + hd], axis=-1)
            for off, hd in zip(HEAD_OFFS, HEAD_DIMS)]


def reference_f32(x, shared, heads):
    """Full-precision reference matching the original PyTorch module."""
    h = x
    for (w, b) in shared:
        h = jnp.maximum(h @ w + b, 0.0)
    outs = []
    for (w1, b1), (w2, b2), (w3, b3) in heads:
        a = jnp.maximum(h @ w1 + b1, 0.0)
        a = jnp.maximum(a @ w2 + b2, 0.0)
        outs.append(jax.nn.softmax(a @ w3 + b3, axis=-1))
    return outs


# ----------------------------------------------------------------------------
if __name__ == "__main__":
    key = jax.random.PRNGKey(0)
    kx, kp = jax.random.split(key)

    B = 64
    x = jax.random.normal(kx, (B, INPUT_DIM), jnp.float32)
    shared, heads = init_params(kp)
    packed = pack_params(shared, heads)

    outs = iraf_forward(x, packed)          # b_tile -> 32, grid=(2,) parallel
    outs = jax.block_until_ready(outs)

    refs_bf16 = reference_packed(x, packed)
    refs_f32 = reference_f32(x, shared, heads)
    for o, rb, rf, hd in zip(outs, refs_bf16, refs_f32, HEAD_DIMS):
        assert o.shape == (B, hd)
        np.testing.assert_allclose(np.asarray(o), np.asarray(rb),
                                   atol=5e-3, rtol=0)
        np.testing.assert_allclose(np.asarray(o), np.asarray(rf),
                                   atol=6e-2, rtol=0)
        np.testing.assert_allclose(np.asarray(jnp.sum(o, axis=-1)), 1.0,
                                   atol=1e-3)

    print("KERNEL_OK")
</pallas_src>

<mosaic_0001>
module attributes {stable_mosaic.version = 11 : i64} {
  func.func @iraf_kernel(%arg0: i32, %arg1: memref<32x128xbf16, #tpu.memory_space<vmem>>, %arg2: memref<128x512xbf16, #tpu.memory_space<vmem>>, %arg3: memref<1x512xf32, #tpu.memory_space<vmem>>, %arg4: memref<512x256xbf16, #tpu.memory_space<vmem>>, %arg5: memref<1x256xf32, #tpu.memory_space<vmem>>, %arg6: memref<256x128xbf16, #tpu.memory_space<vmem>>, %arg7: memref<1x128xf32, #tpu.memory_space<vmem>>, %arg8: memref<128x384xbf16, #tpu.memory_space<vmem>>, %arg9: memref<1x384xf32, #tpu.memory_space<vmem>>, %arg10: memref<384x256xbf16, #tpu.memory_space<vmem>>, %arg11: memref<1x256xf32, #tpu.memory_space<vmem>>, %arg12: memref<256x128xbf16, #tpu.memory_space<vmem>>, %arg13: memref<1x128xf32, #tpu.memory_space<vmem>>, %arg14: memref<32x128xf32, #tpu.memory_space<vmem>>) attributes {dimension_semantics = [#tpu.dimension_semantics<parallel>], iteration_bounds = array<i64: 2>, scalar_prefetch = 0 : i64, scratch_operands = 0 : i64, tpu.core_type = #tpu.core_type<tc>, window_params = [{transform_indices = @transform_0, window_bounds = array<i64: 32, 128>}, {pipeline_mode = #tpu.pipeline_mode<synchronous>, transform_indices = @transform_1, window_bounds = array<i64: 128, 512>}, {pipeline_mode = #tpu.pipeline_mode<synchronous>, transform_indices = @transform_2, window_bounds = array<i64: 1, 512>}, {pipeline_mode = #tpu.pipeline_mode<synchronous>, transform_indices = @transform_3, window_bounds = array<i64: 512, 256>}, {pipeline_mode = #tpu.pipeline_mode<synchronous>, transform_indices = @transform_4, window_bounds = array<i64: 1, 256>}, {pipeline_mode = #tpu.pipeline_mode<synchronous>, transform_indices = @transform_5, window_bounds = array<i64: 256, 128>}, {pipeline_mode = #tpu.pipeline_mode<synchronous>, transform_indices = @transform_6, window_bounds = array<i64: 1, 128>}, {pipeline_mode = #tpu.pipeline_mode<synchronous>, transform_indices = @transform_7, window_bounds = array<i64: 128, 384>}, {pipeline_mode = #tpu.pipeline_mode<synchronous>, transform_indices = @transform_8, window_bounds = array<i64: 1, 384>}, {pipeline_mode = #tpu.pipeline_mode<synchronous>, transform_indices = @transform_9, window_bounds = array<i64: 384, 256>}, {pipeline_mode = #tpu.pipeline_mode<synchronous>, transform_indices = @transform_10, window_bounds = array<i64: 1, 256>}, {pipeline_mode = #tpu.pipeline_mode<synchronous>, transform_indices = @transform_11, window_bounds = array<i64: 256, 128>}, {pipeline_mode = #tpu.pipeline_mode<synchronous>, transform_indices = @transform_12, window_bounds = array<i64: 1, 128>}, {transform_indices = @transform_13, window_bounds = array<i64: 32, 128>}]} {
    %0 = tpu.iota {dimensions = array<i32: 1>} : vector<16x128xi32>
    %c0_i32 = arith.constant 0 : i32
    %1 = vector.broadcast %c0_i32 : i32 to vector<16x128xi32>
    %2 = arith.cmpi sge, %0, %1 : vector<16x128xi32>
    %c20_i32 = arith.constant 20 : i32
    %3 = vector.broadcast %c20_i32 : i32 to vector<16x128xi32>
    %4 = arith.cmpi slt, %0, %3 : vector<16x128xi32>
    %5 = arith.andi %2, %4 : vector<16x128xi1>
    %c20_i32_0 = arith.constant 20 : i32
    %6 = vector.broadcast %c20_i32_0 : i32 to vector<16x128xi32>
    %7 = arith.cmpi sge, %0, %6 : vector<16x128xi32>
    %c30_i32 = arith.constant 30 : i32
    %8 = vector.broadcast %c30_i32 : i32 to vector<16x128xi32>
    %9 = arith.cmpi slt, %0, %8 : vector<16x128xi32>
    %10 = arith.andi %7, %9 : vector<16x128xi1>
    %c30_i32_1 = arith.constant 30 : i32
    %11 = vector.broadcast %c30_i32_1 : i32 to vector<16x128xi32>
    %12 = arith.cmpi sge, %0, %11 : vector<16x128xi32>
    %c40_i32 = arith.constant 40 : i32
    %13 = vector.broadcast %c40_i32 : i32 to vector<16x128xi32>
    %14 = arith.cmpi slt, %0, %13 : vector<16x128xi32>
    %15 = arith.andi %12, %14 : vector<16x128xi1>
    %c40_i32_2 = arith.constant 40 : i32
    %16 = vector.broadcast %c40_i32_2 : i32 to vector<16x128xi32>
    %17 = arith.cmpi sge, %0, %16 : vector<16x128xi32>
    %c50_i32 = arith.constant 50 : i32
    %18 = vector.broadcast %c50_i32 : i32 to vector<16x128xi32>
    %19 = arith.cmpi slt, %0, %18 : vector<16x128xi32>
    %20 = arith.andi %17, %19 : vector<16x128xi1>
    %c50_i32_3 = arith.constant 50 : i32
    %21 = vector.broadcast %c50_i32_3 : i32 to vector<16x128xi32>
    %22 = arith.cmpi sge, %0, %21 : vector<16x128xi32>
    %c60_i32 = arith.constant 60 : i32
    %23 = vector.broadcast %c60_i32 : i32 to vector<16x128xi32>
    %24 = arith.cmpi slt, %0, %23 : vector<16x128xi32>
    %25 = arith.andi %22, %24 : vector<16x128xi1>
    %c0 = arith.constant 0 : index
    %c0_4 = arith.constant 0 : index
    %26 = vector.load %arg1[%c0, %c0_4] : memref<32x128xbf16, #tpu.memory_space<vmem>>, vector<16x128xbf16>
    %c0_5 = arith.constant 0 : index
    %c0_6 = arith.constant 0 : index
    %27 = vector.load %arg2[%c0_5, %c0_6] : memref<128x512xbf16, #tpu.memory_space<vmem>>, vector<128x512xbf16>
    %cst = arith.constant dense<0.000000e+00> : vector<16x512xf32>
    %28 = tpu.matmul %26, %27, %cst {dimension_numbers = #tpu.dot_dimension_numbers<[1], [0], [0], [1], [0, 0, 1, 1], [], []>} : vector<16x128xbf16>, vector<128x512xbf16>, vector<16x512xf32> -> vector<16x512xf32>
    %c0_7 = arith.constant 0 : index
    %c0_8 = arith.constant 0 : index
    %29 = vector.load %arg3[%c0_7, %c0_8] : memref<1x512xf32, #tpu.memory_space<vmem>>, vector<1x512xf32>
    %30 = vector.broadcast %29 : vector<1x512xf32> to vector<16x512xf32>
    %31 = arith.addf %28, %30 : vector<16x512xf32>
    %cst_9 = arith.constant 0.000000e+00 : f32
    %32 = vector.broadcast %cst_9 : f32 to vector<16x512xf32>
    %33 = arith.maximumf %31, %32 : vector<16x512xf32>
    %34 = arith.truncf %33 : vector<16x512xf32> to vector<16x512xbf16>
    %c0_10 = arith.constant 0 : index
    %c0_11 = arith.constant 0 : index
    %35 = vector.load %arg4[%c0_10, %c0_11] : memref<512x256xbf16, #tpu.memory_space<vmem>>, vector<512x256xbf16>
    %cst_12 = arith.constant dense<0.000000e+00> : vector<16x256xf32>
    %36 = tpu.matmul %34, %35, %cst_12 {dimension_numbers = #tpu.dot_dimension_numbers<[1], [0], [0], [1], [0, 0, 1, 1], [], []>} : vector<16x512xbf16>, vector<512x256xbf16>, vector<16x256xf32> -> vector<16x256xf32>
    %c0_13 = arith.constant 0 : index
    %c0_14 = arith.constant 0 : index
    %37 = vector.load %arg5[%c0_13, %c0_14] : memref<1x256xf32, #tpu.memory_space<vmem>>, vector<1x256xf32>
    %38 = vector.broadcast %37 : vector<1x256xf32> to vector<16x256xf32>
    %39 = arith.addf %36, %38 : vector<16x256xf32>
    %cst_15 = arith.constant 0.000000e+00 : f32
    %40 = vector.broadcast %cst_15 : f32 to vector<16x256xf32>
    %41 = arith.maximumf %39, %40 : vector<16x256xf32>
    %42 = arith.truncf %41 : vector<16x256xf32> to vector<16x256xbf16>
    %c0_16 = arith.constant 0 : index
    %c0_17 = arith.constant 0 : index
    %43 = vector.load %arg6[%c0_16, %c0_17] : memref<256x128xbf16, #tpu.memory_space<vmem>>, vector<256x128xbf16>
    %cst_18 = arith.constant dense<0.000000e+00> : vector<16x128xf32>
    %44 = tpu.matmul %42, %43, %cst_18 {dimension_numbers = #tpu.dot_dimension_numbers<[1], [0], [0], [1], [0, 0, 1, 1], [], []>} : vector<16x256xbf16>, vector<256x128xbf16>, vector<16x128xf32> -> vector<16x128xf32>
    %c0_19 = arith.constant 0 : index
    %c0_20 = arith.constant 0 : index
    %45 = vector.load %arg7[%c0_19, %c0_20] : memref<1x128xf32, #tpu.memory_space<vmem>>, vector<1x128xf32>
    %46 = vector.broadcast %45 : vector<1x128xf32> to vector<16x128xf32>
    %47 = arith.addf %44, %46 : vector<16x128xf32>
    %cst_21 = arith.constant 0.000000e+00 : f32
    %48 = vector.broadcast %cst_21 : f32 to vector<16x128xf32>
    %49 = arith.maximumf %47, %48 : vector<16x128xf32>
    %50 = arith.truncf %49 : vector<16x128xf32> to vector<16x128xbf16>
    %c0_22 = arith.constant 0 : index
    %c0_23 = arith.constant 0 : index
    %51 = vector.load %arg8[%c0_22, %c0_23] : memref<128x384xbf16, #tpu.memory_space<vmem>>, vector<128x384xbf16>
    %cst_24 = arith.constant dense<0.000000e+00> : vector<16x384xf32>
    %52 = tpu.matmul %50, %51, %cst_24 {dimension_numbers = #tpu.dot_dimension_numbers<[1], [0], [0], [1], [0, 0, 1, 1], [], []>} : vector<16x128xbf16>, vector<128x384xbf16>, vector<16x384xf32> -> vector<16x384xf32>
    %c0_25 = arith.constant 0 : index
    %c0_26 = arith.constant 0 : index
    %53 = vector.load %arg9[%c0_25, %c0_26] : memref<1x384xf32, #tpu.memory_space<vmem>>, vector<1x384xf32>
    %54 = vector.broadcast %53 : vector<1x384xf32> to vector<16x384xf32>
    %55 = arith.addf %52, %54 : vector<16x384xf32>
    %cst_27 = arith.constant 0.000000e+00 : f32
    %56 = vector.broadcast %cst_27 : f32 to vector<16x384xf32>
    %57 = arith.maximumf %55, %56 : vector<16x384xf32>
    %58 = arith.truncf %57 : vector<16x384xf32> to vector<16x384xbf16>
    %c0_28 = arith.constant 0 : index
    %c0_29 = arith.constant 0 : index
    %59 = vector.load %arg10[%c0_28, %c0_29] : memref<384x256xbf16, #tpu.memory_space<vmem>>, vector<384x256xbf16>
    %cst_30 = arith.constant dense<0.000000e+00> : vector<16x256xf32>
    %60 = tpu.matmul %58, %59, %cst_30 {dimension_numbers = #tpu.dot_dimension_numbers<[1], [0], [0], [1], [0, 0, 1, 1], [], []>} : vector<16x384xbf16>, vector<384x256xbf16>, vector<16x256xf32> -> vector<16x256xf32>
    %c0_31 = arith.constant 0 : index
    %c0_32 = arith.constant 0 : index
    %61 = vector.load %arg11[%c0_31, %c0_32] : memref<1x256xf32, #tpu.memory_space<vmem>>, vector<1x256xf32>
    %62 = vector.broadcast %61 : vector<1x256xf32> to vector<16x256xf32>
    %63 = arith.addf %60, %62 : vector<16x256xf32>
    %cst_33 = arith.constant 0.000000e+00 : f32
    %64 = vector.broadcast %cst_33 : f32 to vector<16x256xf32>
    %65 = arith.maximumf %63, %64 : vector<16x256xf32>
    %66 = arith.truncf %65 : vector<16x256xf32> to vector<16x256xbf16>
    %c0_34 = arith.constant 0 : index
    %c0_35 = arith.constant 0 : index
    %67 = vector.load %arg12[%c0_34, %c0_35] : memref<256x128xbf16, #tpu.memory_space<vmem>>, vector<256x128xbf16>
    %cst_36 = arith.constant dense<0.000000e+00> : vector<16x128xf32>
    %68 = tpu.matmul %66, %67, %cst_36 {dimension_numbers = #tpu.dot_dimension_numbers<[1], [0], [0], [1], [0, 0, 1, 1], [], []>} : vector<16x256xbf16>, vector<256x128xbf16>, vector<16x128xf32> -> vector<16x128xf32>
    %c0_37 = arith.constant 0 : index
    %c0_38 = arith.constant 0 : index
    %69 = vector.load %arg13[%c0_37, %c0_38] : memref<1x128xf32, #tpu.memory_space<vmem>>, vector<1x128xf32>
    %70 = vector.broadcast %69 : vector<1x128xf32> to vector<16x128xf32>
    %71 = arith.addf %68, %70 : vector<16x128xf32>
    %cst_39 = arith.constant 0.000000e+00 : f32
    %72 = vector.broadcast %cst_39 : f32 to vector<16x128xf32>
    %cst_40 = arith.constant -1.000000e+30 : f32
    %73 = vector.broadcast %cst_40 : f32 to vector<16x128xf32>
    %74 = arith.select %5, %71, %73 : vector<16x128xi1>, vector<16x128xf32>
    %cst_41 = arith.constant dense<0xFF800000> : vector<16xf32>
    %75 = vector.multi_reduction <maximumf>, %74, %cst_41 [1] : vector<16x128xf32> to vector<16xf32>
    %76 = vector.shape_cast %75 : vector<16xf32> to vector<16x1xf32>
    %77 = vector.shape_cast %76 : vector<16x1xf32> to vector<16x1xf32>
    %78 = vector.broadcast %77 : vector<16x1xf32> to vector<16x128xf32>
    %79 = arith.select %5, %78, %72 : vector<16x128xi1>, vector<16x128xf32>
    %cst_42 = arith.constant -1.000000e+30 : f32
    %80 = vector.broadcast %cst_42 : f32 to vector<16x128xf32>
    %81 = arith.select %10, %71, %80 : vector<16x128xi1>, vector<16x128xf32>
    %cst_43 = arith.constant dense<0xFF800000> : vector<16xf32>
    %82 = vector.multi_reduction <maximumf>, %81, %cst_43 [1] : vector<16x128xf32> to vector<16xf32>
    %83 = vector.shape_cast %82 : vector<16xf32> to vector<16x1xf32>
    %84 = vector.shape_cast %83 : vector<16x1xf32> to vector<16x1xf32>
    %85 = vector.broadcast %84 : vector<16x1xf32> to vector<16x128xf32>
    %86 = arith.select %10, %85, %79 : vector<16x128xi1>, vector<16x128xf32>
    %cst_44 = arith.constant -1.000000e+30 : f32
    %87 = vector.broadcast %cst_44 : f32 to vector<16x128xf32>
    %88 = arith.select %15, %71, %87 : vector<16x128xi1>, vector<16x128xf32>
    %cst_45 = arith.constant dense<0xFF800000> : vector<16xf32>
    %89 = vector.multi_reduction <maximumf>, %88, %cst_45 [1] : vector<16x128xf32> to vector<16xf32>
    %90 = vector.shape_cast %89 : vector<16xf32> to vector<16x1xf32>
    %91 = vector.shape_cast %90 : vector<16x1xf32> to vector<16x1xf32>
    %92 = vector.broadcast %91 : vector<16x1xf32> to vector<16x128xf32>
    %93 = arith.select %15, %92, %86 : vector<16x128xi1>, vector<16x128xf32>
    %cst_46 = arith.constant -1.000000e+30 : f32
    %94 = vector.broadcast %cst_46 : f32 to vector<16x128xf32>
    %95 = arith.select %20, %71, %94 : vector<16x128xi1>, vector<16x128xf32>
    %cst_47 = arith.constant dense<0xFF800000> : vector<16xf32>
    %96 = vector.multi_reduction <maximumf>, %95, %cst_47 [1] : vector<16x128xf32> to vector<16xf32>
    %97 = vector.shape_cast %96 : vector<16xf32> to vector<16x1xf32>
    %98 = vector.shape_cast %97 : vector<16x1xf32> to vector<16x1xf32>
    %99 = vector.broadcast %98 : vector<16x1xf32> to vector<16x128xf32>
    %100 = arith.select %20, %99, %93 : vector<16x128xi1>, vector<16x128xf32>
    %cst_48 = arith.constant -1.000000e+30 : f32
    %101 = vector.broadcast %cst_48 : f32 to vector<16x128xf32>
    %102 = arith.select %25, %71, %101 : vector<16x128xi1>, vector<16x128xf32>
    %cst_49 = arith.constant dense<0xFF800000> : vector<16xf32>
    %103 = vector.multi_reduction <maximumf>, %102, %cst_49 [1] : vector<16x128xf32> to vector<16xf32>
    %104 = vector.shape_cast %103 : vector<16xf32> to vector<16x1xf32>
    %105 = vector.shape_cast %104 : vector<16x1xf32> to vector<16x1xf32>
    %106 = vector.broadcast %105 : vector<16x1xf32> to vector<16x128xf32>
    %107 = arith.select %25, %106, %100 : vector<16x128xi1>, vector<16x128xf32>
    %108 = arith.subf %71, %107 : vector<16x128xf32>
    %109 = math.exp %108 : vector<16x128xf32>
    %cst_50 = arith.constant 1.000000e+00 : f32
    %110 = vector.broadcast %cst_50 : f32 to vector<16x128xf32>
    %cst_51 = arith.constant 0.000000e+00 : f32
    %111 = vector.broadcast %cst_51 : f32 to vector<16x128xf32>
    %112 = arith.select %5, %109, %111 : vector<16x128xi1>, vector<16x128xf32>
    %cst_52 = arith.constant dense<0.000000e+00> : vector<16xf32>
    %113 = vector.multi_reduction <add>, %112, %cst_52 [1] : vector<16x128xf32> to vector<16xf32>
    %114 = vector.shape_cast %113 : vector<16xf32> to vector<16x1xf32>
    %115 = vector.shape_cast %114 : vector<16x1xf32> to vector<16x1xf32>
    %116 = vector.broadcast %115 : vector<16x1xf32> to vector<16x128xf32>
    %117 = arith.select %5, %116, %110 : vector<16x128xi1>, vector<16x128xf32>
    %cst_53 = arith.constant 0.000000e+00 : f32
    %118 = vector.broadcast %cst_53 : f32 to vector<16x128xf32>
    %119 = arith.select %10, %109, %118 : vector<16x128xi1>, vector<16x128xf32>
    %cst_54 = arith.constant dense<0.000000e+00> : vector<16xf32>
    %120 = vector.multi_reduction <add>, %119, %cst_54 [1] : vector<16x128xf32> to vector<16xf32>
    %121 = vector.shape_cast %120 : vector<16xf32> to vector<16x1xf32>
    %122 = vector.shape_cast %121 : vector<16x1xf32> to vector<16x1xf32>
    %123 = vector.broadcast %122 : vector<16x1xf32> to vector<16x128xf32>
    %124 = arith.select %10, %123, %117 : vector<16x128xi1>, vector<16x128xf32>
    %cst_55 = arith.constant 0.000000e+00 : f32
    %125 = vector.broadcast %cst_55 : f32 to vector<16x128xf32>
    %126 = arith.select %15, %109, %125 : vector<16x128xi1>, vector<16x128xf32>
    %cst_56 = arith.constant dense<0.000000e+00> : vector<16xf32>
    %127 = vector.multi_reduction <add>, %126, %cst_56 [1] : vector<16x128xf32> to vector<16xf32>
    %128 = vector.shape_cast %127 : vector<16xf32> to vector<16x1xf32>
    %129 = vector.shape_cast %128 : vector<16x1xf32> to vector<16x1xf32>
    %130 = vector.broadcast %129 : vector<16x1xf32> to vector<16x128xf32>
    %131 = arith.select %15, %130, %124 : vector<16x128xi1>, vector<16x128xf32>
    %cst_57 = arith.constant 0.000000e+00 : f32
    %132 = vector.broadcast %cst_57 : f32 to vector<16x128xf32>
    %133 = arith.select %20, %109, %132 : vector<16x128xi1>, vector<16x128xf32>
    %cst_58 = arith.constant dense<0.000000e+00> : vector<16xf32>
    %134 = vector.multi_reduction <add>, %133, %cst_58 [1] : vector<16x128xf32> to vector<16xf32>
    %135 = vector.shape_cast %134 : vector<16xf32> to vector<16x1xf32>
    %136 = vector.shape_cast %135 : vector<16x1xf32> to vector<16x1xf32>
    %137 = vector.broadcast %136 : vector<16x1xf32> to vector<16x128xf32>
    %138 = arith.select %20, %137, %131 : vector<16x128xi1>, vector<16x128xf32>
    %cst_59 = arith.constant 0.000000e+00 : f32
    %139 = vector.broadcast %cst_59 : f32 to vector<16x128xf32>
    %140 = arith.select %25, %109, %139 : vector<16x128xi1>, vector<16x128xf32>
    %cst_60 = arith.constant dense<0.000000e+00> : vector<16xf32>
    %141 = vector.multi_reduction <add>, %140, %cst_60 [1] : vector<16x128xf32> to vector<16xf32>
    %142 = vector.shape_cast %141 : vector<16xf32> to vector<16x1xf32>
    %143 = vector.shape_cast %142 : vector<16x1xf32> to vector<16x1xf32>
    %144 = vector.broadcast %143 : vector<16x1xf32> to vector<16x128xf32>
    %145 = arith.select %25, %144, %138 : vector<16x128xi1>, vector<16x128xf32>
    %146 = tpu.reciprocal %145 {approx = true} : vector<16x128xf32> -> vector<16x128xf32>
    %147 = arith.mulf %145, %146 : vector<16x128xf32>
    %cst_61 = arith.constant 2.000000e+00 : f32
    %148 = vector.broadcast %cst_61 : f32 to vector<16x128xf32>
    %149 = arith.subf %148, %147 : vector<16x128xf32>
    %150 = arith.mulf %146, %149 : vector<16x128xf32>
    %151 = arith.mulf %109, %150 : vector<16x128xf32>
    %c0_62 = arith.constant 0 : index
    %c0_63 = arith.constant 0 : index
    %152 = vector.load %arg14[%c0_62, %c0_63] : memref<32x128xf32, #tpu.memory_space<vmem>>, vector<16x128xf32>
    tpu.vector_store %arg14[%c0_62, %c0_63], %151 {strides = array<i32>} : memref<32x128xf32, #tpu.memory_space<vmem>>, vector<16x128xf32>,
    %c16 = arith.constant 16 : index
    %c0_64 = arith.constant 0 : index
    %153 = vector.load %arg1[%c16, %c0_64] : memref<32x128xbf16, #tpu.memory_space<vmem>>, vector<16x128xbf16>
    %c0_65 = arith.constant 0 : index
    %c0_66 = arith.constant 0 : index
    %154 = vector.load %arg2[%c0_65, %c0_66] : memref<128x512xbf16, #tpu.memory_space<vmem>>, vector<128x512xbf16>
    %cst_67 = arith.constant dense<0.000000e+00> : vector<16x512xf32>
    %155 = tpu.matmul %153, %154, %cst_67 {dimension_numbers = #tpu.dot_dimension_numbers<[1], [0], [0], [1], [0, 0, 1, 1], [], []>} : vector<16x128xbf16>, vector<128x512xbf16>, vector<16x512xf32> -> vector<16x512xf32>
    %c0_68 = arith.constant 0 : index
    %c0_69 = arith.constant 0 : index
    %156 = vector.load %arg3[%c0_68, %c0_69] : memref<1x512xf32, #tpu.memory_space<vmem>>, vector<1x512xf32>
    %157 = vector.broadcast %156 : vector<1x512xf32> to vector<16x512xf32>
    %158 = arith.addf %155, %157 : vector<16x512xf32>
    %cst_70 = arith.constant 0.000000e+00 : f32
    %159 = vector.broadcast %cst_70 : f32 to vector<16x512xf32>
    %160 = arith.maximumf %158, %159 : vector<16x512xf32>
    %161 = arith.truncf %160 : vector<16x512xf32> to vector<16x512xbf16>
    %c0_71 = arith.constant 0 : index
    %c0_72 = arith.constant 0 : index
    %162 = vector.load %arg4[%c0_71, %c0_72] : memref<512x256xbf16, #tpu.memory_space<vmem>>, vector<512x256xbf16>
    %cst_73 = arith.constant dense<0.000000e+00> : vector<16x256xf32>
    %163 = tpu.matmul %161, %162, %cst_73 {dimension_numbers = #tpu.dot_dimension_numbers<[1], [0], [0], [1], [0, 0, 1, 1], [], []>} : vector<16x512xbf16>, vector<512x256xbf16>, vector<16x256xf32> -> vector<16x256xf32>
    %c0_74 = arith.constant 0 : index
    %c0_75 = arith.constant 0 : index
    %164 = vector.load %arg5[%c0_74, %c0_75] : memref<1x256xf32, #tpu.memory_space<vmem>>, vector<1x256xf32>
    %165 = vector.broadcast %164 : vector<1x256xf32> to vector<16x256xf32>
    %166 = arith.addf %163, %165 : vector<16x256xf32>
    %cst_76 = arith.constant 0.000000e+00 : f32
    %167 = vector.broadcast %cst_76 : f32 to vector<16x256xf32>
    %168 = arith.maximumf %166, %167 : vector<16x256xf32>
    %169 = arith.truncf %168 : vector<16x256xf32> to vector<16x256xbf16>
    %c0_77 = arith.constant 0 : index
    %c0_78 = arith.constant 0 : index
    %170 = vector.load %arg6[%c0_77, %c0_78] : memref<256x128xbf16, #tpu.memory_space<vmem>>, vector<256x128xbf16>
    %cst_79 = arith.constant dense<0.000000e+00> : vector<16x128xf32>
    %171 = tpu.matmul %169, %170, %cst_79 {dimension_numbers = #tpu.dot_dimension_numbers<[1], [0], [0], [1], [0, 0, 1, 1], [], []>} : vector<16x256xbf16>, vector<256x128xbf16>, vector<16x128xf32> -> vector<16x128xf32>
    %c0_80 = arith.constant 0 : index
    %c0_81 = arith.constant 0 : index
    %172 = vector.load %arg7[%c0_80, %c0_81] : memref<1x128xf32, #tpu.memory_space<vmem>>, vector<1x128xf32>
    %173 = vector.broadcast %172 : vector<1x128xf32> to vector<16x128xf32>
    %174 = arith.addf %171, %173 : vector<16x128xf32>
    %cst_82 = arith.constant 0.000000e+00 : f32
    %175 = vector.broadcast %cst_82 : f32 to vector<16x128xf32>
    %176 = arith.maximumf %174, %175 : vector<16x128xf32>
    %177 = arith.truncf %176 : vector<16x128xf32> to vector<16x128xbf16>
    %c0_83 = arith.constant 0 : index
    %c0_84 = arith.constant 0 : index
    %178 = vector.load %arg8[%c0_83, %c0_84] : memref<128x384xbf16, #tpu.memory_space<vmem>>, vector<128x384xbf16>
    %cst_85 = arith.constant dense<0.000000e+00> : vector<16x384xf32>
    %179 = tpu.matmul %177, %178, %cst_85 {dimension_numbers = #tpu.dot_dimension_numbers<[1], [0], [0], [1], [0, 0, 1, 1], [], []>} : vector<16x128xbf16>, vector<128x384xbf16>, vector<16x384xf32> -> vector<16x384xf32>
    %c0_86 = arith.constant 0 : index
    %c0_87 = arith.constant 0 : index
    %180 = vector.load %arg9[%c0_86, %c0_87] : memref<1x384xf32, #tpu.memory_space<vmem>>, vector<1x384xf32>
    %181 = vector.broadcast %180 : vector<1x384xf32> to vector<16x384xf32>
    %182 = arith.addf %179, %181 : vector<16x384xf32>
    %cst_88 = arith.constant 0.000000e+00 : f32
    %183 = vector.broadcast %cst_88 : f32 to vector<16x384xf32>
    %184 = arith.maximumf %182, %183 : vector<16x384xf32>
    %185 = arith.truncf %184 : vector<16x384xf32> to vector<16x384xbf16>
    %c0_89 = arith.constant 0 : index
    %c0_90 = arith.constant 0 : index
    %186 = vector.load %arg10[%c0_89, %c0_90] : memref<384x256xbf16, #tpu.memory_space<vmem>>, vector<384x256xbf16>
    %cst_91 = arith.constant dense<0.000000e+00> : vector<16x256xf32>
    %187 = tpu.matmul %185, %186, %cst_91 {dimension_numbers = #tpu.dot_dimension_numbers<[1], [0], [0], [1], [0, 0, 1, 1], [], []>} : vector<16x384xbf16>, vector<384x256xbf16>, vector<16x256xf32> -> vector<16x256xf32>
    %c0_92 = arith.constant 0 : index
    %c0_93 = arith.constant 0 : index
    %188 = vector.load %arg11[%c0_92, %c0_93] : memref<1x256xf32, #tpu.memory_space<vmem>>, vector<1x256xf32>
    %189 = vector.broadcast %188 : vector<1x256xf32> to vector<16x256xf32>
    %190 = arith.addf %187, %189 : vector<16x256xf32>
    %cst_94 = arith.constant 0.000000e+00 : f32
    %191 = vector.broadcast %cst_94 : f32 to vector<16x256xf32>
    %192 = arith.maximumf %190, %191 : vector<16x256xf32>
    %193 = arith.truncf %192 : vector<16x256xf32> to vector<16x256xbf16>
    %c0_95 = arith.constant 0 : index
    %c0_96 = arith.constant 0 : index
    %194 = vector.load %arg12[%c0_95, %c0_96] : memref<256x128xbf16, #tpu.memory_space<vmem>>, vector<256x128xbf16>
    %cst_97 = arith.constant dense<0.000000e+00> : vector<16x128xf32>
    %195 = tpu.matmul %193, %194, %cst_97 {dimension_numbers = #tpu.dot_dimension_numbers<[1], [0], [0], [1], [0, 0, 1, 1], [], []>} : vector<16x256xbf16>, vector<256x128xbf16>, vector<16x128xf32> -> vector<16x128xf32>
    %c0_98 = arith.constant 0 : index
    %c0_99 = arith.constant 0 : index
    %196 = vector.load %arg13[%c0_98, %c0_99] : memref<1x128xf32, #tpu.memory_space<vmem>>, vector<1x128xf32>
    %197 = vector.broadcast %196 : vector<1x128xf32> to vector<16x128xf32>
    %198 = arith.addf %195, %197 : vector<16x128xf32>
    %cst_100 = arith.constant 0.000000e+00 : f32
    %199 = vector.broadcast %cst_100 : f32 to vector<16x128xf32>
    %cst_101 = arith.constant -1.000000e+30 : f32
    %200 = vector.broadcast %cst_101 : f32 to vector<16x128xf32>
    %201 = arith.select %5, %198, %200 : vector<16x128xi1>, vector<16x128xf32>
    %cst_102 = arith.constant dense<0xFF800000> : vector<16xf32>
    %202 = vector.multi_reduction <maximumf>, %201, %cst_102 [1] : vector<16x128xf32> to vector<16xf32>
    %203 = vector.shape_cast %202 : vector<16xf32> to vector<16x1xf32>
    %204 = vector.shape_cast %203 : vector<16x1xf32> to vector<16x1xf32>
    %205 = vector.broadcast %204 : vector<16x1xf32> to vector<16x128xf32>
    %206 = arith.select %5, %205, %199 : vector<16x128xi1>, vector<16x128xf32>
    %cst_103 = arith.constant -1.000000e+30 : f32
    %207 = vector.broadcast %cst_103 : f32 to vector<16x128xf32>
    %208 = arith.select %10, %198, %207 : vector<16x128xi1>, vector<16x128xf32>
    %cst_104 = arith.constant dense<0xFF800000> : vector<16xf32>
    %209 = vector.multi_reduction <maximumf>, %208, %cst_104 [1] : vector<16x128xf32> to vector<16xf32>
    %210 = vector.shape_cast %209 : vector<16xf32> to vector<16x1xf32>
    %211 = vector.shape_cast %210 : vector<16x1xf32> to vector<16x1xf32>
    %212 = vector.broadcast %211 : vector<16x1xf32> to vector<16x128xf32>
    %213 = arith.select %10, %212, %206 : vector<16x128xi1>, vector<16x128xf32>
    %cst_105 = arith.constant -1.000000e+30 : f32
    %214 = vector.broadcast %cst_105 : f32 to vector<16x128xf32>
    %215 = arith.select %15, %198, %214 : vector<16x128xi1>, vector<16x128xf32>
    %cst_106 = arith.constant dense<0xFF800000> : vector<16xf32>
    %216 = vector.multi_reduction <maximumf>, %215, %cst_106 [1] : vector<16x128xf32> to vector<16xf32>
    %217 = vector.shape_cast %216 : vector<16xf32> to vector<16x1xf32>
    %218 = vector.shape_cast %217 : vector<16x1xf32> to vector<16x1xf32>
    %219 = vector.broadcast %218 : vector<16x1xf32> to vector<16x128xf32>
    %220 = arith.select %15, %219, %213 : vector<16x128xi1>, vector<16x128xf32>
    %cst_107 = arith.constant -1.000000e+30 : f32
    %221 = vector.broadcast %cst_107 : f32 to vector<16x128xf32>
    %222 = arith.select %20, %198, %221 : vector<16x128xi1>, vector<16x128xf32>
    %cst_108 = arith.constant dense<0xFF800000> : vector<16xf32>
    %223 = vector.multi_reduction <maximumf>, %222, %cst_108 [1] : vector<16x128xf32> to vector<16xf32>
    %224 = vector.shape_cast %223 : vector<16xf32> to vector<16x1xf32>
    %225 = vector.shape_cast %224 : vector<16x1xf32> to vector<16x1xf32>
    %226 = vector.broadcast %225 : vector<16x1xf32> to vector<16x128xf32>
    %227 = arith.select %20, %226, %220 : vector<16x128xi1>, vector<16x128xf32>
    %cst_109 = arith.constant -1.000000e+30 : f32
    %228 = vector.broadcast %cst_109 : f32 to vector<16x128xf32>
    %229 = arith.select %25, %198, %228 : vector<16x128xi1>, vector<16x128xf32>
    %cst_110 = arith.constant dense<0xFF800000> : vector<16xf32>
    %230 = vector.multi_reduction <maximumf>, %229, %cst_110 [1] : vector<16x128xf32> to vector<16xf32>
    %231 = vector.shape_cast %230 : vector<16xf32> to vector<16x1xf32>
    %232 = vector.shape_cast %231 : vector<16x1xf32> to vector<16x1xf32>
    %233 = vector.broadcast %232 : vector<16x1xf32> to vector<16x128xf32>
    %234 = arith.select %25, %233, %227 : vector<16x128xi1>, vector<16x128xf32>
    %235 = arith.subf %198, %234 : vector<16x128xf32>
    %236 = math.exp %235 : vector<16x128xf32>
    %cst_111 = arith.constant 1.000000e+00 : f32
    %237 = vector.broadcast %cst_111 : f32 to vector<16x128xf32>
    %cst_112 = arith.constant 0.000000e+00 : f32
    %238 = vector.broadcast %cst_112 : f32 to vector<16x128xf32>
    %239 = arith.select %5, %236, %238 : vector<16x128xi1>, vector<16x128xf32>
    %cst_113 = arith.constant dense<0.000000e+00> : vector<16xf32>
    %240 = vector.multi_reduction <add>, %239, %cst_113 [1] : vector<16x128xf32> to vector<16xf32>
    %241 = vector.shape_cast %240 : vector<16xf32> to vector<16x1xf32>
    %242 = vector.shape_cast %241 : vector<16x1xf32> to vector<16x1xf32>
    %243 = vector.broadcast %242 : vector<16x1xf32> to vector<16x128xf32>
    %244 = arith.select %5, %243, %237 : vector<16x128xi1>, vector<16x128xf32>
    %cst_114 = arith.constant 0.000000e+00 : f32
    %245 = vector.broadcast %cst_114 : f32 to vector<16x128xf32>
    %246 = arith.select %10, %236, %245 : vector<16x128xi1>, vector<16x128xf32>
    %cst_115 = arith.constant dense<0.000000e+00> : vector<16xf32>
    %247 = vector.multi_reduction <add>, %246, %cst_115 [1] : vector<16x128xf32> to vector<16xf32>
    %248 = vector.shape_cast %247 : vector<16xf32> to vector<16x1xf32>
    %249 = vector.shape_cast %248 : vector<16x1xf32> to vector<16x1xf32>
    %250 = vector.broadcast %249 : vector<16x1xf32> to vector<16x128xf32>
    %251 = arith.select %10, %250, %244 : vector<16x128xi1>, vector<16x128xf32>
    %cst_116 = arith.constant 0.000000e+00 : f32
    %252 = vector.broadcast %cst_116 : f32 to vector<16x128xf32>
    %253 = arith.select %15, %236, %252 : vector<16x128xi1>, vector<16x128xf32>
    %cst_117 = arith.constant dense<0.000000e+00> : vector<16xf32>
    %254 = vector.multi_reduction <add>, %253, %cst_117 [1] : vector<16x128xf32> to vector<16xf32>
    %255 = vector.shape_cast %254 : vector<16xf32> to vector<16x1xf32>
    %256 = vector.shape_cast %255 : vector<16x1xf32> to vector<16x1xf32>
    %257 = vector.broadcast %256 : vector<16x1xf32> to vector<16x128xf32>
    %258 = arith.select %15, %257, %251 : vector<16x128xi1>, vector<16x128xf32>
    %cst_118 = arith.constant 0.000000e+00 : f32
    %259 = vector.broadcast %cst_118 : f32 to vector<16x128xf32>
    %260 = arith.select %20, %236, %259 : vector<16x128xi1>, vector<16x128xf32>
    %cst_119 = arith.constant dense<0.000000e+00> : vector<16xf32>
    %261 = vector.multi_reduction <add>, %260, %cst_119 [1] : vector<16x128xf32> to vector<16xf32>
    %262 = vector.shape_cast %261 : vector<16xf32> to vector<16x1xf32>
    %263 = vector.shape_cast %262 : vector<16x1xf32> to vector<16x1xf32>
    %264 = vector.broadcast %263 : vector<16x1xf32> to vector<16x128xf32>
    %265 = arith.select %20, %264, %258 : vector<16x128xi1>, vector<16x128xf32>
    %cst_120 = arith.constant 0.000000e+00 : f32
    %266 = vector.broadcast %cst_120 : f32 to vector<16x128xf32>
    %267 = arith.select %25, %236, %266 : vector<16x128xi1>, vector<16x128xf32>
    %cst_121 = arith.constant dense<0.000000e+00> : vector<16xf32>
    %268 = vector.multi_reduction <add>, %267, %cst_121 [1] : vector<16x128xf32> to vector<16xf32>
    %269 = vector.shape_cast %268 : vector<16xf32> to vector<16x1xf32>
    %270 = vector.shape_cast %269 : vector<16x1xf32> to vector<16x1xf32>
    %271 = vector.broadcast %270 : vector<16x1xf32> to vector<16x128xf32>
    %272 = arith.select %25, %271, %265 : vector<16x128xi1>, vector<16x128xf32>
    %273 = tpu.reciprocal %272 {approx = true} : vector<16x128xf32> -> vector<16x128xf32>
    %274 = arith.mulf %272, %273 : vector<16x128xf32>
    %cst_122 = arith.constant 2.000000e+00 : f32
    %275 = vector.broadcast %cst_122 : f32 to vector<16x128xf32>
    %276 = arith.subf %275, %274 : vector<16x128xf32>
    %277 = arith.mulf %273, %276 : vector<16x128xf32>
    %278 = arith.mulf %236, %277 : vector<16x128xf32>
    %c16_123 = arith.constant 16 : index
    %c0_124 = arith.constant 0 : index
    %279 = vector.load %arg14[%c16_123, %c0_124] : memref<32x128xf32, #tpu.memory_space<vmem>>, vector<16x128xf32>
    tpu.vector_store %arg14[%c16_123, %c0_124], %278 {strides = array<i32>} : memref<32x128xf32, #tpu.memory_space<vmem>>, vector<16x128xf32>,
    return
  }
  func.func @transform_0(%arg0: i32) -> (i32, i32) {
    %c0_i32 = arith.constant 0 : i32
    %c0_i32_0 = arith.constant 0 : i32
    return %arg0, %c0_i32 : i32, i32
  }
  func.func @transform_1(%arg0: i32) -> (i32, i32) {
    %c0_i32 = arith.constant 0 : i32
    %c0_i32_0 = arith.constant 0 : i32
    %c0_i32_1 = arith.constant 0 : i32
    return %c0_i32, %c0_i32_0 : i32, i32
  }
  func.func @transform_2(%arg0: i32) -> (i32, i32) {
    %c0_i32 = arith.constant 0 : i32
    %c0_i32_0 = arith.constant 0 : i32
    %c0_i32_1 = arith.constant 0 : i32
    return %c0_i32, %c0_i32_0 : i32, i32
  }
  func.func @transform_3(%arg0: i32) -> (i32, i32) {
    %c0_i32 = arith.constant 0 : i32
    %c0_i32_0 = arith.constant 0 : i32
    %c0_i32_1 = arith.constant 0 : i32
    return %c0_i32, %c0_i32_0 : i32, i32
  }
  func.func @transform_4(%arg0: i32) -> (i32, i32) {
    %c0_i32 = arith.constant 0 : i32
    %c0_i32_0 = arith.constant 0 : i32
    %c0_i32_1 = arith.constant 0 : i32
    return %c0_i32, %c0_i32_0 : i32, i32
  }
  func.func @transform_5(%arg0: i32) -> (i32, i32) {
    %c0_i32 = arith.constant 0 : i32
    %c0_i32_0 = arith.constant 0 : i32
    %c0_i32_1 = arith.constant 0 : i32
    return %c0_i32, %c0_i32_0 : i32, i32
  }
  func.func @transform_6(%arg0: i32) -> (i32, i32) {
    %c0_i32 = arith.constant 0 : i32
    %c0_i32_0 = arith.constant 0 : i32
    %c0_i32_1 = arith.constant 0 : i32
    return %c0_i32, %c0_i32_0 : i32, i32
  }
  func.func @transform_7(%arg0: i32) -> (i32, i32) {
    %c0_i32 = arith.constant 0 : i32
    %c0_i32_0 = arith.constant 0 : i32
    %c0_i32_1 = arith.constant 0 : i32
    return %c0_i32, %c0_i32_0 : i32, i32
  }
  func.func @transform_8(%arg0: i32) -> (i32, i32) {
    %c0_i32 = arith.constant 0 : i32
    %c0_i32_0 = arith.constant 0 : i32
    %c0_i32_1 = arith.constant 0 : i32
    return %c0_i32, %c0_i32_0 : i32, i32
  }
  func.func @transform_9(%arg0: i32) -> (i32, i32) {
    %c0_i32 = arith.constant 0 : i32
    %c0_i32_0 = arith.constant 0 : i32
    %c0_i32_1 = arith.constant 0 : i32
    return %c0_i32, %c0_i32_0 : i32, i32
  }
  func.func @transform_10(%arg0: i32) -> (i32, i32) {
    %c0_i32 = arith.constant 0 : i32
    %c0_i32_0 = arith.constant 0 : i32
    %c0_i32_1 = arith.constant 0 : i32
    return %c0_i32, %c0_i32_0 : i32, i32
  }
  func.func @transform_11(%arg0: i32) -> (i32, i32) {
    %c0_i32 = arith.constant 0 : i32
    %c0_i32_0 = arith.constant 0 : i32
    %c0_i32_1 = arith.constant 0 : i32
    return %c0_i32, %c0_i32_0 : i32, i32
  }
  func.func @transform_12(%arg0: i32) -> (i32, i32) {
    %c0_i32 = arith.constant 0 : i32
    %c0_i32_0 = arith.constant 0 : i32
    %c0_i32_1 = arith.constant 0 : i32
    return %c0_i32, %c0_i32_0 : i32, i32
  }
  func.func @transform_13(%arg0: i32) -> (i32, i32) {
    %c0_i32 = arith.constant 0 : i32
    %c0_i32_0 = arith.constant 0 : i32
    return %arg0, %c0_i32 : i32, i32
  }
}

module attributes {stable_mosaic.version = 11 : i64} {
  func.func @iraf_kernel(%arg0: i32, %arg1: memref<32x128xbf16, #tpu.memory_space<vmem>>, %arg2: memref<128x512xbf16, #tpu.memory_space<vmem>>, %arg3: memref<1x512xf32, #tpu.memory_space<vmem>>, %arg4: memref<512x256xbf16, #tpu.memory_space<vmem>>, %arg5: memref<1x256xf32, #tpu.memory_space<vmem>>, %arg6: memref<256x128xbf16, #tpu.memory_space<vmem>>, %arg7: memref<1x128xf32, #tpu.memory_space<vmem>>, %arg8: memref<128x384xbf16, #tpu.memory_space<vmem>>, %arg9: memref<1x384xf32, #tpu.memory_space<vmem>>, %arg10: memref<384x256xbf16, #tpu.memory_space<vmem>>, %arg11: memref<1x256xf32, #tpu.memory_space<vmem>>, %arg12: memref<256x128xbf16, #tpu.memory_space<vmem>>, %arg13: memref<1x128xf32, #tpu.memory_space<vmem>>, %arg14: memref<32x128xf32, #tpu.memory_space<vmem>>) attributes {dimension_semantics = [#tpu.dimension_semantics<parallel>], iteration_bounds = array<i64: 2>, scalar_prefetch = 0 : i64, scratch_operands = 0 : i64, tpu.core_type = #tpu.core_type<tc>, window_params = [{transform_indices = @transform_0, window_bounds = array<i64: 32, 128>}, {pipeline_mode = #tpu.pipeline_mode<synchronous>, transform_indices = @transform_1, window_bounds = array<i64: 128, 512>}, {pipeline_mode = #tpu.pipeline_mode<synchronous>, transform_indices = @transform_2, window_bounds = array<i64: 1, 512>}, {pipeline_mode = #tpu.pipeline_mode<synchronous>, transform_indices = @transform_3, window_bounds = array<i64: 512, 256>}, {pipeline_mode = #tpu.pipeline_mode<synchronous>, transform_indices = @transform_4, window_bounds = array<i64: 1, 256>}, {pipeline_mode = #tpu.pipeline_mode<synchronous>, transform_indices = @transform_5, window_bounds = array<i64: 256, 128>}, {pipeline_mode = #tpu.pipeline_mode<synchronous>, transform_indices = @transform_6, window_bounds = array<i64: 1, 128>}, {pipeline_mode = #tpu.pipeline_mode<synchronous>, transform_indices = @transform_7, window_bounds = array<i64: 128, 384>}, {pipeline_mode = #tpu.pipeline_mode<synchronous>, transform_indices = @transform_8, window_bounds = array<i64: 1, 384>}, {pipeline_mode = #tpu.pipeline_mode<synchronous>, transform_indices = @transform_9, window_bounds = array<i64: 384, 256>}, {pipeline_mode = #tpu.pipeline_mode<synchronous>, transform_indices = @transform_10, window_bounds = array<i64: 1, 256>}, {pipeline_mode = #tpu.pipeline_mode<synchronous>, transform_indices = @transform_11, window_bounds = array<i64: 256, 128>}, {pipeline_mode = #tpu.pipeline_mode<synchronous>, transform_indices = @transform_12, window_bounds = array<i64: 1, 128>}, {transform_indices = @transform_13, window_bounds = array<i64: 32, 128>}]} {
    %0 = tpu.iota {dimensions = array<i32: 1>} : vector<16x128xi32>
    %c0_i32 = arith.constant 0 : i32
    %1 = vector.broadcast %c0_i32 : i32 to vector<16x128xi32>
    %2 = arith.cmpi sge, %0, %1 : vector<16x128xi32>
    %c20_i32 = arith.constant 20 : i32
    %3 = vector.broadcast %c20_i32 : i32 to vector<16x128xi32>
    %4 = arith.cmpi slt, %0, %3 : vector<16x128xi32>
    %5 = arith.andi %2, %4 : vector<16x128xi1>
    %c20_i32_0 = arith.constant 20 : i32
    %6 = vector.broadcast %c20_i32_0 : i32 to vector<16x128xi32>
    %7 = arith.cmpi sge, %0, %6 : vector<16x128xi32>
    %c30_i32 = arith.constant 30 : i32
    %8 = vector.broadcast %c30_i32 : i32 to vector<16x128xi32>
    %9 = arith.cmpi slt, %0, %8 : vector<16x128xi32>
    %10 = arith.andi %7, %9 : vector<16x128xi1>
    %c30_i32_1 = arith.constant 30 : i32
    %11 = vector.broadcast %c30_i32_1 : i32 to vector<16x128xi32>
    %12 = arith.cmpi sge, %0, %11 : vector<16x128xi32>
    %c40_i32 = arith.constant 40 : i32
    %13 = vector.broadcast %c40_i32 : i32 to vector<16x128xi32>
    %14 = arith.cmpi slt, %0, %13 : vector<16x128xi32>
    %15 = arith.andi %12, %14 : vector<16x128xi1>
    %c40_i32_2 = arith.constant 40 : i32
    %16 = vector.broadcast %c40_i32_2 : i32 to vector<16x128xi32>
    %17 = arith.cmpi sge, %0, %16 : vector<16x128xi32>
    %c50_i32 = arith.constant 50 : i32
    %18 = vector.broadcast %c50_i32 : i32 to vector<16x128xi32>
    %19 = arith.cmpi slt, %0, %18 : vector<16x128xi32>
    %20 = arith.andi %17, %19 : vector<16x128xi1>
    %c50_i32_3 = arith.constant 50 : i32
    %21 = vector.broadcast %c50_i32_3 : i32 to vector<16x128xi32>
    %22 = arith.cmpi sge, %0, %21 : vector<16x128xi32>
    %c60_i32 = arith.constant 60 : i32
    %23 = vector.broadcast %c60_i32 : i32 to vector<16x128xi32>
    %24 = arith.cmpi slt, %0, %23 : vector<16x128xi32>
    %25 = arith.andi %22, %24 : vector<16x128xi1>
    %c0 = arith.constant 0 : index
    %c0_4 = arith.constant 0 : index
    %26 = vector.load %arg1[%c0, %c0_4] : memref<32x128xbf16, #tpu.memory_space<vmem>>, vector<16x128xbf16>
    %c0_5 = arith.constant 0 : index
    %c0_6 = arith.constant 0 : index
    %27 = vector.load %arg2[%c0_5, %c0_6] : memref<128x512xbf16, #tpu.memory_space<vmem>>, vector<128x512xbf16>
    %cst = arith.constant dense<0.000000e+00> : vector<16x512xf32>
    %28 = tpu.matmul %26, %27, %cst {dimension_numbers = #tpu.dot_dimension_numbers<[1], [0], [0], [1], [0, 0, 1, 1], [], []>} : vector<16x128xbf16>, vector<128x512xbf16>, vector<16x512xf32> -> vector<16x512xf32>
    %c0_7 = arith.constant 0 : index
    %c0_8 = arith.constant 0 : index
    %29 = vector.load %arg3[%c0_7, %c0_8] : memref<1x512xf32, #tpu.memory_space<vmem>>, vector<1x512xf32>
    %30 = vector.broadcast %29 : vector<1x512xf32> to vector<16x512xf32>
    %31 = arith.addf %28, %30 : vector<16x512xf32>
    %cst_9 = arith.constant 0.000000e+00 : f32
    %32 = vector.broadcast %cst_9 : f32 to vector<16x512xf32>
    %33 = arith.maximumf %31, %32 : vector<16x512xf32>
    %34 = arith.truncf %33 : vector<16x512xf32> to vector<16x512xbf16>
    %c0_10 = arith.constant 0 : index
    %c0_11 = arith.constant 0 : index
    %35 = vector.load %arg4[%c0_10, %c0_11] : memref<512x256xbf16, #tpu.memory_space<vmem>>, vector<512x256xbf16>
    %cst_12 = arith.constant dense<0.000000e+00> : vector<16x256xf32>
    %36 = tpu.matmul %34, %35, %cst_12 {dimension_numbers = #tpu.dot_dimension_numbers<[1], [0], [0], [1], [0, 0, 1, 1], [], []>} : vector<16x512xbf16>, vector<512x256xbf16>, vector<16x256xf32> -> vector<16x256xf32>
    %c0_13 = arith.constant 0 : index
    %c0_14 = arith.constant 0 : index
    %37 = vector.load %arg5[%c0_13, %c0_14] : memref<1x256xf32, #tpu.memory_space<vmem>>, vector<1x256xf32>
    %38 = vector.broadcast %37 : vector<1x256xf32> to vector<16x256xf32>
    %39 = arith.addf %36, %38 : vector<16x256xf32>
    %cst_15 = arith.constant 0.000000e+00 : f32
    %40 = vector.broadcast %cst_15 : f32 to vector<16x256xf32>
    %41 = arith.maximumf %39, %40 : vector<16x256xf32>
    %42 = arith.truncf %41 : vector<16x256xf32> to vector<16x256xbf16>
    %c0_16 = arith.constant 0 : index
    %c0_17 = arith.constant 0 : index
    %43 = vector.load %arg6[%c0_16, %c0_17] : memref<256x128xbf16, #tpu.memory_space<vmem>>, vector<256x128xbf16>
    %cst_18 = arith.constant dense<0.000000e+00> : vector<16x128xf32>
    %44 = tpu.matmul %42, %43, %cst_18 {dimension_numbers = #tpu.dot_dimension_numbers<[1], [0], [0], [1], [0, 0, 1, 1], [], []>} : vector<16x256xbf16>, vector<256x128xbf16>, vector<16x128xf32> -> vector<16x128xf32>
    %c0_19 = arith.constant 0 : index
    %c0_20 = arith.constant 0 : index
    %45 = vector.load %arg7[%c0_19, %c0_20] : memref<1x128xf32, #tpu.memory_space<vmem>>, vector<1x128xf32>
    %46 = vector.broadcast %45 : vector<1x128xf32> to vector<16x128xf32>
    %47 = arith.addf %44, %46 : vector<16x128xf32>
    %cst_21 = arith.constant 0.000000e+00 : f32
    %48 = vector.broadcast %cst_21 : f32 to vector<16x128xf32>
    %49 = arith.maximumf %47, %48 : vector<16x128xf32>
    %50 = arith.truncf %49 : vector<16x128xf32> to vector<16x128xbf16>
    %c0_22 = arith.constant 0 : index
    %c0_23 = arith.constant 0 : index
    %51 = vector.load %arg8[%c0_22, %c0_23] : memref<128x384xbf16, #tpu.memory_space<vmem>>, vector<128x384xbf16>
    %cst_24 = arith.constant dense<0.000000e+00> : vector<16x384xf32>
    %52 = tpu.matmul %50, %51, %cst_24 {dimension_numbers = #tpu.dot_dimension_numbers<[1], [0], [0], [1], [0, 0, 1, 1], [], []>} : vector<16x128xbf16>, vector<128x384xbf16>, vector<16x384xf32> -> vector<16x384xf32>
    %c0_25 = arith.constant 0 : index
    %c0_26 = arith.constant 0 : index
    %53 = vector.load %arg9[%c0_25, %c0_26] : memref<1x384xf32, #tpu.memory_space<vmem>>, vector<1x384xf32>
    %54 = vector.broadcast %53 : vector<1x384xf32> to vector<16x384xf32>
    %55 = arith.addf %52, %54 : vector<16x384xf32>
    %cst_27 = arith.constant 0.000000e+00 : f32
    %56 = vector.broadcast %cst_27 : f32 to vector<16x384xf32>
    %57 = arith.maximumf %55, %56 : vector<16x384xf32>
    %58 = arith.truncf %57 : vector<16x384xf32> to vector<16x384xbf16>
    %c0_28 = arith.constant 0 : index
    %c0_29 = arith.constant 0 : index
    %59 = vector.load %arg10[%c0_28, %c0_29] : memref<384x256xbf16, #tpu.memory_space<vmem>>, vector<384x256xbf16>
    %cst_30 = arith.constant dense<0.000000e+00> : vector<16x256xf32>
    %60 = tpu.matmul %58, %59, %cst_30 {dimension_numbers = #tpu.dot_dimension_numbers<[1], [0], [0], [1], [0, 0, 1, 1], [], []>} : vector<16x384xbf16>, vector<384x256xbf16>, vector<16x256xf32> -> vector<16x256xf32>
    %c0_31 = arith.constant 0 : index
    %c0_32 = arith.constant 0 : index
    %61 = vector.load %arg11[%c0_31, %c0_32] : memref<1x256xf32, #tpu.memory_space<vmem>>, vector<1x256xf32>
    %62 = vector.broadcast %61 : vector<1x256xf32> to vector<16x256xf32>
    %63 = arith.addf %60, %62 : vector<16x256xf32>
    %cst_33 = arith.constant 0.000000e+00 : f32
    %64 = vector.broadcast %cst_33 : f32 to vector<16x256xf32>
    %65 = arith.maximumf %63, %64 : vector<16x256xf32>
    %66 = arith.truncf %65 : vector<16x256xf32> to vector<16x256xbf16>
    %c0_34 = arith.constant 0 : index
    %c0_35 = arith.constant 0 : index
    %67 = vector.load %arg12[%c0_34, %c0_35] : memref<256x128xbf16, #tpu.memory_space<vmem>>, vector<256x128xbf16>
    %cst_36 = arith.constant dense<0.000000e+00> : vector<16x128xf32>
    %68 = tpu.matmul %66, %67, %cst_36 {dimension_numbers = #tpu.dot_dimension_numbers<[1], [0], [0], [1], [0, 0, 1, 1], [], []>} : vector<16x256xbf16>, vector<256x128xbf16>, vector<16x128xf32> -> vector<16x128xf32>
    %c0_37 = arith.constant 0 : index
    %c0_38 = arith.constant 0 : index
    %69 = vector.load %arg13[%c0_37, %c0_38] : memref<1x128xf32, #tpu.memory_space<vmem>>, vector<1x128xf32>
    %70 = vector.broadcast %69 : vector<1x128xf32> to vector<16x128xf32>
    %71 = arith.addf %68, %70 : vector<16x128xf32>
    %cst_39 = arith.constant 0.000000e+00 : f32
    %72 = vector.broadcast %cst_39 : f32 to vector<16x128xf32>
    %cst_40 = arith.constant -1.000000e+30 : f32
    %73 = vector.broadcast %cst_40 : f32 to vector<16x128xf32>
    %74 = arith.select %5, %71, %73 : vector<16x128xi1>, vector<16x128xf32>
    %cst_41 = arith.constant dense<0xFF800000> : vector<16xf32>
    %75 = vector.multi_reduction <maximumf>, %74, %cst_41 [1] : vector<16x128xf32> to vector<16xf32>
    %76 = vector.shape_cast %75 : vector<16xf32> to vector<16x1xf32>
    %77 = vector.shape_cast %76 : vector<16x1xf32> to vector<16x1xf32>
    %78 = vector.broadcast %77 : vector<16x1xf32> to vector<16x128xf32>
    %79 = arith.select %5, %78, %72 : vector<16x128xi1>, vector<16x128xf32>
    %cst_42 = arith.constant -1.000000e+30 : f32
    %80 = vector.broadcast %cst_42 : f32 to vector<16x128xf32>
    %81 = arith.select %10, %71, %80 : vector<16x128xi1>, vector<16x128xf32>
    %cst_43 = arith.constant dense<0xFF800000> : vector<16xf32>
    %82 = vector.multi_reduction <maximumf>, %81, %cst_43 [1] : vector<16x128xf32> to vector<16xf32>
    %83 = vector.shape_cast %82 : vector<16xf32> to vector<16x1xf32>
    %84 = vector.shape_cast %83 : vector<16x1xf32> to vector<16x1xf32>
    %85 = vector.broadcast %84 : vector<16x1xf32> to vector<16x128xf32>
    %86 = arith.select %10, %85, %79 : vector<16x128xi1>, vector<16x128xf32>
    %cst_44 = arith.constant -1.000000e+30 : f32
    %87 = vector.broadcast %cst_44 : f32 to vector<16x128xf32>
    %88 = arith.select %15, %71, %87 : vector<16x128xi1>, vector<16x128xf32>
    %cst_45 = arith.constant dense<0xFF800000> : vector<16xf32>
    %89 = vector.multi_reduction <maximumf>, %88, %cst_45 [1] : vector<16x128xf32> to vector<16xf32>
    %90 = vector.shape_cast %89 : vector<16xf32> to vector<16x1xf32>
    %91 = vector.shape_cast %90 : vector<16x1xf32> to vector<16x1xf32>
    %92 = vector.broadcast %91 : vector<16x1xf32> to vector<16x128xf32>
    %93 = arith.select %15, %92, %86 : vector<16x128xi1>, vector<16x128xf32>
    %cst_46 = arith.constant -1.000000e+30 : f32
    %94 = vector.broadcast %cst_46 : f32 to vector<16x128xf32>
    %95 = arith.select %20, %71, %94 : vector<16x128xi1>, vector<16x128xf32>
    %cst_47 = arith.constant dense<0xFF800000> : vector<16xf32>
    %96 = vector.multi_reduction <maximumf>, %95, %cst_47 [1] : vector<16x128xf32> to vector<16xf32>
    %97 = vector.shape_cast %96 : vector<16xf32> to vector<16x1xf32>
    %98 = vector.shape_cast %97 : vector<16x1xf32> to vector<16x1xf32>
    %99 = vector.broadcast %98 : vector<16x1xf32> to vector<16x128xf32>
    %100 = arith.select %20, %99, %93 : vector<16x128xi1>, vector<16x128xf32>
    %cst_48 = arith.constant -1.000000e+30 : f32
    %101 = vector.broadcast %cst_48 : f32 to vector<16x128xf32>
    %102 = arith.select %25, %71, %101 : vector<16x128xi1>, vector<16x128xf32>
    %cst_49 = arith.constant dense<0xFF800000> : vector<16xf32>
    %103 = vector.multi_reduction <maximumf>, %102, %cst_49 [1] : vector<16x128xf32> to vector<16xf32>
    %104 = vector.shape_cast %103 : vector<16xf32> to vector<16x1xf32>
    %105 = vector.shape_cast %104 : vector<16x1xf32> to vector<16x1xf32>
    %106 = vector.broadcast %105 : vector<16x1xf32> to vector<16x128xf32>
    %107 = arith.select %25, %106, %100 : vector<16x128xi1>, vector<16x128xf32>
    %108 = arith.subf %71, %107 : vector<16x128xf32>
    %109 = math.exp %108 : vector<16x128xf32>
    %cst_50 = arith.constant 1.000000e+00 : f32
    %110 = vector.broadcast %cst_50 : f32 to vector<16x128xf32>
    %cst_51 = arith.constant 0.000000e+00 : f32
    %111 = vector.broadcast %cst_51 : f32 to vector<16x128xf32>
    %112 = arith.select %5, %109, %111 : vector<16x128xi1>, vector<16x128xf32>
    %cst_52 = arith.constant dense<0.000000e+00> : vector<16xf32>
    %113 = vector.multi_reduction <add>, %112, %cst_52 [1] : vector<16x128xf32> to vector<16xf32>
    %114 = vector.shape_cast %113 : vector<16xf32> to vector<16x1xf32>
    %115 = vector.shape_cast %114 : vector<16x1xf32> to vector<16x1xf32>
    %116 = vector.broadcast %115 : vector<16x1xf32> to vector<16x128xf32>
    %117 = arith.select %5, %116, %110 : vector<16x128xi1>, vector<16x128xf32>
    %cst_53 = arith.constant 0.000000e+00 : f32
    %118 = vector.broadcast %cst_53 : f32 to vector<16x128xf32>
    %119 = arith.select %10, %109, %118 : vector<16x128xi1>, vector<16x128xf32>
    %cst_54 = arith.constant dense<0.000000e+00> : vector<16xf32>
    %120 = vector.multi_reduction <add>, %119, %cst_54 [1] : vector<16x128xf32> to vector<16xf32>
    %121 = vector.shape_cast %120 : vector<16xf32> to vector<16x1xf32>
    %122 = vector.shape_cast %121 : vector<16x1xf32> to vector<16x1xf32>
    %123 = vector.broadcast %122 : vector<16x1xf32> to vector<16x128xf32>
    %124 = arith.select %10, %123, %117 : vector<16x128xi1>, vector<16x128xf32>
    %cst_55 = arith.constant 0.000000e+00 : f32
    %125 = vector.broadcast %cst_55 : f32 to vector<16x128xf32>
    %126 = arith.select %15, %109, %125 : vector<16x128xi1>, vector<16x128xf32>
    %cst_56 = arith.constant dense<0.000000e+00> : vector<16xf32>
    %127 = vector.multi_reduction <add>, %126, %cst_56 [1] : vector<16x128xf32> to vector<16xf32>
    %128 = vector.shape_cast %127 : vector<16xf32> to vector<16x1xf32>
    %129 = vector.shape_cast %128 : vector<16x1xf32> to vector<16x1xf32>
    %130 = vector.broadcast %129 : vector<16x1xf32> to vector<16x128xf32>
    %131 = arith.select %15, %130, %124 : vector<16x128xi1>, vector<16x128xf32>
    %cst_57 = arith.constant 0.000000e+00 : f32
    %132 = vector.broadcast %cst_57 : f32 to vector<16x128xf32>
    %133 = arith.select %20, %109, %132 : vector<16x128xi1>, vector<16x128xf32>
    %cst_58 = arith.constant dense<0.000000e+00> : vector<16xf32>
    %134 = vector.multi_reduction <add>, %133, %cst_58 [1] : vector<16x128xf32> to vector<16xf32>
    %135 = vector.shape_cast %134 : vector<16xf32> to vector<16x1xf32>
    %136 = vector.shape_cast %135 : vector<16x1xf32> to vector<16x1xf32>
    %137 = vector.broadcast %136 : vector<16x1xf32> to vector<16x128xf32>
    %138 = arith.select %20, %137, %131 : vector<16x128xi1>, vector<16x128xf32>
    %cst_59 = arith.constant 0.000000e+00 : f32
    %139 = vector.broadcast %cst_59 : f32 to vector<16x128xf32>
    %140 = arith.select %25, %109, %139 : vector<16x128xi1>, vector<16x128xf32>
    %cst_60 = arith.constant dense<0.000000e+00> : vector<16xf32>
    %141 = vector.multi_reduction <add>, %140, %cst_60 [1] : vector<16x128xf32> to vector<16xf32>
    %142 = vector.shape_cast %141 : vector<16xf32> to vector<16x1xf32>
    %143 = vector.shape_cast %142 : vector<16x1xf32> to vector<16x1xf32>
    %144 = vector.broadcast %143 : vector<16x1xf32> to vector<16x128xf32>
    %145 = arith.select %25, %144, %138 : vector<16x128xi1>, vector<16x128xf32>
    %146 = tpu.reciprocal %145 {approx = true} : vector<16x128xf32> -> vector<16x128xf32>
    %147 = arith.mulf %145, %146 : vector<16x128xf32>
    %cst_61 = arith.constant 2.000000e+00 : f32
    %148 = vector.broadcast %cst_61 : f32 to vector<16x128xf32>
    %149 = arith.subf %148, %147 : vector<16x128xf32>
    %150 = arith.mulf %146, %149 : vector<16x128xf32>
    %151 = arith.mulf %109, %150 : vector<16x128xf32>
    %c0_62 = arith.constant 0 : index
    %c0_63 = arith.constant 0 : index
    %152 = vector.load %arg14[%c0_62, %c0_63] : memref<32x128xf32, #tpu.memory_space<vmem>>, vector<16x128xf32>
    tpu.vector_store %arg14[%c0_62, %c0_63], %151 {strides = array<i32>} : memref<32x128xf32, #tpu.memory_space<vmem>>, vector<16x128xf32>,
    %c16 = arith.constant 16 : index
    %c0_64 = arith.constant 0 : index
    %153 = vector.load %arg1[%c16, %c0_64] : memref<32x128xbf16, #tpu.memory_space<vmem>>, vector<16x128xbf16>
    %c0_65 = arith.constant 0 : index
    %c0_66 = arith.constant 0 : index
    %154 = vector.load %arg2[%c0_65, %c0_66] : memref<128x512xbf16, #tpu.memory_space<vmem>>, vector<128x512xbf16>
    %cst_67 = arith.constant dense<0.000000e+00> : vector<16x512xf32>
    %155 = tpu.matmul %153, %154, %cst_67 {dimension_numbers = #tpu.dot_dimension_numbers<[1], [0], [0], [1], [0, 0, 1, 1], [], []>} : vector<16x128xbf16>, vector<128x512xbf16>, vector<16x512xf32> -> vector<16x512xf32>
    %c0_68 = arith.constant 0 : index
    %c0_69 = arith.constant 0 : index
    %156 = vector.load %arg3[%c0_68, %c0_69] : memref<1x512xf32, #tpu.memory_space<vmem>>, vector<1x512xf32>
    %157 = vector.broadcast %156 : vector<1x512xf32> to vector<16x512xf32>
    %158 = arith.addf %155, %157 : vector<16x512xf32>
    %cst_70 = arith.constant 0.000000e+00 : f32
    %159 = vector.broadcast %cst_70 : f32 to vector<16x512xf32>
    %160 = arith.maximumf %158, %159 : vector<16x512xf32>
    %161 = arith.truncf %160 : vector<16x512xf32> to vector<16x512xbf16>
    %c0_71 = arith.constant 0 : index
    %c0_72 = arith.constant 0 : index
    %162 = vector.load %arg4[%c0_71, %c0_72] : memref<512x256xbf16, #tpu.memory_space<vmem>>, vector<512x256xbf16>
    %cst_73 = arith.constant dense<0.000000e+00> : vector<16x256xf32>
    %163 = tpu.matmul %161, %162, %cst_73 {dimension_numbers = #tpu.dot_dimension_numbers<[1], [0], [0], [1], [0, 0, 1, 1], [], []>} : vector<16x512xbf16>, vector<512x256xbf16>, vector<16x256xf32> -> vector<16x256xf32>
    %c0_74 = arith.constant 0 : index
    %c0_75 = arith.constant 0 : index
    %164 = vector.load %arg5[%c0_74, %c0_75] : memref<1x256xf32, #tpu.memory_space<vmem>>, vector<1x256xf32>
    %165 = vector.broadcast %164 : vector<1x256xf32> to vector<16x256xf32>
    %166 = arith.addf %163, %165 : vector<16x256xf32>
    %cst_76 = arith.constant 0.000000e+00 : f32
    %167 = vector.broadcast %cst_76 : f32 to vector<16x256xf32>
    %168 = arith.maximumf %166, %167 : vector<16x256xf32>
    %169 = arith.truncf %168 : vector<16x256xf32> to vector<16x256xbf16>
    %c0_77 = arith.constant 0 : index
    %c0_78 = arith.constant 0 : index
    %170 = vector.load %arg6[%c0_77, %c0_78] : memref<256x128xbf16, #tpu.memory_space<vmem>>, vector<256x128xbf16>
    %cst_79 = arith.constant dense<0.000000e+00> : vector<16x128xf32>
    %171 = tpu.matmul %169, %170, %cst_79 {dimension_numbers = #tpu.dot_dimension_numbers<[1], [0], [0], [1], [0, 0, 1, 1], [], []>} : vector<16x256xbf16>, vector<256x128xbf16>, vector<16x128xf32> -> vector<16x128xf32>
    %c0_80 = arith.constant 0 : index
    %c0_81 = arith.constant 0 : index
    %172 = vector.load %arg7[%c0_80, %c0_81] : memref<1x128xf32, #tpu.memory_space<vmem>>, vector<1x128xf32>
    %173 = vector.broadcast %172 : vector<1x128xf32> to vector<16x128xf32>
    %174 = arith.addf %171, %173 : vector<16x128xf32>
    %cst_82 = arith.constant 0.000000e+00 : f32
    %175 = vector.broadcast %cst_82 : f32 to vector<16x128xf32>
    %176 = arith.maximumf %174, %175 : vector<16x128xf32>
    %177 = arith.truncf %176 : vector<16x128xf32> to vector<16x128xbf16>
    %c0_83 = arith.constant 0 : index
    %c0_84 = arith.constant 0 : index
    %178 = vector.load %arg8[%c0_83, %c0_84] : memref<128x384xbf16, #tpu.memory_space<vmem>>, vector<128x384xbf16>
    %cst_85 = arith.constant dense<0.000000e+00> : vector<16x384xf32>
    %179 = tpu.matmul %177, %178, %cst_85 {dimension_numbers = #tpu.dot_dimension_numbers<[1], [0], [0], [1], [0, 0, 1, 1], [], []>} : vector<16x128xbf16>, vector<128x384xbf16>, vector<16x384xf32> -> vector<16x384xf32>
    %c0_86 = arith.constant 0 : index
    %c0_87 = arith.constant 0 : index
    %180 = vector.load %arg9[%c0_86, %c0_87] : memref<1x384xf32, #tpu.memory_space<vmem>>, vector<1x384xf32>
    %181 = vector.broadcast %180 : vector<1x384xf32> to vector<16x384xf32>
    %182 = arith.addf %179, %181 : vector<16x384xf32>
    %cst_88 = arith.constant 0.000000e+00 : f32
    %183 = vector.broadcast %cst_88 : f32 to vector<16x384xf32>
    %184 = arith.maximumf %182, %183 : vector<16x384xf32>
    %185 = arith.truncf %184 : vector<16x384xf32> to vector<16x384xbf16>
    %c0_89 = arith.constant 0 : index
    %c0_90 = arith.constant 0 : index
    %186 = vector.load %arg10[%c0_89, %c0_90] : memref<384x256xbf16, #tpu.memory_space<vmem>>, vector<384x256xbf16>
    %cst_91 = arith.constant dense<0.000000e+00> : vector<16x256xf32>
    %187 = tpu.matmul %185, %186, %cst_91 {dimension_numbers = #tpu.dot_dimension_numbers<[1], [0], [0], [1], [0, 0, 1, 1], [], []>} : vector<16x384xbf16>, vector<384x256xbf16>, vector<16x256xf32> -> vector<16x256xf32>
    %c0_92 = arith.constant 0 : index
    %c0_93 = arith.constant 0 : index
    %188 = vector.load %arg11[%c0_92, %c0_93] : memref<1x256xf32, #tpu.memory_space<vmem>>, vector<1x256xf32>
    %189 = vector.broadcast %188 : vector<1x256xf32> to vector<16x256xf32>
    %190 = arith.addf %187, %189 : vector<16x256xf32>
    %cst_94 = arith.constant 0.000000e+00 : f32
    %191 = vector.broadcast %cst_94 : f32 to vector<16x256xf32>
    %192 = arith.maximumf %190, %191 : vector<16x256xf32>
    %193 = arith.truncf %192 : vector<16x256xf32> to vector<16x256xbf16>
    %c0_95 = arith.constant 0 : index
    %c0_96 = arith.constant 0 : index
    %194 = vector.load %arg12[%c0_95, %c0_96] : memref<256x128xbf16, #tpu.memory_space<vmem>>, vector<256x128xbf16>
    %cst_97 = arith.constant dense<0.000000e+00> : vector<16x128xf32>
    %195 = tpu.matmul %193, %194, %cst_97 {dimension_numbers = #tpu.dot_dimension_numbers<[1], [0], [0], [1], [0, 0, 1, 1], [], []>} : vector<16x256xbf16>, vector<256x128xbf16>, vector<16x128xf32> -> vector<16x128xf32>
    %c0_98 = arith.constant 0 : index
    %c0_99 = arith.constant 0 : index
    %196 = vector.load %arg13[%c0_98, %c0_99] : memref<1x128xf32, #tpu.memory_space<vmem>>, vector<1x128xf32>
    %197 = vector.broadcast %196 : vector<1x128xf32> to vector<16x128xf32>
    %198 = arith.addf %195, %197 : vector<16x128xf32>
    %cst_100 = arith.constant 0.000000e+00 : f32
    %199 = vector.broadcast %cst_100 : f32 to vector<16x128xf32>
    %cst_101 = arith.constant -1.000000e+30 : f32
    %200 = vector.broadcast %cst_101 : f32 to vector<16x128xf32>
    %201 = arith.select %5, %198, %200 : vector<16x128xi1>, vector<16x128xf32>
    %cst_102 = arith.constant dense<0xFF800000> : vector<16xf32>
    %202 = vector.multi_reduction <maximumf>, %201, %cst_102 [1] : vector<16x128xf32> to vector<16xf32>
    %203 = vector.shape_cast %202 : vector<16xf32> to vector<16x1xf32>
    %204 = vector.shape_cast %203 : vector<16x1xf32> to vector<16x1xf32>
    %205 = vector.broadcast %204 : vector<16x1xf32> to vector<16x128xf32>
    %206 = arith.select %5, %205, %199 : vector<16x128xi1>, vector<16x128xf32>
    %cst_103 = arith.constant -1.000000e+30 : f32
    %207 = vector.broadcast %cst_103 : f32 to vector<16x128xf32>
    %208 = arith.select %10, %198, %207 : vector<16x128xi1>, vector<16x128xf32>
    %cst_104 = arith.constant dense<0xFF800000> : vector<16xf32>
    %209 = vector.multi_reduction <maximumf>, %208, %cst_104 [1] : vector<16x128xf32> to vector<16xf32>
    %210 = vector.shape_cast %209 : vector<16xf32> to vector<16x1xf32>
    %211 = vector.shape_cast %210 : vector<16x1xf32> to vector<16x1xf32>
    %212 = vector.broadcast %211 : vector<16x1xf32> to vector<16x128xf32>
    %213 = arith.select %10, %212, %206 : vector<16x128xi1>, vector<16x128xf32>
    %cst_105 = arith.constant -1.000000e+30 : f32
    %214 = vector.broadcast %cst_105 : f32 to vector<16x128xf32>
    %215 = arith.select %15, %198, %214 : vector<16x128xi1>, vector<16x128xf32>
    %cst_106 = arith.constant dense<0xFF800000> : vector<16xf32>
    %216 = vector.multi_reduction <maximumf>, %215, %cst_106 [1] : vector<16x128xf32> to vector<16xf32>
    %217 = vector.shape_cast %216 : vector<16xf32> to vector<16x1xf32>
    %218 = vector.shape_cast %217 : vector<16x1xf32> to vector<16x1xf32>
    %219 = vector.broadcast %218 : vector<16x1xf32> to vector<16x128xf32>
    %220 = arith.select %15, %219, %213 : vector<16x128xi1>, vector<16x128xf32>
    %cst_107 = arith.constant -1.000000e+30 : f32
    %221 = vector.broadcast %cst_107 : f32 to vector<16x128xf32>
    %222 = arith.select %20, %198, %221 : vector<16x128xi1>, vector<16x128xf32>
    %cst_108 = arith.constant dense<0xFF800000> : vector<16xf32>
    %223 = vector.multi_reduction <maximumf>, %222, %cst_108 [1] : vector<16x128xf32> to vector<16xf32>
    %224 = vector.shape_cast %223 : vector<16xf32> to vector<16x1xf32>
    %225 = vector.shape_cast %224 : vector<16x1xf32> to vector<16x1xf32>
    %226 = vector.broadcast %225 : vector<16x1xf32> to vector<16x128xf32>
    %227 = arith.select %20, %226, %220 : vector<16x128xi1>, vector<16x128xf32>
    %cst_109 = arith.constant -1.000000e+30 : f32
    %228 = vector.broadcast %cst_109 : f32 to vector<16x128xf32>
    %229 = arith.select %25, %198, %228 : vector<16x128xi1>, vector<16x128xf32>
    %cst_110 = arith.constant dense<0xFF800000> : vector<16xf32>
    %230 = vector.multi_reduction <maximumf>, %229, %cst_110 [1] : vector<16x128xf32> to vector<16xf32>
    %231 = vector.shape_cast %230 : vector<16xf32> to vector<16x1xf32>
    %232 = vector.shape_cast %231 : vector<16x1xf32> to vector<16x1xf32>
    %233 = vector.broadcast %232 : vector<16x1xf32> to vector<16x128xf32>
    %234 = arith.select %25, %233, %227 : vector<16x128xi1>, vector<16x128xf32>
    %235 = arith.subf %198, %234 : vector<16x128xf32>
    %236 = math.exp %235 : vector<16x128xf32>
    %cst_111 = arith.constant 1.000000e+00 : f32
    %237 = vector.broadcast %cst_111 : f32 to vector<16x128xf32>
    %cst_112 = arith.constant 0.000000e+00 : f32
    %238 = vector.broadcast %cst_112 : f32 to vector<16x128xf32>
    %239 = arith.select %5, %236, %238 : vector<16x128xi1>, vector<16x128xf32>
    %cst_113 = arith.constant dense<0.000000e+00> : vector<16xf32>
    %240 = vector.multi_reduction <add>, %239, %cst_113 [1] : vector<16x128xf32> to vector<16xf32>
    %241 = vector.shape_cast %240 : vector<16xf32> to vector<16x1xf32>
    %242 = vector.shape_cast %241 : vector<16x1xf32> to vector<16x1xf32>
    %243 = vector.broadcast %242 : vector<16x1xf32> to vector<16x128xf32>
    %244 = arith.select %5, %243, %237 : vector<16x128xi1>, vector<16x128xf32>
    %cst_114 = arith.constant 0.000000e+00 : f32
    %245 = vector.broadcast %cst_114 : f32 to vector<16x128xf32>
    %246 = arith.select %10, %236, %245 : vector<16x128xi1>, vector<16x128xf32>
    %cst_115 = arith.constant dense<0.000000e+00> : vector<16xf32>
    %247 = vector.multi_reduction <add>, %246, %cst_115 [1] : vector<16x128xf32> to vector<16xf32>
    %248 = vector.shape_cast %247 : vector<16xf32> to vector<16x1xf32>
    %249 = vector.shape_cast %248 : vector<16x1xf32> to vector<16x1xf32>
    %250 = vector.broadcast %249 : vector<16x1xf32> to vector<16x128xf32>
    %251 = arith.select %10, %250, %244 : vector<16x128xi1>, vector<16x128xf32>
    %cst_116 = arith.constant 0.000000e+00 : f32
    %252 = vector.broadcast %cst_116 : f32 to vector<16x128xf32>
    %253 = arith.select %15, %236, %252 : vector<16x128xi1>, vector<16x128xf32>
    %cst_117 = arith.constant dense<0.000000e+00> : vector<16xf32>
    %254 = vector.multi_reduction <add>, %253, %cst_117 [1] : vector<16x128xf32> to vector<16xf32>
    %255 = vector.shape_cast %254 : vector<16xf32> to vector<16x1xf32>
    %256 = vector.shape_cast %255 : vector<16x1xf32> to vector<16x1xf32>
    %257 = vector.broadcast %256 : vector<16x1xf32> to vector<16x128xf32>
    %258 = arith.select %15, %257, %251 : vector<16x128xi1>, vector<16x128xf32>
    %cst_118 = arith.constant 0.000000e+00 : f32
    %259 = vector.broadcast %cst_118 : f32 to vector<16x128xf32>
    %260 = arith.select %20, %236, %259 : vector<16x128xi1>, vector<16x128xf32>
    %cst_119 = arith.constant dense<0.000000e+00> : vector<16xf32>
    %261 = vector.multi_reduction <add>, %260, %cst_119 [1] : vector<16x128xf32> to vector<16xf32>
    %262 = vector.shape_cast %261 : vector<16xf32> to vector<16x1xf32>
    %263 = vector.shape_cast %262 : vector<16x1xf32> to vector<16x1xf32>
    %264 = vector.broadcast %263 : vector<16x1xf32> to vector<16x128xf32>
    %265 = arith.select %20, %264, %258 : vector<16x128xi1>, vector<16x128xf32>
    %cst_120 = arith.constant 0.000000e+00 : f32
    %266 = vector.broadcast %cst_120 : f32 to vector<16x128xf32>
    %267 = arith.select %25, %236, %266 : vector<16x128xi1>, vector<16x128xf32>
    %cst_121 = arith.constant dense<0.000000e+00> : vector<16xf32>
    %268 = vector.multi_reduction <add>, %267, %cst_121 [1] : vector<16x128xf32> to vector<16xf32>
    %269 = vector.shape_cast %268 : vector<16xf32> to vector<16x1xf32>
    %270 = vector.shape_cast %269 : vector<16x1xf32> to vector<16x1xf32>
    %271 = vector.broadcast %270 : vector<16x1xf32> to vector<16x128xf32>
    %272 = arith.select %25, %271, %265 : vector<16x128xi1>, vector<16x128xf32>
    %273 = tpu.reciprocal %272 {approx = true} : vector<16x128xf32> -> vector<16x128xf32>
    %274 = arith.mulf %272, %273 : vector<16x128xf32>
    %cst_122 = arith.constant 2.000000e+00 : f32
    %275 = vector.broadcast %cst_122 : f32 to vector<16x128xf32>
    %276 = arith.subf %275, %274 : vector<16x128xf32>
    %277 = arith.mulf %273, %276 : vector<16x128xf32>
    %278 = arith.mulf %236, %277 : vector<16x128xf32>
    %c16_123 = arith.constant 16 : index
    %c0_124 = arith.constant 0 : index
    %279 = vector.load %arg14[%c16_123, %c0_124] : memref<32x128xf32, #tpu.memory_space<vmem>>, vector<16x128xf32>
    tpu.vector_store %arg14[%c16_123, %c0_124], %278 {strides = array<i32>} : memref<32x128xf32, #tpu.memory_space<vmem>>, vector<16x128xf32>,
    return
  }
  func.func @transform_0(%arg0: i32) -> (i32, i32) {
    %c0_i32 = arith.constant 0 : i32
    %c0_i32_0 = arith.constant 0 : i32
    return %arg0, %c0_i32 : i32, i32
  }
  func.func @transform_1(%arg0: i32) -> (i32, i32) {
    %c0_i32 = arith.constant 0 : i32
    %c0_i32_0 = arith.constant 0 : i32
    %c0_i32_1 = arith.constant 0 : i32
    return %c0_i32, %c0_i32_0 : i32, i32
  }
  func.func @transform_2(%arg0: i32) -> (i32, i32) {
    %c0_i32 = arith.constant 0 : i32
    %c0_i32_0 = arith.constant 0 : i32
    %c0_i32_1 = arith.constant 0 : i32
    return %c0_i32, %c0_i32_0 : i32, i32
  }
  func.func @transform_3(%arg0: i32) -> (i32, i32) {
    %c0_i32 = arith.constant 0 : i32
    %c0_i32_0 = arith.constant 0 : i32
    %c0_i32_1 = arith.constant 0 : i32
    return %c0_i32, %c0_i32_0 : i32, i32
  }
  func.func @transform_4(%arg0: i32) -> (i32, i32) {
    %c0_i32 = arith.constant 0 : i32
    %c0_i32_0 = arith.constant 0 : i32
    %c0_i32_1 = arith.constant 0 : i32
    return %c0_i32, %c0_i32_0 : i32, i32
  }
  func.func @transform_5(%arg0: i32) -> (i32, i32) {
    %c0_i32 = arith.constant 0 : i32
    %c0_i32_0 = arith.constant 0 : i32
    %c0_i32_1 = arith.constant 0 : i32
    return %c0_i32, %c0_i32_0 : i32, i32
  }
  func.func @transform_6(%arg0: i32) -> (i32, i32) {
    %c0_i32 = arith.constant 0 : i32
    %c0_i32_0 = arith.constant 0 : i32
    %c0_i32_1 = arith.constant 0 : i32
    return %c0_i32, %c0_i32_0 : i32, i32
  }
  func.func @transform_7(%arg0: i32) -> (i32, i32) {
    %c0_i32 = arith.constant 0 : i32
    %c0_i32_0 = arith.constant 0 : i32
    %c0_i32_1 = arith.constant 0 : i32
    return %c0_i32, %c0_i32_0 : i32, i32
  }
  func.func @transform_8(%arg0: i32) -> (i32, i32) {
    %c0_i32 = arith.constant 0 : i32
    %c0_i32_0 = arith.constant 0 : i32
    %c0_i32_1 = arith.constant 0 : i32
    return %c0_i32, %c0_i32_0 : i32, i32
  }
  func.func @transform_9(%arg0: i32) -> (i32, i32) {
    %c0_i32 = arith.constant 0 : i32
    %c0_i32_0 = arith.constant 0 : i32
    %c0_i32_1 = arith.constant 0 : i32
    return %c0_i32, %c0_i32_0 : i32, i32
  }
  func.func @transform_10(%arg0: i32) -> (i32, i32) {
    %c0_i32 = arith.constant 0 : i32
    %c0_i32_0 = arith.constant 0 : i32
    %c0_i32_1 = arith.constant 0 : i32
    return %c0_i32, %c0_i32_0 : i32, i32
  }
  func.func @transform_11(%arg0: i32) -> (i32, i32) {
    %c0_i32 = arith.constant 0 : i32
    %c0_i32_0 = arith.constant 0 : i32
    %c0_i32_1 = arith.constant 0 : i32
    return %c0_i32, %c0_i32_0 : i32, i32
  }
  func.func @transform_12(%arg0: i32) -> (i32, i32) {
    %c0_i32 = arith.constant 0 : i32
    %c0_i32_0 = arith.constant 0 : i32
    %c0_i32_1 = arith.constant 0 : i32
    return %c0_i32, %c0_i32_0 : i32, i32
  }
  func.func @transform_13(%arg0: i32) -> (i32, i32) {
    %c0_i32 = arith.constant 0 : i32
    %c0_i32_0 = arith.constant 0 : i32
    return %arg0, %c0_i32 : i32, i32
  }
}

</mosaic_0001>

<llo_original>
// kernel: _forward_impl.1
$region0: #{_forward_impl.1}
  #allocation0 [shape = 'u32[]', space=smem, size = 0x4, offset = 0x4, fixed_abs, tag = 'smem constant byte address 0x4 - core index']
  #allocation1 [shape = 'u32[72,128]{1,0:T(1,128)}', space=vmem, size = 0x9000, scoped, tag = 'internal scratch']
  %s0 = inlined_call_operand.vmem [shape: bf16[64,128], index: 0, kind: input, shape index: {}]
  %s1 = inlined_call_operand.hbm [shape: bf16[128,512], index: 1, kind: input, shape index: {}]
  %s2 = inlined_call_operand.vmem [shape: f32[1,512], index: 2, kind: input, shape index: {}]
  %s3 = inlined_call_operand.hbm [shape: bf16[512,256], index: 3, kind: input, shape index: {}]
  %s4 = inlined_call_operand.vmem [shape: f32[1,256], index: 4, kind: input, shape index: {}]
  %s5 = inlined_call_operand.vmem [shape: bf16[256,128], index: 5, kind: input, shape index: {}]
  %s6 = inlined_call_operand.vmem [shape: f32[1,128], index: 6, kind: input, shape index: {}]
  %s7 = inlined_call_operand.hbm [shape: bf16[128,384], index: 7, kind: input, shape index: {}]
  %s8 = inlined_call_operand.vmem [shape: f32[1,384], index: 8, kind: input, shape index: {}]
  %s9 = inlined_call_operand.hbm [shape: bf16[384,256], index: 9, kind: input, shape index: {}]
  %s10 = inlined_call_operand.vmem [shape: f32[1,256], index: 10, kind: input, shape index: {}]
  %s11 = inlined_call_operand.hbm [shape: bf16[256,128], index: 11, kind: input, shape index: {}]
  %s12 = inlined_call_operand.vmem [shape: f32[1,128], index: 12, kind: input, shape index: {}]
  %s13 = inlined_call_operand.vmem [shape: f32[64,128], index: 13, kind: output, shape index: {}]
  %s14 = sld [smem:[#allocation0]]
  $region105: #{_forward_impl.1} parent=0
    _
  %s16 = ssub.s32 1, %s14
  %s17 = scalar_select 0, %s16, %s14
  $region1: #{_forward_impl.1} parent=0
    #allocation2 [shape = 'u8[131072]{0}', space=vmem, size = 0x20000, scoped, tag = 'input window, operand 1, single buffered']
    #allocation3 [shape = 's32[2]{0}', space=sflag, size = 0x8, scoped, tag = 'scoped memory for _forward_impl.1']
    #allocation4 [shape = 'u8[262144]{0}', space=vmem, size = 0x40000, scoped, tag = 'input window, operand 3, single buffered']
    #allocation5 [shape = 's32[1]{0}', space=sflag, size = 0x4, scoped, tag = 'scoped memory for _forward_impl.1']
    #allocation6 [shape = 'u8[98304]{0}', space=vmem, size = 0x18000, scoped, tag = 'input window, operand 7, single buffered']
    #allocation7 [shape = 'u8[196608]{0}', space=vmem, size = 0x30000, scoped, tag = 'input window, operand 9, single buffered']
    #allocation8 [shape = 's32[1]{0}', space=sflag, size = 0x4, scoped, tag = 'scoped memory for _forward_impl.1']
    #allocation9 [shape = 'u8[65536]{0}', space=vmem, size = 0x10000, scoped, tag = 'input window, operand 11, single buffered']
    %18 = vsyncpa [#allocation3], 0
    %19 = vsyncpa [#allocation5], 0
    %20 = vsyncpa [#allocation8], 0
    loop: start=0, step=1, limit=4
    $region2: #{_forward_impl.1} parent=1 // loop_pre_header
      _
    $region3: #{_forward_impl.1} parent=1 // loop_header
      %s22 = sphi 0, %s26
      %p23 = scmp.ge.s32.totalorder %s22, 4
      %s32 = sphi 0, %s34
      %s35 = sphi 0, %s32
      %s36 = sphi 0, %s35
      %s52 = sphi 0, %s36
      %s56 = sphi 0, %s56
      %s58 = sphi 0, %s56
      %s59 = sphi 0, %s58
      %s73 = sphi 0, %s59
      %s77 = sphi 0, %s77
      %s79 = sphi 0, %s77
      %s80 = sphi 0, %s79
      %s94 = sphi 0, %s80
      %s98 = sphi 0, %s98
      %s100 = sphi 0, %s98
      %s101 = sphi 0, %s100
      %s115 = sphi 0, %s101
      %s119 = sphi 0, %s119
      %s121 = sphi 0, %s119
      %s122 = sphi 0, %s121
      %s136 = sphi 0, %s122
      %s140 = sphi 0, %s140
      %s142 = sphi 0, %s140
      %s143 = sphi 0, %s142
      %s157 = sphi 0, %s143
      %s161 = sphi 0, %s161
      %s163 = sphi 0, %s161
      %s164 = sphi 0, %s163
      %s178 = sphi 0, %s164
      %s182 = sphi 0, %s182
      %s184 = sphi 0, %s182
      %s185 = sphi 0, %s184
      %s199 = sphi 0, %s185
      %s203 = sphi 0, %s203
      %s205 = sphi 0, %s203
      %s206 = sphi 0, %s205
      %s220 = sphi 0, %s206
      %s224 = sphi 0, %s224
      %s226 = sphi 0, %s224
      %s227 = sphi 0, %s226
      %s241 = sphi 0, %s227
      %s245 = sphi 0, %s245
      %s247 = sphi 0, %s245
      %s248 = sphi 0, %s247
      %s262 = sphi 0, %s248
      %s266 = sphi 0, %s266
      %s268 = sphi 0, %s266
      %s269 = sphi 0, %s268
      %s283 = sphi 0, %s269
      %s287 = sphi 0, %s287
      %s289 = sphi 0, %s287
      %s290 = sphi 0, %s289
      %s304 = sphi 0, %s290
      %s310 = sphi 0, %s312
      %s313 = sphi 0, %s310
      %s314 = sphi 0, %s313
      %s330 = sphi 0, %s314
    $region4: #{_forward_impl.1} parent=1 // loop_header_branch
      %25 = sbr.rel (%p23) target = $region8
    $region5: #{_forward_impl.1} parent=1 // loop_body
      %s27 = ssub.s32 %s22, 1
      %s28 = ssub.s32 %s22, 2
      %s29 = sadd.s32 %s22, 1
      %s30 = ssub.s32 %s22, %s29
      %p31 = scmp.eq.s32.totalorder %s30, 0
      %s33 = sadd.s32 %s32, 1
      %s34 = scalar_select %p31, %s32, %s33
      %p37 = pneg %p31
      %p38 = scmp.eq.s32.totalorder %s22, 1
      %p39 = por %p37, %p38
      %p40 = scmp.ne.s32.totalorder %s32, %s35
      %p41 = scmp.eq.s32.totalorder %s22, 0
      %p42 = por %p40, %p41
      %p43 = scmp.ne.s32.totalorder %s32, %s35
      %p44 = scmp.eq.s32.totalorder %s27, 1
      %p45 = por %p43, %p44
      %p46 = scmp.ne.s32.totalorder %s35, %s36
      %p47 = scmp.eq.s32.totalorder %s27, 0
      %p48 = por %p46, %p47
      %p49 = scmp.ne.s32.totalorder %s35, %s36
      %p50 = scmp.eq.s32.totalorder %s28, 1
      %p51 = por %p49, %p50
      %p53 = scmp.ne.s32.totalorder %s36, %s52
      %p54 = scmp.eq.s32.totalorder %s28, 0
      %p55 = por %p53, %p54
      %s57 = sadd.s32 %s56, 1
      %p60 = scmp.eq.s32.totalorder %s22, 1
      %p61 = scmp.ne.s32.totalorder %s56, %s58
      %p62 = scmp.eq.s32.totalorder %s22, 0
      %p63 = por %p61, %p62
      %p64 = scmp.ne.s32.totalorder %s56, %s58
      %p65 = scmp.eq.s32.totalorder %s27, 1
      %p66 = por %p64, %p65
      %p67 = scmp.ne.s32.totalorder %s58, %s59
      %p68 = scmp.eq.s32.totalorder %s27, 0
      %p69 = por %p67, %p68
      %p70 = scmp.ne.s32.totalorder %s58, %s59
      %p71 = scmp.eq.s32.totalorder %s28, 1
      %p72 = por %p70, %p71
      %p74 = scmp.ne.s32.totalorder %s59, %s73
      %p75 = scmp.eq.s32.totalorder %s28, 0
      %p76 = por %p74, %p75
      %s78 = sadd.s32 %s77, 1
      %p81 = scmp.eq.s32.totalorder %s22, 1
      %p82 = scmp.ne.s32.totalorder %s77, %s79
      %p83 = scmp.eq.s32.totalorder %s22, 0
      %p84 = por %p82, %p83
      %p85 = scmp.ne.s32.totalorder %s77, %s79
      %p86 = scmp.eq.s32.totalorder %s27, 1
      %p87 = por %p85, %p86
      %p88 = scmp.ne.s32.totalorder %s79, %s80
      %p89 = scmp.eq.s32.totalorder %s27, 0
      %p90 = por %p88, %p89
      %p91 = scmp.ne.s32.totalorder %s79, %s80
      %p92 = scmp.eq.s32.totalorder %s28, 1
      %p93 = por %p91, %p92
      %p95 = scmp.ne.s32.totalorder %s80, %s94
      %p96 = scmp.eq.s32.totalorder %s28, 0
      %p97 = por %p95, %p96
      %s99 = sadd.s32 %s98, 1
      %p102 = scmp.eq.s32.totalorder %s22, 1
      %p103 = scmp.ne.s32.totalorder %s98, %s100
      %p104 = scmp.eq.s32.totalorder %s22, 0
      %p105 = por %p103, %p104
      %p106 = scmp.ne.s32.totalorder %s98, %s100
      %p107 = scmp.eq.s32.totalorder %s27, 1
      %p108 = por %p106, %p107
      %p109 = scmp.ne.s32.totalorder %s100, %s101
      %p110 = scmp.eq.s32.totalorder %s27, 0
      %p111 = por %p109, %p110
      %p112 = scmp.ne.s32.totalorder %s100, %s101
      %p113 = scmp.eq.s32.totalorder %s28, 1
      %p114 = por %p112, %p113
      %p116 = scmp.ne.s32.totalorder %s101, %s115
      %p117 = scmp.eq.s32.totalorder %s28, 0
      %p118 = por %p116, %p117
      %s120 = sadd.s32 %s119, 1
      %p123 = scmp.eq.s32.totalorder %s22, 1
      %p124 = scmp.ne.s32.totalorder %s119, %s121
      %p125 = scmp.eq.s32.totalorder %s22, 0
      %p126 = por %p124, %p125
      %p127 = scmp.ne.s32.totalorder %s119, %s121
      %p128 = scmp.eq.s32.totalorder %s27, 1
      %p129 = por %p127, %p128
      %p130 = scmp.ne.s32.totalorder %s121, %s122
      %p131 = scmp.eq.s32.totalorder %s27, 0
      %p132 = por %p130, %p131
      %p133 = scmp.ne.s32.totalorder %s121, %s122
      %p134 = scmp.eq.s32.totalorder %s28, 1
      %p135 = por %p133, %p134
      %p137 = scmp.ne.s32.totalorder %s122, %s136
      %p138 = scmp.eq.s32.totalorder %s28, 0
      %p139 = por %p137, %p138
      %s141 = sadd.s32 %s140, 1
      %p144 = scmp.eq.s32.totalorder %s22, 1
      %p145 = scmp.ne.s32.totalorder %s140, %s142
      %p146 = scmp.eq.s32.totalorder %s22, 0
      %p147 = por %p145, %p146
      %p148 = scmp.ne.s32.totalorder %s140, %s142
      %p149 = scmp.eq.s32.totalorder %s27, 1
      %p150 = por %p148, %p149
      %p151 = scmp.ne.s32.totalorder %s142, %s143
      %p152 = scmp.eq.s32.totalorder %s27, 0
      %p153 = por %p151, %p152
      %p154 = scmp.ne.s32.totalorder %s142, %s143
      %p155 = scmp.eq.s32.totalorder %s28, 1
      %p156 = por %p154, %p155
      %p158 = scmp.ne.s32.totalorder %s143, %s157
      %p159 = scmp.eq.s32.totalorder %s28, 0
      %p160 = por %p158, %p159
      %s162 = sadd.s32 %s161, 1
      %p165 = scmp.eq.s32.totalorder %s22, 1
      %p166 = scmp.ne.s32.totalorder %s161, %s163
      %p167 = scmp.eq.s32.totalorder %s22, 0
      %p168 = por %p166, %p167
      %p169 = scmp.ne.s32.totalorder %s161, %s163
      %p170 = scmp.eq.s32.totalorder %s27, 1
      %p171 = por %p169, %p170
      %p172 = scmp.ne.s32.totalorder %s163, %s164
      %p173 = scmp.eq.s32.totalorder %s27, 0
      %p174 = por %p172, %p173
      %p175 = scmp.ne.s32.totalorder %s163, %s164
      %p176 = scmp.eq.s32.totalorder %s28, 1
      %p177 = por %p175, %p176
      %p179 = scmp.ne.s32.totalorder %s164, %s178
      %p180 = scmp.eq.s32.totalorder %s28, 0
      %p181 = por %p179, %p180
      %s183 = sadd.s32 %s182, 1
      %p186 = scmp.eq.s32.totalorder %s22, 1
      %p187 = scmp.ne.s32.totalorder %s182, %s184
      %p188 = scmp.eq.s32.totalorder %s22, 0
      %p189 = por %p187, %p188
      %p190 = scmp.ne.s32.totalorder %s182, %s184
      %p191 = scmp.eq.s32.totalorder %s27, 1
      %p192 = por %p190, %p191
      %p193 = scmp.ne.s32.totalorder %s184, %s185
      %p194 = scmp.eq.s32.totalorder %s27, 0
      %p195 = por %p193, %p194
      %p196 = scmp.ne.s32.totalorder %s184, %s185
      %p197 = scmp.eq.s32.totalorder %s28, 1
      %p198 = por %p196, %p197
      %p200 = scmp.ne.s32.totalorder %s185, %s199
      %p201 = scmp.eq.s32.totalorder %s28, 0
      %p202 = por %p200, %p201
      %s204 = sadd.s32 %s203, 1
      %p207 = scmp.eq.s32.totalorder %s22, 1
      %p208 = scmp.ne.s32.totalorder %s203, %s205
      %p209 = scmp.eq.s32.totalorder %s22, 0
      %p210 = por %p208, %p209
      %p211 = scmp.ne.s32.totalorder %s203, %s205
      %p212 = scmp.eq.s32.totalorder %s27, 1
      %p213 = por %p211, %p212
      %p214 = scmp.ne.s32.totalorder %s205, %s206
      %p215 = scmp.eq.s32.totalorder %s27, 0
      %p216 = por %p214, %p215
      %p217 = scmp.ne.s32.totalorder %s205, %s206
      %p218 = scmp.eq.s32.totalorder %s28, 1
      %p219 = por %p217, %p218
      %p221 = scmp.ne.s32.totalorder %s206, %s220
      %p222 = scmp.eq.s32.totalorder %s28, 0
      %p223 = por %p221, %p222
      %s225 = sadd.s32 %s224, 1
      %p228 = scmp.eq.s32.totalorder %s22, 1
      %p229 = scmp.ne.s32.totalorder %s224, %s226
      %p230 = scmp.eq.s32.totalorder %s22, 0
      %p231 = por %p229, %p230
      %p232 = scmp.ne.s32.totalorder %s224, %s226
      %p233 = scmp.eq.s32.totalorder %s27, 1
      %p234 = por %p232, %p233
      %p235 = scmp.ne.s32.totalorder %s226, %s227
      %p236 = scmp.eq.s32.totalorder %s27, 0
      %p237 = por %p235, %p236
      %p238 = scmp.ne.s32.totalorder %s226, %s227
      %p239 = scmp.eq.s32.totalorder %s28, 1
      %p240 = por %p238, %p239
      %p242 = scmp.ne.s32.totalorder %s227, %s241
      %p243 = scmp.eq.s32.totalorder %s28, 0
      %p244 = por %p242, %p243
      %s246 = sadd.s32 %s245, 1
      %p249 = scmp.eq.s32.totalorder %s22, 1
      %p250 = scmp.ne.s32.totalorder %s245, %s247
      %p251 = scmp.eq.s32.totalorder %s22, 0
      %p252 = por %p250, %p251
      %p253 = scmp.ne.s32.totalorder %s245, %s247
      %p254 = scmp.eq.s32.totalorder %s27, 1
      %p255 = por %p253, %p254
      %p256 = scmp.ne.s32.totalorder %s247, %s248
      %p257 = scmp.eq.s32.totalorder %s27, 0
      %p258 = por %p256, %p257
      %p259 = scmp.ne.s32.totalorder %s247, %s248
      %p260 = scmp.eq.s32.totalorder %s28, 1
      %p261 = por %p259, %p260
      %p263 = scmp.ne.s32.totalorder %s248, %s262
      %p264 = scmp.eq.s32.totalorder %s28, 0
      %p265 = por %p263, %p264
      %s267 = sadd.s32 %s266, 1
      %p270 = scmp.eq.s32.totalorder %s22, 1
      %p271 = scmp.ne.s32.totalorder %s266, %s268
      %p272 = scmp.eq.s32.totalorder %s22, 0
      %p273 = por %p271, %p272
      %p274 = scmp.ne.s32.totalorder %s266, %s268
      %p275 = scmp.eq.s32.totalorder %s27, 1
      %p276 = por %p274, %p275
      %p277 = scmp.ne.s32.totalorder %s268, %s269
      %p278 = scmp.eq.s32.totalorder %s27, 0
      %p279 = por %p277, %p278
      %p280 = scmp.ne.s32.totalorder %s268, %s269
      %p281 = scmp.eq.s32.totalorder %s28, 1
      %p282 = por %p280, %p281
      %p284 = scmp.ne.s32.totalorder %s269, %s283
      %p285 = scmp.eq.s32.totalorder %s28, 0
      %p286 = por %p284, %p285
      %s288 = sadd.s32 %s287, 1
      %p291 = scmp.eq.s32.totalorder %s22, 1
      %p292 = scmp.ne.s32.totalorder %s287, %s289
      %p293 = scmp.eq.s32.totalorder %s22, 0
      %p294 = por %p292, %p293
      %p295 = scmp.ne.s32.totalorder %s287, %s289
      %p296 = scmp.eq.s32.totalorder %s27, 1
      %p297 = por %p295, %p296
      %p298 = scmp.ne.s32.totalorder %s289, %s290
      %p299 = scmp.eq.s32.totalorder %s27, 0
      %p300 = por %p298, %p299
      %p301 = scmp.ne.s32.totalorder %s289, %s290
      %p302 = scmp.eq.s32.totalorder %s28, 1
      %p303 = por %p301, %p302
      %p305 = scmp.ne.s32.totalorder %s290, %s304
      %p306 = scmp.eq.s32.totalorder %s28, 0
      %p307 = por %p305, %p306
      %s308 = ssub.s32 %s22, %s29
      %p309 = scmp.eq.s32.totalorder %s308, 0
      %s311 = sadd.s32 %s310, 1
      %s312 = scalar_select %p309, %s310, %s311
      %p315 = pneg %p309
      %p316 = scmp.eq.s32.totalorder %s22, 1
      %p317 = por %p315, %p316
      %p318 = scmp.ne.s32.totalorder %s310, %s313
      %p319 = scmp.eq.s32.totalorder %s22, 0
      %p320 = por %p318, %p319
      %p321 = scmp.ne.s32.totalorder %s310, %s313
      %p322 = scmp.eq.s32.totalorder %s27, 1
      %p323 = por %p321, %p322
      %p324 = scmp.ne.s32.totalorder %s313, %s314
      %p325 = scmp.eq.s32.totalorder %s27, 0
      %p326 = por %p324, %p325
      %p327 = scmp.ne.s32.totalorder %s313, %s314
      %p328 = scmp.eq.s32.totalorder %s28, 1
      %p329 = por %p327, %p328
      %p331 = scmp.ne.s32.totalorder %s314, %s330
      %p332 = scmp.eq.s32.totalorder %s28, 0
      %p333 = por %p331, %p332
      %p334 = scmp.le.s32.totalorder 1, %s22
      %p335 = scmp.lt.s32.totalorder %s22, 3
      %p336 = pnand %p334, %p335
      %p337 = pneg %p336
      // Predicated region
      $region9: #{_forward_impl.1} parent=5 // pred_check
        _
      $region10: #{_forward_impl.1} parent=5 // pred_check_branch
        %339 = sbr.rel (%p336) target = $region12
      $region11: #{_forward_impl.1} parent=5 // pred_region
        %s340 = ssub.s32 %s22, 1
        // Predicated region
        $region13: #{_forward_impl.1} parent=11 // pred_check
          %p341 = pneg %p69
        $region14: #{_forward_impl.1} parent=11 // pred_check_branch
          %343 = sbr.rel (%p341) target = $region16
        $region15: #{_forward_impl.1} parent=11 // pred_region
          %345 = vsyncadd [#allocation3], 0
          %s346 = sshll.u32 %s1, 4
          %s347 = int_to_ptr.hbm [resolvable:$true] %s346
          %s348 = sshll.u32 [#allocation2], 4
          %s349 = int_to_ptr.vmem [resolvable:$true] %s348
          %354 = dma.hbm_to_vmem [thread:$0]  %s347, 4096, %s349, [#allocation3], 256, 256, 16
        $region16: #{_forward_impl.1} parent=11 // pred_fallthru
          _
        // Predicated region
        $region17: #{_forward_impl.1} parent=11 // pred_check
          %p355 = pneg %p90
        $region18: #{_forward_impl.1} parent=11 // pred_check_branch
          %357 = sbr.rel (%p355) target = $region20
        $region19: #{_forward_impl.1} parent=11 // pred_region
          _
        $region20: #{_forward_impl.1} parent=11 // pred_fallthru
          _
        // Predicated region
        $region21: #{_forward_impl.1} parent=11 // pred_check
          %p358 = pneg %p111
        $region22: #{_forward_impl.1} parent=11 // pred_check_branch
          %360 = sbr.rel (%p358) target = $region24
        $region23: #{_forward_impl.1} parent=11 // pred_region
          %362 = vsyncadd [#allocation5], 0
          %s363 = sshll.u32 %s3, 4
          %s364 = int_to_ptr.hbm [resolvable:$true] %s363
          %s365 = sshll.u32 [#allocation4], 4
          %s366 = int_to_ptr.vmem [resolvable:$true] %s365
          %371 = dma.hbm_to_vmem [thread:$0]  %s364, 8192, %s366, [#allocation5], 128, 128, 8
        $region24: #{_forward_impl.1} parent=11 // pred_fallthru
          _
        // Predicated region
        $region25: #{_forward_impl.1} parent=11 // pred_check
          %p372 = pneg %p132
        $region26: #{_forward_impl.1} parent=11 // pred_check_branch
          %374 = sbr.rel (%p372) target = $region28
        $region27: #{_forward_impl.1} parent=11 // pred_region
          _
        $region28: #{_forward_impl.1} parent=11 // pred_fallthru
          _
        // Predicated region
        $region29: #{_forward_impl.1} parent=11 // pred_check
          %p375 = pneg %p153
        $region30: #{_forward_impl.1} parent=11 // pred_check_branch
          %377 = sbr.rel (%p375) target = $region32
        $region31: #{_forward_impl.1} parent=11 // pred_region
          _
        $region32: #{_forward_impl.1} parent=11 // pred_fallthru
          _
        // Predicated region
        $region33: #{_forward_impl.1} parent=11 // pred_check
          %p378 = pneg %p174
        $region34: #{_forward_impl.1} parent=11 // pred_check_branch
          %380 = sbr.rel (%p378) target = $region36
        $region35: #{_forward_impl.1} parent=11 // pred_region
          _
        $region36: #{_forward_impl.1} parent=11 // pred_fallthru
          _
        // Predicated region
        $region37: #{_forward_impl.1} parent=11 // pred_check
          %p381 = pneg %p195
        $region38: #{_forward_impl.1} parent=11 // pred_check_branch
          %383 = sbr.rel (%p381) target = $region40
        $region39: #{_forward_impl.1} parent=11 // pred_region
          %385 = vsyncadd [#allocation5], 0
          %s386 = sshll.u32 %s7, 4
          %s387 = int_to_ptr.hbm [resolvable:$true] %s386
          %s388 = sshll.u32 [#allocation6], 4
          %s389 = int_to_ptr.vmem [resolvable:$true] %s388
          %394 = dma.hbm_to_vmem [thread:$0]  %s387, 3072, %s389, [#allocation5], 192, 192, 12
        $region40: #{_forward_impl.1} parent=11 // pred_fallthru
          _
        // Predicated region
        $region41: #{_forward_impl.1} parent=11 // pred_check
          %p395 = pneg %p216
        $region42: #{_forward_impl.1} parent=11 // pred_check_branch
          %397 = sbr.rel (%p395) target = $region44
        $region43: #{_forward_impl.1} parent=11 // pred_region
          _
        $region44: #{_forward_impl.1} parent=11 // pred_fallthru
          _
        // Predicated region
        $region45: #{_forward_impl.1} parent=11 // pred_check
          %p398 = pneg %p237
        $region46: #{_forward_impl.1} parent=11 // pred_check_branch
          %400 = sbr.rel (%p398) target = $region48
        $region47: #{_forward_impl.1} parent=11 // pred_region
          %402 = vsyncadd [#allocation8], 0
          %s403 = sshll.u32 %s9, 4
          %s404 = int_to_ptr.hbm [resolvable:$true] %s403
          %s405 = sshll.u32 [#allocation7], 4
          %s406 = int_to_ptr.vmem [resolvable:$true] %s405
          %411 = dma.hbm_to_vmem [thread:$0]  %s404, 6144, %s406, [#allocation8], 128, 128, 8
        $region48: #{_forward_impl.1} parent=11 // pred_fallthru
          _
        // Predicated region
        $region49: #{_forward_impl.1} parent=11 // pred_check
          %p412 = pneg %p258
        $region50: #{_forward_impl.1} parent=11 // pred_check_branch
          %414 = sbr.rel (%p412) target = $region52
        $region51: #{_forward_impl.1} parent=11 // pred_region
          _
        $region52: #{_forward_impl.1} parent=11 // pred_fallthru
          _
        // Predicated region
        $region53: #{_forward_impl.1} parent=11 // pred_check
          %p415 = pneg %p279
        $region54: #{_forward_impl.1} parent=11 // pred_check_branch
          %417 = sbr.rel (%p415) target = $region56
        $region55: #{_forward_impl.1} parent=11 // pred_region
          %419 = vsyncadd [#allocation8], 0
          %s420 = sshll.u32 %s11, 4
          %s421 = int_to_ptr.hbm [resolvable:$true] %s420
          %s422 = sshll.u32 [#allocation9], 4
          %s423 = int_to_ptr.vmem [resolvable:$true] %s422
          %428 = dma.hbm_to_vmem [thread:$0]  %s421, 2048, %s423, [#allocation8], 64, 64, 4
        $region56: #{_forward_impl.1} parent=11 // pred_fallthru
          _
        // Predicated region
        $region57: #{_forward_impl.1} parent=11 // pred_check
          %p429 = pneg %p300
        $region58: #{_forward_impl.1} parent=11 // pred_check_branch
          %431 = sbr.rel (%p429) target = $region60
        $region59: #{_forward_impl.1} parent=11 // pred_region
          _
        $region60: #{_forward_impl.1} parent=11 // pred_fallthru
          _
      $region12: #{_forward_impl.1} parent=5 // pred_fallthru
        _
      %p432 = scmp.lt.s32.totalorder %s22, 2
      // Predicated region
      $region61: #{_forward_impl.1} parent=5 // pred_check
        %p433 = pneg %p432
      $region62: #{_forward_impl.1} parent=5 // pred_check_branch
        %435 = sbr.rel (%p433) target = $region64
      $region63: #{_forward_impl.1} parent=5 // pred_region
        // Predicated region
        $region65: #{_forward_impl.1} parent=63 // pred_check
          %p436 = pneg %p42
        $region66: #{_forward_impl.1} parent=63 // pred_check_branch
          %438 = sbr.rel (%p436) target = $region68
        $region67: #{_forward_impl.1} parent=63 // pred_region
          %s439 = smul.u32 4, %s22
          %p440 = scmp.lt.s32.totalorder %s439, 7
          %s441 = scalar_select %p440, %s439, 7
          %s442 = smul.addr %s441, 4
          %s443 = scalar_lea.vmem %s0, %s442
          %s444 = smul.u32 4, %s22
        $region68: #{_forward_impl.1} parent=63 // pred_fallthru
          _
      $region64: #{_forward_impl.1} parent=5 // pred_fallthru
        _
      %p445 = scmp.le.s32.totalorder 1, %s22
      %p446 = scmp.lt.s32.totalorder %s22, 3
      %p447 = pnand %p445, %p446
      %p448 = pneg %p447
      // Predicated region
      $region69: #{_forward_impl.1} parent=5 // pred_check
        _
      $region70: #{_forward_impl.1} parent=5 // pred_check_branch
        %450 = sbr.rel (%p447) target = $region72
      $region71: #{_forward_impl.1} parent=5 // pred_region
        %s451 = ssub.s32 %s22, 1
        // Predicated region
        $region73: #{_forward_impl.1} parent=71 // pred_check
          %p452 = pneg %p69
        $region74: #{_forward_impl.1} parent=71 // pred_check_branch
          %454 = sbr.rel (%p452) target = $region76
        $region75: #{_forward_impl.1} parent=71 // pred_region
          %456 = dma.done [#allocation3], 4096
        $region76: #{_forward_impl.1} parent=71 // pred_fallthru
          _
        // Predicated region
        $region77: #{_forward_impl.1} parent=71 // pred_check
          %p457 = pneg %p111
        $region78: #{_forward_impl.1} parent=71 // pred_check_branch
          %459 = sbr.rel (%p457) target = $region80
        $region79: #{_forward_impl.1} parent=71 // pred_region
          %461 = dma.done [#allocation5], 8192
        $region80: #{_forward_impl.1} parent=71 // pred_fallthru
          _
        // Predicated region
        $region81: #{_forward_impl.1} parent=71 // pred_check
          %p462 = pneg %p195
        $region82: #{_forward_impl.1} parent=71 // pred_check_branch
          %464 = sbr.rel (%p462) target = $region84
        $region83: #{_forward_impl.1} parent=71 // pred_region
          %466 = dma.done [#allocation5], 3072
        $region84: #{_forward_impl.1} parent=71 // pred_fallthru
          _
        // Predicated region
        $region85: #{_forward_impl.1} parent=71 // pred_check
          %p467 = pneg %p237
        $region86: #{_forward_impl.1} parent=71 // pred_check_branch
          %469 = sbr.rel (%p467) target = $region88
        $region87: #{_forward_impl.1} parent=71 // pred_region
          %471 = dma.done [#allocation8], 6144
        $region88: #{_forward_impl.1} parent=71 // pred_fallthru
          _
        // Predicated region
        $region89: #{_forward_impl.1} parent=71 // pred_check
          %p472 = pneg %p279
        $region90: #{_forward_impl.1} parent=71 // pred_check_branch
          %474 = sbr.rel (%p472) target = $region92
        $region91: #{_forward_impl.1} parent=71 // pred_region
          %476 = dma.done [#allocation8], 2048
        $region92: #{_forward_impl.1} parent=71 // pred_fallthru
          _
        %s477 = smul.u32 4, %s27
        %p478 = scmp.lt.s32.totalorder %s477, 7
        %s479 = scalar_select %p478, %s477, 7
        %s480 = smul.addr %s479, 4
        %s481 = scalar_lea.vmem %s0, %s480
        %p482 = pneg %p48
        %p483 = pneg %p45
        %p484 = pneg %p69
        %p485 = pneg %p66
        %p486 = pneg %p90
        %p487 = pneg %p87
        %p488 = pneg %p111
        %p489 = pneg %p108
        %p490 = pneg %p132
        %p491 = pneg %p129
        %p492 = pneg %p153
        %p493 = pneg %p150
        %p494 = pneg %p174
        %p495 = pneg %p171
        %p496 = pneg %p195
        %p497 = pneg %p192
        %p498 = pneg %p216
        %p499 = pneg %p213
        %p500 = pneg %p237
        %p501 = pneg %p234
        %p502 = pneg %p258
        %p503 = pneg %p255
        %p504 = pneg %p279
        %p505 = pneg %p276
        %p506 = pneg %p300
        %p507 = pneg %p297
        %p508 = pneg %p326
        %p509 = pneg %p323
        %s510 = smul.u32 4, %s27
        %p511 = scmp.lt.s32.totalorder %s510, 7
        %s512 = scalar_select %p511, %s510, 7
        %s513 = smul.addr %s512, 8
        %s514 = scalar_lea.vmem %s13, %s513
        %s515 = smul.u32 4, %s27
        %p516 = scmp.lt.s32.totalorder %s515, 7
        %s517 = scalar_select %p516, %s515, 7
        %s518 = smul.addr %s517, 4
        %s519 = scalar_lea.vmem %s0, %s518
        %s520 = smul.u32 4, %s27
        %s521 = smul.u32 4, %s27
        %p522 = scmp.lt.s32.totalorder %s521, 7
        %s523 = scalar_select %p522, %s521, 7
        %s524 = smul.addr %s523, 8
        %s525 = scalar_lea.vmem %s13, %s524
        %s526 = smul.u32 4, %s27
        %v527 = vlaneseq
        %v528 = vand.u32 %v527, 127
        %vm529 = vcmp.ge.s32.totalorder %v528, 0
        %vm530 = vcmp.lt.s32.totalorder %v528, 20
        %vm531 = vmand %vm529, %vm530
        %vm532 = vcmp.ge.s32.totalorder %v528, 20
        %vm533 = vcmp.lt.s32.totalorder %v528, 30
        %vm534 = vmand %vm532, %vm533
        %vm535 = vcmp.ge.s32.totalorder %v528, 30
        %vm536 = vcmp.lt.s32.totalorder %v528, 40
        %vm537 = vmand %vm535, %vm536
        %vm538 = vcmp.ge.s32.totalorder %v528, 40
        %vm539 = vcmp.lt.s32.totalorder %v528, 50
        %vm540 = vmand %vm538, %vm539
        %vm541 = vcmp.ge.s32.totalorder %v528, 50
        %vm542 = vcmp.lt.s32.totalorder %v528, 60
        %vm543 = vmand %vm541, %vm542
        %v544 = vld [vmem:[%s519] sm:$0xf]
        %v545 = vld [vmem:[%s519 + $0x4] sm:$0xf]
        %v546 = vld [vmem:[#allocation2] sm:$0xff]
        %v547 = vld [vmem:[#allocation2 + $0x8] sm:$0xff]
        %v548 = vld [vmem:[#allocation2 + $0x10] sm:$0xff]
        %v549 = vld [vmem:[#allocation2 + $0x18] sm:$0xff]
        %v550 = vld [vmem:[#allocation2 + $0x20] sm:$0xff]
        %v551 = vld [vmem:[#allocation2 + $0x28] sm:$0xff]
        %v552 = vld [vmem:[#allocation2 + $0x30] sm:$0xff]
        %v553 = vld [vmem:[#allocation2 + $0x38] sm:$0xff]
        %v554 = vld [vmem:[#allocation2 + $0x40] sm:$0xff]
        %v555 = vld [vmem:[#allocation2 + $0x48] sm:$0xff]
        %v556 = vld [vmem:[#allocation2 + $0x50] sm:$0xff]
        %v557 = vld [vmem:[#allocation2 + $0x58] sm:$0xff]
        %v558 = vld [vmem:[#allocation2 + $0x60] sm:$0xff]
        %v559 = vld [vmem:[#allocation2 + $0x68] sm:$0xff]
        %v560 = vld [vmem:[#allocation2 + $0x70] sm:$0xff]
        %v561 = vld [vmem:[#allocation2 + $0x78] sm:$0xff]
        %v562 = vld [vmem:[#allocation2 + $0x80] sm:$0xff]
        %v563 = vld [vmem:[#allocation2 + $0x88] sm:$0xff]
        %v564 = vld [vmem:[#allocation2 + $0x90] sm:$0xff]
        %v565 = vld [vmem:[#allocation2 + $0x98] sm:$0xff]
        %v566 = vld [vmem:[#allocation2 + $0xa0] sm:$0xff]
        %v567 = vld [vmem:[#allocation2 + $0xa8] sm:$0xff]
        %v568 = vld [vmem:[#allocation2 + $0xb0] sm:$0xff]
        %v569 = vld [vmem:[#allocation2 + $0xb8] sm:$0xff]
        %v570 = vld [vmem:[#allocation2 + $0xc0] sm:$0xff]
        %v571 = vld [vmem:[#allocation2 + $0xc8] sm:$0xff]
        %v572 = vld [vmem:[#allocation2 + $0xd0] sm:$0xff]
        %v573 = vld [vmem:[#allocation2 + $0xd8] sm:$0xff]
        %v574 = vld [vmem:[#allocation2 + $0xe0] sm:$0xff]
        %v575 = vld [vmem:[#allocation2 + $0xe8] sm:$0xff]
        %v576 = vld [vmem:[#allocation2 + $0xf0] sm:$0xff]
        %v577 = vld [vmem:[#allocation2 + $0xf8] sm:$0xff]
        %v578 = vld [vmem:[%s2] sm:$0xf]
        %v580 = vperm.slane %v578, 0
        %v581 = vperm.slane %v578, 1
        %v582 = vperm.slane %v578, 2
        %v583 = vperm.slane %v578, 3
        %v590 = vunpack.c.l.b16 %v544
        %v591 = vunpack.c.l.b16 %v545
        %v592 = vpack.c.b16 %v591, %v590
        %v626 = vunpack.c.l.b16 %v546
        %v627 = vunpack.c.h.b16 %v546
        %v628 = vunpack.c.l.b16 %v547
        %v629 = vunpack.c.h.b16 %v547
        %v630 = vunpack.c.l.b16 %v548
        %v631 = vunpack.c.h.b16 %v548
        %v632 = vunpack.c.l.b16 %v549
        %v633 = vunpack.c.h.b16 %v549
        %v634 = vunpack.c.l.b16 %v550
        %v635 = vunpack.c.h.b16 %v550
        %v636 = vunpack.c.l.b16 %v551
        %v637 = vunpack.c.h.b16 %v551
        %v638 = vunpack.c.l.b16 %v552
        %v639 = vunpack.c.h.b16 %v552
        %v640 = vunpack.c.l.b16 %v553
        %v641 = vunpack.c.h.b16 %v553
        %v642 = vunpack.c.l.b16 %v554
        %v643 = vunpack.c.h.b16 %v554
        %v644 = vunpack.c.l.b16 %v555
        %v645 = vunpack.c.h.b16 %v555
        %v646 = vunpack.c.l.b16 %v556
        %v647 = vunpack.c.h.b16 %v556
        %v648 = vunpack.c.l.b16 %v557
        %v649 = vunpack.c.h.b16 %v557
        %v650 = vunpack.c.l.b16 %v558
        %v651 = vunpack.c.h.b16 %v558
        %v652 = vunpack.c.l.b16 %v559
        %v653 = vunpack.c.h.b16 %v559
        %v654 = vunpack.c.l.b16 %v560
        %v655 = vunpack.c.h.b16 %v560
        %v656 = vunpack.c.l.b16 %v561
        %v657 = vunpack.c.h.b16 %v561
        %v658 = vunpack.c.l.b16 %v562
        %v659 = vunpack.c.h.b16 %v562
        %v660 = vunpack.c.l.b16 %v563
        %v661 = vunpack.c.h.b16 %v563
        %v662 = vunpack.c.l.b16 %v564
        %v663 = vunpack.c.h.b16 %v564
        %v664 = vunpack.c.l.b16 %v565
        %v665 = vunpack.c.h.b16 %v565
        %v666 = vunpack.c.l.b16 %v566
        %v667 = vunpack.c.h.b16 %v566
        %v668 = vunpack.c.l.b16 %v567
        %v669 = vunpack.c.h.b16 %v567
        %v670 = vunpack.c.l.b16 %v568
        %v671 = vunpack.c.h.b16 %v568
        %v672 = vunpack.c.l.b16 %v569
        %v673 = vunpack.c.h.b16 %v569
        %v674 = vunpack.c.l.b16 %v570
        %v675 = vunpack.c.h.b16 %v570
        %v676 = vunpack.c.l.b16 %v571
        %v677 = vunpack.c.h.b16 %v571
        %v678 = vunpack.c.l.b16 %v572
        %v679 = vunpack.c.h.b16 %v572
        %v680 = vunpack.c.l.b16 %v573
        %v681 = vunpack.c.h.b16 %v573
        %v682 = vunpack.c.l.b16 %v574
        %v683 = vunpack.c.h.b16 %v574
        %v684 = vunpack.c.l.b16 %v575
        %v685 = vunpack.c.h.b16 %v575
        %v686 = vunpack.c.l.b16 %v576
        %v687 = vunpack.c.h.b16 %v576
        %v688 = vunpack.c.l.b16 %v577
        %v689 = vunpack.c.h.b16 %v577
        %v690 = vpack.c.b16 %v630, %v626
        %v691 = vpack.c.b16 %v631, %v627
        %v692 = vpack.c.b16 %v632, %v628
        %v693 = vpack.c.b16 %v633, %v629
        %v694 = vpack.c.b16 %v638, %v634
        %v695 = vpack.c.b16 %v639, %v635
        %v696 = vpack.c.b16 %v640, %v636
        %v697 = vpack.c.b16 %v641, %v637
        %v698 = vpack.c.b16 %v646, %v642
        %v699 = vpack.c.b16 %v647, %v643
        %v700 = vpack.c.b16 %v648, %v644
        %v701 = vpack.c.b16 %v649, %v645
        %v702 = vpack.c.b16 %v654, %v650
        %v703 = vpack.c.b16 %v655, %v651
        %v704 = vpack.c.b16 %v656, %v652
        %v705 = vpack.c.b16 %v657, %v653
        %v706 = vpack.c.b16 %v662, %v658
        %v707 = vpack.c.b16 %v663, %v659
        %v708 = vpack.c.b16 %v664, %v660
        %v709 = vpack.c.b16 %v665, %v661
        %v710 = vpack.c.b16 %v670, %v666
        %v711 = vpack.c.b16 %v671, %v667
        %v712 = vpack.c.b16 %v672, %v668
        %v713 = vpack.c.b16 %v673, %v669
        %v714 = vpack.c.b16 %v678, %v674
        %v715 = vpack.c.b16 %v679, %v675
        %v716 = vpack.c.b16 %v680, %v676
        %v717 = vpack.c.b16 %v681, %v677
        %v718 = vpack.c.b16 %v686, %v682
        %v719 = vpack.c.b16 %v687, %v683
        %v720 = vpack.c.b16 %v688, %v684
        %v721 = vpack.c.b16 %v689, %v685
        %754 = vmatpush.bf16.msra.mxu0 %v718
        %755 = vmatpush.bf16.msra.mxu0 %v714
        %756 = vmatpush.bf16.msra.mxu0 %v710
        %757 = vmatpush.bf16.msra.mxu0 %v706
        %758 = vmatpush.bf16.msra.mxu0 %v702
        %759 = vmatpush.bf16.msra.mxu0 %v698
        %760 = vmatpush.bf16.msra.mxu0 %v694
        %761 = vmatpush.bf16.msra.mxu0 %v690
        %762 = vmatmul.bf16.gmra.mxu0 %v592
        %v763 = vpop.f32.mrf.mxu0
        %v764 = vadd.f32 %v580, %v763
        %v765 = vpop.f32.mrf.mxu0
        %v766 = vadd.f32 %v580, %v765
        %767 = vdwg.mxu0
        %768 = vmatpush.bf16.msra.mxu0 %v719
        %769 = vmatpush.bf16.msra.mxu0 %v715
        %770 = vmatpush.bf16.msra.mxu0 %v711
        %771 = vmatpush.bf16.msra.mxu0 %v707
        %772 = vmatpush.bf16.msra.mxu0 %v703
        %773 = vmatpush.bf16.msra.mxu0 %v699
        %774 = vmatpush.bf16.msra.mxu0 %v695
        %775 = vmatpush.bf16.msra.mxu0 %v691
        %776 = vmatmul.bf16.gmra.mxu0 %v592
        %v777 = vpop.f32.mrf.mxu0
        %v778 = vadd.f32 %v581, %v777
        %v779 = vpop.f32.mrf.mxu0
        %v780 = vadd.f32 %v581, %v779
        %781 = vdwg.mxu0
        %782 = vmatpush.bf16.msra.mxu0 %v720
        %783 = vmatpush.bf16.msra.mxu0 %v716
        %784 = vmatpush.bf16.msra.mxu0 %v712
        %785 = vmatpush.bf16.msra.mxu0 %v708
        %786 = vmatpush.bf16.msra.mxu0 %v704
        %787 = vmatpush.bf16.msra.mxu0 %v700
        %788 = vmatpush.bf16.msra.mxu0 %v696
        %789 = vmatpush.bf16.msra.mxu0 %v692
        %790 = vmatmul.bf16.gmra.mxu0 %v592
        %v791 = vpop.f32.mrf.mxu0
        %v792 = vadd.f32 %v582, %v791
        %v793 = vpop.f32.mrf.mxu0
        %v794 = vadd.f32 %v582, %v793
        %795 = vdwg.mxu0
        %796 = vmatpush.bf16.msra.mxu0 %v721
        %797 = vmatpush.bf16.msra.mxu0 %v717
        %798 = vmatpush.bf16.msra.mxu0 %v713
        %799 = vmatpush.bf16.msra.mxu0 %v709
        %800 = vmatpush.bf16.msra.mxu0 %v705
        %801 = vmatpush.bf16.msra.mxu0 %v701
        %802 = vmatpush.bf16.msra.mxu0 %v697
        %803 = vmatpush.bf16.msra.mxu0 %v693
        %804 = vmatmul.bf16.gmra.mxu0 %v592
        %v805 = vpop.f32.mrf.mxu0
        %v806 = vadd.f32 %v583, %v805
        %v807 = vpop.f32.mrf.mxu0
        %v808 = vadd.f32 %v583, %v807
        %809 = vdwg.mxu0
        %v810 = vmax.f32 %v764, 0.0
        %v811 = vmax.f32 %v778, 0.0
        %v812 = vmax.f32 %v792, 0.0
        %v813 = vmax.f32 %v806, 0.0
        %v814 = vmax.f32 %v766, 0.0
        %v815 = vmax.f32 %v780, 0.0
        %v816 = vmax.f32 %v794, 0.0
        %v817 = vmax.f32 %v808, 0.0
        %v818 = vpack.c.bf16 %v814, %v810
        %v819 = vpack.c.bf16 %v815, %v811
        %v820 = vpack.c.bf16 %v816, %v812
        %v821 = vpack.c.bf16 %v817, %v813
        %v822 = vld [vmem:[#allocation4] sm:$0xff]
        %v823 = vld [vmem:[#allocation4 + $0x8] sm:$0xff]
        %v824 = vld [vmem:[#allocation4 + $0x10] sm:$0xff]
        %v825 = vld [vmem:[#allocation4 + $0x18] sm:$0xff]
        %v826 = vld [vmem:[#allocation4 + $0x20] sm:$0xff]
        %v827 = vld [vmem:[#allocation4 + $0x28] sm:$0xff]
        %v828 = vld [vmem:[#allocation4 + $0x30] sm:$0xff]
        %v829 = vld [vmem:[#allocation4 + $0x38] sm:$0xff]
        %v830 = vld [vmem:[#allocation4 + $0x40] sm:$0xff]
        %v831 = vld [vmem:[#allocation4 + $0x48] sm:$0xff]
        %v832 = vld [vmem:[#allocation4 + $0x50] sm:$0xff]
        %v833 = vld [vmem:[#allocation4 + $0x58] sm:$0xff]
        %v834 = vld [vmem:[#allocation4 + $0x60] sm:$0xff]
        %v835 = vld [vmem:[#allocation4 + $0x68] sm:$0xff]
        %v836 = vld [vmem:[#allocation4 + $0x70] sm:$0xff]
        %v837 = vld [vmem:[#allocation4 + $0x78] sm:$0xff]
        %v838 = vld [vmem:[#allocation4 + $0x80] sm:$0xff]
        %v839 = vld [vmem:[#allocation4 + $0x88] sm:$0xff]
        %v840 = vld [vmem:[#allocation4 + $0x90] sm:$0xff]
        %v841 = vld [vmem:[#allocation4 + $0x98] sm:$0xff]
        %v842 = vld [vmem:[#allocation4 + $0xa0] sm:$0xff]
        %v843 = vld [vmem:[#allocation4 + $0xa8] sm:$0xff]
        %v844 = vld [vmem:[#allocation4 + $0xb0] sm:$0xff]
        %v845 = vld [vmem:[#allocation4 + $0xb8] sm:$0xff]
        %v846 = vld [vmem:[#allocation4 + $0xc0] sm:$0xff]
        %v847 = vld [vmem:[#allocation4 + $0xc8] sm:$0xff]
        %v848 = vld [vmem:[#allocation4 + $0xd0] sm:$0xff]
        %v849 = vld [vmem:[#allocation4 + $0xd8] sm:$0xff]
        %v850 = vld [vmem:[#allocation4 + $0xe0] sm:$0xff]
        %v851 = vld [vmem:[#allocation4 + $0xe8] sm:$0xff]
        %v852 = vld [vmem:[#allocation4 + $0xf0] sm:$0xff]
        %v853 = vld [vmem:[#allocation4 + $0xf8] sm:$0xff]
        %v854 = vld [vmem:[#allocation4 + $0x100] sm:$0xff]
        %v855 = vld [vmem:[#allocation4 + $0x108] sm:$0xff]
        %v856 = vld [vmem:[#allocation4 + $0x110] sm:$0xff]
        %v857 = vld [vmem:[#allocation4 + $0x118] sm:$0xff]
        %v858 = vld [vmem:[#allocation4 + $0x120] sm:$0xff]
        %v859 = vld [vmem:[#allocation4 + $0x128] sm:$0xff]
        %v860 = vld [vmem:[#allocation4 + $0x130] sm:$0xff]
        %v861 = vld [vmem:[#allocation4 + $0x138] sm:$0xff]
        %v862 = vld [vmem:[#allocation4 + $0x140] sm:$0xff]
        %v863 = vld [vmem:[#allocation4 + $0x148] sm:$0xff]
        %v864 = vld [vmem:[#allocation4 + $0x150] sm:$0xff]
        %v865 = vld [vmem:[#allocation4 + $0x158] sm:$0xff]
        %v866 = vld [vmem:[#allocation4 + $0x160] sm:$0xff]
        %v867 = vld [vmem:[#allocation4 + $0x168] sm:$0xff]
        %v868 = vld [vmem:[#allocation4 + $0x170] sm:$0xff]
        %v869 = vld [vmem:[#allocation4 + $0x178] sm:$0xff]
        %v870 = vld [vmem:[#allocation4 + $0x180] sm:$0xff]
        %v871 = vld [vmem:[#allocation4 + $0x188] sm:$0xff]
        %v872 = vld [vmem:[#allocation4 + $0x190] sm:$0xff]
        %v873 = vld [vmem:[#allocation4 + $0x198] sm:$0xff]
        %v874 = vld [vmem:[#allocation4 + $0x1a0] sm:$0xff]
        %v875 = vld [vmem:[#allocation4 + $0x1a8] sm:$0xff]
        %v876 = vld [vmem:[#allocation4 + $0x1b0] sm:$0xff]
        %v877 = vld [vmem:[#allocation4 + $0x1b8] sm:$0xff]
        %v878 = vld [vmem:[#allocation4 + $0x1c0] sm:$0xff]
        %v879 = vld [vmem:[#allocation4 + $0x1c8] sm:$0xff]
        %v880 = vld [vmem:[#allocation4 + $0x1d0] sm:$0xff]
        %v881 = vld [vmem:[#allocation4 + $0x1d8] sm:$0xff]
        %v882 = vld [vmem:[#allocation4 + $0x1e0] sm:$0xff]
        %v883 = vld [vmem:[#allocation4 + $0x1e8] sm:$0xff]
        %v884 = vld [vmem:[#allocation4 + $0x1f0] sm:$0xff]
        %v885 = vld [vmem:[#allocation4 + $0x1f8] sm:$0xff]
        %v886 = vld [vmem:[%s4] sm:$0x3]
        %v888 = vperm.slane %v886, 0
        %v889 = vperm.slane %v886, 1
        %v956 = vunpack.c.l.b16 %v822
        %v957 = vunpack.c.h.b16 %v822
        %v958 = vunpack.c.l.b16 %v823
        %v959 = vunpack.c.h.b16 %v823
        %v960 = vunpack.c.l.b16 %v824
        %v961 = vunpack.c.h.b16 %v824
        %v962 = vunpack.c.l.b16 %v825
        %v963 = vunpack.c.h.b16 %v825
        %v964 = vunpack.c.l.b16 %v826
        %v965 = vunpack.c.h.b16 %v826
        %v966 = vunpack.c.l.b16 %v827
        %v967 = vunpack.c.h.b16 %v827
        %v968 = vunpack.c.l.b16 %v828
        %v969 = vunpack.c.h.b16 %v828
        %v970 = vunpack.c.l.b16 %v829
        %v971 = vunpack.c.h.b16 %v829
        %v972 = vunpack.c.l.b16 %v830
        %v973 = vunpack.c.h.b16 %v830
        %v974 = vunpack.c.l.b16 %v831
        %v975 = vunpack.c.h.b16 %v831
        %v976 = vunpack.c.l.b16 %v832
        %v977 = vunpack.c.h.b16 %v832
        %v978 = vunpack.c.l.b16 %v833
        %v979 = vunpack.c.h.b16 %v833
        %v980 = vunpack.c.l.b16 %v834
        %v981 = vunpack.c.h.b16 %v834
        %v982 = vunpack.c.l.b16 %v835
        %v983 = vunpack.c.h.b16 %v835
        %v984 = vunpack.c.l.b16 %v836
        %v985 = vunpack.c.h.b16 %v836
        %v986 = vunpack.c.l.b16 %v837
        %v987 = vunpack.c.h.b16 %v837
        %v988 = vunpack.c.l.b16 %v838
        %v989 = vunpack.c.h.b16 %v838
        %v990 = vunpack.c.l.b16 %v839
        %v991 = vunpack.c.h.b16 %v839
        %v992 = vunpack.c.l.b16 %v840
        %v993 = vunpack.c.h.b16 %v840
        %v994 = vunpack.c.l.b16 %v841
        %v995 = vunpack.c.h.b16 %v841
        %v996 = vunpack.c.l.b16 %v842
        %v997 = vunpack.c.h.b16 %v842
        %v998 = vunpack.c.l.b16 %v843
        %v999 = vunpack.c.h.b16 %v843
        %v1000 = vunpack.c.l.b16 %v844
        %v1001 = vunpack.c.h.b16 %v844
        %v1002 = vunpack.c.l.b16 %v845
        %v1003 = vunpack.c.h.b16 %v845
        %v1004 = vunpack.c.l.b16 %v846
        %v1005 = vunpack.c.h.b16 %v846
        %v1006 = vunpack.c.l.b16 %v847
        %v1007 = vunpack.c.h.b16 %v847
        %v1008 = vunpack.c.l.b16 %v848
        %v1009 = vunpack.c.h.b16 %v848
        %v1010 = vunpack.c.l.b16 %v849
        %v1011 = vunpack.c.h.b16 %v849
        %v1012 = vunpack.c.l.b16 %v850
        %v1013 = vunpack.c.h.b16 %v850
        %v1014 = vunpack.c.l.b16 %v851
        %v1015 = vunpack.c.h.b16 %v851
        %v1016 = vunpack.c.l.b16 %v852
        %v1017 = vunpack.c.h.b16 %v852
        %v1018 = vunpack.c.l.b16 %v853
        %v1019 = vunpack.c.h.b16 %v853
        %v1020 = vunpack.c.l.b16 %v854
        %v1021 = vunpack.c.h.b16 %v854
        %v1022 = vunpack.c.l.b16 %v855
        %v1023 = vunpack.c.h.b16 %v855
        %v1024 = vunpack.c.l.b16 %v856
        %v1025 = vunpack.c.h.b16 %v856
        %v1026 = vunpack.c.l.b16 %v857
        %v1027 = vunpack.c.h.b16 %v857
        %v1028 = vunpack.c.l.b16 %v858
        %v1029 = vunpack.c.h.b16 %v858
        %v1030 = vunpack.c.l.b16 %v859
        %v1031 = vunpack.c.h.b16 %v859
        %v1032 = vunpack.c.l.b16 %v860
        %v1033 = vunpack.c.h.b16 %v860
        %v1034 = vunpack.c.l.b16 %v861
        %v1035 = vunpack.c.h.b16 %v861
        %v1036 = vunpack.c.l.b16 %v862
        %v1037 = vunpack.c.h.b16 %v862
        %v1038 = vunpack.c.l.b16 %v863
        %v1039 = vunpack.c.h.b16 %v863
        %v1040 = vunpack.c.l.b16 %v864
        %v1041 = vunpack.c.h.b16 %v864
        %v1042 = vunpack.c.l.b16 %v865
        %v1043 = vunpack.c.h.b16 %v865
        %v1044 = vunpack.c.l.b16 %v866
        %v1045 = vunpack.c.h.b16 %v866
        %v1046 = vunpack.c.l.b16 %v867
        %v1047 = vunpack.c.h.b16 %v867
        %v1048 = vunpack.c.l.b16 %v868
        %v1049 = vunpack.c.h.b16 %v868
        %v1050 = vunpack.c.l.b16 %v869
        %v1051 = vunpack.c.h.b16 %v869
        %v1052 = vunpack.c.l.b16 %v870
        %v1053 = vunpack.c.h.b16 %v870
        %v1054 = vunpack.c.l.b16 %v871
        %v1055 = vunpack.c.h.b16 %v871
        %v1056 = vunpack.c.l.b16 %v872
        %v1057 = vunpack.c.h.b16 %v872
        %v1058 = vunpack.c.l.b16 %v873
        %v1059 = vunpack.c.h.b16 %v873
        %v1060 = vunpack.c.l.b16 %v874
        %v1061 = vunpack.c.h.b16 %v874
        %v1062 = vunpack.c.l.b16 %v875
        %v1063 = vunpack.c.h.b16 %v875
        %v1064 = vunpack.c.l.b16 %v876
        %v1065 = vunpack.c.h.b16 %v876
        %v1066 = vunpack.c.l.b16 %v877
        %v1067 = vunpack.c.h.b16 %v877
        %v1068 = vunpack.c.l.b16 %v878
        %v1069 = vunpack.c.h.b16 %v878
        %v1070 = vunpack.c.l.b16 %v879
        %v1071 = vunpack.c.h.b16 %v879
        %v1072 = vunpack.c.l.b16 %v880
        %v1073 = vunpack.c.h.b16 %v880
        %v1074 = vunpack.c.l.b16 %v881
        %v1075 = vunpack.c.h.b16 %v881
        %v1076 = vunpack.c.l.b16 %v882
        %v1077 = vunpack.c.h.b16 %v882
        %v1078 = vunpack.c.l.b16 %v883
        %v1079 = vunpack.c.h.b16 %v883
        %v1080 = vunpack.c.l.b16 %v884
        %v1081 = vunpack.c.h.b16 %v884
        %v1082 = vunpack.c.l.b16 %v885
        %v1083 = vunpack.c.h.b16 %v885
        %v1084 = vpack.c.b16 %v958, %v956
        %v1085 = vpack.c.b16 %v959, %v957
        %v1086 = vpack.c.b16 %v962, %v960
        %v1087 = vpack.c.b16 %v963, %v961
        %v1088 = vpack.c.b16 %v966, %v964
        %v1089 = vpack.c.b16 %v967, %v965
        %v1090 = vpack.c.b16 %v970, %v968
        %v1091 = vpack.c.b16 %v971, %v969
        %v1092 = vpack.c.b16 %v974, %v972
        %v1093 = vpack.c.b16 %v975, %v973
        %v1094 = vpack.c.b16 %v978, %v976
        %v1095 = vpack.c.b16 %v979, %v977
        %v1096 = vpack.c.b16 %v982, %v980
        %v1097 = vpack.c.b16 %v983, %v981
        %v1098 = vpack.c.b16 %v986, %v984
        %v1099 = vpack.c.b16 %v987, %v985
        %v1100 = vpack.c.b16 %v990, %v988
        %v1101 = vpack.c.b16 %v991, %v989
        %v1102 = vpack.c.b16 %v994, %v992
        %v1103 = vpack.c.b16 %v995, %v993
        %v1104 = vpack.c.b16 %v998, %v996
        %v1105 = vpack.c.b16 %v999, %v997
        %v1106 = vpack.c.b16 %v1002, %v1000
        %v1107 = vpack.c.b16 %v1003, %v1001
        %v1108 = vpack.c.b16 %v1006, %v1004
        %v1109 = vpack.c.b16 %v1007, %v1005
        %v1110 = vpack.c.b16 %v1010, %v1008
        %v1111 = vpack.c.b16 %v1011, %v1009
        %v1112 = vpack.c.b16 %v1014, %v1012
        %v1113 = vpack.c.b16 %v1015, %v1013
        %v1114 = vpack.c.b16 %v1018, %v1016
        %v1115 = vpack.c.b16 %v1019, %v1017
        %v1116 = vpack.c.b16 %v1022, %v1020
        %v1117 = vpack.c.b16 %v1023, %v1021
        %v1118 = vpack.c.b16 %v1026, %v1024
        %v1119 = vpack.c.b16 %v1027, %v1025
        %v1120 = vpack.c.b16 %v1030, %v1028
        %v1121 = vpack.c.b16 %v1031, %v1029
        %v1122 = vpack.c.b16 %v1034, %v1032
        %v1123 = vpack.c.b16 %v1035, %v1033
        %v1124 = vpack.c.b16 %v1038, %v1036
        %v1125 = vpack.c.b16 %v1039, %v1037
        %v1126 = vpack.c.b16 %v1042, %v1040
        %v1127 = vpack.c.b16 %v1043, %v1041
        %v1128 = vpack.c.b16 %v1046, %v1044
        %v1129 = vpack.c.b16 %v1047, %v1045
        %v1130 = vpack.c.b16 %v1050, %v1048
        %v1131 = vpack.c.b16 %v1051, %v1049
        %v1132 = vpack.c.b16 %v1054, %v1052
        %v1133 = vpack.c.b16 %v1055, %v1053
        %v1134 = vpack.c.b16 %v1058, %v1056
        %v1135 = vpack.c.b16 %v1059, %v1057
        %v1136 = vpack.c.b16 %v1062, %v1060
        %v1137 = vpack.c.b16 %v1063, %v1061
        %v1138 = vpack.c.b16 %v1066, %v1064
        %v1139 = vpack.c.b16 %v1067, %v1065
        %v1140 = vpack.c.b16 %v1070, %v1068
        %v1141 = vpack.c.b16 %v1071, %v1069
        %v1142 = vpack.c.b16 %v1074, %v1072
        %v1143 = vpack.c.b16 %v1075, %v1073
        %v1144 = vpack.c.b16 %v1078, %v1076
        %v1145 = vpack.c.b16 %v1079, %v1077
        %v1146 = vpack.c.b16 %v1082, %v1080
        %v1147 = vpack.c.b16 %v1083, %v1081
        %1212 = vmatpush.bf16.msra.mxu0 %v1098
        %1213 = vmatpush.bf16.msra.mxu0 %v1096
        %1214 = vmatpush.bf16.msra.mxu0 %v1094
        %1215 = vmatpush.bf16.msra.mxu0 %v1092
        %1216 = vmatpush.bf16.msra.mxu0 %v1090
        %1217 = vmatpush.bf16.msra.mxu0 %v1088
        %1218 = vmatpush.bf16.msra.mxu0 %v1086
        %1219 = vmatpush.bf16.msra.mxu0 %v1084
        %1220 = vmatmul.bf16.gmra.mxu0 %v818
        %v1221 = vpop.f32.mrf.mxu0
        %v1222 = vadd.f32 %v888, %v1221
        %v1223 = vpop.f32.mrf.mxu0
        %v1224 = vadd.f32 %v888, %v1223
        %1225 = vdwg.mxu0
        %1226 = vmatpush.bf16.msra.mxu0 %v1114
        %1227 = vmatpush.bf16.msra.mxu0 %v1112
        %1228 = vmatpush.bf16.msra.mxu0 %v1110
        %1229 = vmatpush.bf16.msra.mxu0 %v1108
        %1230 = vmatpush.bf16.msra.mxu0 %v1106
        %1231 = vmatpush.bf16.msra.mxu0 %v1104
        %1232 = vmatpush.bf16.msra.mxu0 %v1102
        %1233 = vmatpush.bf16.msra.mxu0 %v1100
        %1234 = vmatmul.bf16.gmra.mxu0 %v819
        %v1235 = vpop.f32.mrf.mxu0
        %v1236 = vadd.f32 %v1222, %v1235
        %v1237 = vpop.f32.mrf.mxu0
        %v1238 = vadd.f32 %v1224, %v1237
        %1239 = vdwg.mxu0
        %1240 = vmatpush.bf16.msra.mxu0 %v1130
        %1241 = vmatpush.bf16.msra.mxu0 %v1128
        %1242 = vmatpush.bf16.msra.mxu0 %v1126
        %1243 = vmatpush.bf16.msra.mxu0 %v1124
        %1244 = vmatpush.bf16.msra.mxu0 %v1122
        %1245 = vmatpush.bf16.msra.mxu0 %v1120
        %1246 = vmatpush.bf16.msra.mxu0 %v1118
        %1247 = vmatpush.bf16.msra.mxu0 %v1116
        %1248 = vmatmul.bf16.gmra.mxu0 %v820
        %v1249 = vpop.f32.mrf.mxu0
        %v1250 = vadd.f32 %v1236, %v1249
        %v1251 = vpop.f32.mrf.mxu0
        %v1252 = vadd.f32 %v1238, %v1251
        %1253 = vdwg.mxu0
        %1254 = vmatpush.bf16.msra.mxu0 %v1146
        %1255 = vmatpush.bf16.msra.mxu0 %v1144
        %1256 = vmatpush.bf16.msra.mxu0 %v1142
        %1257 = vmatpush.bf16.msra.mxu0 %v1140
        %1258 = vmatpush.bf16.msra.mxu0 %v1138
        %1259 = vmatpush.bf16.msra.mxu0 %v1136
        %1260 = vmatpush.bf16.msra.mxu0 %v1134
        %1261 = vmatpush.bf16.msra.mxu0 %v1132
        %1262 = vmatmul.bf16.gmra.mxu0 %v821
        %v1263 = vpop.f32.mrf.mxu0
        %v1264 = vadd.f32 %v1250, %v1263
        %v1265 = vpop.f32.mrf.mxu0
        %v1266 = vadd.f32 %v1252, %v1265
        %1267 = vdwg.mxu0
        %1268 = vmatpush.bf16.msra.mxu0 %v1099
        %1269 = vmatpush.bf16.msra.mxu0 %v1097
        %1270 = vmatpush.bf16.msra.mxu0 %v1095
        %1271 = vmatpush.bf16.msra.mxu0 %v1093
        %1272 = vmatpush.bf16.msra.mxu0 %v1091
        %1273 = vmatpush.bf16.msra.mxu0 %v1089
        %1274 = vmatpush.bf16.msra.mxu0 %v1087
        %1275 = vmatpush.bf16.msra.mxu0 %v1085
        %1276 = vmatmul.bf16.gmra.mxu0 %v818
        %v1277 = vpop.f32.mrf.mxu0
        %v1278 = vadd.f32 %v889, %v1277
        %v1279 = vpop.f32.mrf.mxu0
        %v1280 = vadd.f32 %v889, %v1279
        %1281 = vdwg.mxu0
        %1282 = vmatpush.bf16.msra.mxu0 %v1115
        %1283 = vmatpush.bf16.msra.mxu0 %v1113
        %1284 = vmatpush.bf16.msra.mxu0 %v1111
        %1285 = vmatpush.bf16.msra.mxu0 %v1109
        %1286 = vmatpush.bf16.msra.mxu0 %v1107
        %1287 = vmatpush.bf16.msra.mxu0 %v1105
        %1288 = vmatpush.bf16.msra.mxu0 %v1103
        %1289 = vmatpush.bf16.msra.mxu0 %v1101
        %1290 = vmatmul.bf16.gmra.mxu0 %v819
        %v1291 = vpop.f32.mrf.mxu0
        %v1292 = vadd.f32 %v1278, %v1291
        %v1293 = vpop.f32.mrf.mxu0
        %v1294 = vadd.f32 %v1280, %v1293
        %1295 = vdwg.mxu0
        %1296 = vmatpush.bf16.msra.mxu0 %v1131
        %1297 = vmatpush.bf16.msra.mxu0 %v1129
        %1298 = vmatpush.bf16.msra.mxu0 %v1127
        %1299 = vmatpush.bf16.msra.mxu0 %v1125
        %1300 = vmatpush.bf16.msra.mxu0 %v1123
        %1301 = vmatpush.bf16.msra.mxu0 %v1121
        %1302 = vmatpush.bf16.msra.mxu0 %v1119
        %1303 = vmatpush.bf16.msra.mxu0 %v1117
        %1304 = vmatmul.bf16.gmra.mxu0 %v820
        %v1305 = vpop.f32.mrf.mxu0
        %v1306 = vadd.f32 %v1292, %v1305
        %v1307 = vpop.f32.mrf.mxu0
        %v1308 = vadd.f32 %v1294, %v1307
        %1309 = vdwg.mxu0
        %1310 = vmatpush.bf16.msra.mxu0 %v1147
        %1311 = vmatpush.bf16.msra.mxu0 %v1145
        %1312 = vmatpush.bf16.msra.mxu0 %v1143
        %1313 = vmatpush.bf16.msra.mxu0 %v1141
        %1314 = vmatpush.bf16.msra.mxu0 %v1139
        %1315 = vmatpush.bf16.msra.mxu0 %v1137
        %1316 = vmatpush.bf16.msra.mxu0 %v1135
        %1317 = vmatpush.bf16.msra.mxu0 %v1133
        %1318 = vmatmul.bf16.gmra.mxu0 %v821
        %v1319 = vpop.f32.mrf.mxu0
        %v1320 = vadd.f32 %v1306, %v1319
        %v1321 = vpop.f32.mrf.mxu0
        %v1322 = vadd.f32 %v1308, %v1321
        %1323 = vdwg.mxu0
        %v1324 = vmax.f32 %v1264, 0.0
        %v1325 = vmax.f32 %v1320, 0.0
        %v1326 = vmax.f32 %v1266, 0.0
        %v1327 = vmax.f32 %v1322, 0.0
        %v1328 = vpack.c.bf16 %v1326, %v1324
        %v1329 = vpack.c.bf16 %v1327, %v1325
        %v1330 = vld [vmem:[%s5] sm:$0xf]
        %v1331 = vld [vmem:[%s5 + $0x4] sm:$0xf]
        %v1332 = vld [vmem:[%s5 + $0x8] sm:$0xf]
        %v1333 = vld [vmem:[%s5 + $0xc] sm:$0xf]
        %v1334 = vld [vmem:[%s5 + $0x10] sm:$0xf]
        %v1335 = vld [vmem:[%s5 + $0x14] sm:$0xf]
        %v1336 = vld [vmem:[%s5 + $0x18] sm:$0xf]
        %v1337 = vld [vmem:[%s5 + $0x1c] sm:$0xf]
        %v1338 = vld [vmem:[%s5 + $0x20] sm:$0xf]
        %v1339 = vld [vmem:[%s5 + $0x24] sm:$0xf]
        %v1340 = vld [vmem:[%s5 + $0x28] sm:$0xf]
        %v1341 = vld [vmem:[%s5 + $0x2c] sm:$0xf]
        %v1342 = vld [vmem:[%s5 + $0x30] sm:$0xf]
        %v1343 = vld [vmem:[%s5 + $0x34] sm:$0xf]
        %v1344 = vld [vmem:[%s5 + $0x38] sm:$0xf]
        %v1345 = vld [vmem:[%s5 + $0x3c] sm:$0xf]
        %v1346 = vld [vmem:[%s5 + $0x40] sm:$0xf]
        %v1347 = vld [vmem:[%s5 + $0x44] sm:$0xf]
        %v1348 = vld [vmem:[%s5 + $0x48] sm:$0xf]
        %v1349 = vld [vmem:[%s5 + $0x4c] sm:$0xf]
        %v1350 = vld [vmem:[%s5 + $0x50] sm:$0xf]
        %v1351 = vld [vmem:[%s5 + $0x54] sm:$0xf]
        %v1352 = vld [vmem:[%s5 + $0x58] sm:$0xf]
        %v1353 = vld [vmem:[%s5 + $0x5c] sm:$0xf]
        %v1354 = vld [vmem:[%s5 + $0x60] sm:$0xf]
        %v1355 = vld [vmem:[%s5 + $0x64] sm:$0xf]
        %v1356 = vld [vmem:[%s5 + $0x68] sm:$0xf]
        %v1357 = vld [vmem:[%s5 + $0x6c] sm:$0xf]
        %v1358 = vld [vmem:[%s5 + $0x70] sm:$0xf]
        %v1359 = vld [vmem:[%s5 + $0x74] sm:$0xf]
        %v1360 = vld [vmem:[%s5 + $0x78] sm:$0xf]
        %v1361 = vld [vmem:[%s5 + $0x7c] sm:$0xf]
        %v1362 = vld [vmem:[%s6] sm:$0x1]
        %v1364 = vperm.slane %v1362, 0
        %v1398 = vunpack.c.l.b16 %v1330
        %v1399 = vunpack.c.l.b16 %v1331
        %v1400 = vunpack.c.l.b16 %v1332
        %v1401 = vunpack.c.l.b16 %v1333
        %v1402 = vunpack.c.l.b16 %v1334
        %v1403 = vunpack.c.l.b16 %v1335
        %v1404 = vunpack.c.l.b16 %v1336
        %v1405 = vunpack.c.l.b16 %v1337
        %v1406 = vunpack.c.l.b16 %v1338
        %v1407 = vunpack.c.l.b16 %v1339
        %v1408 = vunpack.c.l.b16 %v1340
        %v1409 = vunpack.c.l.b16 %v1341
        %v1410 = vunpack.c.l.b16 %v1342
        %v1411 = vunpack.c.l.b16 %v1343
        %v1412 = vunpack.c.l.b16 %v1344
        %v1413 = vunpack.c.l.b16 %v1345
        %v1414 = vunpack.c.l.b16 %v1346
        %v1415 = vunpack.c.l.b16 %v1347
        %v1416 = vunpack.c.l.b16 %v1348
        %v1417 = vunpack.c.l.b16 %v1349
        %v1418 = vunpack.c.l.b16 %v1350
        %v1419 = vunpack.c.l.b16 %v1351
        %v1420 = vunpack.c.l.b16 %v1352
        %v1421 = vunpack.c.l.b16 %v1353
        %v1422 = vunpack.c.l.b16 %v1354
        %v1423 = vunpack.c.l.b16 %v1355
        %v1424 = vunpack.c.l.b16 %v1356
        %v1425 = vunpack.c.l.b16 %v1357
        %v1426 = vunpack.c.l.b16 %v1358
        %v1427 = vunpack.c.l.b16 %v1359
        %v1428 = vunpack.c.l.b16 %v1360
        %v1429 = vunpack.c.l.b16 %v1361
        %v1430 = vpack.c.b16 %v1399, %v1398
        %v1431 = vpack.c.b16 %v1401, %v1400
        %v1432 = vpack.c.b16 %v1403, %v1402
        %v1433 = vpack.c.b16 %v1405, %v1404
        %v1434 = vpack.c.b16 %v1407, %v1406
        %v1435 = vpack.c.b16 %v1409, %v1408
        %v1436 = vpack.c.b16 %v1411, %v1410
        %v1437 = vpack.c.b16 %v1413, %v1412
        %v1438 = vpack.c.b16 %v1415, %v1414
        %v1439 = vpack.c.b16 %v1417, %v1416
        %v1440 = vpack.c.b16 %v1419, %v1418
        %v1441 = vpack.c.b16 %v1421, %v1420
        %v1442 = vpack.c.b16 %v1423, %v1422
        %v1443 = vpack.c.b16 %v1425, %v1424
        %v1444 = vpack.c.b16 %v1427, %v1426
        %v1445 = vpack.c.b16 %v1429, %v1428
        %1462 = vmatpush.bf16.msra.mxu0 %v1437
        %1463 = vmatpush.bf16.msra.mxu0 %v1436
        %1464 = vmatpush.bf16.msra.mxu0 %v1435
        %1465 = vmatpush.bf16.msra.mxu0 %v1434
        %1466 = vmatpush.bf16.msra.mxu0 %v1433
        %1467 = vmatpush.bf16.msra.mxu0 %v1432
        %1468 = vmatpush.bf16.msra.mxu0 %v1431
        %1469 = vmatpush.bf16.msra.mxu0 %v1430
        %1470 = vmatmul.bf16.gmra.mxu0 %v1328
        %v1471 = vpop.f32.mrf.mxu0
        %v1472 = vadd.f32 %v1364, %v1471
        %v1473 = vpop.f32.mrf.mxu0
        %v1474 = vadd.f32 %v1364, %v1473
        %1475 = vdwg.mxu0
        %1476 = vmatpush.bf16.msra.mxu0 %v1445
        %1477 = vmatpush.bf16.msra.mxu0 %v1444
        %1478 = vmatpush.bf16.msra.mxu0 %v1443
        %1479 = vmatpush.bf16.msra.mxu0 %v1442
        %1480 = vmatpush.bf16.msra.mxu0 %v1441
        %1481 = vmatpush.bf16.msra.mxu0 %v1440
        %1482 = vmatpush.bf16.msra.mxu0 %v1439
        %1483 = vmatpush.bf16.msra.mxu0 %v1438
        %1484 = vmatmul.bf16.gmra.mxu0 %v1329
        %v1485 = vpop.f32.mrf.mxu0
        %v1486 = vadd.f32 %v1472, %v1485
        %v1487 = vpop.f32.mrf.mxu0
        %v1488 = vadd.f32 %v1474, %v1487
        %1489 = vdwg.mxu0
        %v1490 = vmax.f32 %v1486, 0.0
        %v1491 = vmax.f32 %v1488, 0.0
        %v1492 = vpack.c.bf16 %v1491, %v1490
        %v1493 = vld [vmem:[#allocation6] sm:$0xff]
        %v1494 = vld [vmem:[#allocation6 + $0x8] sm:$0xf]
        %v1495 = vld [vmem:[#allocation6 + $0xc] sm:$0xff]
        %v1496 = vld [vmem:[#allocation6 + $0x14] sm:$0xf]
        %v1497 = vld [vmem:[#allocation6 + $0x18] sm:$0xff]
        %v1498 = vld [vmem:[#allocation6 + $0x20] sm:$0xf]
        %v1499 = vld [vmem:[#allocation6 + $0x24] sm:$0xff]
        %v1500 = vld [vmem:[#allocation6 + $0x2c] sm:$0xf]
        %v1501 = vld [vmem:[#allocation6 + $0x30] sm:$0xff]
        %v1502 = vld [vmem:[#allocation6 + $0x38] sm:$0xf]
        %v1503 = vld [vmem:[#allocation6 + $0x3c] sm:$0xff]
        %v1504 = vld [vmem:[#allocation6 + $0x44] sm:$0xf]
        %v1505 = vld [vmem:[#allocation6 + $0x48] sm:$0xff]
        %v1506 = vld [vmem:[#allocation6 + $0x50] sm:$0xf]
        %v1507 = vld [vmem:[#allocation6 + $0x54] sm:$0xff]
        %v1508 = vld [vmem:[#allocation6 + $0x5c] sm:$0xf]
        %v1509 = vld [vmem:[#allocation6 + $0x60] sm:$0xff]
        %v1510 = vld [vmem:[#allocation6 + $0x68] sm:$0xf]
        %v1511 = vld [vmem:[#allocation6 + $0x6c] sm:$0xff]
        %v1512 = vld [vmem:[#allocation6 + $0x74] sm:$0xf]
        %v1513 = vld [vmem:[#allocation6 + $0x78] sm:$0xff]
        %v1514 = vld [vmem:[#allocation6 + $0x80] sm:$0xf]
        %v1515 = vld [vmem:[#allocation6 + $0x84] sm:$0xff]
        %v1516 = vld [vmem:[#allocation6 + $0x8c] sm:$0xf]
        %v1517 = vld [vmem:[#allocation6 + $0x90] sm:$0xff]
        %v1518 = vld [vmem:[#allocation6 + $0x98] sm:$0xf]
        %v1519 = vld [vmem:[#allocation6 + $0x9c] sm:$0xff]
        %v1520 = vld [vmem:[#allocation6 + $0xa4] sm:$0xf]
        %v1521 = vld [vmem:[#allocation6 + $0xa8] sm:$0xff]
        %v1522 = vld [vmem:[#allocation6 + $0xb0] sm:$0xf]
        %v1523 = vld [vmem:[#allocation6 + $0xb4] sm:$0xff]
        %v1524 = vld [vmem:[#allocation6 + $0xbc] sm:$0xf]
        %v1525 = vld [vmem:[%s8] sm:$0x7]
        %v1527 = vperm.slane %v1525, 0
        %v1528 = vperm.slane %v1525, 1
        %v1529 = vperm.slane %v1525, 2
        %v1565 = vunpack.c.l.b16 %v1493
        %v1566 = vunpack.c.h.b16 %v1493
        %v1567 = vunpack.c.l.b16 %v1494
        %v1568 = vunpack.c.l.b16 %v1495
        %v1569 = vunpack.c.h.b16 %v1495
        %v1570 = vunpack.c.l.b16 %v1496
        %v1571 = vunpack.c.l.b16 %v1497
        %v1572 = vunpack.c.h.b16 %v1497
        %v1573 = vunpack.c.l.b16 %v1498
        %v1574 = vunpack.c.l.b16 %v1499
        %v1575 = vunpack.c.h.b16 %v1499
        %v1576 = vunpack.c.l.b16 %v1500
        %v1577 = vunpack.c.l.b16 %v1501
        %v1578 = vunpack.c.h.b16 %v1501
        %v1579 = vunpack.c.l.b16 %v1502
        %v1580 = vunpack.c.l.b16 %v1503
        %v1581 = vunpack.c.h.b16 %v1503
        %v1582 = vunpack.c.l.b16 %v1504
        %v1583 = vunpack.c.l.b16 %v1505
        %v1584 = vunpack.c.h.b16 %v1505
        %v1585 = vunpack.c.l.b16 %v1506
        %v1586 = vunpack.c.l.b16 %v1507
        %v1587 = vunpack.c.h.b16 %v1507
        %v1588 = vunpack.c.l.b16 %v1508
        %v1589 = vunpack.c.l.b16 %v1509
        %v1590 = vunpack.c.h.b16 %v1509
        %v1591 = vunpack.c.l.b16 %v1510
        %v1592 = vunpack.c.l.b16 %v1511
        %v1593 = vunpack.c.h.b16 %v1511
        %v1594 = vunpack.c.l.b16 %v1512
        %v1595 = vunpack.c.l.b16 %v1513
        %v1596 = vunpack.c.h.b16 %v1513
        %v1597 = vunpack.c.l.b16 %v1514
        %v1598 = vunpack.c.l.b16 %v1515
        %v1599 = vunpack.c.h.b16 %v1515
        %v1600 = vunpack.c.l.b16 %v1516
        %v1601 = vunpack.c.l.b16 %v1517
        %v1602 = vunpack.c.h.b16 %v1517
        %v1603 = vunpack.c.l.b16 %v1518
        %v1604 = vunpack.c.l.b16 %v1519
        %v1605 = vunpack.c.h.b16 %v1519
        %v1606 = vunpack.c.l.b16 %v1520
        %v1607 = vunpack.c.l.b16 %v1521
        %v1608 = vunpack.c.h.b16 %v1521
        %v1609 = vunpack.c.l.b16 %v1522
        %v1610 = vunpack.c.l.b16 %v1523
        %v1611 = vunpack.c.h.b16 %v1523
        %v1612 = vunpack.c.l.b16 %v1524
        %v1613 = vpack.c.b16 %v1568, %v1565
        %v1614 = vpack.c.b16 %v1569, %v1566
        %v1615 = vpack.c.b16 %v1570, %v1567
        %v1616 = vpack.c.b16 %v1574, %v1571
        %v1617 = vpack.c.b16 %v1575, %v1572
        %v1618 = vpack.c.b16 %v1576, %v1573
        %v1619 = vpack.c.b16 %v1580, %v1577
        %v1620 = vpack.c.b16 %v1581, %v1578
        %v1621 = vpack.c.b16 %v1582, %v1579
        %v1622 = vpack.c.b16 %v1586, %v1583
        %v1623 = vpack.c.b16 %v1587, %v1584
        %v1624 = vpack.c.b16 %v1588, %v1585
        %v1625 = vpack.c.b16 %v1592, %v1589
        %v1626 = vpack.c.b16 %v1593, %v1590
        %v1627 = vpack.c.b16 %v1594, %v1591
        %v1628 = vpack.c.b16 %v1598, %v1595
        %v1629 = vpack.c.b16 %v1599, %v1596
        %v1630 = vpack.c.b16 %v1600, %v1597
        %v1631 = vpack.c.b16 %v1604, %v1601
        %v1632 = vpack.c.b16 %v1605, %v1602
        %v1633 = vpack.c.b16 %v1606, %v1603
        %v1634 = vpack.c.b16 %v1610, %v1607
        %v1635 = vpack.c.b16 %v1611, %v1608
        %v1636 = vpack.c.b16 %v1612, %v1609
        %1661 = vmatpush.bf16.msra.mxu0 %v1634
        %1662 = vmatpush.bf16.msra.mxu0 %v1631
        %1663 = vmatpush.bf16.msra.mxu0 %v1628
        %1664 = vmatpush.bf16.msra.mxu0 %v1625
        %1665 = vmatpush.bf16.msra.mxu0 %v1622
        %1666 = vmatpush.bf16.msra.mxu0 %v1619
        %1667 = vmatpush.bf16.msra.mxu0 %v1616
        %1668 = vmatpush.bf16.msra.mxu0 %v1613
        %1669 = vmatmul.bf16.gmra.mxu0 %v1492
        %v1670 = vpop.f32.mrf.mxu0
        %v1671 = vadd.f32 %v1527, %v1670
        %v1672 = vpop.f32.mrf.mxu0
        %v1673 = vadd.f32 %v1527, %v1672
        %1674 = vdwg.mxu0
        %1675 = vmatpush.bf16.msra.mxu0 %v1635
        %1676 = vmatpush.bf16.msra.mxu0 %v1632
        %1677 = vmatpush.bf16.msra.mxu0 %v1629
        %1678 = vmatpush.bf16.msra.mxu0 %v1626
        %1679 = vmatpush.bf16.msra.mxu0 %v1623
        %1680 = vmatpush.bf16.msra.mxu0 %v1620
        %1681 = vmatpush.bf16.msra.mxu0 %v1617
        %1682 = vmatpush.bf16.msra.mxu0 %v1614
        %1683 = vmatmul.bf16.gmra.mxu0 %v1492
        %v1684 = vpop.f32.mrf.mxu0
        %v1685 = vadd.f32 %v1528, %v1684
        %v1686 = vpop.f32.mrf.mxu0
        %v1687 = vadd.f32 %v1528, %v1686
        %1688 = vdwg.mxu0
        %1689 = vmatpush.bf16.msra.mxu0 %v1636
        %1690 = vmatpush.bf16.msra.mxu0 %v1633
        %1691 = vmatpush.bf16.msra.mxu0 %v1630
        %1692 = vmatpush.bf16.msra.mxu0 %v1627
        %1693 = vmatpush.bf16.msra.mxu0 %v1624
        %1694 = vmatpush.bf16.msra.mxu0 %v1621
        %1695 = vmatpush.bf16.msra.mxu0 %v1618
        %1696 = vmatpush.bf16.msra.mxu0 %v1615
        %1697 = vmatmul.bf16.gmra.mxu0 %v1492
        %v1698 = vpop.f32.mrf.mxu0
        %v1699 = vadd.f32 %v1529, %v1698
        %v1700 = vpop.f32.mrf.mxu0
        %v1701 = vadd.f32 %v1529, %v1700
        %1702 = vdwg.mxu0
        %v1703 = vmax.f32 %v1671, 0.0
        %v1704 = vmax.f32 %v1685, 0.0
        %v1705 = vmax.f32 %v1699, 0.0
        %v1706 = vmax.f32 %v1673, 0.0
        %v1707 = vmax.f32 %v1687, 0.0
        %v1708 = vmax.f32 %v1701, 0.0
        %v1709 = vpack.c.bf16 %v1706, %v1703
        %v1710 = vpack.c.bf16 %v1707, %v1704
        %v1711 = vpack.c.bf16 %v1708, %v1705
        %v1712 = vld [vmem:[#allocation7] sm:$0xff]
        %v1713 = vld [vmem:[#allocation7 + $0x8] sm:$0xff]
        %v1714 = vld [vmem:[#allocation7 + $0x10] sm:$0xff]
        %v1715 = vld [vmem:[#allocation7 + $0x18] sm:$0xff]
        %v1716 = vld [vmem:[#allocation7 + $0x20] sm:$0xff]
        %v1717 = vld [vmem:[#allocation7 + $0x28] sm:$0xff]
        %v1718 = vld [vmem:[#allocation7 + $0x30] sm:$0xff]
        %v1719 = vld [vmem:[#allocation7 + $0x38] sm:$0xff]
        %v1720 = vld [vmem:[#allocation7 + $0x40] sm:$0xff]
        %v1721 = vld [vmem:[#allocation7 + $0x48] sm:$0xff]
        %v1722 = vld [vmem:[#allocation7 + $0x50] sm:$0xff]
        %v1723 = vld [vmem:[#allocation7 + $0x58] sm:$0xff]
        %v1724 = vld [vmem:[#allocation7 + $0x60] sm:$0xff]
        %v1725 = vld [vmem:[#allocation7 + $0x68] sm:$0xff]
        %v1726 = vld [vmem:[#allocation7 + $0x70] sm:$0xff]
        %v1727 = vld [vmem:[#allocation7 + $0x78] sm:$0xff]
        %v1728 = vld [vmem:[#allocation7 + $0x80] sm:$0xff]
        %v1729 = vld [vmem:[#allocation7 + $0x88] sm:$0xff]
        %v1730 = vld [vmem:[#allocation7 + $0x90] sm:$0xff]
        %v1731 = vld [vmem:[#allocation7 + $0x98] sm:$0xff]
        %v1732 = vld [vmem:[#allocation7 + $0xa0] sm:$0xff]
        %v1733 = vld [vmem:[#allocation7 + $0xa8] sm:$0xff]
        %v1734 = vld [vmem:[#allocation7 + $0xb0] sm:$0xff]
        %v1735 = vld [vmem:[#allocation7 + $0xb8] sm:$0xff]
        %v1736 = vld [vmem:[#allocation7 + $0xc0] sm:$0xff]
        %v1737 = vld [vmem:[#allocation7 + $0xc8] sm:$0xff]
        %v1738 = vld [vmem:[#allocation7 + $0xd0] sm:$0xff]
        %v1739 = vld [vmem:[#allocation7 + $0xd8] sm:$0xff]
        %v1740 = vld [vmem:[#allocation7 + $0xe0] sm:$0xff]
        %v1741 = vld [vmem:[#allocation7 + $0xe8] sm:$0xff]
        %v1742 = vld [vmem:[#allocation7 + $0xf0] sm:$0xff]
        %v1743 = vld [vmem:[#allocation7 + $0xf8] sm:$0xff]
        %v1744 = vld [vmem:[#allocation7 + $0x100] sm:$0xff]
        %v1745 = vld [vmem:[#allocation7 + $0x108] sm:$0xff]
        %v1746 = vld [vmem:[#allocation7 + $0x110] sm:$0xff]
        %v1747 = vld [vmem:[#allocation7 + $0x118] sm:$0xff]
        %v1748 = vld [vmem:[#allocation7 + $0x120] sm:$0xff]
        %v1749 = vld [vmem:[#allocation7 + $0x128] sm:$0xff]
        %v1750 = vld [vmem:[#allocation7 + $0x130] sm:$0xff]
        %v1751 = vld [vmem:[#allocation7 + $0x138] sm:$0xff]
        %v1752 = vld [vmem:[#allocation7 + $0x140] sm:$0xff]
        %v1753 = vld [vmem:[#allocation7 + $0x148] sm:$0xff]
        %v1754 = vld [vmem:[#allocation7 + $0x150] sm:$0xff]
        %v1755 = vld [vmem:[#allocation7 + $0x158] sm:$0xff]
        %v1756 = vld [vmem:[#allocation7 + $0x160] sm:$0xff]
        %v1757 = vld [vmem:[#allocation7 + $0x168] sm:$0xff]
        %v1758 = vld [vmem:[#allocation7 + $0x170] sm:$0xff]
        %v1759 = vld [vmem:[#allocation7 + $0x178] sm:$0xff]
        %v1760 = vld [vmem:[%s10] sm:$0x3]
        %v1762 = vperm.slane %v1760, 0
        %v1763 = vperm.slane %v1760, 1
        %v1814 = vunpack.c.l.b16 %v1712
        %v1815 = vunpack.c.h.b16 %v1712
        %v1816 = vunpack.c.l.b16 %v1713
        %v1817 = vunpack.c.h.b16 %v1713
        %v1818 = vunpack.c.l.b16 %v1714
        %v1819 = vunpack.c.h.b16 %v1714
        %v1820 = vunpack.c.l.b16 %v1715
        %v1821 = vunpack.c.h.b16 %v1715
        %v1822 = vunpack.c.l.b16 %v1716
        %v1823 = vunpack.c.h.b16 %v1716
        %v1824 = vunpack.c.l.b16 %v1717
        %v1825 = vunpack.c.h.b16 %v1717
        %v1826 = vunpack.c.l.b16 %v1718
        %v1827 = vunpack.c.h.b16 %v1718
        %v1828 = vunpack.c.l.b16 %v1719
        %v1829 = vunpack.c.h.b16 %v1719
        %v1830 = vunpack.c.l.b16 %v1720
        %v1831 = vunpack.c.h.b16 %v1720
        %v1832 = vunpack.c.l.b16 %v1721
        %v1833 = vunpack.c.h.b16 %v1721
        %v1834 = vunpack.c.l.b16 %v1722
        %v1835 = vunpack.c.h.b16 %v1722
        %v1836 = vunpack.c.l.b16 %v1723
        %v1837 = vunpack.c.h.b16 %v1723
        %v1838 = vunpack.c.l.b16 %v1724
        %v1839 = vunpack.c.h.b16 %v1724
        %v1840 = vunpack.c.l.b16 %v1725
        %v1841 = vunpack.c.h.b16 %v1725
        %v1842 = vunpack.c.l.b16 %v1726
        %v1843 = vunpack.c.h.b16 %v1726
        %v1844 = vunpack.c.l.b16 %v1727
        %v1845 = vunpack.c.h.b16 %v1727
        %v1846 = vunpack.c.l.b16 %v1728
        %v1847 = vunpack.c.h.b16 %v1728
        %v1848 = vunpack.c.l.b16 %v1729
        %v1849 = vunpack.c.h.b16 %v1729
        %v1850 = vunpack.c.l.b16 %v1730
        %v1851 = vunpack.c.h.b16 %v1730
        %v1852 = vunpack.c.l.b16 %v1731
        %v1853 = vunpack.c.h.b16 %v1731
        %v1854 = vunpack.c.l.b16 %v1732
        %v1855 = vunpack.c.h.b16 %v1732
        %v1856 = vunpack.c.l.b16 %v1733
        %v1857 = vunpack.c.h.b16 %v1733
        %v1858 = vunpack.c.l.b16 %v1734
        %v1859 = vunpack.c.h.b16 %v1734
        %v1860 = vunpack.c.l.b16 %v1735
        %v1861 = vunpack.c.h.b16 %v1735
        %v1862 = vunpack.c.l.b16 %v1736
        %v1863 = vunpack.c.h.b16 %v1736
        %v1864 = vunpack.c.l.b16 %v1737
        %v1865 = vunpack.c.h.b16 %v1737
        %v1866 = vunpack.c.l.b16 %v1738
        %v1867 = vunpack.c.h.b16 %v1738
        %v1868 = vunpack.c.l.b16 %v1739
        %v1869 = vunpack.c.h.b16 %v1739
        %v1870 = vunpack.c.l.b16 %v1740
        %v1871 = vunpack.c.h.b16 %v1740
        %v1872 = vunpack.c.l.b16 %v1741
        %v1873 = vunpack.c.h.b16 %v1741
        %v1874 = vunpack.c.l.b16 %v1742
        %v1875 = vunpack.c.h.b16 %v1742
        %v1876 = vunpack.c.l.b16 %v1743
        %v1877 = vunpack.c.h.b16 %v1743
        %v1878 = vunpack.c.l.b16 %v1744
        %v1879 = vunpack.c.h.b16 %v1744
        %v1880 = vunpack.c.l.b16 %v1745
        %v1881 = vunpack.c.h.b16 %v1745
        %v1882 = vunpack.c.l.b16 %v1746
        %v1883 = vunpack.c.h.b16 %v1746
        %v1884 = vunpack.c.l.b16 %v1747
        %v1885 = vunpack.c.h.b16 %v1747
        %v1886 = vunpack.c.l.b16 %v1748
        %v1887 = vunpack.c.h.b16 %v1748
        %v1888 = vunpack.c.l.b16 %v1749
        %v1889 = vunpack.c.h.b16 %v1749
        %v1890 = vunpack.c.l.b16 %v1750
        %v1891 = vunpack.c.h.b16 %v1750
        %v1892 = vunpack.c.l.b16 %v1751
        %v1893 = vunpack.c.h.b16 %v1751
        %v1894 = vunpack.c.l.b16 %v1752
        %v1895 = vunpack.c.h.b16 %v1752
        %v1896 = vunpack.c.l.b16 %v1753
        %v1897 = vunpack.c.h.b16 %v1753
        %v1898 = vunpack.c.l.b16 %v1754
        %v1899 = vunpack.c.h.b16 %v1754
        %v1900 = vunpack.c.l.b16 %v1755
        %v1901 = vunpack.c.h.b16 %v1755
        %v1902 = vunpack.c.l.b16 %v1756
        %v1903 = vunpack.c.h.b16 %v1756
        %v1904 = vunpack.c.l.b16 %v1757
        %v1905 = vunpack.c.h.b16 %v1757
        %v1906 = vunpack.c.l.b16 %v1758
        %v1907 = vunpack.c.h.b16 %v1758
        %v1908 = vunpack.c.l.b16 %v1759
        %v1909 = vunpack.c.h.b16 %v1759
        %v1910 = vpack.c.b16 %v1816, %v1814
        %v1911 = vpack.c.b16 %v1817, %v1815
        %v1912 = vpack.c.b16 %v1820, %v1818
        %v1913 = vpack.c.b16 %v1821, %v1819
        %v1914 = vpack.c.b16 %v1824, %v1822
        %v1915 = vpack.c.b16 %v1825, %v1823
        %v1916 = vpack.c.b16 %v1828, %v1826
        %v1917 = vpack.c.b16 %v1829, %v1827
        %v1918 = vpack.c.b16 %v1832, %v1830
        %v1919 = vpack.c.b16 %v1833, %v1831
        %v1920 = vpack.c.b16 %v1836, %v1834
        %v1921 = vpack.c.b16 %v1837, %v1835
        %v1922 = vpack.c.b16 %v1840, %v1838
        %v1923 = vpack.c.b16 %v1841, %v1839
        %v1924 = vpack.c.b16 %v1844, %v1842
        %v1925 = vpack.c.b16 %v1845, %v1843
        %v1926 = vpack.c.b16 %v1848, %v1846
        %v1927 = vpack.c.b16 %v1849, %v1847
        %v1928 = vpack.c.b16 %v1852, %v1850
        %v1929 = vpack.c.b16 %v1853, %v1851
        %v1930 = vpack.c.b16 %v1856, %v1854
        %v1931 = vpack.c.b16 %v1857, %v1855
        %v1932 = vpack.c.b16 %v1860, %v1858
        %v1933 = vpack.c.b16 %v1861, %v1859
        %v1934 = vpack.c.b16 %v1864, %v1862
        %v1935 = vpack.c.b16 %v1865, %v1863
        %v1936 = vpack.c.b16 %v1868, %v1866
        %v1937 = vpack.c.b16 %v1869, %v1867
        %v1938 = vpack.c.b16 %v1872, %v1870
        %v1939 = vpack.c.b16 %v1873, %v1871
        %v1940 = vpack.c.b16 %v1876, %v1874
        %v1941 = vpack.c.b16 %v1877, %v1875
        %v1942 = vpack.c.b16 %v1880, %v1878
        %v1943 = vpack.c.b16 %v1881, %v1879
        %v1944 = vpack.c.b16 %v1884, %v1882
        %v1945 = vpack.c.b16 %v1885, %v1883
        %v1946 = vpack.c.b16 %v1888, %v1886
        %v1947 = vpack.c.b16 %v1889, %v1887
        %v1948 = vpack.c.b16 %v1892, %v1890
        %v1949 = vpack.c.b16 %v1893, %v1891
        %v1950 = vpack.c.b16 %v1896, %v1894
        %v1951 = vpack.c.b16 %v1897, %v1895
        %v1952 = vpack.c.b16 %v1900, %v1898
        %v1953 = vpack.c.b16 %v1901, %v1899
        %v1954 = vpack.c.b16 %v1904, %v1902
        %v1955 = vpack.c.b16 %v1905, %v1903
        %v1956 = vpack.c.b16 %v1908, %v1906
        %v1957 = vpack.c.b16 %v1909, %v1907
        %2006 = vmatpush.bf16.msra.mxu0 %v1924
        %2007 = vmatpush.bf16.msra.mxu0 %v1922
        %2008 = vmatpush.bf16.msra.mxu0 %v1920
        %2009 = vmatpush.bf16.msra.mxu0 %v1918
        %2010 = vmatpush.bf16.msra.mxu0 %v1916
        %2011 = vmatpush.bf16.msra.mxu0 %v1914
        %2012 = vmatpush.bf16.msra.mxu0 %v1912
        %2013 = vmatpush.bf16.msra.mxu0 %v1910
        %2014 = vmatmul.bf16.gmra.mxu0 %v1709
        %v2015 = vpop.f32.mrf.mxu0
        %v2016 = vadd.f32 %v1762, %v2015
        %v2017 = vpop.f32.mrf.mxu0
        %v2018 = vadd.f32 %v1762, %v2017
        %2019 = vdwg.mxu0
        %2020 = vmatpush.bf16.msra.mxu0 %v1940
        %2021 = vmatpush.bf16.msra.mxu0 %v1938
        %2022 = vmatpush.bf16.msra.mxu0 %v1936
        %2023 = vmatpush.bf16.msra.mxu0 %v1934
        %2024 = vmatpush.bf16.msra.mxu0 %v1932
        %2025 = vmatpush.bf16.msra.mxu0 %v1930
        %2026 = vmatpush.bf16.msra.mxu0 %v1928
        %2027 = vmatpush.bf16.msra.mxu0 %v1926
        %2028 = vmatmul.bf16.gmra.mxu0 %v1710
        %v2029 = vpop.f32.mrf.mxu0
        %v2030 = vadd.f32 %v2016, %v2029
        %v2031 = vpop.f32.mrf.mxu0
        %v2032 = vadd.f32 %v2018, %v2031
        %2033 = vdwg.mxu0
        %2034 = vmatpush.bf16.msra.mxu0 %v1956
        %2035 = vmatpush.bf16.msra.mxu0 %v1954
        %2036 = vmatpush.bf16.msra.mxu0 %v1952
        %2037 = vmatpush.bf16.msra.mxu0 %v1950
        %2038 = vmatpush.bf16.msra.mxu0 %v1948
        %2039 = vmatpush.bf16.msra.mxu0 %v1946
        %2040 = vmatpush.bf16.msra.mxu0 %v1944
        %2041 = vmatpush.bf16.msra.mxu0 %v1942
        %2042 = vmatmul.bf16.gmra.mxu0 %v1711
        %v2043 = vpop.f32.mrf.mxu0
        %v2044 = vadd.f32 %v2030, %v2043
        %v2045 = vpop.f32.mrf.mxu0
        %v2046 = vadd.f32 %v2032, %v2045
        %2047 = vdwg.mxu0
        %2048 = vmatpush.bf16.msra.mxu0 %v1925
        %2049 = vmatpush.bf16.msra.mxu0 %v1923
        %2050 = vmatpush.bf16.msra.mxu0 %v1921
        %2051 = vmatpush.bf16.msra.mxu0 %v1919
        %2052 = vmatpush.bf16.msra.mxu0 %v1917
        %2053 = vmatpush.bf16.msra.mxu0 %v1915
        %2054 = vmatpush.bf16.msra.mxu0 %v1913
        %2055 = vmatpush.bf16.msra.mxu0 %v1911
        %2056 = vmatmul.bf16.gmra.mxu0 %v1709
        %v2057 = vpop.f32.mrf.mxu0
        %v2058 = vadd.f32 %v1763, %v2057
        %v2059 = vpop.f32.mrf.mxu0
        %v2060 = vadd.f32 %v1763, %v2059
        %2061 = vdwg.mxu0
        %2062 = vmatpush.bf16.msra.mxu0 %v1941
        %2063 = vmatpush.bf16.msra.mxu0 %v1939
        %2064 = vmatpush.bf16.msra.mxu0 %v1937
        %2065 = vmatpush.bf16.msra.mxu0 %v1935
        %2066 = vmatpush.bf16.msra.mxu0 %v1933
        %2067 = vmatpush.bf16.msra.mxu0 %v1931
        %2068 = vmatpush.bf16.msra.mxu0 %v1929
        %2069 = vmatpush.bf16.msra.mxu0 %v1927
        %2070 = vmatmul.bf16.gmra.mxu0 %v1710
        %v2071 = vpop.f32.mrf.mxu0
        %v2072 = vadd.f32 %v2058, %v2071
        %v2073 = vpop.f32.mrf.mxu0
        %v2074 = vadd.f32 %v2060, %v2073
        %2075 = vdwg.mxu0
        %2076 = vmatpush.bf16.msra.mxu0 %v1957
        %2077 = vmatpush.bf16.msra.mxu0 %v1955
        %2078 = vmatpush.bf16.msra.mxu0 %v1953
        %2079 = vmatpush.bf16.msra.mxu0 %v1951
        %2080 = vmatpush.bf16.msra.mxu0 %v1949
        %2081 = vmatpush.bf16.msra.mxu0 %v1947
        %2082 = vmatpush.bf16.msra.mxu0 %v1945
        %2083 = vmatpush.bf16.msra.mxu0 %v1943
        %2084 = vmatmul.bf16.gmra.mxu0 %v1711
        %v2085 = vpop.f32.mrf.mxu0
        %v2086 = vadd.f32 %v2072, %v2085
        %v2087 = vpop.f32.mrf.mxu0
        %v2088 = vadd.f32 %v2074, %v2087
        %2089 = vdwg.mxu0
        %v2090 = vmax.f32 %v2044, 0.0
        %v2091 = vmax.f32 %v2086, 0.0
        %v2092 = vmax.f32 %v2046, 0.0
        %v2093 = vmax.f32 %v2088, 0.0
        %v2094 = vpack.c.bf16 %v2092, %v2090
        %v2095 = vpack.c.bf16 %v2093, %v2091
        %v2096 = vld [vmem:[#allocation9] sm:$0xf]
        %v2097 = vld [vmem:[#allocation9 + $0x4] sm:$0xf]
        %v2098 = vld [vmem:[#allocation9 + $0x8] sm:$0xf]
        %v2099 = vld [vmem:[#allocation9 + $0xc] sm:$0xf]
        %v2100 = vld [vmem:[#allocation9 + $0x10] sm:$0xf]
        %v2101 = vld [vmem:[#allocation9 + $0x14] sm:$0xf]
        %v2102 = vld [vmem:[#allocation9 + $0x18] sm:$0xf]
        %v2103 = vld [vmem:[#allocation9 + $0x1c] sm:$0xf]
        %v2104 = vld [vmem:[#allocation9 + $0x20] sm:$0xf]
        %v2105 = vld [vmem:[#allocation9 + $0x24] sm:$0xf]
        %v2106 = vld [vmem:[#allocation9 + $0x28] sm:$0xf]
        %v2107 = vld [vmem:[#allocation9 + $0x2c] sm:$0xf]
        %v2108 = vld [vmem:[#allocation9 + $0x30] sm:$0xf]
        %v2109 = vld [vmem:[#allocation9 + $0x34] sm:$0xf]
        %v2110 = vld [vmem:[#allocation9 + $0x38] sm:$0xf]
        %v2111 = vld [vmem:[#allocation9 + $0x3c] sm:$0xf]
        %v2112 = vld [vmem:[#allocation9 + $0x40] sm:$0xf]
        %v2113 = vld [vmem:[#allocation9 + $0x44] sm:$0xf]
        %v2114 = vld [vmem:[#allocation9 + $0x48] sm:$0xf]
        %v2115 = vld [vmem:[#allocation9 + $0x4c] sm:$0xf]
        %v2116 = vld [vmem:[#allocation9 + $0x50] sm:$0xf]
        %v2117 = vld [vmem:[#allocation9 + $0x54] sm:$0xf]
        %v2118 = vld [vmem:[#allocation9 + $0x58] sm:$0xf]
        %v2119 = vld [vmem:[#allocation9 + $0x5c] sm:$0xf]
        %v2120 = vld [vmem:[#allocation9 + $0x60] sm:$0xf]
        %v2121 = vld [vmem:[#allocation9 + $0x64] sm:$0xf]
        %v2122 = vld [vmem:[#allocation9 + $0x68] sm:$0xf]
        %v2123 = vld [vmem:[#allocation9 + $0x6c] sm:$0xf]
        %v2124 = vld [vmem:[#allocation9 + $0x70] sm:$0xf]
        %v2125 = vld [vmem:[#allocation9 + $0x74] sm:$0xf]
        %v2126 = vld [vmem:[#allocation9 + $0x78] sm:$0xf]
        %v2127 = vld [vmem:[#allocation9 + $0x7c] sm:$0xf]
        %v2128 = vld [vmem:[%s12] sm:$0x1]
        %v2130 = vperm.slane %v2128, 0
        %v2164 = vunpack.c.l.b16 %v2096
        %v2165 = vunpack.c.l.b16 %v2097
        %v2166 = vunpack.c.l.b16 %v2098
        %v2167 = vunpack.c.l.b16 %v2099
        %v2168 = vunpack.c.l.b16 %v2100
        %v2169 = vunpack.c.l.b16 %v2101
        %v2170 = vunpack.c.l.b16 %v2102
        %v2171 = vunpack.c.l.b16 %v2103
        %v2172 = vunpack.c.l.b16 %v2104
        %v2173 = vunpack.c.l.b16 %v2105
        %v2174 = vunpack.c.l.b16 %v2106
        %v2175 = vunpack.c.l.b16 %v2107
        %v2176 = vunpack.c.l.b16 %v2108
        %v2177 = vunpack.c.l.b16 %v2109
        %v2178 = vunpack.c.l.b16 %v2110
        %v2179 = vunpack.c.l.b16 %v2111
        %v2180 = vunpack.c.l.b16 %v2112
        %v2181 = vunpack.c.l.b16 %v2113
        %v2182 = vunpack.c.l.b16 %v2114
        %v2183 = vunpack.c.l.b16 %v2115
        %v2184 = vunpack.c.l.b16 %v2116
        %v2185 = vunpack.c.l.b16 %v2117
        %v2186 = vunpack.c.l.b16 %v2118
        %v2187 = vunpack.c.l.b16 %v2119
        %v2188 = vunpack.c.l.b16 %v2120
        %v2189 = vunpack.c.l.b16 %v2121
        %v2190 = vunpack.c.l.b16 %v2122
        %v2191 = vunpack.c.l.b16 %v2123
        %v2192 = vunpack.c.l.b16 %v2124
        %v2193 = vunpack.c.l.b16 %v2125
        %v2194 = vunpack.c.l.b16 %v2126
        %v2195 = vunpack.c.l.b16 %v2127
        %v2196 = vpack.c.b16 %v2165, %v2164
        %v2197 = vpack.c.b16 %v2167, %v2166
        %v2198 = vpack.c.b16 %v2169, %v2168
        %v2199 = vpack.c.b16 %v2171, %v2170
        %v2200 = vpack.c.b16 %v2173, %v2172
        %v2201 = vpack.c.b16 %v2175, %v2174
        %v2202 = vpack.c.b16 %v2177, %v2176
        %v2203 = vpack.c.b16 %v2179, %v2178
        %v2204 = vpack.c.b16 %v2181, %v2180
        %v2205 = vpack.c.b16 %v2183, %v2182
        %v2206 = vpack.c.b16 %v2185, %v2184
        %v2207 = vpack.c.b16 %v2187, %v2186
        %v2208 = vpack.c.b16 %v2189, %v2188
        %v2209 = vpack.c.b16 %v2191, %v2190
        %v2210 = vpack.c.b16 %v2193, %v2192
        %v2211 = vpack.c.b16 %v2195, %v2194
        %2228 = vmatpush.bf16.msra.mxu0 %v2203
        %2229 = vmatpush.bf16.msra.mxu0 %v2202
        %2230 = vmatpush.bf16.msra.mxu0 %v2201
        %2231 = vmatpush.bf16.msra.mxu0 %v2200
        %2232 = vmatpush.bf16.msra.mxu0 %v2199
        %2233 = vmatpush.bf16.msra.mxu0 %v2198
        %2234 = vmatpush.bf16.msra.mxu0 %v2197
        %2235 = vmatpush.bf16.msra.mxu0 %v2196
        %2236 = vmatmul.bf16.gmra.mxu0 %v2094
        %v2237 = vpop.f32.mrf.mxu0
        %v2238 = vadd.f32 %v2130, %v2237
        %v2239 = vpop.f32.mrf.mxu0
        %v2240 = vadd.f32 %v2130, %v2239
        %2241 = vdwg.mxu0
        %2242 = vmatpush.bf16.msra.mxu0 %v2211
        %2243 = vmatpush.bf16.msra.mxu0 %v2210
        %2244 = vmatpush.bf16.msra.mxu0 %v2209
        %2245 = vmatpush.bf16.msra.mxu0 %v2208
        %2246 = vmatpush.bf16.msra.mxu0 %v2207
        %2247 = vmatpush.bf16.msra.mxu0 %v2206
        %2248 = vmatpush.bf16.msra.mxu0 %v2205
        %2249 = vmatpush.bf16.msra.mxu0 %v2204
        %2250 = vmatmul.bf16.gmra.mxu0 %v2095
        %v2251 = vpop.f32.mrf.mxu0
        %v2252 = vadd.f32 %v2238, %v2251
        %v2253 = vpop.f32.mrf.mxu0
        %v2254 = vadd.f32 %v2240, %v2253
        %2255 = vdwg.mxu0
        %v2256 = vsel %vm531, %v2252, -1e+30
        %v2257 = vsel %vm531, %v2254, -1e+30
        %2258 = vmax.xlane.f32.xlu0 %v2256
        %v2259 = vpop.xlane.xlu0 %2258
        %2260 = vmax.xlane.f32.xlu0 %v2257
        %v2261 = vpop.xlane.xlu0 %2260
        %v2262 = vsel %vm531, %v2259, 0.0
        %v2263 = vsel %vm531, %v2261, 0.0
        %v2264 = vsel %vm534, %v2252, -1e+30
        %v2265 = vsel %vm534, %v2254, -1e+30
        %2266 = vmax.xlane.f32.xlu0 %v2264
        %v2267 = vpop.xlane.xlu0 %2266
        %2268 = vmax.xlane.f32.xlu0 %v2265
        %v2269 = vpop.xlane.xlu0 %2268
        %v2270 = vsel %vm534, %v2267, %v2262
        %v2271 = vsel %vm534, %v2269, %v2263
        %v2272 = vsel %vm537, %v2252, -1e+30
        %v2273 = vsel %vm537, %v2254, -1e+30
        %2274 = vmax.xlane.f32.xlu0 %v2272
        %v2275 = vpop.xlane.xlu0 %2274
        %2276 = vmax.xlane.f32.xlu0 %v2273
        %v2277 = vpop.xlane.xlu0 %2276
        %v2278 = vsel %vm537, %v2275, %v2270
        %v2279 = vsel %vm537, %v2277, %v2271
        %v2280 = vsel %vm540, %v2252, -1e+30
        %v2281 = vsel %vm540, %v2254, -1e+30
        %2282 = vmax.xlane.f32.xlu0 %v2280
        %v2283 = vpop.xlane.xlu0 %2282
        %2284 = vmax.xlane.f32.xlu0 %v2281
        %v2285 = vpop.xlane.xlu0 %2284
        %v2286 = vsel %vm540, %v2283, %v2278
        %v2287 = vsel %vm540, %v2285, %v2279
        %v2288 = vsel %vm543, %v2252, -1e+30
        %v2289 = vsel %vm543, %v2254, -1e+30
        %2290 = vmax.xlane.f32.xlu0 %v2288
        %v2291 = vpop.xlane.xlu0 %2290
        %2292 = vmax.xlane.f32.xlu0 %v2289
        %v2293 = vpop.xlane.xlu0 %2292
        %v2294 = vsel %vm543, %v2291, %v2286
        %v2295 = vsel %vm543, %v2293, %v2287
        %v2296 = vsub.f32 %v2252, %v2294
        %v2297 = vsub.f32 %v2254, %v2295
        %v2298 = vmul.f32 %v2296, 1.442695
        %v2299 = vpow.pop %v2298
        %v2300 = vmul.f32 %v2297, 1.442695
        %v2301 = vpow.pop %v2300
        %v2302 = vsel %vm531, %v2299, 0.0
        %v2303 = vsel %vm531, %v2301, 0.0
        %2304 = vadd.xlane.f32.xlu0 %v2302
        %v2305 = vpop.xlane.xlu0 %2304
        %2306 = vadd.xlane.f32.xlu0 %v2303
        %v2307 = vpop.xlane.xlu0 %2306
        %v2308 = vsel %vm531, %v2305, 1.0
        %v2309 = vsel %vm531, %v2307, 1.0
        %v2310 = vsel %vm534, %v2299, 0.0
        %v2311 = vsel %vm534, %v2301, 0.0
        %2312 = vadd.xlane.f32.xlu0 %v2310
        %v2313 = vpop.xlane.xlu0 %2312
        %2314 = vadd.xlane.f32.xlu0 %v2311
        %v2315 = vpop.xlane.xlu0 %2314
        %v2316 = vsel %vm534, %v2313, %v2308
        %v2317 = vsel %vm534, %v2315, %v2309
        %v2318 = vsel %vm537, %v2299, 0.0
        %v2319 = vsel %vm537, %v2301, 0.0
        %2320 = vadd.xlane.f32.xlu0 %v2318
        %v2321 = vpop.xlane.xlu0 %2320
        %2322 = vadd.xlane.f32.xlu0 %v2319
        %v2323 = vpop.xlane.xlu0 %2322
        %v2324 = vsel %vm537, %v2321, %v2316
        %v2325 = vsel %vm537, %v2323, %v2317
        %v2326 = vsel %vm540, %v2299, 0.0
        %v2327 = vsel %vm540, %v2301, 0.0
        %2328 = vadd.xlane.f32.xlu0 %v2326
        %v2329 = vpop.xlane.xlu0 %2328
        %2330 = vadd.xlane.f32.xlu0 %v2327
        %v2331 = vpop.xlane.xlu0 %2330
        %v2332 = vsel %vm540, %v2329, %v2324
        %v2333 = vsel %vm540, %v2331, %v2325
        %v2334 = vsel %vm543, %v2299, 0.0
        %v2335 = vsel %vm543, %v2301, 0.0
        %2336 = vadd.xlane.f32.xlu0 %v2334
        %v2337 = vpop.xlane.xlu0 %2336
        %2338 = vadd.xlane.f32.xlu0 %v2335
        %v2339 = vpop.xlane.xlu0 %2338
        %v2340 = vsel %vm543, %v2337, %v2332
        %v2341 = vsel %vm543, %v2339, %v2333
        %v2342 = vrcp.pop %v2340
        %v2343 = vrcp.pop %v2341
        %v2344 = vmul.f32 %v2340, %v2342
        %v2345 = vmul.f32 %v2341, %v2343
        %v2346 = vsub.f32 2.0, %v2344
        %v2347 = vsub.f32 2.0, %v2345
        %v2348 = vmul.f32 %v2342, %v2346
        %v2349 = vmul.f32 %v2343, %v2347
        %v2350 = vmul.f32 %v2299, %v2348
        %v2351 = vmul.f32 %v2301, %v2349
        %2352 = vst [vmem:[%s525] sm:$0xff] %v2350
        %2353 = vst [vmem:[%s525 + $0x8] sm:$0xff] %v2351
        %v2354 = vld [vmem:[%s519 + $0x8] sm:$0xf]
        %v2355 = vld [vmem:[%s519 + $0xc] sm:$0xf]
        %v2356 = vld [vmem:[#allocation2] sm:$0xff]
        %v2357 = vld [vmem:[#allocation2 + $0x8] sm:$0xff]
        %v2358 = vld [vmem:[#allocation2 + $0x10] sm:$0xff]
        %v2359 = vld [vmem:[#allocation2 + $0x18] sm:$0xff]
        %v2360 = vld [vmem:[#allocation2 + $0x20] sm:$0xff]
        %v2361 = vld [vmem:[#allocation2 + $0x28] sm:$0xff]
        %v2362 = vld [vmem:[#allocation2 + $0x30] sm:$0xff]
        %v2363 = vld [vmem:[#allocation2 + $0x38] sm:$0xff]
        %v2364 = vld [vmem:[#allocation2 + $0x40] sm:$0xff]
        %v2365 = vld [vmem:[#allocation2 + $0x48] sm:$0xff]
        %v2366 = vld [vmem:[#allocation2 + $0x50] sm:$0xff]
        %v2367 = vld [vmem:[#allocation2 + $0x58] sm:$0xff]
        %v2368 = vld [vmem:[#allocation2 + $0x60] sm:$0xff]
        %v2369 = vld [vmem:[#allocation2 + $0x68] sm:$0xff]
        %v2370 = vld [vmem:[#allocation2 + $0x70] sm:$0xff]
        %v2371 = vld [vmem:[#allocation2 + $0x78] sm:$0xff]
        %v2372 = vld [vmem:[#allocation2 + $0x80] sm:$0xff]
        %v2373 = vld [vmem:[#allocation2 + $0x88] sm:$0xff]
        %v2374 = vld [vmem:[#allocation2 + $0x90] sm:$0xff]
        %v2375 = vld [vmem:[#allocation2 + $0x98] sm:$0xff]
        %v2376 = vld [vmem:[#allocation2 + $0xa0] sm:$0xff]
        %v2377 = vld [vmem:[#allocation2 + $0xa8] sm:$0xff]
        %v2378 = vld [vmem:[#allocation2 + $0xb0] sm:$0xff]
        %v2379 = vld [vmem:[#allocation2 + $0xb8] sm:$0xff]
        %v2380 = vld [vmem:[#allocation2 + $0xc0] sm:$0xff]
        %v2381 = vld [vmem:[#allocation2 + $0xc8] sm:$0xff]
        %v2382 = vld [vmem:[#allocation2 + $0xd0] sm:$0xff]
        %v2383 = vld [vmem:[#allocation2 + $0xd8] sm:$0xff]
        %v2384 = vld [vmem:[#allocation2 + $0xe0] sm:$0xff]
        %v2385 = vld [vmem:[#allocation2 + $0xe8] sm:$0xff]
        %v2386 = vld [vmem:[#allocation2 + $0xf0] sm:$0xff]
        %v2387 = vld [vmem:[#allocation2 + $0xf8] sm:$0xff]
        %v2388 = vld [vmem:[%s2] sm:$0xf]
        %v2390 = vperm.slane %v2388, 0
        %v2391 = vperm.slane %v2388, 1
        %v2392 = vperm.slane %v2388, 2
        %v2393 = vperm.slane %v2388, 3
        %v2400 = vunpack.c.l.b16 %v2354
        %v2401 = vunpack.c.l.b16 %v2355
        %v2402 = vpack.c.b16 %v2401, %v2400
        %v2436 = vunpack.c.l.b16 %v2356
        %v2437 = vunpack.c.h.b16 %v2356
        %v2438 = vunpack.c.l.b16 %v2357
        %v2439 = vunpack.c.h.b16 %v2357
        %v2440 = vunpack.c.l.b16 %v2358
        %v2441 = vunpack.c.h.b16 %v2358
        %v2442 = vunpack.c.l.b16 %v2359
        %v2443 = vunpack.c.h.b16 %v2359
        %v2444 = vunpack.c.l.b16 %v2360
        %v2445 = vunpack.c.h.b16 %v2360
        %v2446 = vunpack.c.l.b16 %v2361
        %v2447 = vunpack.c.h.b16 %v2361
        %v2448 = vunpack.c.l.b16 %v2362
        %v2449 = vunpack.c.h.b16 %v2362
        %v2450 = vunpack.c.l.b16 %v2363
        %v2451 = vunpack.c.h.b16 %v2363
        %v2452 = vunpack.c.l.b16 %v2364
        %v2453 = vunpack.c.h.b16 %v2364
        %v2454 = vunpack.c.l.b16 %v2365
        %v2455 = vunpack.c.h.b16 %v2365
        %v2456 = vunpack.c.l.b16 %v2366
        %v2457 = vunpack.c.h.b16 %v2366
        %v2458 = vunpack.c.l.b16 %v2367
        %v2459 = vunpack.c.h.b16 %v2367
        %v2460 = vunpack.c.l.b16 %v2368
        %v2461 = vunpack.c.h.b16 %v2368
        %v2462 = vunpack.c.l.b16 %v2369
        %v2463 = vunpack.c.h.b16 %v2369
        %v2464 = vunpack.c.l.b16 %v2370
        %v2465 = vunpack.c.h.b16 %v2370
        %v2466 = vunpack.c.l.b16 %v2371
        %v2467 = vunpack.c.h.b16 %v2371
        %v2468 = vunpack.c.l.b16 %v2372
        %v2469 = vunpack.c.h.b16 %v2372
        %v2470 = vunpack.c.l.b16 %v2373
        %v2471 = vunpack.c.h.b16 %v2373
        %v2472 = vunpack.c.l.b16 %v2374
        %v2473 = vunpack.c.h.b16 %v2374
        %v2474 = vunpack.c.l.b16 %v2375
        %v2475 = vunpack.c.h.b16 %v2375
        %v2476 = vunpack.c.l.b16 %v2376
        %v2477 = vunpack.c.h.b16 %v2376
        %v2478 = vunpack.c.l.b16 %v2377
        %v2479 = vunpack.c.h.b16 %v2377
        %v2480 = vunpack.c.l.b16 %v2378
        %v2481 = vunpack.c.h.b16 %v2378
        %v2482 = vunpack.c.l.b16 %v2379
        %v2483 = vunpack.c.h.b16 %v2379
        %v2484 = vunpack.c.l.b16 %v2380
        %v2485 = vunpack.c.h.b16 %v2380
        %v2486 = vunpack.c.l.b16 %v2381
        %v2487 = vunpack.c.h.b16 %v2381
        %v2488 = vunpack.c.l.b16 %v2382
        %v2489 = vunpack.c.h.b16 %v2382
        %v2490 = vunpack.c.l.b16 %v2383
        %v2491 = vunpack.c.h.b16 %v2383
        %v2492 = vunpack.c.l.b16 %v2384
        %v2493 = vunpack.c.h.b16 %v2384
        %v2494 = vunpack.c.l.b16 %v2385
        %v2495 = vunpack.c.h.b16 %v2385
        %v2496 = vunpack.c.l.b16 %v2386
        %v2497 = vunpack.c.h.b16 %v2386
        %v2498 = vunpack.c.l.b16 %v2387
        %v2499 = vunpack.c.h.b16 %v2387
        %v2500 = vpack.c.b16 %v2440, %v2436
        %v2501 = vpack.c.b16 %v2441, %v2437
        %v2502 = vpack.c.b16 %v2442, %v2438
        %v2503 = vpack.c.b16 %v2443, %v2439
        %v2504 = vpack.c.b16 %v2448, %v2444
        %v2505 = vpack.c.b16 %v2449, %v2445
        %v2506 = vpack.c.b16 %v2450, %v2446
        %v2507 = vpack.c.b16 %v2451, %v2447
        %v2508 = vpack.c.b16 %v2456, %v2452
        %v2509 = vpack.c.b16 %v2457, %v2453
        %v2510 = vpack.c.b16 %v2458, %v2454
        %v2511 = vpack.c.b16 %v2459, %v2455
        %v2512 = vpack.c.b16 %v2464, %v2460
        %v2513 = vpack.c.b16 %v2465, %v2461
        %v2514 = vpack.c.b16 %v2466, %v2462
        %v2515 = vpack.c.b16 %v2467, %v2463
        %v2516 = vpack.c.b16 %v2472, %v2468
        %v2517 = vpack.c.b16 %v2473, %v2469
        %v2518 = vpack.c.b16 %v2474, %v2470
        %v2519 = vpack.c.b16 %v2475, %v2471
        %v2520 = vpack.c.b16 %v2480, %v2476
        %v2521 = vpack.c.b16 %v2481, %v2477
        %v2522 = vpack.c.b16 %v2482, %v2478
        %v2523 = vpack.c.b16 %v2483, %v2479
        %v2524 = vpack.c.b16 %v2488, %v2484
        %v2525 = vpack.c.b16 %v2489, %v2485
        %v2526 = vpack.c.b16 %v2490, %v2486
        %v2527 = vpack.c.b16 %v2491, %v2487
        %v2528 = vpack.c.b16 %v2496, %v2492
        %v2529 = vpack.c.b16 %v2497, %v2493
        %v2530 = vpack.c.b16 %v2498, %v2494
        %v2531 = vpack.c.b16 %v2499, %v2495
        %2564 = vmatpush.bf16.msra.mxu0 %v2528
        %2565 = vmatpush.bf16.msra.mxu0 %v2524
        %2566 = vmatpush.bf16.msra.mxu0 %v2520
        %2567 = vmatpush.bf16.msra.mxu0 %v2516
        %2568 = vmatpush.bf16.msra.mxu0 %v2512
        %2569 = vmatpush.bf16.msra.mxu0 %v2508
        %2570 = vmatpush.bf16.msra.mxu0 %v2504
        %2571 = vmatpush.bf16.msra.mxu0 %v2500
        %2572 = vmatmul.bf16.gmra.mxu0 %v2402
        %v2573 = vpop.f32.mrf.mxu0
        %v2574 = vadd.f32 %v2390, %v2573
        %v2575 = vpop.f32.mrf.mxu0
        %v2576 = vadd.f32 %v2390, %v2575
        %2577 = vdwg.mxu0
        %2578 = vmatpush.bf16.msra.mxu0 %v2529
        %2579 = vmatpush.bf16.msra.mxu0 %v2525
        %2580 = vmatpush.bf16.msra.mxu0 %v2521
        %2581 = vmatpush.bf16.msra.mxu0 %v2517
        %2582 = vmatpush.bf16.msra.mxu0 %v2513
        %2583 = vmatpush.bf16.msra.mxu0 %v2509
        %2584 = vmatpush.bf16.msra.mxu0 %v2505
        %2585 = vmatpush.bf16.msra.mxu0 %v2501
        %2586 = vmatmul.bf16.gmra.mxu0 %v2402
        %v2587 = vpop.f32.mrf.mxu0
        %v2588 = vadd.f32 %v2391, %v2587
        %v2589 = vpop.f32.mrf.mxu0
        %v2590 = vadd.f32 %v2391, %v2589
        %2591 = vdwg.mxu0
        %2592 = vmatpush.bf16.msra.mxu0 %v2530
        %2593 = vmatpush.bf16.msra.mxu0 %v2526
        %2594 = vmatpush.bf16.msra.mxu0 %v2522
        %2595 = vmatpush.bf16.msra.mxu0 %v2518
        %2596 = vmatpush.bf16.msra.mxu0 %v2514
        %2597 = vmatpush.bf16.msra.mxu0 %v2510
        %2598 = vmatpush.bf16.msra.mxu0 %v2506
        %2599 = vmatpush.bf16.msra.mxu0 %v2502
        %2600 = vmatmul.bf16.gmra.mxu0 %v2402
        %v2601 = vpop.f32.mrf.mxu0
        %v2602 = vadd.f32 %v2392, %v2601
        %v2603 = vpop.f32.mrf.mxu0
        %v2604 = vadd.f32 %v2392, %v2603
        %2605 = vdwg.mxu0
        %2606 = vmatpush.bf16.msra.mxu0 %v2531
        %2607 = vmatpush.bf16.msra.mxu0 %v2527
        %2608 = vmatpush.bf16.msra.mxu0 %v2523
        %2609 = vmatpush.bf16.msra.mxu0 %v2519
        %2610 = vmatpush.bf16.msra.mxu0 %v2515
        %2611 = vmatpush.bf16.msra.mxu0 %v2511
        %2612 = vmatpush.bf16.msra.mxu0 %v2507
        %2613 = vmatpush.bf16.msra.mxu0 %v2503
        %2614 = vmatmul.bf16.gmra.mxu0 %v2402
        %v2615 = vpop.f32.mrf.mxu0
        %v2616 = vadd.f32 %v2393, %v2615
        %v2617 = vpop.f32.mrf.mxu0
        %v2618 = vadd.f32 %v2393, %v2617
        %2619 = vdwg.mxu0
        %v2620 = vmax.f32 %v2574, 0.0
        %v2621 = vmax.f32 %v2588, 0.0
        %v2622 = vmax.f32 %v2602, 0.0
        %v2623 = vmax.f32 %v2616, 0.0
        %v2624 = vmax.f32 %v2576, 0.0
        %v2625 = vmax.f32 %v2590, 0.0
        %v2626 = vmax.f32 %v2604, 0.0
        %v2627 = vmax.f32 %v2618, 0.0
        %v2628 = vpack.c.bf16 %v2624, %v2620
        %v2629 = vpack.c.bf16 %v2625, %v2621
        %v2630 = vpack.c.bf16 %v2626, %v2622
        %v2631 = vpack.c.bf16 %v2627, %v2623
        %v2632 = vld [vmem:[#allocation4] sm:$0xff]
        %v2633 = vld [vmem:[#allocation4 + $0x8] sm:$0xff]
        %v2634 = vld [vmem:[#allocation4 + $0x10] sm:$0xff]
        %v2635 = vld [vmem:[#allocation4 + $0x18] sm:$0xff]
        %v2636 = vld [vmem:[#allocation4 + $0x20] sm:$0xff]
        %v2637 = vld [vmem:[#allocation4 + $0x28] sm:$0xff]
        %v2638 = vld [vmem:[#allocation4 + $0x30] sm:$0xff]
        %v2639 = vld [vmem:[#allocation4 + $0x38] sm:$0xff]
        %v2640 = vld [vmem:[#allocation4 + $0x40] sm:$0xff]
        %v2641 = vld [vmem:[#allocation4 + $0x48] sm:$0xff]
        %v2642 = vld [vmem:[#allocation4 + $0x50] sm:$0xff]
        %v2643 = vld [vmem:[#allocation4 + $0x58] sm:$0xff]
        %v2644 = vld [vmem:[#allocation4 + $0x60] sm:$0xff]
        %v2645 = vld [vmem:[#allocation4 + $0x68] sm:$0xff]
        %v2646 = vld [vmem:[#allocation4 + $0x70] sm:$0xff]
        %v2647 = vld [vmem:[#allocation4 + $0x78] sm:$0xff]
        %v2648 = vld [vmem:[#allocation4 + $0x80] sm:$0xff]
        %v2649 = vld [vmem:[#allocation4 + $0x88] sm:$0xff]
        %v2650 = vld [vmem:[#allocation4 + $0x90] sm:$0xff]
        %v2651 = vld [vmem:[#allocation4 + $0x98] sm:$0xff]
        %v2652 = vld [vmem:[#allocation4 + $0xa0] sm:$0xff]
        %v2653 = vld [vmem:[#allocation4 + $0xa8] sm:$0xff]
        %v2654 = vld [vmem:[#allocation4 + $0xb0] sm:$0xff]
        %v2655 = vld [vmem:[#allocation4 + $0xb8] sm:$0xff]
        %v2656 = vld [vmem:[#allocation4 + $0xc0] sm:$0xff]
        %v2657 = vld [vmem:[#allocation4 + $0xc8] sm:$0xff]
        %v2658 = vld [vmem:[#allocation4 + $0xd0] sm:$0xff]
        %v2659 = vld [vmem:[#allocation4 + $0xd8] sm:$0xff]
        %v2660 = vld [vmem:[#allocation4 + $0xe0] sm:$0xff]
        %v2661 = vld [vmem:[#allocation4 + $0xe8] sm:$0xff]
        %v2662 = vld [vmem:[#allocation4 + $0xf0] sm:$0xff]
        %v2663 = vld [vmem:[#allocation4 + $0xf8] sm:$0xff]
        %v2664 = vld [vmem:[#allocation4 + $0x100] sm:$0xff]
        %v2665 = vld [vmem:[#allocation4 + $0x108] sm:$0xff]
        %v2666 = vld [vmem:[#allocation4 + $0x110] sm:$0xff]
        %v2667 = vld [vmem:[#allocation4 + $0x118] sm:$0xff]
        %v2668 = vld [vmem:[#allocation4 + $0x120] sm:$0xff]
        %v2669 = vld [vmem:[#allocation4 + $0x128] sm:$0xff]
        %v2670 = vld [vmem:[#allocation4 + $0x130] sm:$0xff]
        %v2671 = vld [vmem:[#allocation4 + $0x138] sm:$0xff]
        %v2672 = vld [vmem:[#allocation4 + $0x140] sm:$0xff]
        %v2673 = vld [vmem:[#allocation4 + $0x148] sm:$0xff]
        %v2674 = vld [vmem:[#allocation4 + $0x150] sm:$0xff]
        %v2675 = vld [vmem:[#allocation4 + $0x158] sm:$0xff]
        %v2676 = vld [vmem:[#allocation4 + $0x160] sm:$0xff]
        %v2677 = vld [vmem:[#allocation4 + $0x168] sm:$0xff]
        %v2678 = vld [vmem:[#allocation4 + $0x170] sm:$0xff]
        %v2679 = vld [vmem:[#allocation4 + $0x178] sm:$0xff]
        %v2680 = vld [vmem:[#allocation4 + $0x180] sm:$0xff]
        %v2681 = vld [vmem:[#allocation4 + $0x188] sm:$0xff]
        %v2682 = vld [vmem:[#allocation4 + $0x190] sm:$0xff]
        %v2683 = vld [vmem:[#allocation4 + $0x198] sm:$0xff]
        %v2684 = vld [vmem:[#allocation4 + $0x1a0] sm:$0xff]
        %v2685 = vld [vmem:[#allocation4 + $0x1a8] sm:$0xff]
        %v2686 = vld [vmem:[#allocation4 + $0x1b0] sm:$0xff]
        %v2687 = vld [vmem:[#allocation4 + $0x1b8] sm:$0xff]
        %v2688 = vld [vmem:[#allocation4 + $0x1c0] sm:$0xff]
        %v2689 = vld [vmem:[#allocation4 + $0x1c8] sm:$0xff]
        %v2690 = vld [vmem:[#allocation4 + $0x1d0] sm:$0xff]
        %v2691 = vld [vmem:[#allocation4 + $0x1d8] sm:$0xff]
        %v2692 = vld [vmem:[#allocation4 + $0x1e0] sm:$0xff]
        %v2693 = vld [vmem:[#allocation4 + $0x1e8] sm:$0xff]
        %v2694 = vld [vmem:[#allocation4 + $0x1f0] sm:$0xff]
        %v2695 = vld [vmem:[#allocation4 + $0x1f8] sm:$0xff]
        %v2696 = vld [vmem:[%s4] sm:$0x3]
        %v2698 = vperm.slane %v2696, 0
        %v2699 = vperm.slane %v2696, 1
        %v2766 = vunpack.c.l.b16 %v2632
        %v2767 = vunpack.c.h.b16 %v2632
        %v2768 = vunpack.c.l.b16 %v2633
        %v2769 = vunpack.c.h.b16 %v2633
        %v2770 = vunpack.c.l.b16 %v2634
        %v2771 = vunpack.c.h.b16 %v2634
        %v2772 = vunpack.c.l.b16 %v2635
        %v2773 = vunpack.c.h.b16 %v2635
        %v2774 = vunpack.c.l.b16 %v2636
        %v2775 = vunpack.c.h.b16 %v2636
        %v2776 = vunpack.c.l.b16 %v2637
        %v2777 = vunpack.c.h.b16 %v2637
        %v2778 = vunpack.c.l.b16 %v2638
        %v2779 = vunpack.c.h.b16 %v2638
        %v2780 = vunpack.c.l.b16 %v2639
        %v2781 = vunpack.c.h.b16 %v2639
        %v2782 = vunpack.c.l.b16 %v2640
        %v2783 = vunpack.c.h.b16 %v2640
        %v2784 = vunpack.c.l.b16 %v2641
        %v2785 = vunpack.c.h.b16 %v2641
        %v2786 = vunpack.c.l.b16 %v2642
        %v2787 = vunpack.c.h.b16 %v2642
        %v2788 = vunpack.c.l.b16 %v2643
        %v2789 = vunpack.c.h.b16 %v2643
        %v2790 = vunpack.c.l.b16 %v2644
        %v2791 = vunpack.c.h.b16 %v2644
        %v2792 = vunpack.c.l.b16 %v2645
        %v2793 = vunpack.c.h.b16 %v2645
        %v2794 = vunpack.c.l.b16 %v2646
        %v2795 = vunpack.c.h.b16 %v2646
        %v2796 = vunpack.c.l.b16 %v2647
        %v2797 = vunpack.c.h.b16 %v2647
        %v2798 = vunpack.c.l.b16 %v2648
        %v2799 = vunpack.c.h.b16 %v2648
        %v2800 = vunpack.c.l.b16 %v2649
        %v2801 = vunpack.c.h.b16 %v2649
        %v2802 = vunpack.c.l.b16 %v2650
        %v2803 = vunpack.c.h.b16 %v2650
        %v2804 = vunpack.c.l.b16 %v2651
        %v2805 = vunpack.c.h.b16 %v2651
        %v2806 = vunpack.c.l.b16 %v2652
        %v2807 = vunpack.c.h.b16 %v2652
        %v2808 = vunpack.c.l.b16 %v2653
        %v2809 = vunpack.c.h.b16 %v2653
        %v2810 = vunpack.c.l.b16 %v2654
        %v2811 = vunpack.c.h.b16 %v2654
        %v2812 = vunpack.c.l.b16 %v2655
        %v2813 = vunpack.c.h.b16 %v2655
        %v2814 = vunpack.c.l.b16 %v2656
        %v2815 = vunpack.c.h.b16 %v2656
        %v2816 = vunpack.c.l.b16 %v2657
        %v2817 = vunpack.c.h.b16 %v2657
        %v2818 = vunpack.c.l.b16 %v2658
        %v2819 = vunpack.c.h.b16 %v2658
        %v2820 = vunpack.c.l.b16 %v2659
        %v2821 = vunpack.c.h.b16 %v2659
        %v2822 = vunpack.c.l.b16 %v2660
        %v2823 = vunpack.c.h.b16 %v2660
        %v2824 = vunpack.c.l.b16 %v2661
        %v2825 = vunpack.c.h.b16 %v2661
        %v2826 = vunpack.c.l.b16 %v2662
        %v2827 = vunpack.c.h.b16 %v2662
        %v2828 = vunpack.c.l.b16 %v2663
        %v2829 = vunpack.c.h.b16 %v2663
        %v2830 = vunpack.c.l.b16 %v2664
        %v2831 = vunpack.c.h.b16 %v2664
        %v2832 = vunpack.c.l.b16 %v2665
        %v2833 = vunpack.c.h.b16 %v2665
        %v2834 = vunpack.c.l.b16 %v2666
        %v2835 = vunpack.c.h.b16 %v2666
        %v2836 = vunpack.c.l.b16 %v2667
        %v2837 = vunpack.c.h.b16 %v2667
        %v2838 = vunpack.c.l.b16 %v2668
        %v2839 = vunpack.c.h.b16 %v2668
        %v2840 = vunpack.c.l.b16 %v2669
        %v2841 = vunpack.c.h.b16 %v2669
        %v2842 = vunpack.c.l.b16 %v2670
        %v2843 = vunpack.c.h.b16 %v2670
        %v2844 = vunpack.c.l.b16 %v2671
        %v2845 = vunpack.c.h.b16 %v2671
        %v2846 = vunpack.c.l.b16 %v2672
        %v2847 = vunpack.c.h.b16 %v2672
        %v2848 = vunpack.c.l.b16 %v2673
        %v2849 = vunpack.c.h.b16 %v2673
        %v2850 = vunpack.c.l.b16 %v2674
        %v2851 = vunpack.c.h.b16 %v2674
        %v2852 = vunpack.c.l.b16 %v2675
        %v2853 = vunpack.c.h.b16 %v2675
        %v2854 = vunpack.c.l.b16 %v2676
        %v2855 = vunpack.c.h.b16 %v2676
        %v2856 = vunpack.c.l.b16 %v2677
        %v2857 = vunpack.c.h.b16 %v2677
        %v2858 = vunpack.c.l.b16 %v2678
        %v2859 = vunpack.c.h.b16 %v2678
        %v2860 = vunpack.c.l.b16 %v2679
        %v2861 = vunpack.c.h.b16 %v2679
        %v2862 = vunpack.c.l.b16 %v2680
        %v2863 = vunpack.c.h.b16 %v2680
        %v2864 = vunpack.c.l.b16 %v2681
        %v2865 = vunpack.c.h.b16 %v2681
        %v2866 = vunpack.c.l.b16 %v2682
        %v2867 = vunpack.c.h.b16 %v2682
        %v2868 = vunpack.c.l.b16 %v2683
        %v2869 = vunpack.c.h.b16 %v2683
        %v2870 = vunpack.c.l.b16 %v2684
        %v2871 = vunpack.c.h.b16 %v2684
        %v2872 = vunpack.c.l.b16 %v2685
        %v2873 = vunpack.c.h.b16 %v2685
        %v2874 = vunpack.c.l.b16 %v2686
        %v2875 = vunpack.c.h.b16 %v2686
        %v2876 = vunpack.c.l.b16 %v2687
        %v2877 = vunpack.c.h.b16 %v2687
        %v2878 = vunpack.c.l.b16 %v2688
        %v2879 = vunpack.c.h.b16 %v2688
        %v2880 = vunpack.c.l.b16 %v2689
        %v2881 = vunpack.c.h.b16 %v2689
        %v2882 = vunpack.c.l.b16 %v2690
        %v2883 = vunpack.c.h.b16 %v2690
        %v2884 = vunpack.c.l.b16 %v2691
        %v2885 = vunpack.c.h.b16 %v2691
        %v2886 = vunpack.c.l.b16 %v2692
        %v2887 = vunpack.c.h.b16 %v2692
        %v2888 = vunpack.c.l.b16 %v2693
        %v2889 = vunpack.c.h.b16 %v2693
        %v2890 = vunpack.c.l.b16 %v2694
        %v2891 = vunpack.c.h.b16 %v2694
        %v2892 = vunpack.c.l.b16 %v2695
        %v2893 = vunpack.c.h.b16 %v2695
        %v2894 = vpack.c.b16 %v2768, %v2766
        %v2895 = vpack.c.b16 %v2769, %v2767
        %v2896 = vpack.c.b16 %v2772, %v2770
        %v2897 = vpack.c.b16 %v2773, %v2771
        %v2898 = vpack.c.b16 %v2776, %v2774
        %v2899 = vpack.c.b16 %v2777, %v2775
        %v2900 = vpack.c.b16 %v2780, %v2778
        %v2901 = vpack.c.b16 %v2781, %v2779
        %v2902 = vpack.c.b16 %v2784, %v2782
        %v2903 = vpack.c.b16 %v2785, %v2783
        %v2904 = vpack.c.b16 %v2788, %v2786
        %v2905 = vpack.c.b16 %v2789, %v2787
        %v2906 = vpack.c.b16 %v2792, %v2790
        %v2907 = vpack.c.b16 %v2793, %v2791
        %v2908 = vpack.c.b16 %v2796, %v2794
        %v2909 = vpack.c.b16 %v2797, %v2795
        %v2910 = vpack.c.b16 %v2800, %v2798
        %v2911 = vpack.c.b16 %v2801, %v2799
        %v2912 = vpack.c.b16 %v2804, %v2802
        %v2913 = vpack.c.b16 %v2805, %v2803
        %v2914 = vpack.c.b16 %v2808, %v2806
        %v2915 = vpack.c.b16 %v2809, %v2807
        %v2916 = vpack.c.b16 %v2812, %v2810
        %v2917 = vpack.c.b16 %v2813, %v2811
        %v2918 = vpack.c.b16 %v2816, %v2814
        %v2919 = vpack.c.b16 %v2817, %v2815
        %v2920 = vpack.c.b16 %v2820, %v2818
        %v2921 = vpack.c.b16 %v2821, %v2819
        %v2922 = vpack.c.b16 %v2824, %v2822
        %v2923 = vpack.c.b16 %v2825, %v2823
        %v2924 = vpack.c.b16 %v2828, %v2826
        %v2925 = vpack.c.b16 %v2829, %v2827
        %v2926 = vpack.c.b16 %v2832, %v2830
        %v2927 = vpack.c.b16 %v2833, %v2831
        %v2928 = vpack.c.b16 %v2836, %v2834
        %v2929 = vpack.c.b16 %v2837, %v2835
        %v2930 = vpack.c.b16 %v2840, %v2838
        %v2931 = vpack.c.b16 %v2841, %v2839
        %v2932 = vpack.c.b16 %v2844, %v2842
        %v2933 = vpack.c.b16 %v2845, %v2843
        %v2934 = vpack.c.b16 %v2848, %v2846
        %v2935 = vpack.c.b16 %v2849, %v2847
        %v2936 = vpack.c.b16 %v2852, %v2850
        %v2937 = vpack.c.b16 %v2853, %v2851
        %v2938 = vpack.c.b16 %v2856, %v2854
        %v2939 = vpack.c.b16 %v2857, %v2855
        %v2940 = vpack.c.b16 %v2860, %v2858
        %v2941 = vpack.c.b16 %v2861, %v2859
        %v2942 = vpack.c.b16 %v2864, %v2862
        %v2943 = vpack.c.b16 %v2865, %v2863
        %v2944 = vpack.c.b16 %v2868, %v2866
        %v2945 = vpack.c.b16 %v2869, %v2867
        %v2946 = vpack.c.b16 %v2872, %v2870
        %v2947 = vpack.c.b16 %v2873, %v2871
        %v2948 = vpack.c.b16 %v2876, %v2874
        %v2949 = vpack.c.b16 %v2877, %v2875
        %v2950 = vpack.c.b16 %v2880, %v2878
        %v2951 = vpack.c.b16 %v2881, %v2879
        %v2952 = vpack.c.b16 %v2884, %v2882
        %v2953 = vpack.c.b16 %v2885, %v2883
        %v2954 = vpack.c.b16 %v2888, %v2886
        %v2955 = vpack.c.b16 %v2889, %v2887
        %v2956 = vpack.c.b16 %v2892, %v2890
        %v2957 = vpack.c.b16 %v2893, %v2891
        %3022 = vmatpush.bf16.msra.mxu0 %v2908
        %3023 = vmatpush.bf16.msra.mxu0 %v2906
        %3024 = vmatpush.bf16.msra.mxu0 %v2904
        %3025 = vmatpush.bf16.msra.mxu0 %v2902
        %3026 = vmatpush.bf16.msra.mxu0 %v2900
        %3027 = vmatpush.bf16.msra.mxu0 %v2898
        %3028 = vmatpush.bf16.msra.mxu0 %v2896
        %3029 = vmatpush.bf16.msra.mxu0 %v2894
        %3030 = vmatmul.bf16.gmra.mxu0 %v2628
        %v3031 = vpop.f32.mrf.mxu0
        %v3032 = vadd.f32 %v2698, %v3031
        %v3033 = vpop.f32.mrf.mxu0
        %v3034 = vadd.f32 %v2698, %v3033
        %3035 = vdwg.mxu0
        %3036 = vmatpush.bf16.msra.mxu0 %v2924
        %3037 = vmatpush.bf16.msra.mxu0 %v2922
        %3038 = vmatpush.bf16.msra.mxu0 %v2920
        %3039 = vmatpush.bf16.msra.mxu0 %v2918
        %3040 = vmatpush.bf16.msra.mxu0 %v2916
        %3041 = vmatpush.bf16.msra.mxu0 %v2914
        %3042 = vmatpush.bf16.msra.mxu0 %v2912
        %3043 = vmatpush.bf16.msra.mxu0 %v2910
        %3044 = vmatmul.bf16.gmra.mxu0 %v2629
        %v3045 = vpop.f32.mrf.mxu0
        %v3046 = vadd.f32 %v3032, %v3045
        %v3047 = vpop.f32.mrf.mxu0
        %v3048 = vadd.f32 %v3034, %v3047
        %3049 = vdwg.mxu0
        %3050 = vmatpush.bf16.msra.mxu0 %v2940
        %3051 = vmatpush.bf16.msra.mxu0 %v2938
        %3052 = vmatpush.bf16.msra.mxu0 %v2936
        %3053 = vmatpush.bf16.msra.mxu0 %v2934
        %3054 = vmatpush.bf16.msra.mxu0 %v2932
        %3055 = vmatpush.bf16.msra.mxu0 %v2930
        %3056 = vmatpush.bf16.msra.mxu0 %v2928
        %3057 = vmatpush.bf16.msra.mxu0 %v2926
        %3058 = vmatmul.bf16.gmra.mxu0 %v2630
        %v3059 = vpop.f32.mrf.mxu0
        %v3060 = vadd.f32 %v3046, %v3059
        %v3061 = vpop.f32.mrf.mxu0
        %v3062 = vadd.f32 %v3048, %v3061
        %3063 = vdwg.mxu0
        %3064 = vmatpush.bf16.msra.mxu0 %v2956
        %3065 = vmatpush.bf16.msra.mxu0 %v2954
        %3066 = vmatpush.bf16.msra.mxu0 %v2952
        %3067 = vmatpush.bf16.msra.mxu0 %v2950
        %3068 = vmatpush.bf16.msra.mxu0 %v2948
        %3069 = vmatpush.bf16.msra.mxu0 %v2946
        %3070 = vmatpush.bf16.msra.mxu0 %v2944
        %3071 = vmatpush.bf16.msra.mxu0 %v2942
        %3072 = vmatmul.bf16.gmra.mxu0 %v2631
        %v3073 = vpop.f32.mrf.mxu0
        %v3074 = vadd.f32 %v3060, %v3073
        %v3075 = vpop.f32.mrf.mxu0
        %v3076 = vadd.f32 %v3062, %v3075
        %3077 = vdwg.mxu0
        %3078 = vmatpush.bf16.msra.mxu0 %v2909
        %3079 = vmatpush.bf16.msra.mxu0 %v2907
        %3080 = vmatpush.bf16.msra.mxu0 %v2905
        %3081 = vmatpush.bf16.msra.mxu0 %v2903
        %3082 = vmatpush.bf16.msra.mxu0 %v2901
        %3083 = vmatpush.bf16.msra.mxu0 %v2899
        %3084 = vmatpush.bf16.msra.mxu0 %v2897
        %3085 = vmatpush.bf16.msra.mxu0 %v2895
        %3086 = vmatmul.bf16.gmra.mxu0 %v2628
        %v3087 = vpop.f32.mrf.mxu0
        %v3088 = vadd.f32 %v2699, %v3087
        %v3089 = vpop.f32.mrf.mxu0
        %v3090 = vadd.f32 %v2699, %v3089
        %3091 = vdwg.mxu0
        %3092 = vmatpush.bf16.msra.mxu0 %v2925
        %3093 = vmatpush.bf16.msra.mxu0 %v2923
        %3094 = vmatpush.bf16.msra.mxu0 %v2921
        %3095 = vmatpush.bf16.msra.mxu0 %v2919
        %3096 = vmatpush.bf16.msra.mxu0 %v2917
        %3097 = vmatpush.bf16.msra.mxu0 %v2915
        %3098 = vmatpush.bf16.msra.mxu0 %v2913
        %3099 = vmatpush.bf16.msra.mxu0 %v2911
        %3100 = vmatmul.bf16.gmra.mxu0 %v2629
        %v3101 = vpop.f32.mrf.mxu0
        %v3102 = vadd.f32 %v3088, %v3101
        %v3103 = vpop.f32.mrf.mxu0
        %v3104 = vadd.f32 %v3090, %v3103
        %3105 = vdwg.mxu0
        %3106 = vmatpush.bf16.msra.mxu0 %v2941
        %3107 = vmatpush.bf16.msra.mxu0 %v2939
        %3108 = vmatpush.bf16.msra.mxu0 %v2937
        %3109 = vmatpush.bf16.msra.mxu0 %v2935
        %3110 = vmatpush.bf16.msra.mxu0 %v2933
        %3111 = vmatpush.bf16.msra.mxu0 %v2931
        %3112 = vmatpush.bf16.msra.mxu0 %v2929
        %3113 = vmatpush.bf16.msra.mxu0 %v2927
        %3114 = vmatmul.bf16.gmra.mxu0 %v2630
        %v3115 = vpop.f32.mrf.mxu0
        %v3116 = vadd.f32 %v3102, %v3115
        %v3117 = vpop.f32.mrf.mxu0
        %v3118 = vadd.f32 %v3104, %v3117
        %3119 = vdwg.mxu0
        %3120 = vmatpush.bf16.msra.mxu0 %v2957
        %3121 = vmatpush.bf16.msra.mxu0 %v2955
        %3122 = vmatpush.bf16.msra.mxu0 %v2953
        %3123 = vmatpush.bf16.msra.mxu0 %v2951
        %3124 = vmatpush.bf16.msra.mxu0 %v2949
        %3125 = vmatpush.bf16.msra.mxu0 %v2947
        %3126 = vmatpush.bf16.msra.mxu0 %v2945
        %3127 = vmatpush.bf16.msra.mxu0 %v2943
        %3128 = vmatmul.bf16.gmra.mxu0 %v2631
        %v3129 = vpop.f32.mrf.mxu0
        %v3130 = vadd.f32 %v3116, %v3129
        %v3131 = vpop.f32.mrf.mxu0
        %v3132 = vadd.f32 %v3118, %v3131
        %3133 = vdwg.mxu0
        %v3134 = vmax.f32 %v3074, 0.0
        %v3135 = vmax.f32 %v3130, 0.0
        %v3136 = vmax.f32 %v3076, 0.0
        %v3137 = vmax.f32 %v3132, 0.0
        %v3138 = vpack.c.bf16 %v3136, %v3134
        %v3139 = vpack.c.bf16 %v3137, %v3135
        %v3140 = vld [vmem:[%s5] sm:$0xf]
        %v3141 = vld [vmem:[%s5 + $0x4] sm:$0xf]
        %v3142 = vld [vmem:[%s5 + $0x8] sm:$0xf]
        %v3143 = vld [vmem:[%s5 + $0xc] sm:$0xf]
        %v3144 = vld [vmem:[%s5 + $0x10] sm:$0xf]
        %v3145 = vld [vmem:[%s5 + $0x14] sm:$0xf]
        %v3146 = vld [vmem:[%s5 + $0x18] sm:$0xf]
        %v3147 = vld [vmem:[%s5 + $0x1c] sm:$0xf]
        %v3148 = vld [vmem:[%s5 + $0x20] sm:$0xf]
        %v3149 = vld [vmem:[%s5 + $0x24] sm:$0xf]
        %v3150 = vld [vmem:[%s5 + $0x28] sm:$0xf]
        %v3151 = vld [vmem:[%s5 + $0x2c] sm:$0xf]
        %v3152 = vld [vmem:[%s5 + $0x30] sm:$0xf]
        %v3153 = vld [vmem:[%s5 + $0x34] sm:$0xf]
        %v3154 = vld [vmem:[%s5 + $0x38] sm:$0xf]
        %v3155 = vld [vmem:[%s5 + $0x3c] sm:$0xf]
        %v3156 = vld [vmem:[%s5 + $0x40] sm:$0xf]
        %v3157 = vld [vmem:[%s5 + $0x44] sm:$0xf]
        %v3158 = vld [vmem:[%s5 + $0x48] sm:$0xf]
        %v3159 = vld [vmem:[%s5 + $0x4c] sm:$0xf]
        %v3160 = vld [vmem:[%s5 + $0x50] sm:$0xf]
        %v3161 = vld [vmem:[%s5 + $0x54] sm:$0xf]
        %v3162 = vld [vmem:[%s5 + $0x58] sm:$0xf]
        %v3163 = vld [vmem:[%s5 + $0x5c] sm:$0xf]
        %v3164 = vld [vmem:[%s5 + $0x60] sm:$0xf]
        %v3165 = vld [vmem:[%s5 + $0x64] sm:$0xf]
        %v3166 = vld [vmem:[%s5 + $0x68] sm:$0xf]
        %v3167 = vld [vmem:[%s5 + $0x6c] sm:$0xf]
        %v3168 = vld [vmem:[%s5 + $0x70] sm:$0xf]
        %v3169 = vld [vmem:[%s5 + $0x74] sm:$0xf]
        %v3170 = vld [vmem:[%s5 + $0x78] sm:$0xf]
        %v3171 = vld [vmem:[%s5 + $0x7c] sm:$0xf]
        %v3172 = vld [vmem:[%s6] sm:$0x1]
        %v3174 = vperm.slane %v3172, 0
        %v3208 = vunpack.c.l.b16 %v3140
        %v3209 = vunpack.c.l.b16 %v3141
        %v3210 = vunpack.c.l.b16 %v3142
        %v3211 = vunpack.c.l.b16 %v3143
        %v3212 = vunpack.c.l.b16 %v3144
        %v3213 = vunpack.c.l.b16 %v3145
        %v3214 = vunpack.c.l.b16 %v3146
        %v3215 = vunpack.c.l.b16 %v3147
        %v3216 = vunpack.c.l.b16 %v3148
        %v3217 = vunpack.c.l.b16 %v3149
        %v3218 = vunpack.c.l.b16 %v3150
        %v3219 = vunpack.c.l.b16 %v3151
        %v3220 = vunpack.c.l.b16 %v3152
        %v3221 = vunpack.c.l.b16 %v3153
        %v3222 = vunpack.c.l.b16 %v3154
        %v3223 = vunpack.c.l.b16 %v3155
        %v3224 = vunpack.c.l.b16 %v3156
        %v3225 = vunpack.c.l.b16 %v3157
        %v3226 = vunpack.c.l.b16 %v3158
        %v3227 = vunpack.c.l.b16 %v3159
        %v3228 = vunpack.c.l.b16 %v3160
        %v3229 = vunpack.c.l.b16 %v3161
        %v3230 = vunpack.c.l.b16 %v3162
        %v3231 = vunpack.c.l.b16 %v3163
        %v3232 = vunpack.c.l.b16 %v3164
        %v3233 = vunpack.c.l.b16 %v3165
        %v3234 = vunpack.c.l.b16 %v3166
        %v3235 = vunpack.c.l.b16 %v3167
        %v3236 = vunpack.c.l.b16 %v3168
        %v3237 = vunpack.c.l.b16 %v3169
        %v3238 = vunpack.c.l.b16 %v3170
        %v3239 = vunpack.c.l.b16 %v3171
        %v3240 = vpack.c.b16 %v3209, %v3208
        %v3241 = vpack.c.b16 %v3211, %v3210
        %v3242 = vpack.c.b16 %v3213, %v3212
        %v3243 = vpack.c.b16 %v3215, %v3214
        %v3244 = vpack.c.b16 %v3217, %v3216
        %v3245 = vpack.c.b16 %v3219, %v3218
        %v3246 = vpack.c.b16 %v3221, %v3220
        %v3247 = vpack.c.b16 %v3223, %v3222
        %v3248 = vpack.c.b16 %v3225, %v3224
        %v3249 = vpack.c.b16 %v3227, %v3226
        %v3250 = vpack.c.b16 %v3229, %v3228
        %v3251 = vpack.c.b16 %v3231, %v3230
        %v3252 = vpack.c.b16 %v3233, %v3232
        %v3253 = vpack.c.b16 %v3235, %v3234
        %v3254 = vpack.c.b16 %v3237, %v3236
        %v3255 = vpack.c.b16 %v3239, %v3238
        %3272 = vmatpush.bf16.msra.mxu0 %v3247
        %3273 = vmatpush.bf16.msra.mxu0 %v3246
        %3274 = vmatpush.bf16.msra.mxu0 %v3245
        %3275 = vmatpush.bf16.msra.mxu0 %v3244
        %3276 = vmatpush.bf16.msra.mxu0 %v3243
        %3277 = vmatpush.bf16.msra.mxu0 %v3242
        %3278 = vmatpush.bf16.msra.mxu0 %v3241
        %3279 = vmatpush.bf16.msra.mxu0 %v3240
        %3280 = vmatmul.bf16.gmra.mxu0 %v3138
        %v3281 = vpop.f32.mrf.mxu0
        %v3282 = vadd.f32 %v3174, %v3281
        %v3283 = vpop.f32.mrf.mxu0
        %v3284 = vadd.f32 %v3174, %v3283
        %3285 = vdwg.mxu0
        %3286 = vmatpush.bf16.msra.mxu0 %v3255
        %3287 = vmatpush.bf16.msra.mxu0 %v3254
        %3288 = vmatpush.bf16.msra.mxu0 %v3253
        %3289 = vmatpush.bf16.msra.mxu0 %v3252
        %3290 = vmatpush.bf16.msra.mxu0 %v3251
        %3291 = vmatpush.bf16.msra.mxu0 %v3250
        %3292 = vmatpush.bf16.msra.mxu0 %v3249
        %3293 = vmatpush.bf16.msra.mxu0 %v3248
        %3294 = vmatmul.bf16.gmra.mxu0 %v3139
        %v3295 = vpop.f32.mrf.mxu0
        %v3296 = vadd.f32 %v3282, %v3295
        %v3297 = vpop.f32.mrf.mxu0
        %v3298 = vadd.f32 %v3284, %v3297
        %3299 = vdwg.mxu0
        %v3300 = vmax.f32 %v3296, 0.0
        %v3301 = vmax.f32 %v3298, 0.0
        %v3302 = vpack.c.bf16 %v3301, %v3300
        %v3303 = vld [vmem:[#allocation6] sm:$0xff]
        %v3304 = vld [vmem:[#allocation6 + $0x8] sm:$0xf]
        %v3305 = vld [vmem:[#allocation6 + $0xc] sm:$0xff]
        %v3306 = vld [vmem:[#allocation6 + $0x14] sm:$0xf]
        %v3307 = vld [vmem:[#allocation6 + $0x18] sm:$0xff]
        %v3308 = vld [vmem:[#allocation6 + $0x20] sm:$0xf]
        %v3309 = vld [vmem:[#allocation6 + $0x24] sm:$0xff]
        %v3310 = vld [vmem:[#allocation6 + $0x2c] sm:$0xf]
        %v3311 = vld [vmem:[#allocation6 + $0x30] sm:$0xff]
        %v3312 = vld [vmem:[#allocation6 + $0x38] sm:$0xf]
        %v3313 = vld [vmem:[#allocation6 + $0x3c] sm:$0xff]
        %v3314 = vld [vmem:[#allocation6 + $0x44] sm:$0xf]
        %v3315 = vld [vmem:[#allocation6 + $0x48] sm:$0xff]
        %v3316 = vld [vmem:[#allocation6 + $0x50] sm:$0xf]
        %v3317 = vld [vmem:[#allocation6 + $0x54] sm:$0xff]
        %v3318 = vld [vmem:[#allocation6 + $0x5c] sm:$0xf]
        %v3319 = vld [vmem:[#allocation6 + $0x60] sm:$0xff]
        %v3320 = vld [vmem:[#allocation6 + $0x68] sm:$0xf]
        %v3321 = vld [vmem:[#allocation6 + $0x6c] sm:$0xff]
        %v3322 = vld [vmem:[#allocation6 + $0x74] sm:$0xf]
        %v3323 = vld [vmem:[#allocation6 + $0x78] sm:$0xff]
        %v3324 = vld [vmem:[#allocation6 + $0x80] sm:$0xf]
        %v3325 = vld [vmem:[#allocation6 + $0x84] sm:$0xff]
        %v3326 = vld [vmem:[#allocation6 + $0x8c] sm:$0xf]
        %v3327 = vld [vmem:[#allocation6 + $0x90] sm:$0xff]
        %v3328 = vld [vmem:[#allocation6 + $0x98] sm:$0xf]
        %v3329 = vld [vmem:[#allocation6 + $0x9c] sm:$0xff]
        %v3330 = vld [vmem:[#allocation6 + $0xa4] sm:$0xf]
        %v3331 = vld [vmem:[#allocation6 + $0xa8] sm:$0xff]
        %v3332 = vld [vmem:[#allocation6 + $0xb0] sm:$0xf]
        %v3333 = vld [vmem:[#allocation6 + $0xb4] sm:$0xff]
        %v3334 = vld [vmem:[#allocation6 + $0xbc] sm:$0xf]
        %v3335 = vld [vmem:[%s8] sm:$0x7]
        %v3337 = vperm.slane %v3335, 0
        %v3338 = vperm.slane %v3335, 1
        %v3339 = vperm.slane %v3335, 2
        %v3375 = vunpack.c.l.b16 %v3303
        %v3376 = vunpack.c.h.b16 %v3303
        %v3377 = vunpack.c.l.b16 %v3304
        %v3378 = vunpack.c.l.b16 %v3305
        %v3379 = vunpack.c.h.b16 %v3305
        %v3380 = vunpack.c.l.b16 %v3306
        %v3381 = vunpack.c.l.b16 %v3307
        %v3382 = vunpack.c.h.b16 %v3307
        %v3383 = vunpack.c.l.b16 %v3308
        %v3384 = vunpack.c.l.b16 %v3309
        %v3385 = vunpack.c.h.b16 %v3309
        %v3386 = vunpack.c.l.b16 %v3310
        %v3387 = vunpack.c.l.b16 %v3311
        %v3388 = vunpack.c.h.b16 %v3311
        %v3389 = vunpack.c.l.b16 %v3312
        %v3390 = vunpack.c.l.b16 %v3313
        %v3391 = vunpack.c.h.b16 %v3313
        %v3392 = vunpack.c.l.b16 %v3314
        %v3393 = vunpack.c.l.b16 %v3315
        %v3394 = vunpack.c.h.b16 %v3315
        %v3395 = vunpack.c.l.b16 %v3316
        %v3396 = vunpack.c.l.b16 %v3317
        %v3397 = vunpack.c.h.b16 %v3317
        %v3398 = vunpack.c.l.b16 %v3318
        %v3399 = vunpack.c.l.b16 %v3319
        %v3400 = vunpack.c.h.b16 %v3319
        %v3401 = vunpack.c.l.b16 %v3320
        %v3402 = vunpack.c.l.b16 %v3321
        %v3403 = vunpack.c.h.b16 %v3321
        %v3404 = vunpack.c.l.b16 %v3322
        %v3405 = vunpack.c.l.b16 %v3323
        %v3406 = vunpack.c.h.b16 %v3323
        %v3407 = vunpack.c.l.b16 %v3324
        %v3408 = vunpack.c.l.b16 %v3325
        %v3409 = vunpack.c.h.b16 %v3325
        %v3410 = vunpack.c.l.b16 %v3326
        %v3411 = vunpack.c.l.b16 %v3327
        %v3412 = vunpack.c.h.b16 %v3327
        %v3413 = vunpack.c.l.b16 %v3328
        %v3414 = vunpack.c.l.b16 %v3329
        %v3415 = vunpack.c.h.b16 %v3329
        %v3416 = vunpack.c.l.b16 %v3330
        %v3417 = vunpack.c.l.b16 %v3331
        %v3418 = vunpack.c.h.b16 %v3331
        %v3419 = vunpack.c.l.b16 %v3332
        %v3420 = vunpack.c.l.b16 %v3333
        %v3421 = vunpack.c.h.b16 %v3333
        %v3422 = vunpack.c.l.b16 %v3334
        %v3423 = vpack.c.b16 %v3378, %v3375
        %v3424 = vpack.c.b16 %v3379, %v3376
        %v3425 = vpack.c.b16 %v3380, %v3377
        %v3426 = vpack.c.b16 %v3384, %v3381
        %v3427 = vpack.c.b16 %v3385, %v3382
        %v3428 = vpack.c.b16 %v3386, %v3383
        %v3429 = vpack.c.b16 %v3390, %v3387
        %v3430 = vpack.c.b16 %v3391, %v3388
        %v3431 = vpack.c.b16 %v3392, %v3389
        %v3432 = vpack.c.b16 %v3396, %v3393
        %v3433 = vpack.c.b16 %v3397, %v3394
        %v3434 = vpack.c.b16 %v3398, %v3395
        %v3435 = vpack.c.b16 %v3402, %v3399
        %v3436 = vpack.c.b16 %v3403, %v3400
        %v3437 = vpack.c.b16 %v3404, %v3401
        %v3438 = vpack.c.b16 %v3408, %v3405
        %v3439 = vpack.c.b16 %v3409, %v3406
        %v3440 = vpack.c.b16 %v3410, %v3407
        %v3441 = vpack.c.b16 %v3414, %v3411
        %v3442 = vpack.c.b16 %v3415, %v3412
        %v3443 = vpack.c.b16 %v3416, %v3413
        %v3444 = vpack.c.b16 %v3420, %v3417
        %v3445 = vpack.c.b16 %v3421, %v3418
        %v3446 = vpack.c.b16 %v3422, %v3419
        %3471 = vmatpush.bf16.msra.mxu0 %v3444
        %3472 = vmatpush.bf16.msra.mxu0 %v3441
        %3473 = vmatpush.bf16.msra.mxu0 %v3438
        %3474 = vmatpush.bf16.msra.mxu0 %v3435
        %3475 = vmatpush.bf16.msra.mxu0 %v3432
        %3476 = vmatpush.bf16.msra.mxu0 %v3429
        %3477 = vmatpush.bf16.msra.mxu0 %v3426
        %3478 = vmatpush.bf16.msra.mxu0 %v3423
        %3479 = vmatmul.bf16.gmra.mxu0 %v3302
        %v3480 = vpop.f32.mrf.mxu0
        %v3481 = vadd.f32 %v3337, %v3480
        %v3482 = vpop.f32.mrf.mxu0
        %v3483 = vadd.f32 %v3337, %v3482
        %3484 = vdwg.mxu0
        %3485 = vmatpush.bf16.msra.mxu0 %v3445
        %3486 = vmatpush.bf16.msra.mxu0 %v3442
        %3487 = vmatpush.bf16.msra.mxu0 %v3439
        %3488 = vmatpush.bf16.msra.mxu0 %v3436
        %3489 = vmatpush.bf16.msra.mxu0 %v3433
        %3490 = vmatpush.bf16.msra.mxu0 %v3430
        %3491 = vmatpush.bf16.msra.mxu0 %v3427
        %3492 = vmatpush.bf16.msra.mxu0 %v3424
        %3493 = vmatmul.bf16.gmra.mxu0 %v3302
        %v3494 = vpop.f32.mrf.mxu0
        %v3495 = vadd.f32 %v3338, %v3494
        %v3496 = vpop.f32.mrf.mxu0
        %v3497 = vadd.f32 %v3338, %v3496
        %3498 = vdwg.mxu0
        %3499 = vmatpush.bf16.msra.mxu0 %v3446
        %3500 = vmatpush.bf16.msra.mxu0 %v3443
        %3501 = vmatpush.bf16.msra.mxu0 %v3440
        %3502 = vmatpush.bf16.msra.mxu0 %v3437
        %3503 = vmatpush.bf16.msra.mxu0 %v3434
        %3504 = vmatpush.bf16.msra.mxu0 %v3431
        %3505 = vmatpush.bf16.msra.mxu0 %v3428
        %3506 = vmatpush.bf16.msra.mxu0 %v3425
        %3507 = vmatmul.bf16.gmra.mxu0 %v3302
        %v3508 = vpop.f32.mrf.mxu0
        %v3509 = vadd.f32 %v3339, %v3508
        %v3510 = vpop.f32.mrf.mxu0
        %v3511 = vadd.f32 %v3339, %v3510
        %3512 = vdwg.mxu0
        %v3513 = vmax.f32 %v3481, 0.0
        %v3514 = vmax.f32 %v3495, 0.0
        %v3515 = vmax.f32 %v3509, 0.0
        %v3516 = vmax.f32 %v3483, 0.0
        %v3517 = vmax.f32 %v3497, 0.0
        %v3518 = vmax.f32 %v3511, 0.0
        %v3519 = vpack.c.bf16 %v3516, %v3513
        %v3520 = vpack.c.bf16 %v3517, %v3514
        %v3521 = vpack.c.bf16 %v3518, %v3515
        %v3522 = vld [vmem:[#allocation7] sm:$0xff]
        %v3523 = vld [vmem:[#allocation7 + $0x8] sm:$0xff]
        %v3524 = vld [vmem:[#allocation7 + $0x10] sm:$0xff]
        %v3525 = vld [vmem:[#allocation7 + $0x18] sm:$0xff]
        %v3526 = vld [vmem:[#allocation7 + $0x20] sm:$0xff]
        %v3527 = vld [vmem:[#allocation7 + $0x28] sm:$0xff]
        %v3528 = vld [vmem:[#allocation7 + $0x30] sm:$0xff]
        %v3529 = vld [vmem:[#allocation7 + $0x38] sm:$0xff]
        %v3530 = vld [vmem:[#allocation7 + $0x40] sm:$0xff]
        %v3531 = vld [vmem:[#allocation7 + $0x48] sm:$0xff]
        %v3532 = vld [vmem:[#allocation7 + $0x50] sm:$0xff]
        %v3533 = vld [vmem:[#allocation7 + $0x58] sm:$0xff]
        %v3534 = vld [vmem:[#allocation7 + $0x60] sm:$0xff]
        %v3535 = vld [vmem:[#allocation7 + $0x68] sm:$0xff]
        %v3536 = vld [vmem:[#allocation7 + $0x70] sm:$0xff]
        %v3537 = vld [vmem:[#allocation7 + $0x78] sm:$0xff]
        %v3538 = vld [vmem:[#allocation7 + $0x80] sm:$0xff]
        %v3539 = vld [vmem:[#allocation7 + $0x88] sm:$0xff]
        %v3540 = vld [vmem:[#allocation7 + $0x90] sm:$0xff]
        %v3541 = vld [vmem:[#allocation7 + $0x98] sm:$0xff]
        %v3542 = vld [vmem:[#allocation7 + $0xa0] sm:$0xff]
        %v3543 = vld [vmem:[#allocation7 + $0xa8] sm:$0xff]
        %v3544 = vld [vmem:[#allocation7 + $0xb0] sm:$0xff]
        %v3545 = vld [vmem:[#allocation7 + $0xb8] sm:$0xff]
        %v3546 = vld [vmem:[#allocation7 + $0xc0] sm:$0xff]
        %v3547 = vld [vmem:[#allocation7 + $0xc8] sm:$0xff]
        %v3548 = vld [vmem:[#allocation7 + $0xd0] sm:$0xff]
        %v3549 = vld [vmem:[#allocation7 + $0xd8] sm:$0xff]
        %v3550 = vld [vmem:[#allocation7 + $0xe0] sm:$0xff]
        %v3551 = vld [vmem:[#allocation7 + $0xe8] sm:$0xff]
        %v3552 = vld [vmem:[#allocation7 + $0xf0] sm:$0xff]
        %v3553 = vld [vmem:[#allocation7 + $0xf8] sm:$0xff]
        %v3554 = vld [vmem:[#allocation7 + $0x100] sm:$0xff]
        %v3555 = vld [vmem:[#allocation7 + $0x108] sm:$0xff]
        %v3556 = vld [vmem:[#allocation7 + $0x110] sm:$0xff]
        %v3557 = vld [vmem:[#allocation7 + $0x118] sm:$0xff]
        %v3558 = vld [vmem:[#allocation7 + $0x120] sm:$0xff]
        %v3559 = vld [vmem:[#allocation7 + $0x128] sm:$0xff]
        %v3560 = vld [vmem:[#allocation7 + $0x130] sm:$0xff]
        %v3561 = vld [vmem:[#allocation7 + $0x138] sm:$0xff]
        %v3562 = vld [vmem:[#allocation7 + $0x140] sm:$0xff]
        %v3563 = vld [vmem:[#allocation7 + $0x148] sm:$0xff]
        %v3564 = vld [vmem:[#allocation7 + $0x150] sm:$0xff]
        %v3565 = vld [vmem:[#allocation7 + $0x158] sm:$0xff]
        %v3566 = vld [vmem:[#allocation7 + $0x160] sm:$0xff]
        %v3567 = vld [vmem:[#allocation7 + $0x168] sm:$0xff]
        %v3568 = vld [vmem:[#allocation7 + $0x170] sm:$0xff]
        %v3569 = vld [vmem:[#allocation7 + $0x178] sm:$0xff]
        %v3570 = vld [vmem:[%s10] sm:$0x3]
        %v3572 = vperm.slane %v3570, 0
        %v3573 = vperm.slane %v3570, 1
        %v3624 = vunpack.c.l.b16 %v3522
        %v3625 = vunpack.c.h.b16 %v3522
        %v3626 = vunpack.c.l.b16 %v3523
        %v3627 = vunpack.c.h.b16 %v3523
        %v3628 = vunpack.c.l.b16 %v3524
        %v3629 = vunpack.c.h.b16 %v3524
        %v3630 = vunpack.c.l.b16 %v3525
        %v3631 = vunpack.c.h.b16 %v3525
        %v3632 = vunpack.c.l.b16 %v3526
        %v3633 = vunpack.c.h.b16 %v3526
        %v3634 = vunpack.c.l.b16 %v3527
        %v3635 = vunpack.c.h.b16 %v3527
        %v3636 = vunpack.c.l.b16 %v3528
        %v3637 = vunpack.c.h.b16 %v3528
        %v3638 = vunpack.c.l.b16 %v3529
        %v3639 = vunpack.c.h.b16 %v3529
        %v3640 = vunpack.c.l.b16 %v3530
        %v3641 = vunpack.c.h.b16 %v3530
        %v3642 = vunpack.c.l.b16 %v3531
        %v3643 = vunpack.c.h.b16 %v3531
        %v3644 = vunpack.c.l.b16 %v3532
        %v3645 = vunpack.c.h.b16 %v3532
        %v3646 = vunpack.c.l.b16 %v3533
        %v3647 = vunpack.c.h.b16 %v3533
        %v3648 = vunpack.c.l.b16 %v3534
        %v3649 = vunpack.c.h.b16 %v3534
        %v3650 = vunpack.c.l.b16 %v3535
        %v3651 = vunpack.c.h.b16 %v3535
        %v3652 = vunpack.c.l.b16 %v3536
        %v3653 = vunpack.c.h.b16 %v3536
        %v3654 = vunpack.c.l.b16 %v3537
        %v3655 = vunpack.c.h.b16 %v3537
        %v3656 = vunpack.c.l.b16 %v3538
        %v3657 = vunpack.c.h.b16 %v3538
        %v3658 = vunpack.c.l.b16 %v3539
        %v3659 = vunpack.c.h.b16 %v3539
        %v3660 = vunpack.c.l.b16 %v3540
        %v3661 = vunpack.c.h.b16 %v3540
        %v3662 = vunpack.c.l.b16 %v3541
        %v3663 = vunpack.c.h.b16 %v3541
        %v3664 = vunpack.c.l.b16 %v3542
        %v3665 = vunpack.c.h.b16 %v3542
        %v3666 = vunpack.c.l.b16 %v3543
        %v3667 = vunpack.c.h.b16 %v3543
        %v3668 = vunpack.c.l.b16 %v3544
        %v3669 = vunpack.c.h.b16 %v3544
        %v3670 = vunpack.c.l.b16 %v3545
        %v3671 = vunpack.c.h.b16 %v3545
        %v3672 = vunpack.c.l.b16 %v3546
        %v3673 = vunpack.c.h.b16 %v3546
        %v3674 = vunpack.c.l.b16 %v3547
        %v3675 = vunpack.c.h.b16 %v3547
        %v3676 = vunpack.c.l.b16 %v3548
        %v3677 = vunpack.c.h.b16 %v3548
        %v3678 = vunpack.c.l.b16 %v3549
        %v3679 = vunpack.c.h.b16 %v3549
        %v3680 = vunpack.c.l.b16 %v3550
        %v3681 = vunpack.c.h.b16 %v3550
        %v3682 = vunpack.c.l.b16 %v3551
        %v3683 = vunpack.c.h.b16 %v3551
        %v3684 = vunpack.c.l.b16 %v3552
        %v3685 = vunpack.c.h.b16 %v3552
        %v3686 = vunpack.c.l.b16 %v3553
        %v3687 = vunpack.c.h.b16 %v3553
        %v3688 = vunpack.c.l.b16 %v3554
        %v3689 = vunpack.c.h.b16 %v3554
        %v3690 = vunpack.c.l.b16 %v3555
        %v3691 = vunpack.c.h.b16 %v3555
        %v3692 = vunpack.c.l.b16 %v3556
        %v3693 = vunpack.c.h.b16 %v3556
        %v3694 = vunpack.c.l.b16 %v3557
        %v3695 = vunpack.c.h.b16 %v3557
        %v3696 = vunpack.c.l.b16 %v3558
        %v3697 = vunpack.c.h.b16 %v3558
        %v3698 = vunpack.c.l.b16 %v3559
        %v3699 = vunpack.c.h.b16 %v3559
        %v3700 = vunpack.c.l.b16 %v3560
        %v3701 = vunpack.c.h.b16 %v3560
        %v3702 = vunpack.c.l.b16 %v3561
        %v3703 = vunpack.c.h.b16 %v3561
        %v3704 = vunpack.c.l.b16 %v3562
        %v3705 = vunpack.c.h.b16 %v3562
        %v3706 = vunpack.c.l.b16 %v3563
        %v3707 = vunpack.c.h.b16 %v3563
        %v3708 = vunpack.c.l.b16 %v3564
        %v3709 = vunpack.c.h.b16 %v3564
        %v3710 = vunpack.c.l.b16 %v3565
        %v3711 = vunpack.c.h.b16 %v3565
        %v3712 = vunpack.c.l.b16 %v3566
        %v3713 = vunpack.c.h.b16 %v3566
        %v3714 = vunpack.c.l.b16 %v3567
        %v3715 = vunpack.c.h.b16 %v3567
        %v3716 = vunpack.c.l.b16 %v3568
        %v3717 = vunpack.c.h.b16 %v3568
        %v3718 = vunpack.c.l.b16 %v3569
        %v3719 = vunpack.c.h.b16 %v3569
        %v3720 = vpack.c.b16 %v3626, %v3624
        %v3721 = vpack.c.b16 %v3627, %v3625
        %v3722 = vpack.c.b16 %v3630, %v3628
        %v3723 = vpack.c.b16 %v3631, %v3629
        %v3724 = vpack.c.b16 %v3634, %v3632
        %v3725 = vpack.c.b16 %v3635, %v3633
        %v3726 = vpack.c.b16 %v3638, %v3636
        %v3727 = vpack.c.b16 %v3639, %v3637
        %v3728 = vpack.c.b16 %v3642, %v3640
        %v3729 = vpack.c.b16 %v3643, %v3641
        %v3730 = vpack.c.b16 %v3646, %v3644
        %v3731 = vpack.c.b16 %v3647, %v3645
        %v3732 = vpack.c.b16 %v3650, %v3648
        %v3733 = vpack.c.b16 %v3651, %v3649
        %v3734 = vpack.c.b16 %v3654, %v3652
        %v3735 = vpack.c.b16 %v3655, %v3653
        %v3736 = vpack.c.b16 %v3658, %v3656
        %v3737 = vpack.c.b16 %v3659, %v3657
        %v3738 = vpack.c.b16 %v3662, %v3660
        %v3739 = vpack.c.b16 %v3663, %v3661
        %v3740 = vpack.c.b16 %v3666, %v3664
        %v3741 = vpack.c.b16 %v3667, %v3665
        %v3742 = vpack.c.b16 %v3670, %v3668
        %v3743 = vpack.c.b16 %v3671, %v3669
        %v3744 = vpack.c.b16 %v3674, %v3672
        %v3745 = vpack.c.b16 %v3675, %v3673
        %v3746 = vpack.c.b16 %v3678, %v3676
        %v3747 = vpack.c.b16 %v3679, %v3677
        %v3748 = vpack.c.b16 %v3682, %v3680
        %v3749 = vpack.c.b16 %v3683, %v3681
        %v3750 = vpack.c.b16 %v3686, %v3684
        %v3751 = vpack.c.b16 %v3687, %v3685
        %v3752 = vpack.c.b16 %v3690, %v3688
        %v3753 = vpack.c.b16 %v3691, %v3689
        %v3754 = vpack.c.b16 %v3694, %v3692
        %v3755 = vpack.c.b16 %v3695, %v3693
        %v3756 = vpack.c.b16 %v3698, %v3696
        %v3757 = vpack.c.b16 %v3699, %v3697
        %v3758 = vpack.c.b16 %v3702, %v3700
        %v3759 = vpack.c.b16 %v3703, %v3701
        %v3760 = vpack.c.b16 %v3706, %v3704
        %v3761 = vpack.c.b16 %v3707, %v3705
        %v3762 = vpack.c.b16 %v3710, %v3708
        %v3763 = vpack.c.b16 %v3711, %v3709
        %v3764 = vpack.c.b16 %v3714, %v3712
        %v3765 = vpack.c.b16 %v3715, %v3713
        %v3766 = vpack.c.b16 %v3718, %v3716
        %v3767 = vpack.c.b16 %v3719, %v3717
        %3816 = vmatpush.bf16.msra.mxu0 %v3734
        %3817 = vmatpush.bf16.msra.mxu0 %v3732
        %3818 = vmatpush.bf16.msra.mxu0 %v3730
        %3819 = vmatpush.bf16.msra.mxu0 %v3728
        %3820 = vmatpush.bf16.msra.mxu0 %v3726
        %3821 = vmatpush.bf16.msra.mxu0 %v3724
        %3822 = vmatpush.bf16.msra.mxu0 %v3722
        %3823 = vmatpush.bf16.msra.mxu0 %v3720
        %3824 = vmatmul.bf16.gmra.mxu0 %v3519
        %v3825 = vpop.f32.mrf.mxu0
        %v3826 = vadd.f32 %v3572, %v3825
        %v3827 = vpop.f32.mrf.mxu0
        %v3828 = vadd.f32 %v3572, %v3827
        %3829 = vdwg.mxu0
        %3830 = vmatpush.bf16.msra.mxu0 %v3750
        %3831 = vmatpush.bf16.msra.mxu0 %v3748
        %3832 = vmatpush.bf16.msra.mxu0 %v3746
        %3833 = vmatpush.bf16.msra.mxu0 %v3744
        %3834 = vmatpush.bf16.msra.mxu0 %v3742
        %3835 = vmatpush.bf16.msra.mxu0 %v3740
        %3836 = vmatpush.bf16.msra.mxu0 %v3738
        %3837 = vmatpush.bf16.msra.mxu0 %v3736
        %3838 = vmatmul.bf16.gmra.mxu0 %v3520
        %v3839 = vpop.f32.mrf.mxu0
        %v3840 = vadd.f32 %v3826, %v3839
        %v3841 = vpop.f32.mrf.mxu0
        %v3842 = vadd.f32 %v3828, %v3841
        %3843 = vdwg.mxu0
        %3844 = vmatpush.bf16.msra.mxu0 %v3766
        %3845 = vmatpush.bf16.msra.mxu0 %v3764
        %3846 = vmatpush.bf16.msra.mxu0 %v3762
        %3847 = vmatpush.bf16.msra.mxu0 %v3760
        %3848 = vmatpush.bf16.msra.mxu0 %v3758
        %3849 = vmatpush.bf16.msra.mxu0 %v3756
        %3850 = vmatpush.bf16.msra.mxu0 %v3754
        %3851 = vmatpush.bf16.msra.mxu0 %v3752
        %3852 = vmatmul.bf16.gmra.mxu0 %v3521
        %v3853 = vpop.f32.mrf.mxu0
        %v3854 = vadd.f32 %v3840, %v3853
        %v3855 = vpop.f32.mrf.mxu0
        %v3856 = vadd.f32 %v3842, %v3855
        %3857 = vdwg.mxu0
        %3858 = vmatpush.bf16.msra.mxu0 %v3735
        %3859 = vmatpush.bf16.msra.mxu0 %v3733
        %3860 = vmatpush.bf16.msra.mxu0 %v3731
        %3861 = vmatpush.bf16.msra.mxu0 %v3729
        %3862 = vmatpush.bf16.msra.mxu0 %v3727
        %3863 = vmatpush.bf16.msra.mxu0 %v3725
        %3864 = vmatpush.bf16.msra.mxu0 %v3723
        %3865 = vmatpush.bf16.msra.mxu0 %v3721
        %3866 = vmatmul.bf16.gmra.mxu0 %v3519
        %v3867 = vpop.f32.mrf.mxu0
        %v3868 = vadd.f32 %v3573, %v3867
        %v3869 = vpop.f32.mrf.mxu0
        %v3870 = vadd.f32 %v3573, %v3869
        %3871 = vdwg.mxu0
        %3872 = vmatpush.bf16.msra.mxu0 %v3751
        %3873 = vmatpush.bf16.msra.mxu0 %v3749
        %3874 = vmatpush.bf16.msra.mxu0 %v3747
        %3875 = vmatpush.bf16.msra.mxu0 %v3745
        %3876 = vmatpush.bf16.msra.mxu0 %v3743
        %3877 = vmatpush.bf16.msra.mxu0 %v3741
        %3878 = vmatpush.bf16.msra.mxu0 %v3739
        %3879 = vmatpush.bf16.msra.mxu0 %v3737
        %3880 = vmatmul.bf16.gmra.mxu0 %v3520
        %v3881 = vpop.f32.mrf.mxu0
        %v3882 = vadd.f32 %v3868, %v3881
        %v3883 = vpop.f32.mrf.mxu0
        %v3884 = vadd.f32 %v3870, %v3883
        %3885 = vdwg.mxu0
        %3886 = vmatpush.bf16.msra.mxu0 %v3767
        %3887 = vmatpush.bf16.msra.mxu0 %v3765
        %3888 = vmatpush.bf16.msra.mxu0 %v3763
        %3889 = vmatpush.bf16.msra.mxu0 %v3761
        %3890 = vmatpush.bf16.msra.mxu0 %v3759
        %3891 = vmatpush.bf16.msra.mxu0 %v3757
        %3892 = vmatpush.bf16.msra.mxu0 %v3755
        %3893 = vmatpush.bf16.msra.mxu0 %v3753
        %3894 = vmatmul.bf16.gmra.mxu0 %v3521
        %v3895 = vpop.f32.mrf.mxu0
        %v3896 = vadd.f32 %v3882, %v3895
        %v3897 = vpop.f32.mrf.mxu0
        %v3898 = vadd.f32 %v3884, %v3897
        %3899 = vdwg.mxu0
        %v3900 = vmax.f32 %v3854, 0.0
        %v3901 = vmax.f32 %v3896, 0.0
        %v3902 = vmax.f32 %v3856, 0.0
        %v3903 = vmax.f32 %v3898, 0.0
        %v3904 = vpack.c.bf16 %v3902, %v3900
        %v3905 = vpack.c.bf16 %v3903, %v3901
        %v3906 = vld [vmem:[#allocation9] sm:$0xf]
        %v3907 = vld [vmem:[#allocation9 + $0x4] sm:$0xf]
        %v3908 = vld [vmem:[#allocation9 + $0x8] sm:$0xf]
        %v3909 = vld [vmem:[#allocation9 + $0xc] sm:$0xf]
        %v3910 = vld [vmem:[#allocation9 + $0x10] sm:$0xf]
        %v3911 = vld [vmem:[#allocation9 + $0x14] sm:$0xf]
        %v3912 = vld [vmem:[#allocation9 + $0x18] sm:$0xf]
        %v3913 = vld [vmem:[#allocation9 + $0x1c] sm:$0xf]
        %v3914 = vld [vmem:[#allocation9 + $0x20] sm:$0xf]
        %v3915 = vld [vmem:[#allocation9 + $0x24] sm:$0xf]
        %v3916 = vld [vmem:[#allocation9 + $0x28] sm:$0xf]
        %v3917 = vld [vmem:[#allocation9 + $0x2c] sm:$0xf]
        %v3918 = vld [vmem:[#allocation9 + $0x30] sm:$0xf]
        %v3919 = vld [vmem:[#allocation9 + $0x34] sm:$0xf]
        %v3920 = vld [vmem:[#allocation9 + $0x38] sm:$0xf]
        %v3921 = vld [vmem:[#allocation9 + $0x3c] sm:$0xf]
        %v3922 = vld [vmem:[#allocation9 + $0x40] sm:$0xf]
        %v3923 = vld [vmem:[#allocation9 + $0x44] sm:$0xf]
        %v3924 = vld [vmem:[#allocation9 + $0x48] sm:$0xf]
        %v3925 = vld [vmem:[#allocation9 + $0x4c] sm:$0xf]
        %v3926 = vld [vmem:[#allocation9 + $0x50] sm:$0xf]
        %v3927 = vld [vmem:[#allocation9 + $0x54] sm:$0xf]
        %v3928 = vld [vmem:[#allocation9 + $0x58] sm:$0xf]
        %v3929 = vld [vmem:[#allocation9 + $0x5c] sm:$0xf]
        %v3930 = vld [vmem:[#allocation9 + $0x60] sm:$0xf]
        %v3931 = vld [vmem:[#allocation9 + $0x64] sm:$0xf]
        %v3932 = vld [vmem:[#allocation9 + $0x68] sm:$0xf]
        %v3933 = vld [vmem:[#allocation9 + $0x6c] sm:$0xf]
        %v3934 = vld [vmem:[#allocation9 + $0x70] sm:$0xf]
        %v3935 = vld [vmem:[#allocation9 + $0x74] sm:$0xf]
        %v3936 = vld [vmem:[#allocation9 + $0x78] sm:$0xf]
        %v3937 = vld [vmem:[#allocation9 + $0x7c] sm:$0xf]
        %v3938 = vld [vmem:[%s12] sm:$0x1]
        %v3940 = vperm.slane %v3938, 0
        %v3974 = vunpack.c.l.b16 %v3906
        %v3975 = vunpack.c.l.b16 %v3907
        %v3976 = vunpack.c.l.b16 %v3908
        %v3977 = vunpack.c.l.b16 %v3909
        %v3978 = vunpack.c.l.b16 %v3910
        %v3979 = vunpack.c.l.b16 %v3911
        %v3980 = vunpack.c.l.b16 %v3912
        %v3981 = vunpack.c.l.b16 %v3913
        %v3982 = vunpack.c.l.b16 %v3914
        %v3983 = vunpack.c.l.b16 %v3915
        %v3984 = vunpack.c.l.b16 %v3916
        %v3985 = vunpack.c.l.b16 %v3917
        %v3986 = vunpack.c.l.b16 %v3918
        %v3987 = vunpack.c.l.b16 %v3919
        %v3988 = vunpack.c.l.b16 %v3920
        %v3989 = vunpack.c.l.b16 %v3921
        %v3990 = vunpack.c.l.b16 %v3922
        %v3991 = vunpack.c.l.b16 %v3923
        %v3992 = vunpack.c.l.b16 %v3924
        %v3993 = vunpack.c.l.b16 %v3925
        %v3994 = vunpack.c.l.b16 %v3926
        %v3995 = vunpack.c.l.b16 %v3927
        %v3996 = vunpack.c.l.b16 %v3928
        %v3997 = vunpack.c.l.b16 %v3929
        %v3998 = vunpack.c.l.b16 %v3930
        %v3999 = vunpack.c.l.b16 %v3931
        %v4000 = vunpack.c.l.b16 %v3932
        %v4001 = vunpack.c.l.b16 %v3933
        %v4002 = vunpack.c.l.b16 %v3934
        %v4003 = vunpack.c.l.b16 %v3935
        %v4004 = vunpack.c.l.b16 %v3936
        %v4005 = vunpack.c.l.b16 %v3937
        %v4006 = vpack.c.b16 %v3975, %v3974
        %v4007 = vpack.c.b16 %v3977, %v3976
        %v4008 = vpack.c.b16 %v3979, %v3978
        %v4009 = vpack.c.b16 %v3981, %v3980
        %v4010 = vpack.c.b16 %v3983, %v3982
        %v4011 = vpack.c.b16 %v3985, %v3984
        %v4012 = vpack.c.b16 %v3987, %v3986
        %v4013 = vpack.c.b16 %v3989, %v3988
        %v4014 = vpack.c.b16 %v3991, %v3990
        %v4015 = vpack.c.b16 %v3993, %v3992
        %v4016 = vpack.c.b16 %v3995, %v3994
        %v4017 = vpack.c.b16 %v3997, %v3996
        %v4018 = vpack.c.b16 %v3999, %v3998
        %v4019 = vpack.c.b16 %v4001, %v4000
        %v4020 = vpack.c.b16 %v4003, %v4002
        %v4021 = vpack.c.b16 %v4005, %v4004
        %4038 = vmatpush.bf16.msra.mxu0 %v4013
        %4039 = vmatpush.bf16.msra.mxu0 %v4012
        %4040 = vmatpush.bf16.msra.mxu0 %v4011
        %4041 = vmatpush.bf16.msra.mxu0 %v4010
        %4042 = vmatpush.bf16.msra.mxu0 %v4009
        %4043 = vmatpush.bf16.msra.mxu0 %v4008
        %4044 = vmatpush.bf16.msra.mxu0 %v4007
        %4045 = vmatpush.bf16.msra.mxu0 %v4006
        %4046 = vmatmul.bf16.gmra.mxu0 %v3904
        %v4047 = vpop.f32.mrf.mxu0
        %v4048 = vadd.f32 %v3940, %v4047
        %v4049 = vpop.f32.mrf.mxu0
        %v4050 = vadd.f32 %v3940, %v4049
        %4051 = vdwg.mxu0
        %4052 = vmatpush.bf16.msra.mxu0 %v4021
        %4053 = vmatpush.bf16.msra.mxu0 %v4020
        %4054 = vmatpush.bf16.msra.mxu0 %v4019
        %4055 = vmatpush.bf16.msra.mxu0 %v4018
        %4056 = vmatpush.bf16.msra.mxu0 %v4017
        %4057 = vmatpush.bf16.msra.mxu0 %v4016
        %4058 = vmatpush.bf16.msra.mxu0 %v4015
        %4059 = vmatpush.bf16.msra.mxu0 %v4014
        %4060 = vmatmul.bf16.gmra.mxu0 %v3905
        %v4061 = vpop.f32.mrf.mxu0
        %v4062 = vadd.f32 %v4048, %v4061
        %v4063 = vpop.f32.mrf.mxu0
        %v4064 = vadd.f32 %v4050, %v4063
        %4065 = vdwg.mxu0
        %v4066 = vsel %vm531, %v4062, -1e+30
        %v4067 = vsel %vm531, %v4064, -1e+30
        %4068 = vmax.xlane.f32.xlu0 %v4066
        %v4069 = vpop.xlane.xlu0 %4068
        %4070 = vmax.xlane.f32.xlu0 %v4067
        %v4071 = vpop.xlane.xlu0 %4070
        %v4072 = vsel %vm531, %v4069, 0.0
        %v4073 = vsel %vm531, %v4071, 0.0
        %v4074 = vsel %vm534, %v4062, -1e+30
        %v4075 = vsel %vm534, %v4064, -1e+30
        %4076 = vmax.xlane.f32.xlu0 %v4074
        %v4077 = vpop.xlane.xlu0 %4076
        %4078 = vmax.xlane.f32.xlu0 %v4075
        %v4079 = vpop.xlane.xlu0 %4078
        %v4080 = vsel %vm534, %v4077, %v4072
        %v4081 = vsel %vm534, %v4079, %v4073
        %v4082 = vsel %vm537, %v4062, -1e+30
        %v4083 = vsel %vm537, %v4064, -1e+30
        %4084 = vmax.xlane.f32.xlu0 %v4082
        %v4085 = vpop.xlane.xlu0 %4084
        %4086 = vmax.xlane.f32.xlu0 %v4083
        %v4087 = vpop.xlane.xlu0 %4086
        %v4088 = vsel %vm537, %v4085, %v4080
        %v4089 = vsel %vm537, %v4087, %v4081
        %v4090 = vsel %vm540, %v4062, -1e+30
        %v4091 = vsel %vm540, %v4064, -1e+30
        %4092 = vmax.xlane.f32.xlu0 %v4090
        %v4093 = vpop.xlane.xlu0 %4092
        %4094 = vmax.xlane.f32.xlu0 %v4091
        %v4095 = vpop.xlane.xlu0 %4094
        %v4096 = vsel %vm540, %v4093, %v4088
        %v4097 = vsel %vm540, %v4095, %v4089
        %v4098 = vsel %vm543, %v4062, -1e+30
        %v4099 = vsel %vm543, %v4064, -1e+30
        %4100 = vmax.xlane.f32.xlu0 %v4098
        %v4101 = vpop.xlane.xlu0 %4100
        %4102 = vmax.xlane.f32.xlu0 %v4099
        %v4103 = vpop.xlane.xlu0 %4102
        %v4104 = vsel %vm543, %v4101, %v4096
        %v4105 = vsel %vm543, %v4103, %v4097
        %v4106 = vsub.f32 %v4062, %v4104
        %v4107 = vsub.f32 %v4064, %v4105
        %v4108 = vmul.f32 %v4106, 1.442695
        %v4109 = vpow.pop %v4108
        %v4110 = vmul.f32 %v4107, 1.442695
        %v4111 = vpow.pop %v4110
        %v4112 = vsel %vm531, %v4109, 0.0
        %v4113 = vsel %vm531, %v4111, 0.0
        %4114 = vadd.xlane.f32.xlu0 %v4112
        %v4115 = vpop.xlane.xlu0 %4114
        %4116 = vadd.xlane.f32.xlu0 %v4113
        %v4117 = vpop.xlane.xlu0 %4116
        %v4118 = vsel %vm531, %v4115, 1.0
        %v4119 = vsel %vm531, %v4117, 1.0
        %v4120 = vsel %vm534, %v4109, 0.0
        %v4121 = vsel %vm534, %v4111, 0.0
        %4122 = vadd.xlane.f32.xlu0 %v4120
        %v4123 = vpop.xlane.xlu0 %4122
        %4124 = vadd.xlane.f32.xlu0 %v4121
        %v4125 = vpop.xlane.xlu0 %4124
        %v4126 = vsel %vm534, %v4123, %v4118
        %v4127 = vsel %vm534, %v4125, %v4119
        %v4128 = vsel %vm537, %v4109, 0.0
        %v4129 = vsel %vm537, %v4111, 0.0
        %4130 = vadd.xlane.f32.xlu0 %v4128
        %v4131 = vpop.xlane.xlu0 %4130
        %4132 = vadd.xlane.f32.xlu0 %v4129
        %v4133 = vpop.xlane.xlu0 %4132
        %v4134 = vsel %vm537, %v4131, %v4126
        %v4135 = vsel %vm537, %v4133, %v4127
        %v4136 = vsel %vm540, %v4109, 0.0
        %v4137 = vsel %vm540, %v4111, 0.0
        %4138 = vadd.xlane.f32.xlu0 %v4136
        %v4139 = vpop.xlane.xlu0 %4138
        %4140 = vadd.xlane.f32.xlu0 %v4137
        %v4141 = vpop.xlane.xlu0 %4140
        %v4142 = vsel %vm540, %v4139, %v4134
        %v4143 = vsel %vm540, %v4141, %v4135
        %v4144 = vsel %vm543, %v4109, 0.0
        %v4145 = vsel %vm543, %v4111, 0.0
        %4146 = vadd.xlane.f32.xlu0 %v4144
        %v4147 = vpop.xlane.xlu0 %4146
        %4148 = vadd.xlane.f32.xlu0 %v4145
        %v4149 = vpop.xlane.xlu0 %4148
        %v4150 = vsel %vm543, %v4147, %v4142
        %v4151 = vsel %vm543, %v4149, %v4143
        %v4152 = vrcp.pop %v4150
        %v4153 = vrcp.pop %v4151
        %v4154 = vmul.f32 %v4150, %v4152
        %v4155 = vmul.f32 %v4151, %v4153
        %v4156 = vsub.f32 2.0, %v4154
        %v4157 = vsub.f32 2.0, %v4155
        %v4158 = vmul.f32 %v4152, %v4156
        %v4159 = vmul.f32 %v4153, %v4157
        %v4160 = vmul.f32 %v4109, %v4158
        %v4161 = vmul.f32 %v4111, %v4159
        %4162 = vst [vmem:[%s525 + $0x10] sm:$0xff] %v4160
        %4163 = vst [vmem:[%s525 + $0x18] sm:$0xff] %v4161
        %s4164 = smul.u32 4, %s27
        %p4165 = scmp.lt.s32.totalorder %s4164, 7
        %s4166 = scalar_select %p4165, %s4164, 7
        %s4167 = smul.addr %s4166, 8
        %s4168 = scalar_lea.vmem %s13, %s4167
        // Predicated region
        $region93: #{_forward_impl.1} parent=71 // pred_check
          %p4169 = pneg %p323
        $region94: #{_forward_impl.1} parent=71 // pred_check_branch
          %4171 = sbr.rel (%p4169) target = $region96
        $region95: #{_forward_impl.1} parent=71 // pred_region
          %s4172 = smul.u32 4, %s27
        $region96: #{_forward_impl.1} parent=71 // pred_fallthru
          _
      $region72: #{_forward_impl.1} parent=5 // pred_fallthru
        _
      %p4173 = scmp.le.s32.totalorder 2, %s22
      // Predicated region
      $region97: #{_forward_impl.1} parent=5 // pred_check
        %p4174 = pneg %p4173
      $region98: #{_forward_impl.1} parent=5 // pred_check_branch
        %4176 = sbr.rel (%p4174) target = $region100
      $region99: #{_forward_impl.1} parent=5 // pred_region
        %s4177 = ssub.s32 %s22, 2
        // Predicated region
        $region101: #{_forward_impl.1} parent=99 // pred_check
          %p4178 = pneg %p329
        $region102: #{_forward_impl.1} parent=99 // pred_check_branch
          %4180 = sbr.rel (%p4178) target = $region104
        $region103: #{_forward_impl.1} parent=99 // pred_region
          %s4181 = smul.u32 4, %s28
          %p4182 = scmp.lt.s32.totalorder %s4181, 7
          %s4183 = scalar_select %p4182, %s4181, 7
          %s4184 = smul.addr %s4183, 8
          %s4185 = scalar_lea.vmem %s13, %s4184
        $region104: #{_forward_impl.1} parent=99 // pred_fallthru
          _
      $region100: #{_forward_impl.1} parent=5 // pred_fallthru
        _
    $region6: #{_forward_impl.1} parent=1 // loop_footer
      %s26 = sadd.s32 1, %s22
    $region7: #{_forward_impl.1} parent=1 // loop_footer_branch
      %21 = sbr.rel target = $region3
    $region8: #{_forward_impl.1} parent=1 // loop_exit
      _
    %4186 = vsyncpa [#allocation3], 1
    %s4187 = scalar_lea.sflag [#allocation3], 1
    %4188 = vsyncpa %s4187, 1
    %4189 = vsyncpa [#allocation5], 1
    %4190 = vsyncpa [#allocation8], 1

// kernel: _forward_impl.1
$region0: #{_forward_impl.1}
  #allocation0 [shape = 'u32[]', space=smem, size = 0x4, offset = 0x4, fixed_abs, tag = 'smem constant byte address 0x4 - core index']
  #allocation1 [shape = 'u32[72,128]{1,0:T(1,128)}', space=vmem, size = 0x9000, scoped, tag = 'internal scratch']
  %s0 = inlined_call_operand.vmem [shape: bf16[64,128], index: 0, kind: input, shape index: {}]
  %s1 = inlined_call_operand.hbm [shape: bf16[128,512], index: 1, kind: input, shape index: {}]
  %s2 = inlined_call_operand.vmem [shape: f32[1,512], index: 2, kind: input, shape index: {}]
  %s3 = inlined_call_operand.hbm [shape: bf16[512,256], index: 3, kind: input, shape index: {}]
  %s4 = inlined_call_operand.vmem [shape: f32[1,256], index: 4, kind: input, shape index: {}]
  %s5 = inlined_call_operand.vmem [shape: bf16[256,128], index: 5, kind: input, shape index: {}]
  %s6 = inlined_call_operand.vmem [shape: f32[1,128], index: 6, kind: input, shape index: {}]
  %s7 = inlined_call_operand.hbm [shape: bf16[128,384], index: 7, kind: input, shape index: {}]
  %s8 = inlined_call_operand.vmem [shape: f32[1,384], index: 8, kind: input, shape index: {}]
  %s9 = inlined_call_operand.hbm [shape: bf16[384,256], index: 9, kind: input, shape index: {}]
  %s10 = inlined_call_operand.vmem [shape: f32[1,256], index: 10, kind: input, shape index: {}]
  %s11 = inlined_call_operand.hbm [shape: bf16[256,128], index: 11, kind: input, shape index: {}]
  %s12 = inlined_call_operand.vmem [shape: f32[1,128], index: 12, kind: input, shape index: {}]
  %s13 = inlined_call_operand.vmem [shape: f32[64,128], index: 13, kind: output, shape index: {}]
  %s14 = sld [smem:[#allocation0]]
  $region105: #{_forward_impl.1} parent=0
    _
  %s16 = ssub.s32 1, %s14
  %s17 = scalar_select 0, %s16, %s14
  $region1: #{_forward_impl.1} parent=0
    #allocation2 [shape = 'u8[131072]{0}', space=vmem, size = 0x20000, scoped, tag = 'input window, operand 1, single buffered']
    #allocation3 [shape = 's32[2]{0}', space=sflag, size = 0x8, scoped, tag = 'scoped memory for _forward_impl.1']
    #allocation4 [shape = 'u8[262144]{0}', space=vmem, size = 0x40000, scoped, tag = 'input window, operand 3, single buffered']
    #allocation5 [shape = 's32[1]{0}', space=sflag, size = 0x4, scoped, tag = 'scoped memory for _forward_impl.1']
    #allocation6 [shape = 'u8[98304]{0}', space=vmem, size = 0x18000, scoped, tag = 'input window, operand 7, single buffered']
    #allocation7 [shape = 'u8[196608]{0}', space=vmem, size = 0x30000, scoped, tag = 'input window, operand 9, single buffered']
    #allocation8 [shape = 's32[1]{0}', space=sflag, size = 0x4, scoped, tag = 'scoped memory for _forward_impl.1']
    #allocation9 [shape = 'u8[65536]{0}', space=vmem, size = 0x10000, scoped, tag = 'input window, operand 11, single buffered']
    %18 = vsyncpa [#allocation3], 0
    %19 = vsyncpa [#allocation5], 0
    %20 = vsyncpa [#allocation8], 0
    loop: start=0, step=1, limit=4
    $region2: #{_forward_impl.1} parent=1 // loop_pre_header
      _
    $region3: #{_forward_impl.1} parent=1 // loop_header
      %s22 = sphi 0, %s26
      %p23 = scmp.ge.s32.totalorder %s22, 4
      %s32 = sphi 0, %s34
      %s35 = sphi 0, %s32
      %s36 = sphi 0, %s35
      %s52 = sphi 0, %s36
      %s56 = sphi 0, %s56
      %s58 = sphi 0, %s56
      %s59 = sphi 0, %s58
      %s73 = sphi 0, %s59
      %s77 = sphi 0, %s77
      %s79 = sphi 0, %s77
      %s80 = sphi 0, %s79
      %s94 = sphi 0, %s80
      %s98 = sphi 0, %s98
      %s100 = sphi 0, %s98
      %s101 = sphi 0, %s100
      %s115 = sphi 0, %s101
      %s119 = sphi 0, %s119
      %s121 = sphi 0, %s119
      %s122 = sphi 0, %s121
      %s136 = sphi 0, %s122
      %s140 = sphi 0, %s140
      %s142 = sphi 0, %s140
      %s143 = sphi 0, %s142
      %s157 = sphi 0, %s143
      %s161 = sphi 0, %s161
      %s163 = sphi 0, %s161
      %s164 = sphi 0, %s163
      %s178 = sphi 0, %s164
      %s182 = sphi 0, %s182
      %s184 = sphi 0, %s182
      %s185 = sphi 0, %s184
      %s199 = sphi 0, %s185
      %s203 = sphi 0, %s203
      %s205 = sphi 0, %s203
      %s206 = sphi 0, %s205
      %s220 = sphi 0, %s206
      %s224 = sphi 0, %s224
      %s226 = sphi 0, %s224
      %s227 = sphi 0, %s226
      %s241 = sphi 0, %s227
      %s245 = sphi 0, %s245
      %s247 = sphi 0, %s245
      %s248 = sphi 0, %s247
      %s262 = sphi 0, %s248
      %s266 = sphi 0, %s266
      %s268 = sphi 0, %s266
      %s269 = sphi 0, %s268
      %s283 = sphi 0, %s269
      %s287 = sphi 0, %s287
      %s289 = sphi 0, %s287
      %s290 = sphi 0, %s289
      %s304 = sphi 0, %s290
      %s310 = sphi 0, %s312
      %s313 = sphi 0, %s310
      %s314 = sphi 0, %s313
      %s330 = sphi 0, %s314
    $region4: #{_forward_impl.1} parent=1 // loop_header_branch
      %25 = sbr.rel (%p23) target = $region8
    $region5: #{_forward_impl.1} parent=1 // loop_body
      %s27 = ssub.s32 %s22, 1
      %s28 = ssub.s32 %s22, 2
      %s29 = sadd.s32 %s22, 1
      %s30 = ssub.s32 %s22, %s29
      %p31 = scmp.eq.s32.totalorder %s30, 0
      %s33 = sadd.s32 %s32, 1
      %s34 = scalar_select %p31, %s32, %s33
      %p37 = pneg %p31
      %p38 = scmp.eq.s32.totalorder %s22, 1
      %p39 = por %p37, %p38
      %p40 = scmp.ne.s32.totalorder %s32, %s35
      %p41 = scmp.eq.s32.totalorder %s22, 0
      %p42 = por %p40, %p41
      %p43 = scmp.ne.s32.totalorder %s32, %s35
      %p44 = scmp.eq.s32.totalorder %s27, 1
      %p45 = por %p43, %p44
      %p46 = scmp.ne.s32.totalorder %s35, %s36
      %p47 = scmp.eq.s32.totalorder %s27, 0
      %p48 = por %p46, %p47
      %p49 = scmp.ne.s32.totalorder %s35, %s36
      %p50 = scmp.eq.s32.totalorder %s28, 1
      %p51 = por %p49, %p50
      %p53 = scmp.ne.s32.totalorder %s36, %s52
      %p54 = scmp.eq.s32.totalorder %s28, 0
      %p55 = por %p53, %p54
      %s57 = sadd.s32 %s56, 1
      %p60 = scmp.eq.s32.totalorder %s22, 1
      %p61 = scmp.ne.s32.totalorder %s56, %s58
      %p62 = scmp.eq.s32.totalorder %s22, 0
      %p63 = por %p61, %p62
      %p64 = scmp.ne.s32.totalorder %s56, %s58
      %p65 = scmp.eq.s32.totalorder %s27, 1
      %p66 = por %p64, %p65
      %p67 = scmp.ne.s32.totalorder %s58, %s59
      %p68 = scmp.eq.s32.totalorder %s27, 0
      %p69 = por %p67, %p68
      %p70 = scmp.ne.s32.totalorder %s58, %s59
      %p71 = scmp.eq.s32.totalorder %s28, 1
      %p72 = por %p70, %p71
      %p74 = scmp.ne.s32.totalorder %s59, %s73
      %p75 = scmp.eq.s32.totalorder %s28, 0
      %p76 = por %p74, %p75
      %s78 = sadd.s32 %s77, 1
      %p81 = scmp.eq.s32.totalorder %s22, 1
      %p82 = scmp.ne.s32.totalorder %s77, %s79
      %p83 = scmp.eq.s32.totalorder %s22, 0
      %p84 = por %p82, %p83
      %p85 = scmp.ne.s32.totalorder %s77, %s79
      %p86 = scmp.eq.s32.totalorder %s27, 1
      %p87 = por %p85, %p86
      %p88 = scmp.ne.s32.totalorder %s79, %s80
      %p89 = scmp.eq.s32.totalorder %s27, 0
      %p90 = por %p88, %p89
      %p91 = scmp.ne.s32.totalorder %s79, %s80
      %p92 = scmp.eq.s32.totalorder %s28, 1
      %p93 = por %p91, %p92
      %p95 = scmp.ne.s32.totalorder %s80, %s94
      %p96 = scmp.eq.s32.totalorder %s28, 0
      %p97 = por %p95, %p96
      %s99 = sadd.s32 %s98, 1
      %p102 = scmp.eq.s32.totalorder %s22, 1
      %p103 = scmp.ne.s32.totalorder %s98, %s100
      %p104 = scmp.eq.s32.totalorder %s22, 0
      %p105 = por %p103, %p104
      %p106 = scmp.ne.s32.totalorder %s98, %s100
      %p107 = scmp.eq.s32.totalorder %s27, 1
      %p108 = por %p106, %p107
      %p109 = scmp.ne.s32.totalorder %s100, %s101
      %p110 = scmp.eq.s32.totalorder %s27, 0
      %p111 = por %p109, %p110
      %p112 = scmp.ne.s32.totalorder %s100, %s101
      %p113 = scmp.eq.s32.totalorder %s28, 1
      %p114 = por %p112, %p113
      %p116 = scmp.ne.s32.totalorder %s101, %s115
      %p117 = scmp.eq.s32.totalorder %s28, 0
      %p118 = por %p116, %p117
      %s120 = sadd.s32 %s119, 1
      %p123 = scmp.eq.s32.totalorder %s22, 1
      %p124 = scmp.ne.s32.totalorder %s119, %s121
      %p125 = scmp.eq.s32.totalorder %s22, 0
      %p126 = por %p124, %p125
      %p127 = scmp.ne.s32.totalorder %s119, %s121
      %p128 = scmp.eq.s32.totalorder %s27, 1
      %p129 = por %p127, %p128
      %p130 = scmp.ne.s32.totalorder %s121, %s122
      %p131 = scmp.eq.s32.totalorder %s27, 0
      %p132 = por %p130, %p131
      %p133 = scmp.ne.s32.totalorder %s121, %s122
      %p134 = scmp.eq.s32.totalorder %s28, 1
      %p135 = por %p133, %p134
      %p137 = scmp.ne.s32.totalorder %s122, %s136
      %p138 = scmp.eq.s32.totalorder %s28, 0
      %p139 = por %p137, %p138
      %s141 = sadd.s32 %s140, 1
      %p144 = scmp.eq.s32.totalorder %s22, 1
      %p145 = scmp.ne.s32.totalorder %s140, %s142
      %p146 = scmp.eq.s32.totalorder %s22, 0
      %p147 = por %p145, %p146
      %p148 = scmp.ne.s32.totalorder %s140, %s142
      %p149 = scmp.eq.s32.totalorder %s27, 1
      %p150 = por %p148, %p149
      %p151 = scmp.ne.s32.totalorder %s142, %s143
      %p152 = scmp.eq.s32.totalorder %s27, 0
      %p153 = por %p151, %p152
      %p154 = scmp.ne.s32.totalorder %s142, %s143
      %p155 = scmp.eq.s32.totalorder %s28, 1
      %p156 = por %p154, %p155
      %p158 = scmp.ne.s32.totalorder %s143, %s157
      %p159 = scmp.eq.s32.totalorder %s28, 0
      %p160 = por %p158, %p159
      %s162 = sadd.s32 %s161, 1
      %p165 = scmp.eq.s32.totalorder %s22, 1
      %p166 = scmp.ne.s32.totalorder %s161, %s163
      %p167 = scmp.eq.s32.totalorder %s22, 0
      %p168 = por %p166, %p167
      %p169 = scmp.ne.s32.totalorder %s161, %s163
      %p170 = scmp.eq.s32.totalorder %s27, 1
      %p171 = por %p169, %p170
      %p172 = scmp.ne.s32.totalorder %s163, %s164
      %p173 = scmp.eq.s32.totalorder %s27, 0
      %p174 = por %p172, %p173
      %p175 = scmp.ne.s32.totalorder %s163, %s164
      %p176 = scmp.eq.s32.totalorder %s28, 1
      %p177 = por %p175, %p176
      %p179 = scmp.ne.s32.totalorder %s164, %s178
      %p180 = scmp.eq.s32.totalorder %s28, 0
      %p181 = por %p179, %p180
      %s183 = sadd.s32 %s182, 1
      %p186 = scmp.eq.s32.totalorder %s22, 1
      %p187 = scmp.ne.s32.totalorder %s182, %s184
      %p188 = scmp.eq.s32.totalorder %s22, 0
      %p189 = por %p187, %p188
      %p190 = scmp.ne.s32.totalorder %s182, %s184
      %p191 = scmp.eq.s32.totalorder %s27, 1
      %p192 = por %p190, %p191
      %p193 = scmp.ne.s32.totalorder %s184, %s185
      %p194 = scmp.eq.s32.totalorder %s27, 0
      %p195 = por %p193, %p194
      %p196 = scmp.ne.s32.totalorder %s184, %s185
      %p197 = scmp.eq.s32.totalorder %s28, 1
      %p198 = por %p196, %p197
      %p200 = scmp.ne.s32.totalorder %s185, %s199
      %p201 = scmp.eq.s32.totalorder %s28, 0
      %p202 = por %p200, %p201
      %s204 = sadd.s32 %s203, 1
      %p207 = scmp.eq.s32.totalorder %s22, 1
      %p208 = scmp.ne.s32.totalorder %s203, %s205
      %p209 = scmp.eq.s32.totalorder %s22, 0
      %p210 = por %p208, %p209
      %p211 = scmp.ne.s32.totalorder %s203, %s205
      %p212 = scmp.eq.s32.totalorder %s27, 1
      %p213 = por %p211, %p212
      %p214 = scmp.ne.s32.totalorder %s205, %s206
      %p215 = scmp.eq.s32.totalorder %s27, 0
      %p216 = por %p214, %p215
      %p217 = scmp.ne.s32.totalorder %s205, %s206
      %p218 = scmp.eq.s32.totalorder %s28, 1
      %p219 = por %p217, %p218
      %p221 = scmp.ne.s32.totalorder %s206, %s220
      %p222 = scmp.eq.s32.totalorder %s28, 0
      %p223 = por %p221, %p222
      %s225 = sadd.s32 %s224, 1
      %p228 = scmp.eq.s32.totalorder %s22, 1
      %p229 = scmp.ne.s32.totalorder %s224, %s226
      %p230 = scmp.eq.s32.totalorder %s22, 0
      %p231 = por %p229, %p230
      %p232 = scmp.ne.s32.totalorder %s224, %s226
      %p233 = scmp.eq.s32.totalorder %s27, 1
      %p234 = por %p232, %p233
      %p235 = scmp.ne.s32.totalorder %s226, %s227
      %p236 = scmp.eq.s32.totalorder %s27, 0
      %p237 = por %p235, %p236
      %p238 = scmp.ne.s32.totalorder %s226, %s227
      %p239 = scmp.eq.s32.totalorder %s28, 1
      %p240 = por %p238, %p239
      %p242 = scmp.ne.s32.totalorder %s227, %s241
      %p243 = scmp.eq.s32.totalorder %s28, 0
      %p244 = por %p242, %p243
      %s246 = sadd.s32 %s245, 1
      %p249 = scmp.eq.s32.totalorder %s22, 1
      %p250 = scmp.ne.s32.totalorder %s245, %s247
      %p251 = scmp.eq.s32.totalorder %s22, 0
      %p252 = por %p250, %p251
      %p253 = scmp.ne.s32.totalorder %s245, %s247
      %p254 = scmp.eq.s32.totalorder %s27, 1
      %p255 = por %p253, %p254
      %p256 = scmp.ne.s32.totalorder %s247, %s248
      %p257 = scmp.eq.s32.totalorder %s27, 0
      %p258 = por %p256, %p257
      %p259 = scmp.ne.s32.totalorder %s247, %s248
      %p260 = scmp.eq.s32.totalorder %s28, 1
      %p261 = por %p259, %p260
      %p263 = scmp.ne.s32.totalorder %s248, %s262
      %p264 = scmp.eq.s32.totalorder %s28, 0
      %p265 = por %p263, %p264
      %s267 = sadd.s32 %s266, 1
      %p270 = scmp.eq.s32.totalorder %s22, 1
      %p271 = scmp.ne.s32.totalorder %s266, %s268
      %p272 = scmp.eq.s32.totalorder %s22, 0
      %p273 = por %p271, %p272
      %p274 = scmp.ne.s32.totalorder %s266, %s268
      %p275 = scmp.eq.s32.totalorder %s27, 1
      %p276 = por %p274, %p275
      %p277 = scmp.ne.s32.totalorder %s268, %s269
      %p278 = scmp.eq.s32.totalorder %s27, 0
      %p279 = por %p277, %p278
      %p280 = scmp.ne.s32.totalorder %s268, %s269
      %p281 = scmp.eq.s32.totalorder %s28, 1
      %p282 = por %p280, %p281
      %p284 = scmp.ne.s32.totalorder %s269, %s283
      %p285 = scmp.eq.s32.totalorder %s28, 0
      %p286 = por %p284, %p285
      %s288 = sadd.s32 %s287, 1
      %p291 = scmp.eq.s32.totalorder %s22, 1
      %p292 = scmp.ne.s32.totalorder %s287, %s289
      %p293 = scmp.eq.s32.totalorder %s22, 0
      %p294 = por %p292, %p293
      %p295 = scmp.ne.s32.totalorder %s287, %s289
      %p296 = scmp.eq.s32.totalorder %s27, 1
      %p297 = por %p295, %p296
      %p298 = scmp.ne.s32.totalorder %s289, %s290
      %p299 = scmp.eq.s32.totalorder %s27, 0
      %p300 = por %p298, %p299
      %p301 = scmp.ne.s32.totalorder %s289, %s290
      %p302 = scmp.eq.s32.totalorder %s28, 1
      %p303 = por %p301, %p302
      %p305 = scmp.ne.s32.totalorder %s290, %s304
      %p306 = scmp.eq.s32.totalorder %s28, 0
      %p307 = por %p305, %p306
      %s308 = ssub.s32 %s22, %s29
      %p309 = scmp.eq.s32.totalorder %s308, 0
      %s311 = sadd.s32 %s310, 1
      %s312 = scalar_select %p309, %s310, %s311
      %p315 = pneg %p309
      %p316 = scmp.eq.s32.totalorder %s22, 1
      %p317 = por %p315, %p316
      %p318 = scmp.ne.s32.totalorder %s310, %s313
      %p319 = scmp.eq.s32.totalorder %s22, 0
      %p320 = por %p318, %p319
      %p321 = scmp.ne.s32.totalorder %s310, %s313
      %p322 = scmp.eq.s32.totalorder %s27, 1
      %p323 = por %p321, %p322
      %p324 = scmp.ne.s32.totalorder %s313, %s314
      %p325 = scmp.eq.s32.totalorder %s27, 0
      %p326 = por %p324, %p325
      %p327 = scmp.ne.s32.totalorder %s313, %s314
      %p328 = scmp.eq.s32.totalorder %s28, 1
      %p329 = por %p327, %p328
      %p331 = scmp.ne.s32.totalorder %s314, %s330
      %p332 = scmp.eq.s32.totalorder %s28, 0
      %p333 = por %p331, %p332
      %p334 = scmp.le.s32.totalorder 1, %s22
      %p335 = scmp.lt.s32.totalorder %s22, 3
      %p336 = pnand %p334, %p335
      %p337 = pneg %p336
      // Predicated region
      $region9: #{_forward_impl.1} parent=5 // pred_check
        _
      $region10: #{_forward_impl.1} parent=5 // pred_check_branch
        %339 = sbr.rel (%p336) target = $region12
      $region11: #{_forward_impl.1} parent=5 // pred_region
        %s340 = ssub.s32 %s22, 1
        // Predicated region
        $region13: #{_forward_impl.1} parent=11 // pred_check
          %p341 = pneg %p69
        $region14: #{_forward_impl.1} parent=11 // pred_check_branch
          %343 = sbr.rel (%p341) target = $region16
        $region15: #{_forward_impl.1} parent=11 // pred_region
          %345 = vsyncadd [#allocation3], 0
          %s346 = sshll.u32 %s1, 4
          %s347 = int_to_ptr.hbm [resolvable:$true] %s346
          %s348 = sshll.u32 [#allocation2], 4
          %s349 = int_to_ptr.vmem [resolvable:$true] %s348
          %354 = dma.hbm_to_vmem [thread:$0]  %s347, 4096, %s349, [#allocation3], 256, 256, 16
        $region16: #{_forward_impl.1} parent=11 // pred_fallthru
          _
        // Predicated region
        $region17: #{_forward_impl.1} parent=11 // pred_check
          %p355 = pneg %p90
        $region18: #{_forward_impl.1} parent=11 // pred_check_branch
          %357 = sbr.rel (%p355) target = $region20
        $region19: #{_forward_impl.1} parent=11 // pred_region
          _
        $region20: #{_forward_impl.1} parent=11 // pred_fallthru
          _
        // Predicated region
        $region21: #{_forward_impl.1} parent=11 // pred_check
          %p358 = pneg %p111
        $region22: #{_forward_impl.1} parent=11 // pred_check_branch
          %360 = sbr.rel (%p358) target = $region24
        $region23: #{_forward_impl.1} parent=11 // pred_region
          %362 = vsyncadd [#allocation5], 0
          %s363 = sshll.u32 %s3, 4
          %s364 = int_to_ptr.hbm [resolvable:$true] %s363
          %s365 = sshll.u32 [#allocation4], 4
          %s366 = int_to_ptr.vmem [resolvable:$true] %s365
          %371 = dma.hbm_to_vmem [thread:$0]  %s364, 8192, %s366, [#allocation5], 128, 128, 8
        $region24: #{_forward_impl.1} parent=11 // pred_fallthru
          _
        // Predicated region
        $region25: #{_forward_impl.1} parent=11 // pred_check
          %p372 = pneg %p132
        $region26: #{_forward_impl.1} parent=11 // pred_check_branch
          %374 = sbr.rel (%p372) target = $region28
        $region27: #{_forward_impl.1} parent=11 // pred_region
          _
        $region28: #{_forward_impl.1} parent=11 // pred_fallthru
          _
        // Predicated region
        $region29: #{_forward_impl.1} parent=11 // pred_check
          %p375 = pneg %p153
        $region30: #{_forward_impl.1} parent=11 // pred_check_branch
          %377 = sbr.rel (%p375) target = $region32
        $region31: #{_forward_impl.1} parent=11 // pred_region
          _
        $region32: #{_forward_impl.1} parent=11 // pred_fallthru
          _
        // Predicated region
        $region33: #{_forward_impl.1} parent=11 // pred_check
          %p378 = pneg %p174
        $region34: #{_forward_impl.1} parent=11 // pred_check_branch
          %380 = sbr.rel (%p378) target = $region36
        $region35: #{_forward_impl.1} parent=11 // pred_region
          _
        $region36: #{_forward_impl.1} parent=11 // pred_fallthru
          _
        // Predicated region
        $region37: #{_forward_impl.1} parent=11 // pred_check
          %p381 = pneg %p195
        $region38: #{_forward_impl.1} parent=11 // pred_check_branch
          %383 = sbr.rel (%p381) target = $region40
        $region39: #{_forward_impl.1} parent=11 // pred_region
          %385 = vsyncadd [#allocation5], 0
          %s386 = sshll.u32 %s7, 4
          %s387 = int_to_ptr.hbm [resolvable:$true] %s386
          %s388 = sshll.u32 [#allocation6], 4
          %s389 = int_to_ptr.vmem [resolvable:$true] %s388
          %394 = dma.hbm_to_vmem [thread:$0]  %s387, 3072, %s389, [#allocation5], 192, 192, 12
        $region40: #{_forward_impl.1} parent=11 // pred_fallthru
          _
        // Predicated region
        $region41: #{_forward_impl.1} parent=11 // pred_check
          %p395 = pneg %p216
        $region42: #{_forward_impl.1} parent=11 // pred_check_branch
          %397 = sbr.rel (%p395) target = $region44
        $region43: #{_forward_impl.1} parent=11 // pred_region
          _
        $region44: #{_forward_impl.1} parent=11 // pred_fallthru
          _
        // Predicated region
        $region45: #{_forward_impl.1} parent=11 // pred_check
          %p398 = pneg %p237
        $region46: #{_forward_impl.1} parent=11 // pred_check_branch
          %400 = sbr.rel (%p398) target = $region48
        $region47: #{_forward_impl.1} parent=11 // pred_region
          %402 = vsyncadd [#allocation8], 0
          %s403 = sshll.u32 %s9, 4
          %s404 = int_to_ptr.hbm [resolvable:$true] %s403
          %s405 = sshll.u32 [#allocation7], 4
          %s406 = int_to_ptr.vmem [resolvable:$true] %s405
          %411 = dma.hbm_to_vmem [thread:$0]  %s404, 6144, %s406, [#allocation8], 128, 128, 8
        $region48: #{_forward_impl.1} parent=11 // pred_fallthru
          _
        // Predicated region
        $region49: #{_forward_impl.1} parent=11 // pred_check
          %p412 = pneg %p258
        $region50: #{_forward_impl.1} parent=11 // pred_check_branch
          %414 = sbr.rel (%p412) target = $region52
        $region51: #{_forward_impl.1} parent=11 // pred_region
          _
        $region52: #{_forward_impl.1} parent=11 // pred_fallthru
          _
        // Predicated region
        $region53: #{_forward_impl.1} parent=11 // pred_check
          %p415 = pneg %p279
        $region54: #{_forward_impl.1} parent=11 // pred_check_branch
          %417 = sbr.rel (%p415) target = $region56
        $region55: #{_forward_impl.1} parent=11 // pred_region
          %419 = vsyncadd [#allocation8], 0
          %s420 = sshll.u32 %s11, 4
          %s421 = int_to_ptr.hbm [resolvable:$true] %s420
          %s422 = sshll.u32 [#allocation9], 4
          %s423 = int_to_ptr.vmem [resolvable:$true] %s422
          %428 = dma.hbm_to_vmem [thread:$0]  %s421, 2048, %s423, [#allocation8], 64, 64, 4
        $region56: #{_forward_impl.1} parent=11 // pred_fallthru
          _
        // Predicated region
        $region57: #{_forward_impl.1} parent=11 // pred_check
          %p429 = pneg %p300
        $region58: #{_forward_impl.1} parent=11 // pred_check_branch
          %431 = sbr.rel (%p429) target = $region60
        $region59: #{_forward_impl.1} parent=11 // pred_region
          _
        $region60: #{_forward_impl.1} parent=11 // pred_fallthru
          _
      $region12: #{_forward_impl.1} parent=5 // pred_fallthru
        _
      %p432 = scmp.lt.s32.totalorder %s22, 2
      // Predicated region
      $region61: #{_forward_impl.1} parent=5 // pred_check
        %p433 = pneg %p432
      $region62: #{_forward_impl.1} parent=5 // pred_check_branch
        %435 = sbr.rel (%p433) target = $region64
      $region63: #{_forward_impl.1} parent=5 // pred_region
        // Predicated region
        $region65: #{_forward_impl.1} parent=63 // pred_check
          %p436 = pneg %p42
        $region66: #{_forward_impl.1} parent=63 // pred_check_branch
          %438 = sbr.rel (%p436) target = $region68
        $region67: #{_forward_impl.1} parent=63 // pred_region
          %s439 = smul.u32 4, %s22
          %p440 = scmp.lt.s32.totalorder %s439, 7
          %s441 = scalar_select %p440, %s439, 7
          %s442 = smul.addr %s441, 4
          %s443 = scalar_lea.vmem %s0, %s442
          %s444 = smul.u32 4, %s22
        $region68: #{_forward_impl.1} parent=63 // pred_fallthru
          _
      $region64: #{_forward_impl.1} parent=5 // pred_fallthru
        _
      %p445 = scmp.le.s32.totalorder 1, %s22
      %p446 = scmp.lt.s32.totalorder %s22, 3
      %p447 = pnand %p445, %p446
      %p448 = pneg %p447
      // Predicated region
      $region69: #{_forward_impl.1} parent=5 // pred_check
        _
      $region70: #{_forward_impl.1} parent=5 // pred_check_branch
        %450 = sbr.rel (%p447) target = $region72
      $region71: #{_forward_impl.1} parent=5 // pred_region
        %s451 = ssub.s32 %s22, 1
        // Predicated region
        $region73: #{_forward_impl.1} parent=71 // pred_check
          %p452 = pneg %p69
        $region74: #{_forward_impl.1} parent=71 // pred_check_branch
          %454 = sbr.rel (%p452) target = $region76
        $region75: #{_forward_impl.1} parent=71 // pred_region
          %456 = dma.done [#allocation3], 4096
        $region76: #{_forward_impl.1} parent=71 // pred_fallthru
          _
        // Predicated region
        $region77: #{_forward_impl.1} parent=71 // pred_check
          %p457 = pneg %p111
        $region78: #{_forward_impl.1} parent=71 // pred_check_branch
          %459 = sbr.rel (%p457) target = $region80
        $region79: #{_forward_impl.1} parent=71 // pred_region
          %461 = dma.done [#allocation5], 8192
        $region80: #{_forward_impl.1} parent=71 // pred_fallthru
          _
        // Predicated region
        $region81: #{_forward_impl.1} parent=71 // pred_check
          %p462 = pneg %p195
        $region82: #{_forward_impl.1} parent=71 // pred_check_branch
          %464 = sbr.rel (%p462) target = $region84
        $region83: #{_forward_impl.1} parent=71 // pred_region
          %466 = dma.done [#allocation5], 3072
        $region84: #{_forward_impl.1} parent=71 // pred_fallthru
          _
        // Predicated region
        $region85: #{_forward_impl.1} parent=71 // pred_check
          %p467 = pneg %p237
        $region86: #{_forward_impl.1} parent=71 // pred_check_branch
          %469 = sbr.rel (%p467) target = $region88
        $region87: #{_forward_impl.1} parent=71 // pred_region
          %471 = dma.done [#allocation8], 6144
        $region88: #{_forward_impl.1} parent=71 // pred_fallthru
          _
        // Predicated region
        $region89: #{_forward_impl.1} parent=71 // pred_check
          %p472 = pneg %p279
        $region90: #{_forward_impl.1} parent=71 // pred_check_branch
          %474 = sbr.rel (%p472) target = $region92
        $region91: #{_forward_impl.1} parent=71 // pred_region
          %476 = dma.done [#allocation8], 2048
        $region92: #{_forward_impl.1} parent=71 // pred_fallthru
          _
        %s477 = smul.u32 4, %s27
        %p478 = scmp.lt.s32.totalorder %s477, 7
        %s479 = scalar_select %p478, %s477, 7
        %s480 = smul.addr %s479, 4
        %s481 = scalar_lea.vmem %s0, %s480
        %p482 = pneg %p48
        %p483 = pneg %p45
        %p484 = pneg %p69
        %p485 = pneg %p66
        %p486 = pneg %p90
        %p487 = pneg %p87
        %p488 = pneg %p111
        %p489 = pneg %p108
        %p490 = pneg %p132
        %p491 = pneg %p129
        %p492 = pneg %p153
        %p493 = pneg %p150
        %p494 = pneg %p174
        %p495 = pneg %p171
        %p496 = pneg %p195
        %p497 = pneg %p192
        %p498 = pneg %p216
        %p499 = pneg %p213
        %p500 = pneg %p237
        %p501 = pneg %p234
        %p502 = pneg %p258
        %p503 = pneg %p255
        %p504 = pneg %p279
        %p505 = pneg %p276
        %p506 = pneg %p300
        %p507 = pneg %p297
        %p508 = pneg %p326
        %p509 = pneg %p323
        %s510 = smul.u32 4, %s27
        %p511 = scmp.lt.s32.totalorder %s510, 7
        %s512 = scalar_select %p511, %s510, 7
        %s513 = smul.addr %s512, 8
        %s514 = scalar_lea.vmem %s13, %s513
        %s515 = smul.u32 4, %s27
        %p516 = scmp.lt.s32.totalorder %s515, 7
        %s517 = scalar_select %p516, %s515, 7
        %s518 = smul.addr %s517, 4
        %s519 = scalar_lea.vmem %s0, %s518
        %s520 = smul.u32 4, %s27
        %s521 = smul.u32 4, %s27
        %p522 = scmp.lt.s32.totalorder %s521, 7
        %s523 = scalar_select %p522, %s521, 7
        %s524 = smul.addr %s523, 8
        %s525 = scalar_lea.vmem %s13, %s524
        %s526 = smul.u32 4, %s27
        %v527 = vlaneseq
        %v528 = vand.u32 %v527, 127
        %vm529 = vcmp.ge.s32.totalorder %v528, 0
        %vm530 = vcmp.lt.s32.totalorder %v528, 20
        %vm531 = vmand %vm529, %vm530
        %vm532 = vcmp.ge.s32.totalorder %v528, 20
        %vm533 = vcmp.lt.s32.totalorder %v528, 30
        %vm534 = vmand %vm532, %vm533
        %vm535 = vcmp.ge.s32.totalorder %v528, 30
        %vm536 = vcmp.lt.s32.totalorder %v528, 40
        %vm537 = vmand %vm535, %vm536
        %vm538 = vcmp.ge.s32.totalorder %v528, 40
        %vm539 = vcmp.lt.s32.totalorder %v528, 50
        %vm540 = vmand %vm538, %vm539
        %vm541 = vcmp.ge.s32.totalorder %v528, 50
        %vm542 = vcmp.lt.s32.totalorder %v528, 60
        %vm543 = vmand %vm541, %vm542
        %v544 = vld [vmem:[%s519] sm:$0xf]
        %v545 = vld [vmem:[%s519 + $0x4] sm:$0xf]
        %v546 = vld [vmem:[#allocation2] sm:$0xff]
        %v547 = vld [vmem:[#allocation2 + $0x8] sm:$0xff]
        %v548 = vld [vmem:[#allocation2 + $0x10] sm:$0xff]
        %v549 = vld [vmem:[#allocation2 + $0x18] sm:$0xff]
        %v550 = vld [vmem:[#allocation2 + $0x20] sm:$0xff]
        %v551 = vld [vmem:[#allocation2 + $0x28] sm:$0xff]
        %v552 = vld [vmem:[#allocation2 + $0x30] sm:$0xff]
        %v553 = vld [vmem:[#allocation2 + $0x38] sm:$0xff]
        %v554 = vld [vmem:[#allocation2 + $0x40] sm:$0xff]
        %v555 = vld [vmem:[#allocation2 + $0x48] sm:$0xff]
        %v556 = vld [vmem:[#allocation2 + $0x50] sm:$0xff]
        %v557 = vld [vmem:[#allocation2 + $0x58] sm:$0xff]
        %v558 = vld [vmem:[#allocation2 + $0x60] sm:$0xff]
        %v559 = vld [vmem:[#allocation2 + $0x68] sm:$0xff]
        %v560 = vld [vmem:[#allocation2 + $0x70] sm:$0xff]
        %v561 = vld [vmem:[#allocation2 + $0x78] sm:$0xff]
        %v562 = vld [vmem:[#allocation2 + $0x80] sm:$0xff]
        %v563 = vld [vmem:[#allocation2 + $0x88] sm:$0xff]
        %v564 = vld [vmem:[#allocation2 + $0x90] sm:$0xff]
        %v565 = vld [vmem:[#allocation2 + $0x98] sm:$0xff]
        %v566 = vld [vmem:[#allocation2 + $0xa0] sm:$0xff]
        %v567 = vld [vmem:[#allocation2 + $0xa8] sm:$0xff]
        %v568 = vld [vmem:[#allocation2 + $0xb0] sm:$0xff]
        %v569 = vld [vmem:[#allocation2 + $0xb8] sm:$0xff]
        %v570 = vld [vmem:[#allocation2 + $0xc0] sm:$0xff]
        %v571 = vld [vmem:[#allocation2 + $0xc8] sm:$0xff]
        %v572 = vld [vmem:[#allocation2 + $0xd0] sm:$0xff]
        %v573 = vld [vmem:[#allocation2 + $0xd8] sm:$0xff]
        %v574 = vld [vmem:[#allocation2 + $0xe0] sm:$0xff]
        %v575 = vld [vmem:[#allocation2 + $0xe8] sm:$0xff]
        %v576 = vld [vmem:[#allocation2 + $0xf0] sm:$0xff]
        %v577 = vld [vmem:[#allocation2 + $0xf8] sm:$0xff]
        %v578 = vld [vmem:[%s2] sm:$0xf]
        %v580 = vperm.slane %v578, 0
        %v581 = vperm.slane %v578, 1
        %v582 = vperm.slane %v578, 2
        %v583 = vperm.slane %v578, 3
        %v590 = vunpack.c.l.b16 %v544
        %v591 = vunpack.c.l.b16 %v545
        %v592 = vpack.c.b16 %v591, %v590
        %v626 = vunpack.c.l.b16 %v546
        %v627 = vunpack.c.h.b16 %v546
        %v628 = vunpack.c.l.b16 %v547
        %v629 = vunpack.c.h.b16 %v547
        %v630 = vunpack.c.l.b16 %v548
        %v631 = vunpack.c.h.b16 %v548
        %v632 = vunpack.c.l.b16 %v549
        %v633 = vunpack.c.h.b16 %v549
        %v634 = vunpack.c.l.b16 %v550
        %v635 = vunpack.c.h.b16 %v550
        %v636 = vunpack.c.l.b16 %v551
        %v637 = vunpack.c.h.b16 %v551
        %v638 = vunpack.c.l.b16 %v552
        %v639 = vunpack.c.h.b16 %v552
        %v640 = vunpack.c.l.b16 %v553
        %v641 = vunpack.c.h.b16 %v553
        %v642 = vunpack.c.l.b16 %v554
        %v643 = vunpack.c.h.b16 %v554
        %v644 = vunpack.c.l.b16 %v555
        %v645 = vunpack.c.h.b16 %v555
        %v646 = vunpack.c.l.b16 %v556
        %v647 = vunpack.c.h.b16 %v556
        %v648 = vunpack.c.l.b16 %v557
        %v649 = vunpack.c.h.b16 %v557
        %v650 = vunpack.c.l.b16 %v558
        %v651 = vunpack.c.h.b16 %v558
        %v652 = vunpack.c.l.b16 %v559
        %v653 = vunpack.c.h.b16 %v559
        %v654 = vunpack.c.l.b16 %v560
        %v655 = vunpack.c.h.b16 %v560
        %v656 = vunpack.c.l.b16 %v561
        %v657 = vunpack.c.h.b16 %v561
        %v658 = vunpack.c.l.b16 %v562
        %v659 = vunpack.c.h.b16 %v562
        %v660 = vunpack.c.l.b16 %v563
        %v661 = vunpack.c.h.b16 %v563
        %v662 = vunpack.c.l.b16 %v564
        %v663 = vunpack.c.h.b16 %v564
        %v664 = vunpack.c.l.b16 %v565
        %v665 = vunpack.c.h.b16 %v565
        %v666 = vunpack.c.l.b16 %v566
        %v667 = vunpack.c.h.b16 %v566
        %v668 = vunpack.c.l.b16 %v567
        %v669 = vunpack.c.h.b16 %v567
        %v670 = vunpack.c.l.b16 %v568
        %v671 = vunpack.c.h.b16 %v568
        %v672 = vunpack.c.l.b16 %v569
        %v673 = vunpack.c.h.b16 %v569
        %v674 = vunpack.c.l.b16 %v570
        %v675 = vunpack.c.h.b16 %v570
        %v676 = vunpack.c.l.b16 %v571
        %v677 = vunpack.c.h.b16 %v571
        %v678 = vunpack.c.l.b16 %v572
        %v679 = vunpack.c.h.b16 %v572
        %v680 = vunpack.c.l.b16 %v573
        %v681 = vunpack.c.h.b16 %v573
        %v682 = vunpack.c.l.b16 %v574
        %v683 = vunpack.c.h.b16 %v574
        %v684 = vunpack.c.l.b16 %v575
        %v685 = vunpack.c.h.b16 %v575
        %v686 = vunpack.c.l.b16 %v576
        %v687 = vunpack.c.h.b16 %v576
        %v688 = vunpack.c.l.b16 %v577
        %v689 = vunpack.c.h.b16 %v577
        %v690 = vpack.c.b16 %v630, %v626
        %v691 = vpack.c.b16 %v631, %v627
        %v692 = vpack.c.b16 %v632, %v628
        %v693 = vpack.c.b16 %v633, %v629
        %v694 = vpack.c.b16 %v638, %v634
        %v695 = vpack.c.b16 %v639, %v635
        %v696 = vpack.c.b16 %v640, %v636
        %v697 = vpack.c.b16 %v641, %v637
        %v698 = vpack.c.b16 %v646, %v642
        %v699 = vpack.c.b16 %v647, %v643
        %v700 = vpack.c.b16 %v648, %v644
        %v701 = vpack.c.b16 %v649, %v645
        %v702 = vpack.c.b16 %v654, %v650
        %v703 = vpack.c.b16 %v655, %v651
        %v704 = vpack.c.b16 %v656, %v652
        %v705 = vpack.c.b16 %v657, %v653
        %v706 = vpack.c.b16 %v662, %v658
        %v707 = vpack.c.b16 %v663, %v659
        %v708 = vpack.c.b16 %v664, %v660
        %v709 = vpack.c.b16 %v665, %v661
        %v710 = vpack.c.b16 %v670, %v666
        %v711 = vpack.c.b16 %v671, %v667
        %v712 = vpack.c.b16 %v672, %v668
        %v713 = vpack.c.b16 %v673, %v669
        %v714 = vpack.c.b16 %v678, %v674
        %v715 = vpack.c.b16 %v679, %v675
        %v716 = vpack.c.b16 %v680, %v676
        %v717 = vpack.c.b16 %v681, %v677
        %v718 = vpack.c.b16 %v686, %v682
        %v719 = vpack.c.b16 %v687, %v683
        %v720 = vpack.c.b16 %v688, %v684
        %v721 = vpack.c.b16 %v689, %v685
        %754 = vmatpush.bf16.msra.mxu0 %v718
        %755 = vmatpush.bf16.msra.mxu0 %v714
        %756 = vmatpush.bf16.msra.mxu0 %v710
        %757 = vmatpush.bf16.msra.mxu0 %v706
        %758 = vmatpush.bf16.msra.mxu0 %v702
        %759 = vmatpush.bf16.msra.mxu0 %v698
        %760 = vmatpush.bf16.msra.mxu0 %v694
        %761 = vmatpush.bf16.msra.mxu0 %v690
        %762 = vmatmul.bf16.gmra.mxu0 %v592
        %v763 = vpop.f32.mrf.mxu0
        %v764 = vadd.f32 %v580, %v763
        %v765 = vpop.f32.mrf.mxu0
        %v766 = vadd.f32 %v580, %v765
        %767 = vdwg.mxu0
        %768 = vmatpush.bf16.msra.mxu0 %v719
        %769 = vmatpush.bf16.msra.mxu0 %v715
        %770 = vmatpush.bf16.msra.mxu0 %v711
        %771 = vmatpush.bf16.msra.mxu0 %v707
        %772 = vmatpush.bf16.msra.mxu0 %v703
        %773 = vmatpush.bf16.msra.mxu0 %v699
        %774 = vmatpush.bf16.msra.mxu0 %v695
        %775 = vmatpush.bf16.msra.mxu0 %v691
        %776 = vmatmul.bf16.gmra.mxu0 %v592
        %v777 = vpop.f32.mrf.mxu0
        %v778 = vadd.f32 %v581, %v777
        %v779 = vpop.f32.mrf.mxu0
        %v780 = vadd.f32 %v581, %v779
        %781 = vdwg.mxu0
        %782 = vmatpush.bf16.msra.mxu0 %v720
        %783 = vmatpush.bf16.msra.mxu0 %v716
        %784 = vmatpush.bf16.msra.mxu0 %v712
        %785 = vmatpush.bf16.msra.mxu0 %v708
        %786 = vmatpush.bf16.msra.mxu0 %v704
        %787 = vmatpush.bf16.msra.mxu0 %v700
        %788 = vmatpush.bf16.msra.mxu0 %v696
        %789 = vmatpush.bf16.msra.mxu0 %v692
        %790 = vmatmul.bf16.gmra.mxu0 %v592
        %v791 = vpop.f32.mrf.mxu0
        %v792 = vadd.f32 %v582, %v791
        %v793 = vpop.f32.mrf.mxu0
        %v794 = vadd.f32 %v582, %v793
        %795 = vdwg.mxu0
        %796 = vmatpush.bf16.msra.mxu0 %v721
        %797 = vmatpush.bf16.msra.mxu0 %v717
        %798 = vmatpush.bf16.msra.mxu0 %v713
        %799 = vmatpush.bf16.msra.mxu0 %v709
        %800 = vmatpush.bf16.msra.mxu0 %v705
        %801 = vmatpush.bf16.msra.mxu0 %v701
        %802 = vmatpush.bf16.msra.mxu0 %v697
        %803 = vmatpush.bf16.msra.mxu0 %v693
        %804 = vmatmul.bf16.gmra.mxu0 %v592
        %v805 = vpop.f32.mrf.mxu0
        %v806 = vadd.f32 %v583, %v805
        %v807 = vpop.f32.mrf.mxu0
        %v808 = vadd.f32 %v583, %v807
        %809 = vdwg.mxu0
        %v810 = vmax.f32 %v764, 0.0
        %v811 = vmax.f32 %v778, 0.0
        %v812 = vmax.f32 %v792, 0.0
        %v813 = vmax.f32 %v806, 0.0
        %v814 = vmax.f32 %v766, 0.0
        %v815 = vmax.f32 %v780, 0.0
        %v816 = vmax.f32 %v794, 0.0
        %v817 = vmax.f32 %v808, 0.0
        %v818 = vpack.c.bf16 %v814, %v810
        %v819 = vpack.c.bf16 %v815, %v811
        %v820 = vpack.c.bf16 %v816, %v812
        %v821 = vpack.c.bf16 %v817, %v813
        %v822 = vld [vmem:[#allocation4] sm:$0xff]
        %v823 = vld [vmem:[#allocation4 + $0x8] sm:$0xff]
        %v824 = vld [vmem:[#allocation4 + $0x10] sm:$0xff]
        %v825 = vld [vmem:[#allocation4 + $0x18] sm:$0xff]
        %v826 = vld [vmem:[#allocation4 + $0x20] sm:$0xff]
        %v827 = vld [vmem:[#allocation4 + $0x28] sm:$0xff]
        %v828 = vld [vmem:[#allocation4 + $0x30] sm:$0xff]
        %v829 = vld [vmem:[#allocation4 + $0x38] sm:$0xff]
        %v830 = vld [vmem:[#allocation4 + $0x40] sm:$0xff]
        %v831 = vld [vmem:[#allocation4 + $0x48] sm:$0xff]
        %v832 = vld [vmem:[#allocation4 + $0x50] sm:$0xff]
        %v833 = vld [vmem:[#allocation4 + $0x58] sm:$0xff]
        %v834 = vld [vmem:[#allocation4 + $0x60] sm:$0xff]
        %v835 = vld [vmem:[#allocation4 + $0x68] sm:$0xff]
        %v836 = vld [vmem:[#allocation4 + $0x70] sm:$0xff]
        %v837 = vld [vmem:[#allocation4 + $0x78] sm:$0xff]
        %v838 = vld [vmem:[#allocation4 + $0x80] sm:$0xff]
        %v839 = vld [vmem:[#allocation4 + $0x88] sm:$0xff]
        %v840 = vld [vmem:[#allocation4 + $0x90] sm:$0xff]
        %v841 = vld [vmem:[#allocation4 + $0x98] sm:$0xff]
        %v842 = vld [vmem:[#allocation4 + $0xa0] sm:$0xff]
        %v843 = vld [vmem:[#allocation4 + $0xa8] sm:$0xff]
        %v844 = vld [vmem:[#allocation4 + $0xb0] sm:$0xff]
        %v845 = vld [vmem:[#allocation4 + $0xb8] sm:$0xff]
        %v846 = vld [vmem:[#allocation4 + $0xc0] sm:$0xff]
        %v847 = vld [vmem:[#allocation4 + $0xc8] sm:$0xff]
        %v848 = vld [vmem:[#allocation4 + $0xd0] sm:$0xff]
        %v849 = vld [vmem:[#allocation4 + $0xd8] sm:$0xff]
        %v850 = vld [vmem:[#allocation4 + $0xe0] sm:$0xff]
        %v851 = vld [vmem:[#allocation4 + $0xe8] sm:$0xff]
        %v852 = vld [vmem:[#allocation4 + $0xf0] sm:$0xff]
        %v853 = vld [vmem:[#allocation4 + $0xf8] sm:$0xff]
        %v854 = vld [vmem:[#allocation4 + $0x100] sm:$0xff]
        %v855 = vld [vmem:[#allocation4 + $0x108] sm:$0xff]
        %v856 = vld [vmem:[#allocation4 + $0x110] sm:$0xff]
        %v857 = vld [vmem:[#allocation4 + $0x118] sm:$0xff]
        %v858 = vld [vmem:[#allocation4 + $0x120] sm:$0xff]
        %v859 = vld [vmem:[#allocation4 + $0x128] sm:$0xff]
        %v860 = vld [vmem:[#allocation4 + $0x130] sm:$0xff]
        %v861 = vld [vmem:[#allocation4 + $0x138] sm:$0xff]
        %v862 = vld [vmem:[#allocation4 + $0x140] sm:$0xff]
        %v863 = vld [vmem:[#allocation4 + $0x148] sm:$0xff]
        %v864 = vld [vmem:[#allocation4 + $0x150] sm:$0xff]
        %v865 = vld [vmem:[#allocation4 + $0x158] sm:$0xff]
        %v866 = vld [vmem:[#allocation4 + $0x160] sm:$0xff]
        %v867 = vld [vmem:[#allocation4 + $0x168] sm:$0xff]
        %v868 = vld [vmem:[#allocation4 + $0x170] sm:$0xff]
        %v869 = vld [vmem:[#allocation4 + $0x178] sm:$0xff]
        %v870 = vld [vmem:[#allocation4 + $0x180] sm:$0xff]
        %v871 = vld [vmem:[#allocation4 + $0x188] sm:$0xff]
        %v872 = vld [vmem:[#allocation4 + $0x190] sm:$0xff]
        %v873 = vld [vmem:[#allocation4 + $0x198] sm:$0xff]
        %v874 = vld [vmem:[#allocation4 + $0x1a0] sm:$0xff]
        %v875 = vld [vmem:[#allocation4 + $0x1a8] sm:$0xff]
        %v876 = vld [vmem:[#allocation4 + $0x1b0] sm:$0xff]
        %v877 = vld [vmem:[#allocation4 + $0x1b8] sm:$0xff]
        %v878 = vld [vmem:[#allocation4 + $0x1c0] sm:$0xff]
        %v879 = vld [vmem:[#allocation4 + $0x1c8] sm:$0xff]
        %v880 = vld [vmem:[#allocation4 + $0x1d0] sm:$0xff]
        %v881 = vld [vmem:[#allocation4 + $0x1d8] sm:$0xff]
        %v882 = vld [vmem:[#allocation4 + $0x1e0] sm:$0xff]
        %v883 = vld [vmem:[#allocation4 + $0x1e8] sm:$0xff]
        %v884 = vld [vmem:[#allocation4 + $0x1f0] sm:$0xff]
        %v885 = vld [vmem:[#allocation4 + $0x1f8] sm:$0xff]
        %v886 = vld [vmem:[%s4] sm:$0x3]
        %v888 = vperm.slane %v886, 0
        %v889 = vperm.slane %v886, 1
        %v956 = vunpack.c.l.b16 %v822
        %v957 = vunpack.c.h.b16 %v822
        %v958 = vunpack.c.l.b16 %v823
        %v959 = vunpack.c.h.b16 %v823
        %v960 = vunpack.c.l.b16 %v824
        %v961 = vunpack.c.h.b16 %v824
        %v962 = vunpack.c.l.b16 %v825
        %v963 = vunpack.c.h.b16 %v825
        %v964 = vunpack.c.l.b16 %v826
        %v965 = vunpack.c.h.b16 %v826
        %v966 = vunpack.c.l.b16 %v827
        %v967 = vunpack.c.h.b16 %v827
        %v968 = vunpack.c.l.b16 %v828
        %v969 = vunpack.c.h.b16 %v828
        %v970 = vunpack.c.l.b16 %v829
        %v971 = vunpack.c.h.b16 %v829
        %v972 = vunpack.c.l.b16 %v830
        %v973 = vunpack.c.h.b16 %v830
        %v974 = vunpack.c.l.b16 %v831
        %v975 = vunpack.c.h.b16 %v831
        %v976 = vunpack.c.l.b16 %v832
        %v977 = vunpack.c.h.b16 %v832
        %v978 = vunpack.c.l.b16 %v833
        %v979 = vunpack.c.h.b16 %v833
        %v980 = vunpack.c.l.b16 %v834
        %v981 = vunpack.c.h.b16 %v834
        %v982 = vunpack.c.l.b16 %v835
        %v983 = vunpack.c.h.b16 %v835
        %v984 = vunpack.c.l.b16 %v836
        %v985 = vunpack.c.h.b16 %v836
        %v986 = vunpack.c.l.b16 %v837
        %v987 = vunpack.c.h.b16 %v837
        %v988 = vunpack.c.l.b16 %v838
        %v989 = vunpack.c.h.b16 %v838
        %v990 = vunpack.c.l.b16 %v839
        %v991 = vunpack.c.h.b16 %v839
        %v992 = vunpack.c.l.b16 %v840
        %v993 = vunpack.c.h.b16 %v840
        %v994 = vunpack.c.l.b16 %v841
        %v995 = vunpack.c.h.b16 %v841
        %v996 = vunpack.c.l.b16 %v842
        %v997 = vunpack.c.h.b16 %v842
        %v998 = vunpack.c.l.b16 %v843
        %v999 = vunpack.c.h.b16 %v843
        %v1000 = vunpack.c.l.b16 %v844
        %v1001 = vunpack.c.h.b16 %v844
        %v1002 = vunpack.c.l.b16 %v845
        %v1003 = vunpack.c.h.b16 %v845
        %v1004 = vunpack.c.l.b16 %v846
        %v1005 = vunpack.c.h.b16 %v846
        %v1006 = vunpack.c.l.b16 %v847
        %v1007 = vunpack.c.h.b16 %v847
        %v1008 = vunpack.c.l.b16 %v848
        %v1009 = vunpack.c.h.b16 %v848
        %v1010 = vunpack.c.l.b16 %v849
        %v1011 = vunpack.c.h.b16 %v849
        %v1012 = vunpack.c.l.b16 %v850
        %v1013 = vunpack.c.h.b16 %v850
        %v1014 = vunpack.c.l.b16 %v851
        %v1015 = vunpack.c.h.b16 %v851
        %v1016 = vunpack.c.l.b16 %v852
        %v1017 = vunpack.c.h.b16 %v852
        %v1018 = vunpack.c.l.b16 %v853
        %v1019 = vunpack.c.h.b16 %v853
        %v1020 = vunpack.c.l.b16 %v854
        %v1021 = vunpack.c.h.b16 %v854
        %v1022 = vunpack.c.l.b16 %v855
        %v1023 = vunpack.c.h.b16 %v855
        %v1024 = vunpack.c.l.b16 %v856
        %v1025 = vunpack.c.h.b16 %v856
        %v1026 = vunpack.c.l.b16 %v857
        %v1027 = vunpack.c.h.b16 %v857
        %v1028 = vunpack.c.l.b16 %v858
        %v1029 = vunpack.c.h.b16 %v858
        %v1030 = vunpack.c.l.b16 %v859
        %v1031 = vunpack.c.h.b16 %v859
        %v1032 = vunpack.c.l.b16 %v860
        %v1033 = vunpack.c.h.b16 %v860
        %v1034 = vunpack.c.l.b16 %v861
        %v1035 = vunpack.c.h.b16 %v861
        %v1036 = vunpack.c.l.b16 %v862
        %v1037 = vunpack.c.h.b16 %v862
        %v1038 = vunpack.c.l.b16 %v863
        %v1039 = vunpack.c.h.b16 %v863
        %v1040 = vunpack.c.l.b16 %v864
        %v1041 = vunpack.c.h.b16 %v864
        %v1042 = vunpack.c.l.b16 %v865
        %v1043 = vunpack.c.h.b16 %v865
        %v1044 = vunpack.c.l.b16 %v866
        %v1045 = vunpack.c.h.b16 %v866
        %v1046 = vunpack.c.l.b16 %v867
        %v1047 = vunpack.c.h.b16 %v867
        %v1048 = vunpack.c.l.b16 %v868
        %v1049 = vunpack.c.h.b16 %v868
        %v1050 = vunpack.c.l.b16 %v869
        %v1051 = vunpack.c.h.b16 %v869
        %v1052 = vunpack.c.l.b16 %v870
        %v1053 = vunpack.c.h.b16 %v870
        %v1054 = vunpack.c.l.b16 %v871
        %v1055 = vunpack.c.h.b16 %v871
        %v1056 = vunpack.c.l.b16 %v872
        %v1057 = vunpack.c.h.b16 %v872
        %v1058 = vunpack.c.l.b16 %v873
        %v1059 = vunpack.c.h.b16 %v873
        %v1060 = vunpack.c.l.b16 %v874
        %v1061 = vunpack.c.h.b16 %v874
        %v1062 = vunpack.c.l.b16 %v875
        %v1063 = vunpack.c.h.b16 %v875
        %v1064 = vunpack.c.l.b16 %v876
        %v1065 = vunpack.c.h.b16 %v876
        %v1066 = vunpack.c.l.b16 %v877
        %v1067 = vunpack.c.h.b16 %v877
        %v1068 = vunpack.c.l.b16 %v878
        %v1069 = vunpack.c.h.b16 %v878
        %v1070 = vunpack.c.l.b16 %v879
        %v1071 = vunpack.c.h.b16 %v879
        %v1072 = vunpack.c.l.b16 %v880
        %v1073 = vunpack.c.h.b16 %v880
        %v1074 = vunpack.c.l.b16 %v881
        %v1075 = vunpack.c.h.b16 %v881
        %v1076 = vunpack.c.l.b16 %v882
        %v1077 = vunpack.c.h.b16 %v882
        %v1078 = vunpack.c.l.b16 %v883
        %v1079 = vunpack.c.h.b16 %v883
        %v1080 = vunpack.c.l.b16 %v884
        %v1081 = vunpack.c.h.b16 %v884
        %v1082 = vunpack.c.l.b16 %v885
        %v1083 = vunpack.c.h.b16 %v885
        %v1084 = vpack.c.b16 %v958, %v956
        %v1085 = vpack.c.b16 %v959, %v957
        %v1086 = vpack.c.b16 %v962, %v960
        %v1087 = vpack.c.b16 %v963, %v961
        %v1088 = vpack.c.b16 %v966, %v964
        %v1089 = vpack.c.b16 %v967, %v965
        %v1090 = vpack.c.b16 %v970, %v968
        %v1091 = vpack.c.b16 %v971, %v969
        %v1092 = vpack.c.b16 %v974, %v972
        %v1093 = vpack.c.b16 %v975, %v973
        %v1094 = vpack.c.b16 %v978, %v976
        %v1095 = vpack.c.b16 %v979, %v977
        %v1096 = vpack.c.b16 %v982, %v980
        %v1097 = vpack.c.b16 %v983, %v981
        %v1098 = vpack.c.b16 %v986, %v984
        %v1099 = vpack.c.b16 %v987, %v985
        %v1100 = vpack.c.b16 %v990, %v988
        %v1101 = vpack.c.b16 %v991, %v989
        %v1102 = vpack.c.b16 %v994, %v992
        %v1103 = vpack.c.b16 %v995, %v993
        %v1104 = vpack.c.b16 %v998, %v996
        %v1105 = vpack.c.b16 %v999, %v997
        %v1106 = vpack.c.b16 %v1002, %v1000
        %v1107 = vpack.c.b16 %v1003, %v1001
        %v1108 = vpack.c.b16 %v1006, %v1004
        %v1109 = vpack.c.b16 %v1007, %v1005
        %v1110 = vpack.c.b16 %v1010, %v1008
        %v1111 = vpack.c.b16 %v1011, %v1009
        %v1112 = vpack.c.b16 %v1014, %v1012
        %v1113 = vpack.c.b16 %v1015, %v1013
        %v1114 = vpack.c.b16 %v1018, %v1016
        %v1115 = vpack.c.b16 %v1019, %v1017
        %v1116 = vpack.c.b16 %v1022, %v1020
        %v1117 = vpack.c.b16 %v1023, %v1021
        %v1118 = vpack.c.b16 %v1026, %v1024
        %v1119 = vpack.c.b16 %v1027, %v1025
        %v1120 = vpack.c.b16 %v1030, %v1028
        %v1121 = vpack.c.b16 %v1031, %v1029
        %v1122 = vpack.c.b16 %v1034, %v1032
        %v1123 = vpack.c.b16 %v1035, %v1033
        %v1124 = vpack.c.b16 %v1038, %v1036
        %v1125 = vpack.c.b16 %v1039, %v1037
        %v1126 = vpack.c.b16 %v1042, %v1040
        %v1127 = vpack.c.b16 %v1043, %v1041
        %v1128 = vpack.c.b16 %v1046, %v1044
        %v1129 = vpack.c.b16 %v1047, %v1045
        %v1130 = vpack.c.b16 %v1050, %v1048
        %v1131 = vpack.c.b16 %v1051, %v1049
        %v1132 = vpack.c.b16 %v1054, %v1052
        %v1133 = vpack.c.b16 %v1055, %v1053
        %v1134 = vpack.c.b16 %v1058, %v1056
        %v1135 = vpack.c.b16 %v1059, %v1057
        %v1136 = vpack.c.b16 %v1062, %v1060
        %v1137 = vpack.c.b16 %v1063, %v1061
        %v1138 = vpack.c.b16 %v1066, %v1064
        %v1139 = vpack.c.b16 %v1067, %v1065
        %v1140 = vpack.c.b16 %v1070, %v1068
        %v1141 = vpack.c.b16 %v1071, %v1069
        %v1142 = vpack.c.b16 %v1074, %v1072
        %v1143 = vpack.c.b16 %v1075, %v1073
        %v1144 = vpack.c.b16 %v1078, %v1076
        %v1145 = vpack.c.b16 %v1079, %v1077
        %v1146 = vpack.c.b16 %v1082, %v1080
        %v1147 = vpack.c.b16 %v1083, %v1081
        %1212 = vmatpush.bf16.msra.mxu0 %v1098
        %1213 = vmatpush.bf16.msra.mxu0 %v1096
        %1214 = vmatpush.bf16.msra.mxu0 %v1094
        %1215 = vmatpush.bf16.msra.mxu0 %v1092
        %1216 = vmatpush.bf16.msra.mxu0 %v1090
        %1217 = vmatpush.bf16.msra.mxu0 %v1088
        %1218 = vmatpush.bf16.msra.mxu0 %v1086
        %1219 = vmatpush.bf16.msra.mxu0 %v1084
        %1220 = vmatmul.bf16.gmra.mxu0 %v818
        %v1221 = vpop.f32.mrf.mxu0
        %v1222 = vadd.f32 %v888, %v1221
        %v1223 = vpop.f32.mrf.mxu0
        %v1224 = vadd.f32 %v888, %v1223
        %1225 = vdwg.mxu0
        %1226 = vmatpush.bf16.msra.mxu0 %v1114
        %1227 = vmatpush.bf16.msra.mxu0 %v1112
        %1228 = vmatpush.bf16.msra.mxu0 %v1110
        %1229 = vmatpush.bf16.msra.mxu0 %v1108
        %1230 = vmatpush.bf16.msra.mxu0 %v1106
        %1231 = vmatpush.bf16.msra.mxu0 %v1104
        %1232 = vmatpush.bf16.msra.mxu0 %v1102
        %1233 = vmatpush.bf16.msra.mxu0 %v1100
        %1234 = vmatmul.bf16.gmra.mxu0 %v819
        %v1235 = vpop.f32.mrf.mxu0
        %v1236 = vadd.f32 %v1222, %v1235
        %v1237 = vpop.f32.mrf.mxu0
        %v1238 = vadd.f32 %v1224, %v1237
        %1239 = vdwg.mxu0
        %1240 = vmatpush.bf16.msra.mxu0 %v1130
        %1241 = vmatpush.bf16.msra.mxu0 %v1128
        %1242 = vmatpush.bf16.msra.mxu0 %v1126
        %1243 = vmatpush.bf16.msra.mxu0 %v1124
        %1244 = vmatpush.bf16.msra.mxu0 %v1122
        %1245 = vmatpush.bf16.msra.mxu0 %v1120
        %1246 = vmatpush.bf16.msra.mxu0 %v1118
        %1247 = vmatpush.bf16.msra.mxu0 %v1116
        %1248 = vmatmul.bf16.gmra.mxu0 %v820
        %v1249 = vpop.f32.mrf.mxu0
        %v1250 = vadd.f32 %v1236, %v1249
        %v1251 = vpop.f32.mrf.mxu0
        %v1252 = vadd.f32 %v1238, %v1251
        %1253 = vdwg.mxu0
        %1254 = vmatpush.bf16.msra.mxu0 %v1146
        %1255 = vmatpush.bf16.msra.mxu0 %v1144
        %1256 = vmatpush.bf16.msra.mxu0 %v1142
        %1257 = vmatpush.bf16.msra.mxu0 %v1140
        %1258 = vmatpush.bf16.msra.mxu0 %v1138
        %1259 = vmatpush.bf16.msra.mxu0 %v1136
        %1260 = vmatpush.bf16.msra.mxu0 %v1134
        %1261 = vmatpush.bf16.msra.mxu0 %v1132
        %1262 = vmatmul.bf16.gmra.mxu0 %v821
        %v1263 = vpop.f32.mrf.mxu0
        %v1264 = vadd.f32 %v1250, %v1263
        %v1265 = vpop.f32.mrf.mxu0
        %v1266 = vadd.f32 %v1252, %v1265
        %1267 = vdwg.mxu0
        %1268 = vmatpush.bf16.msra.mxu0 %v1099
        %1269 = vmatpush.bf16.msra.mxu0 %v1097
        %1270 = vmatpush.bf16.msra.mxu0 %v1095
        %1271 = vmatpush.bf16.msra.mxu0 %v1093
        %1272 = vmatpush.bf16.msra.mxu0 %v1091
        %1273 = vmatpush.bf16.msra.mxu0 %v1089
        %1274 = vmatpush.bf16.msra.mxu0 %v1087
        %1275 = vmatpush.bf16.msra.mxu0 %v1085
        %1276 = vmatmul.bf16.gmra.mxu0 %v818
        %v1277 = vpop.f32.mrf.mxu0
        %v1278 = vadd.f32 %v889, %v1277
        %v1279 = vpop.f32.mrf.mxu0
        %v1280 = vadd.f32 %v889, %v1279
        %1281 = vdwg.mxu0
        %1282 = vmatpush.bf16.msra.mxu0 %v1115
        %1283 = vmatpush.bf16.msra.mxu0 %v1113
        %1284 = vmatpush.bf16.msra.mxu0 %v1111
        %1285 = vmatpush.bf16.msra.mxu0 %v1109
        %1286 = vmatpush.bf16.msra.mxu0 %v1107
        %1287 = vmatpush.bf16.msra.mxu0 %v1105
        %1288 = vmatpush.bf16.msra.mxu0 %v1103
        %1289 = vmatpush.bf16.msra.mxu0 %v1101
        %1290 = vmatmul.bf16.gmra.mxu0 %v819
        %v1291 = vpop.f32.mrf.mxu0
        %v1292 = vadd.f32 %v1278, %v1291
        %v1293 = vpop.f32.mrf.mxu0
        %v1294 = vadd.f32 %v1280, %v1293
        %1295 = vdwg.mxu0
        %1296 = vmatpush.bf16.msra.mxu0 %v1131
        %1297 = vmatpush.bf16.msra.mxu0 %v1129
        %1298 = vmatpush.bf16.msra.mxu0 %v1127
        %1299 = vmatpush.bf16.msra.mxu0 %v1125
        %1300 = vmatpush.bf16.msra.mxu0 %v1123
        %1301 = vmatpush.bf16.msra.mxu0 %v1121
        %1302 = vmatpush.bf16.msra.mxu0 %v1119
        %1303 = vmatpush.bf16.msra.mxu0 %v1117
        %1304 = vmatmul.bf16.gmra.mxu0 %v820
        %v1305 = vpop.f32.mrf.mxu0
        %v1306 = vadd.f32 %v1292, %v1305
        %v1307 = vpop.f32.mrf.mxu0
        %v1308 = vadd.f32 %v1294, %v1307
        %1309 = vdwg.mxu0
        %1310 = vmatpush.bf16.msra.mxu0 %v1147
        %1311 = vmatpush.bf16.msra.mxu0 %v1145
        %1312 = vmatpush.bf16.msra.mxu0 %v1143
        %1313 = vmatpush.bf16.msra.mxu0 %v1141
        %1314 = vmatpush.bf16.msra.mxu0 %v1139
        %1315 = vmatpush.bf16.msra.mxu0 %v1137
        %1316 = vmatpush.bf16.msra.mxu0 %v1135
        %1317 = vmatpush.bf16.msra.mxu0 %v1133
        %1318 = vmatmul.bf16.gmra.mxu0 %v821
        %v1319 = vpop.f32.mrf.mxu0
        %v1320 = vadd.f32 %v1306, %v1319
        %v1321 = vpop.f32.mrf.mxu0
        %v1322 = vadd.f32 %v1308, %v1321
        %1323 = vdwg.mxu0
        %v1324 = vmax.f32 %v1264, 0.0
        %v1325 = vmax.f32 %v1320, 0.0
        %v1326 = vmax.f32 %v1266, 0.0
        %v1327 = vmax.f32 %v1322, 0.0
        %v1328 = vpack.c.bf16 %v1326, %v1324
        %v1329 = vpack.c.bf16 %v1327, %v1325
        %v1330 = vld [vmem:[%s5] sm:$0xf]
        %v1331 = vld [vmem:[%s5 + $0x4] sm:$0xf]
        %v1332 = vld [vmem:[%s5 + $0x8] sm:$0xf]
        %v1333 = vld [vmem:[%s5 + $0xc] sm:$0xf]
        %v1334 = vld [vmem:[%s5 + $0x10] sm:$0xf]
        %v1335 = vld [vmem:[%s5 + $0x14] sm:$0xf]
        %v1336 = vld [vmem:[%s5 + $0x18] sm:$0xf]
        %v1337 = vld [vmem:[%s5 + $0x1c] sm:$0xf]
        %v1338 = vld [vmem:[%s5 + $0x20] sm:$0xf]
        %v1339 = vld [vmem:[%s5 + $0x24] sm:$0xf]
        %v1340 = vld [vmem:[%s5 + $0x28] sm:$0xf]
        %v1341 = vld [vmem:[%s5 + $0x2c] sm:$0xf]
        %v1342 = vld [vmem:[%s5 + $0x30] sm:$0xf]
        %v1343 = vld [vmem:[%s5 + $0x34] sm:$0xf]
        %v1344 = vld [vmem:[%s5 + $0x38] sm:$0xf]
        %v1345 = vld [vmem:[%s5 + $0x3c] sm:$0xf]
        %v1346 = vld [vmem:[%s5 + $0x40] sm:$0xf]
        %v1347 = vld [vmem:[%s5 + $0x44] sm:$0xf]
        %v1348 = vld [vmem:[%s5 + $0x48] sm:$0xf]
        %v1349 = vld [vmem:[%s5 + $0x4c] sm:$0xf]
        %v1350 = vld [vmem:[%s5 + $0x50] sm:$0xf]
        %v1351 = vld [vmem:[%s5 + $0x54] sm:$0xf]
        %v1352 = vld [vmem:[%s5 + $0x58] sm:$0xf]
        %v1353 = vld [vmem:[%s5 + $0x5c] sm:$0xf]
        %v1354 = vld [vmem:[%s5 + $0x60] sm:$0xf]
        %v1355 = vld [vmem:[%s5 + $0x64] sm:$0xf]
        %v1356 = vld [vmem:[%s5 + $0x68] sm:$0xf]
        %v1357 = vld [vmem:[%s5 + $0x6c] sm:$0xf]
        %v1358 = vld [vmem:[%s5 + $0x70] sm:$0xf]
        %v1359 = vld [vmem:[%s5 + $0x74] sm:$0xf]
        %v1360 = vld [vmem:[%s5 + $0x78] sm:$0xf]
        %v1361 = vld [vmem:[%s5 + $0x7c] sm:$0xf]
        %v1362 = vld [vmem:[%s6] sm:$0x1]
        %v1364 = vperm.slane %v1362, 0
        %v1398 = vunpack.c.l.b16 %v1330
        %v1399 = vunpack.c.l.b16 %v1331
        %v1400 = vunpack.c.l.b16 %v1332
        %v1401 = vunpack.c.l.b16 %v1333
        %v1402 = vunpack.c.l.b16 %v1334
        %v1403 = vunpack.c.l.b16 %v1335
        %v1404 = vunpack.c.l.b16 %v1336
        %v1405 = vunpack.c.l.b16 %v1337
        %v1406 = vunpack.c.l.b16 %v1338
        %v1407 = vunpack.c.l.b16 %v1339
        %v1408 = vunpack.c.l.b16 %v1340
        %v1409 = vunpack.c.l.b16 %v1341
        %v1410 = vunpack.c.l.b16 %v1342
        %v1411 = vunpack.c.l.b16 %v1343
        %v1412 = vunpack.c.l.b16 %v1344
        %v1413 = vunpack.c.l.b16 %v1345
        %v1414 = vunpack.c.l.b16 %v1346
        %v1415 = vunpack.c.l.b16 %v1347
        %v1416 = vunpack.c.l.b16 %v1348
        %v1417 = vunpack.c.l.b16 %v1349
        %v1418 = vunpack.c.l.b16 %v1350
        %v1419 = vunpack.c.l.b16 %v1351
        %v1420 = vunpack.c.l.b16 %v1352
        %v1421 = vunpack.c.l.b16 %v1353
        %v1422 = vunpack.c.l.b16 %v1354
        %v1423 = vunpack.c.l.b16 %v1355
        %v1424 = vunpack.c.l.b16 %v1356
        %v1425 = vunpack.c.l.b16 %v1357
        %v1426 = vunpack.c.l.b16 %v1358
        %v1427 = vunpack.c.l.b16 %v1359
        %v1428 = vunpack.c.l.b16 %v1360
        %v1429 = vunpack.c.l.b16 %v1361
        %v1430 = vpack.c.b16 %v1399, %v1398
        %v1431 = vpack.c.b16 %v1401, %v1400
        %v1432 = vpack.c.b16 %v1403, %v1402
        %v1433 = vpack.c.b16 %v1405, %v1404
        %v1434 = vpack.c.b16 %v1407, %v1406
        %v1435 = vpack.c.b16 %v1409, %v1408
        %v1436 = vpack.c.b16 %v1411, %v1410
        %v1437 = vpack.c.b16 %v1413, %v1412
        %v1438 = vpack.c.b16 %v1415, %v1414
        %v1439 = vpack.c.b16 %v1417, %v1416
        %v1440 = vpack.c.b16 %v1419, %v1418
        %v1441 = vpack.c.b16 %v1421, %v1420
        %v1442 = vpack.c.b16 %v1423, %v1422
        %v1443 = vpack.c.b16 %v1425, %v1424
        %v1444 = vpack.c.b16 %v1427, %v1426
        %v1445 = vpack.c.b16 %v1429, %v1428
        %1462 = vmatpush.bf16.msra.mxu0 %v1437
        %1463 = vmatpush.bf16.msra.mxu0 %v1436
        %1464 = vmatpush.bf16.msra.mxu0 %v1435
        %1465 = vmatpush.bf16.msra.mxu0 %v1434
        %1466 = vmatpush.bf16.msra.mxu0 %v1433
        %1467 = vmatpush.bf16.msra.mxu0 %v1432
        %1468 = vmatpush.bf16.msra.mxu0 %v1431
        %1469 = vmatpush.bf16.msra.mxu0 %v1430
        %1470 = vmatmul.bf16.gmra.mxu0 %v1328
        %v1471 = vpop.f32.mrf.mxu0
        %v1472 = vadd.f32 %v1364, %v1471
        %v1473 = vpop.f32.mrf.mxu0
        %v1474 = vadd.f32 %v1364, %v1473
        %1475 = vdwg.mxu0
        %1476 = vmatpush.bf16.msra.mxu0 %v1445
        %1477 = vmatpush.bf16.msra.mxu0 %v1444
        %1478 = vmatpush.bf16.msra.mxu0 %v1443
        %1479 = vmatpush.bf16.msra.mxu0 %v1442
        %1480 = vmatpush.bf16.msra.mxu0 %v1441
        %1481 = vmatpush.bf16.msra.mxu0 %v1440
        %1482 = vmatpush.bf16.msra.mxu0 %v1439
        %1483 = vmatpush.bf16.msra.mxu0 %v1438
        %1484 = vmatmul.bf16.gmra.mxu0 %v1329
        %v1485 = vpop.f32.mrf.mxu0
        %v1486 = vadd.f32 %v1472, %v1485
        %v1487 = vpop.f32.mrf.mxu0
        %v1488 = vadd.f32 %v1474, %v1487
        %1489 = vdwg.mxu0
        %v1490 = vmax.f32 %v1486, 0.0
        %v1491 = vmax.f32 %v1488, 0.0
        %v1492 = vpack.c.bf16 %v1491, %v1490
        %v1493 = vld [vmem:[#allocation6] sm:$0xff]
        %v1494 = vld [vmem:[#allocation6 + $0x8] sm:$0xf]
        %v1495 = vld [vmem:[#allocation6 + $0xc] sm:$0xff]
        %v1496 = vld [vmem:[#allocation6 + $0x14] sm:$0xf]
        %v1497 = vld [vmem:[#allocation6 + $0x18] sm:$0xff]
        %v1498 = vld [vmem:[#allocation6 + $0x20] sm:$0xf]
        %v1499 = vld [vmem:[#allocation6 + $0x24] sm:$0xff]
        %v1500 = vld [vmem:[#allocation6 + $0x2c] sm:$0xf]
        %v1501 = vld [vmem:[#allocation6 + $0x30] sm:$0xff]
        %v1502 = vld [vmem:[#allocation6 + $0x38] sm:$0xf]
        %v1503 = vld [vmem:[#allocation6 + $0x3c] sm:$0xff]
        %v1504 = vld [vmem:[#allocation6 + $0x44] sm:$0xf]
        %v1505 = vld [vmem:[#allocation6 + $0x48] sm:$0xff]
        %v1506 = vld [vmem:[#allocation6 + $0x50] sm:$0xf]
        %v1507 = vld [vmem:[#allocation6 + $0x54] sm:$0xff]
        %v1508 = vld [vmem:[#allocation6 + $0x5c] sm:$0xf]
        %v1509 = vld [vmem:[#allocation6 + $0x60] sm:$0xff]
        %v1510 = vld [vmem:[#allocation6 + $0x68] sm:$0xf]
        %v1511 = vld [vmem:[#allocation6 + $0x6c] sm:$0xff]
        %v1512 = vld [vmem:[#allocation6 + $0x74] sm:$0xf]
        %v1513 = vld [vmem:[#allocation6 + $0x78] sm:$0xff]
        %v1514 = vld [vmem:[#allocation6 + $0x80] sm:$0xf]
        %v1515 = vld [vmem:[#allocation6 + $0x84] sm:$0xff]
        %v1516 = vld [vmem:[#allocation6 + $0x8c] sm:$0xf]
        %v1517 = vld [vmem:[#allocation6 + $0x90] sm:$0xff]
        %v1518 = vld [vmem:[#allocation6 + $0x98] sm:$0xf]
        %v1519 = vld [vmem:[#allocation6 + $0x9c] sm:$0xff]
        %v1520 = vld [vmem:[#allocation6 + $0xa4] sm:$0xf]
        %v1521 = vld [vmem:[#allocation6 + $0xa8] sm:$0xff]
        %v1522 = vld [vmem:[#allocation6 + $0xb0] sm:$0xf]
        %v1523 = vld [vmem:[#allocation6 + $0xb4] sm:$0xff]
        %v1524 = vld [vmem:[#allocation6 + $0xbc] sm:$0xf]
        %v1525 = vld [vmem:[%s8] sm:$0x7]
        %v1527 = vperm.slane %v1525, 0
        %v1528 = vperm.slane %v1525, 1
        %v1529 = vperm.slane %v1525, 2
        %v1565 = vunpack.c.l.b16 %v1493
        %v1566 = vunpack.c.h.b16 %v1493
        %v1567 = vunpack.c.l.b16 %v1494
        %v1568 = vunpack.c.l.b16 %v1495
        %v1569 = vunpack.c.h.b16 %v1495
        %v1570 = vunpack.c.l.b16 %v1496
        %v1571 = vunpack.c.l.b16 %v1497
        %v1572 = vunpack.c.h.b16 %v1497
        %v1573 = vunpack.c.l.b16 %v1498
        %v1574 = vunpack.c.l.b16 %v1499
        %v1575 = vunpack.c.h.b16 %v1499
        %v1576 = vunpack.c.l.b16 %v1500
        %v1577 = vunpack.c.l.b16 %v1501
        %v1578 = vunpack.c.h.b16 %v1501
        %v1579 = vunpack.c.l.b16 %v1502
        %v1580 = vunpack.c.l.b16 %v1503
        %v1581 = vunpack.c.h.b16 %v1503
        %v1582 = vunpack.c.l.b16 %v1504
        %v1583 = vunpack.c.l.b16 %v1505
        %v1584 = vunpack.c.h.b16 %v1505
        %v1585 = vunpack.c.l.b16 %v1506
        %v1586 = vunpack.c.l.b16 %v1507
        %v1587 = vunpack.c.h.b16 %v1507
        %v1588 = vunpack.c.l.b16 %v1508
        %v1589 = vunpack.c.l.b16 %v1509
        %v1590 = vunpack.c.h.b16 %v1509
        %v1591 = vunpack.c.l.b16 %v1510
        %v1592 = vunpack.c.l.b16 %v1511
        %v1593 = vunpack.c.h.b16 %v1511
        %v1594 = vunpack.c.l.b16 %v1512
        %v1595 = vunpack.c.l.b16 %v1513
        %v1596 = vunpack.c.h.b16 %v1513
        %v1597 = vunpack.c.l.b16 %v1514
        %v1598 = vunpack.c.l.b16 %v1515
        %v1599 = vunpack.c.h.b16 %v1515
        %v1600 = vunpack.c.l.b16 %v1516
        %v1601 = vunpack.c.l.b16 %v1517
        %v1602 = vunpack.c.h.b16 %v1517
        %v1603 = vunpack.c.l.b16 %v1518
        %v1604 = vunpack.c.l.b16 %v1519
        %v1605 = vunpack.c.h.b16 %v1519
        %v1606 = vunpack.c.l.b16 %v1520
        %v1607 = vunpack.c.l.b16 %v1521
        %v1608 = vunpack.c.h.b16 %v1521
        %v1609 = vunpack.c.l.b16 %v1522
        %v1610 = vunpack.c.l.b16 %v1523
        %v1611 = vunpack.c.h.b16 %v1523
        %v1612 = vunpack.c.l.b16 %v1524
        %v1613 = vpack.c.b16 %v1568, %v1565
        %v1614 = vpack.c.b16 %v1569, %v1566
        %v1615 = vpack.c.b16 %v1570, %v1567
        %v1616 = vpack.c.b16 %v1574, %v1571
        %v1617 = vpack.c.b16 %v1575, %v1572
        %v1618 = vpack.c.b16 %v1576, %v1573
        %v1619 = vpack.c.b16 %v1580, %v1577
        %v1620 = vpack.c.b16 %v1581, %v1578
        %v1621 = vpack.c.b16 %v1582, %v1579
        %v1622 = vpack.c.b16 %v1586, %v1583
        %v1623 = vpack.c.b16 %v1587, %v1584
        %v1624 = vpack.c.b16 %v1588, %v1585
        %v1625 = vpack.c.b16 %v1592, %v1589
        %v1626 = vpack.c.b16 %v1593, %v1590
        %v1627 = vpack.c.b16 %v1594, %v1591
        %v1628 = vpack.c.b16 %v1598, %v1595
        %v1629 = vpack.c.b16 %v1599, %v1596
        %v1630 = vpack.c.b16 %v1600, %v1597
        %v1631 = vpack.c.b16 %v1604, %v1601
        %v1632 = vpack.c.b16 %v1605, %v1602
        %v1633 = vpack.c.b16 %v1606, %v1603
        %v1634 = vpack.c.b16 %v1610, %v1607
        %v1635 = vpack.c.b16 %v1611, %v1608
        %v1636 = vpack.c.b16 %v1612, %v1609
        %1661 = vmatpush.bf16.msra.mxu0 %v1634
        %1662 = vmatpush.bf16.msra.mxu0 %v1631
        %1663 = vmatpush.bf16.msra.mxu0 %v1628
        %1664 = vmatpush.bf16.msra.mxu0 %v1625
        %1665 = vmatpush.bf16.msra.mxu0 %v1622
        %1666 = vmatpush.bf16.msra.mxu0 %v1619
        %1667 = vmatpush.bf16.msra.mxu0 %v1616
        %1668 = vmatpush.bf16.msra.mxu0 %v1613
        %1669 = vmatmul.bf16.gmra.mxu0 %v1492
        %v1670 = vpop.f32.mrf.mxu0
        %v1671 = vadd.f32 %v1527, %v1670
        %v1672 = vpop.f32.mrf.mxu0
        %v1673 = vadd.f32 %v1527, %v1672
        %1674 = vdwg.mxu0
        %1675 = vmatpush.bf16.msra.mxu0 %v1635
        %1676 = vmatpush.bf16.msra.mxu0 %v1632
        %1677 = vmatpush.bf16.msra.mxu0 %v1629
        %1678 = vmatpush.bf16.msra.mxu0 %v1626
        %1679 = vmatpush.bf16.msra.mxu0 %v1623
        %1680 = vmatpush.bf16.msra.mxu0 %v1620
        %1681 = vmatpush.bf16.msra.mxu0 %v1617
        %1682 = vmatpush.bf16.msra.mxu0 %v1614
        %1683 = vmatmul.bf16.gmra.mxu0 %v1492
        %v1684 = vpop.f32.mrf.mxu0
        %v1685 = vadd.f32 %v1528, %v1684
        %v1686 = vpop.f32.mrf.mxu0
        %v1687 = vadd.f32 %v1528, %v1686
        %1688 = vdwg.mxu0
        %1689 = vmatpush.bf16.msra.mxu0 %v1636
        %1690 = vmatpush.bf16.msra.mxu0 %v1633
        %1691 = vmatpush.bf16.msra.mxu0 %v1630
        %1692 = vmatpush.bf16.msra.mxu0 %v1627
        %1693 = vmatpush.bf16.msra.mxu0 %v1624
        %1694 = vmatpush.bf16.msra.mxu0 %v1621
        %1695 = vmatpush.bf16.msra.mxu0 %v1618
        %1696 = vmatpush.bf16.msra.mxu0 %v1615
        %1697 = vmatmul.bf16.gmra.mxu0 %v1492
        %v1698 = vpop.f32.mrf.mxu0
        %v1699 = vadd.f32 %v1529, %v1698
        %v1700 = vpop.f32.mrf.mxu0
        %v1701 = vadd.f32 %v1529, %v1700
        %1702 = vdwg.mxu0
        %v1703 = vmax.f32 %v1671, 0.0
        %v1704 = vmax.f32 %v1685, 0.0
        %v1705 = vmax.f32 %v1699, 0.0
        %v1706 = vmax.f32 %v1673, 0.0
        %v1707 = vmax.f32 %v1687, 0.0
        %v1708 = vmax.f32 %v1701, 0.0
        %v1709 = vpack.c.bf16 %v1706, %v1703
        %v1710 = vpack.c.bf16 %v1707, %v1704
        %v1711 = vpack.c.bf16 %v1708, %v1705
        %v1712 = vld [vmem:[#allocation7] sm:$0xff]
        %v1713 = vld [vmem:[#allocation7 + $0x8] sm:$0xff]
        %v1714 = vld [vmem:[#allocation7 + $0x10] sm:$0xff]
        %v1715 = vld [vmem:[#allocation7 + $0x18] sm:$0xff]
        %v1716 = vld [vmem:[#allocation7 + $0x20] sm:$0xff]
        %v1717 = vld [vmem:[#allocation7 + $0x28] sm:$0xff]
        %v1718 = vld [vmem:[#allocation7 + $0x30] sm:$0xff]
        %v1719 = vld [vmem:[#allocation7 + $0x38] sm:$0xff]
        %v1720 = vld [vmem:[#allocation7 + $0x40] sm:$0xff]
        %v1721 = vld [vmem:[#allocation7 + $0x48] sm:$0xff]
        %v1722 = vld [vmem:[#allocation7 + $0x50] sm:$0xff]
        %v1723 = vld [vmem:[#allocation7 + $0x58] sm:$0xff]
        %v1724 = vld [vmem:[#allocation7 + $0x60] sm:$0xff]
        %v1725 = vld [vmem:[#allocation7 + $0x68] sm:$0xff]
        %v1726 = vld [vmem:[#allocation7 + $0x70] sm:$0xff]
        %v1727 = vld [vmem:[#allocation7 + $0x78] sm:$0xff]
        %v1728 = vld [vmem:[#allocation7 + $0x80] sm:$0xff]
        %v1729 = vld [vmem:[#allocation7 + $0x88] sm:$0xff]
        %v1730 = vld [vmem:[#allocation7 + $0x90] sm:$0xff]
        %v1731 = vld [vmem:[#allocation7 + $0x98] sm:$0xff]
        %v1732 = vld [vmem:[#allocation7 + $0xa0] sm:$0xff]
        %v1733 = vld [vmem:[#allocation7 + $0xa8] sm:$0xff]
        %v1734 = vld [vmem:[#allocation7 + $0xb0] sm:$0xff]
        %v1735 = vld [vmem:[#allocation7 + $0xb8] sm:$0xff]
        %v1736 = vld [vmem:[#allocation7 + $0xc0] sm:$0xff]
        %v1737 = vld [vmem:[#allocation7 + $0xc8] sm:$0xff]
        %v1738 = vld [vmem:[#allocation7 + $0xd0] sm:$0xff]
        %v1739 = vld [vmem:[#allocation7 + $0xd8] sm:$0xff]
        %v1740 = vld [vmem:[#allocation7 + $0xe0] sm:$0xff]
        %v1741 = vld [vmem:[#allocation7 + $0xe8] sm:$0xff]
        %v1742 = vld [vmem:[#allocation7 + $0xf0] sm:$0xff]
        %v1743 = vld [vmem:[#allocation7 + $0xf8] sm:$0xff]
        %v1744 = vld [vmem:[#allocation7 + $0x100] sm:$0xff]
        %v1745 = vld [vmem:[#allocation7 + $0x108] sm:$0xff]
        %v1746 = vld [vmem:[#allocation7 + $0x110] sm:$0xff]
        %v1747 = vld [vmem:[#allocation7 + $0x118] sm:$0xff]
        %v1748 = vld [vmem:[#allocation7 + $0x120] sm:$0xff]
        %v1749 = vld [vmem:[#allocation7 + $0x128] sm:$0xff]
        %v1750 = vld [vmem:[#allocation7 + $0x130] sm:$0xff]
        %v1751 = vld [vmem:[#allocation7 + $0x138] sm:$0xff]
        %v1752 = vld [vmem:[#allocation7 + $0x140] sm:$0xff]
        %v1753 = vld [vmem:[#allocation7 + $0x148] sm:$0xff]
        %v1754 = vld [vmem:[#allocation7 + $0x150] sm:$0xff]
        %v1755 = vld [vmem:[#allocation7 + $0x158] sm:$0xff]
        %v1756 = vld [vmem:[#allocation7 + $0x160] sm:$0xff]
        %v1757 = vld [vmem:[#allocation7 + $0x168] sm:$0xff]
        %v1758 = vld [vmem:[#allocation7 + $0x170] sm:$0xff]
        %v1759 = vld [vmem:[#allocation7 + $0x178] sm:$0xff]
        %v1760 = vld [vmem:[%s10] sm:$0x3]
        %v1762 = vperm.slane %v1760, 0
        %v1763 = vperm.slane %v1760, 1
        %v1814 = vunpack.c.l.b16 %v1712
        %v1815 = vunpack.c.h.b16 %v1712
        %v1816 = vunpack.c.l.b16 %v1713
        %v1817 = vunpack.c.h.b16 %v1713
        %v1818 = vunpack.c.l.b16 %v1714
        %v1819 = vunpack.c.h.b16 %v1714
        %v1820 = vunpack.c.l.b16 %v1715
        %v1821 = vunpack.c.h.b16 %v1715
        %v1822 = vunpack.c.l.b16 %v1716
        %v1823 = vunpack.c.h.b16 %v1716
        %v1824 = vunpack.c.l.b16 %v1717
        %v1825 = vunpack.c.h.b16 %v1717
        %v1826 = vunpack.c.l.b16 %v1718
        %v1827 = vunpack.c.h.b16 %v1718
        %v1828 = vunpack.c.l.b16 %v1719
        %v1829 = vunpack.c.h.b16 %v1719
        %v1830 = vunpack.c.l.b16 %v1720
        %v1831 = vunpack.c.h.b16 %v1720
        %v1832 = vunpack.c.l.b16 %v1721
        %v1833 = vunpack.c.h.b16 %v1721
        %v1834 = vunpack.c.l.b16 %v1722
        %v1835 = vunpack.c.h.b16 %v1722
        %v1836 = vunpack.c.l.b16 %v1723
        %v1837 = vunpack.c.h.b16 %v1723
        %v1838 = vunpack.c.l.b16 %v1724
        %v1839 = vunpack.c.h.b16 %v1724
        %v1840 = vunpack.c.l.b16 %v1725
        %v1841 = vunpack.c.h.b16 %v1725
        %v1842 = vunpack.c.l.b16 %v1726
        %v1843 = vunpack.c.h.b16 %v1726
        %v1844 = vunpack.c.l.b16 %v1727
        %v1845 = vunpack.c.h.b16 %v1727
        %v1846 = vunpack.c.l.b16 %v1728
        %v1847 = vunpack.c.h.b16 %v1728
        %v1848 = vunpack.c.l.b16 %v1729
        %v1849 = vunpack.c.h.b16 %v1729
        %v1850 = vunpack.c.l.b16 %v1730
        %v1851 = vunpack.c.h.b16 %v1730
        %v1852 = vunpack.c.l.b16 %v1731
        %v1853 = vunpack.c.h.b16 %v1731
        %v1854 = vunpack.c.l.b16 %v1732
        %v1855 = vunpack.c.h.b16 %v1732
        %v1856 = vunpack.c.l.b16 %v1733
        %v1857 = vunpack.c.h.b16 %v1733
        %v1858 = vunpack.c.l.b16 %v1734
        %v1859 = vunpack.c.h.b16 %v1734
        %v1860 = vunpack.c.l.b16 %v1735
        %v1861 = vunpack.c.h.b16 %v1735
        %v1862 = vunpack.c.l.b16 %v1736
        %v1863 = vunpack.c.h.b16 %v1736
        %v1864 = vunpack.c.l.b16 %v1737
        %v1865 = vunpack.c.h.b16 %v1737
        %v1866 = vunpack.c.l.b16 %v1738
        %v1867 = vunpack.c.h.b16 %v1738
        %v1868 = vunpack.c.l.b16 %v1739
        %v1869 = vunpack.c.h.b16 %v1739
        %v1870 = vunpack.c.l.b16 %v1740
        %v1871 = vunpack.c.h.b16 %v1740
        %v1872 = vunpack.c.l.b16 %v1741
        %v1873 = vunpack.c.h.b16 %v1741
        %v1874 = vunpack.c.l.b16 %v1742
        %v1875 = vunpack.c.h.b16 %v1742
        %v1876 = vunpack.c.l.b16 %v1743
        %v1877 = vunpack.c.h.b16 %v1743
        %v1878 = vunpack.c.l.b16 %v1744
        %v1879 = vunpack.c.h.b16 %v1744
        %v1880 = vunpack.c.l.b16 %v1745
        %v1881 = vunpack.c.h.b16 %v1745
        %v1882 = vunpack.c.l.b16 %v1746
        %v1883 = vunpack.c.h.b16 %v1746
        %v1884 = vunpack.c.l.b16 %v1747
        %v1885 = vunpack.c.h.b16 %v1747
        %v1886 = vunpack.c.l.b16 %v1748
        %v1887 = vunpack.c.h.b16 %v1748
        %v1888 = vunpack.c.l.b16 %v1749
        %v1889 = vunpack.c.h.b16 %v1749
        %v1890 = vunpack.c.l.b16 %v1750
        %v1891 = vunpack.c.h.b16 %v1750
        %v1892 = vunpack.c.l.b16 %v1751
        %v1893 = vunpack.c.h.b16 %v1751
        %v1894 = vunpack.c.l.b16 %v1752
        %v1895 = vunpack.c.h.b16 %v1752
        %v1896 = vunpack.c.l.b16 %v1753
        %v1897 = vunpack.c.h.b16 %v1753
        %v1898 = vunpack.c.l.b16 %v1754
        %v1899 = vunpack.c.h.b16 %v1754
        %v1900 = vunpack.c.l.b16 %v1755
        %v1901 = vunpack.c.h.b16 %v1755
        %v1902 = vunpack.c.l.b16 %v1756
        %v1903 = vunpack.c.h.b16 %v1756
        %v1904 = vunpack.c.l.b16 %v1757
        %v1905 = vunpack.c.h.b16 %v1757
        %v1906 = vunpack.c.l.b16 %v1758
        %v1907 = vunpack.c.h.b16 %v1758
        %v1908 = vunpack.c.l.b16 %v1759
        %v1909 = vunpack.c.h.b16 %v1759
        %v1910 = vpack.c.b16 %v1816, %v1814
        %v1911 = vpack.c.b16 %v1817, %v1815
        %v1912 = vpack.c.b16 %v1820, %v1818
        %v1913 = vpack.c.b16 %v1821, %v1819
        %v1914 = vpack.c.b16 %v1824, %v1822
        %v1915 = vpack.c.b16 %v1825, %v1823
        %v1916 = vpack.c.b16 %v1828, %v1826
        %v1917 = vpack.c.b16 %v1829, %v1827
        %v1918 = vpack.c.b16 %v1832, %v1830
        %v1919 = vpack.c.b16 %v1833, %v1831
        %v1920 = vpack.c.b16 %v1836, %v1834
        %v1921 = vpack.c.b16 %v1837, %v1835
        %v1922 = vpack.c.b16 %v1840, %v1838
        %v1923 = vpack.c.b16 %v1841, %v1839
        %v1924 = vpack.c.b16 %v1844, %v1842
        %v1925 = vpack.c.b16 %v1845, %v1843
        %v1926 = vpack.c.b16 %v1848, %v1846
        %v1927 = vpack.c.b16 %v1849, %v1847
        %v1928 = vpack.c.b16 %v1852, %v1850
        %v1929 = vpack.c.b16 %v1853, %v1851
        %v1930 = vpack.c.b16 %v1856, %v1854
        %v1931 = vpack.c.b16 %v1857, %v1855
        %v1932 = vpack.c.b16 %v1860, %v1858
        %v1933 = vpack.c.b16 %v1861, %v1859
        %v1934 = vpack.c.b16 %v1864, %v1862
        %v1935 = vpack.c.b16 %v1865, %v1863
        %v1936 = vpack.c.b16 %v1868, %v1866
        %v1937 = vpack.c.b16 %v1869, %v1867
        %v1938 = vpack.c.b16 %v1872, %v1870
        %v1939 = vpack.c.b16 %v1873, %v1871
        %v1940 = vpack.c.b16 %v1876, %v1874
        %v1941 = vpack.c.b16 %v1877, %v1875
        %v1942 = vpack.c.b16 %v1880, %v1878
        %v1943 = vpack.c.b16 %v1881, %v1879
        %v1944 = vpack.c.b16 %v1884, %v1882
        %v1945 = vpack.c.b16 %v1885, %v1883
        %v1946 = vpack.c.b16 %v1888, %v1886
        %v1947 = vpack.c.b16 %v1889, %v1887
        %v1948 = vpack.c.b16 %v1892, %v1890
        %v1949 = vpack.c.b16 %v1893, %v1891
        %v1950 = vpack.c.b16 %v1896, %v1894
        %v1951 = vpack.c.b16 %v1897, %v1895
        %v1952 = vpack.c.b16 %v1900, %v1898
        %v1953 = vpack.c.b16 %v1901, %v1899
        %v1954 = vpack.c.b16 %v1904, %v1902
        %v1955 = vpack.c.b16 %v1905, %v1903
        %v1956 = vpack.c.b16 %v1908, %v1906
        %v1957 = vpack.c.b16 %v1909, %v1907
        %2006 = vmatpush.bf16.msra.mxu0 %v1924
        %2007 = vmatpush.bf16.msra.mxu0 %v1922
        %2008 = vmatpush.bf16.msra.mxu0 %v1920
        %2009 = vmatpush.bf16.msra.mxu0 %v1918
        %2010 = vmatpush.bf16.msra.mxu0 %v1916
        %2011 = vmatpush.bf16.msra.mxu0 %v1914
        %2012 = vmatpush.bf16.msra.mxu0 %v1912
        %2013 = vmatpush.bf16.msra.mxu0 %v1910
        %2014 = vmatmul.bf16.gmra.mxu0 %v1709
        %v2015 = vpop.f32.mrf.mxu0
        %v2016 = vadd.f32 %v1762, %v2015
        %v2017 = vpop.f32.mrf.mxu0
        %v2018 = vadd.f32 %v1762, %v2017
        %2019 = vdwg.mxu0
        %2020 = vmatpush.bf16.msra.mxu0 %v1940
        %2021 = vmatpush.bf16.msra.mxu0 %v1938
        %2022 = vmatpush.bf16.msra.mxu0 %v1936
        %2023 = vmatpush.bf16.msra.mxu0 %v1934
        %2024 = vmatpush.bf16.msra.mxu0 %v1932
        %2025 = vmatpush.bf16.msra.mxu0 %v1930
        %2026 = vmatpush.bf16.msra.mxu0 %v1928
        %2027 = vmatpush.bf16.msra.mxu0 %v1926
        %2028 = vmatmul.bf16.gmra.mxu0 %v1710
        %v2029 = vpop.f32.mrf.mxu0
        %v2030 = vadd.f32 %v2016, %v2029
        %v2031 = vpop.f32.mrf.mxu0
        %v2032 = vadd.f32 %v2018, %v2031
        %2033 = vdwg.mxu0
        %2034 = vmatpush.bf16.msra.mxu0 %v1956
        %2035 = vmatpush.bf16.msra.mxu0 %v1954
        %2036 = vmatpush.bf16.msra.mxu0 %v1952
        %2037 = vmatpush.bf16.msra.mxu0 %v1950
        %2038 = vmatpush.bf16.msra.mxu0 %v1948
        %2039 = vmatpush.bf16.msra.mxu0 %v1946
        %2040 = vmatpush.bf16.msra.mxu0 %v1944
        %2041 = vmatpush.bf16.msra.mxu0 %v1942
        %2042 = vmatmul.bf16.gmra.mxu0 %v1711
        %v2043 = vpop.f32.mrf.mxu0
        %v2044 = vadd.f32 %v2030, %v2043
        %v2045 = vpop.f32.mrf.mxu0
        %v2046 = vadd.f32 %v2032, %v2045
        %2047 = vdwg.mxu0
        %2048 = vmatpush.bf16.msra.mxu0 %v1925
        %2049 = vmatpush.bf16.msra.mxu0 %v1923
        %2050 = vmatpush.bf16.msra.mxu0 %v1921
        %2051 = vmatpush.bf16.msra.mxu0 %v1919
        %2052 = vmatpush.bf16.msra.mxu0 %v1917
        %2053 = vmatpush.bf16.msra.mxu0 %v1915
        %2054 = vmatpush.bf16.msra.mxu0 %v1913
        %2055 = vmatpush.bf16.msra.mxu0 %v1911
        %2056 = vmatmul.bf16.gmra.mxu0 %v1709
        %v2057 = vpop.f32.mrf.mxu0
        %v2058 = vadd.f32 %v1763, %v2057
        %v2059 = vpop.f32.mrf.mxu0
        %v2060 = vadd.f32 %v1763, %v2059
        %2061 = vdwg.mxu0
        %2062 = vmatpush.bf16.msra.mxu0 %v1941
        %2063 = vmatpush.bf16.msra.mxu0 %v1939
        %2064 = vmatpush.bf16.msra.mxu0 %v1937
        %2065 = vmatpush.bf16.msra.mxu0 %v1935
        %2066 = vmatpush.bf16.msra.mxu0 %v1933
        %2067 = vmatpush.bf16.msra.mxu0 %v1931
        %2068 = vmatpush.bf16.msra.mxu0 %v1929
        %2069 = vmatpush.bf16.msra.mxu0 %v1927
        %2070 = vmatmul.bf16.gmra.mxu0 %v1710
        %v2071 = vpop.f32.mrf.mxu0
        %v2072 = vadd.f32 %v2058, %v2071
        %v2073 = vpop.f32.mrf.mxu0
        %v2074 = vadd.f32 %v2060, %v2073
        %2075 = vdwg.mxu0
        %2076 = vmatpush.bf16.msra.mxu0 %v1957
        %2077 = vmatpush.bf16.msra.mxu0 %v1955
        %2078 = vmatpush.bf16.msra.mxu0 %v1953
        %2079 = vmatpush.bf16.msra.mxu0 %v1951
        %2080 = vmatpush.bf16.msra.mxu0 %v1949
        %2081 = vmatpush.bf16.msra.mxu0 %v1947
        %2082 = vmatpush.bf16.msra.mxu0 %v1945
        %2083 = vmatpush.bf16.msra.mxu0 %v1943
        %2084 = vmatmul.bf16.gmra.mxu0 %v1711
        %v2085 = vpop.f32.mrf.mxu0
        %v2086 = vadd.f32 %v2072, %v2085
        %v2087 = vpop.f32.mrf.mxu0
        %v2088 = vadd.f32 %v2074, %v2087
        %2089 = vdwg.mxu0
        %v2090 = vmax.f32 %v2044, 0.0
        %v2091 = vmax.f32 %v2086, 0.0
        %v2092 = vmax.f32 %v2046, 0.0
        %v2093 = vmax.f32 %v2088, 0.0
        %v2094 = vpack.c.bf16 %v2092, %v2090
        %v2095 = vpack.c.bf16 %v2093, %v2091
        %v2096 = vld [vmem:[#allocation9] sm:$0xf]
        %v2097 = vld [vmem:[#allocation9 + $0x4] sm:$0xf]
        %v2098 = vld [vmem:[#allocation9 + $0x8] sm:$0xf]
        %v2099 = vld [vmem:[#allocation9 + $0xc] sm:$0xf]
        %v2100 = vld [vmem:[#allocation9 + $0x10] sm:$0xf]
        %v2101 = vld [vmem:[#allocation9 + $0x14] sm:$0xf]
        %v2102 = vld [vmem:[#allocation9 + $0x18] sm:$0xf]
        %v2103 = vld [vmem:[#allocation9 + $0x1c] sm:$0xf]
        %v2104 = vld [vmem:[#allocation9 + $0x20] sm:$0xf]
        %v2105 = vld [vmem:[#allocation9 + $0x24] sm:$0xf]
        %v2106 = vld [vmem:[#allocation9 + $0x28] sm:$0xf]
        %v2107 = vld [vmem:[#allocation9 + $0x2c] sm:$0xf]
        %v2108 = vld [vmem:[#allocation9 + $0x30] sm:$0xf]
        %v2109 = vld [vmem:[#allocation9 + $0x34] sm:$0xf]
        %v2110 = vld [vmem:[#allocation9 + $0x38] sm:$0xf]
        %v2111 = vld [vmem:[#allocation9 + $0x3c] sm:$0xf]
        %v2112 = vld [vmem:[#allocation9 + $0x40] sm:$0xf]
        %v2113 = vld [vmem:[#allocation9 + $0x44] sm:$0xf]
        %v2114 = vld [vmem:[#allocation9 + $0x48] sm:$0xf]
        %v2115 = vld [vmem:[#allocation9 + $0x4c] sm:$0xf]
        %v2116 = vld [vmem:[#allocation9 + $0x50] sm:$0xf]
        %v2117 = vld [vmem:[#allocation9 + $0x54] sm:$0xf]
        %v2118 = vld [vmem:[#allocation9 + $0x58] sm:$0xf]
        %v2119 = vld [vmem:[#allocation9 + $0x5c] sm:$0xf]
        %v2120 = vld [vmem:[#allocation9 + $0x60] sm:$0xf]
        %v2121 = vld [vmem:[#allocation9 + $0x64] sm:$0xf]
        %v2122 = vld [vmem:[#allocation9 + $0x68] sm:$0xf]
        %v2123 = vld [vmem:[#allocation9 + $0x6c] sm:$0xf]
        %v2124 = vld [vmem:[#allocation9 + $0x70] sm:$0xf]
        %v2125 = vld [vmem:[#allocation9 + $0x74] sm:$0xf]
        %v2126 = vld [vmem:[#allocation9 + $0x78] sm:$0xf]
        %v2127 = vld [vmem:[#allocation9 + $0x7c] sm:$0xf]
        %v2128 = vld [vmem:[%s12] sm:$0x1]
        %v2130 = vperm.slane %v2128, 0
        %v2164 = vunpack.c.l.b16 %v2096
        %v2165 = vunpack.c.l.b16 %v2097
        %v2166 = vunpack.c.l.b16 %v2098
        %v2167 = vunpack.c.l.b16 %v2099
        %v2168 = vunpack.c.l.b16 %v2100
        %v2169 = vunpack.c.l.b16 %v2101
        %v2170 = vunpack.c.l.b16 %v2102
        %v2171 = vunpack.c.l.b16 %v2103
        %v2172 = vunpack.c.l.b16 %v2104
        %v2173 = vunpack.c.l.b16 %v2105
        %v2174 = vunpack.c.l.b16 %v2106
        %v2175 = vunpack.c.l.b16 %v2107
        %v2176 = vunpack.c.l.b16 %v2108
        %v2177 = vunpack.c.l.b16 %v2109
        %v2178 = vunpack.c.l.b16 %v2110
        %v2179 = vunpack.c.l.b16 %v2111
        %v2180 = vunpack.c.l.b16 %v2112
        %v2181 = vunpack.c.l.b16 %v2113
        %v2182 = vunpack.c.l.b16 %v2114
        %v2183 = vunpack.c.l.b16 %v2115
        %v2184 = vunpack.c.l.b16 %v2116
        %v2185 = vunpack.c.l.b16 %v2117
        %v2186 = vunpack.c.l.b16 %v2118
        %v2187 = vunpack.c.l.b16 %v2119
        %v2188 = vunpack.c.l.b16 %v2120
        %v2189 = vunpack.c.l.b16 %v2121
        %v2190 = vunpack.c.l.b16 %v2122
        %v2191 = vunpack.c.l.b16 %v2123
        %v2192 = vunpack.c.l.b16 %v2124
        %v2193 = vunpack.c.l.b16 %v2125
        %v2194 = vunpack.c.l.b16 %v2126
        %v2195 = vunpack.c.l.b16 %v2127
        %v2196 = vpack.c.b16 %v2165, %v2164
        %v2197 = vpack.c.b16 %v2167, %v2166
        %v2198 = vpack.c.b16 %v2169, %v2168
        %v2199 = vpack.c.b16 %v2171, %v2170
        %v2200 = vpack.c.b16 %v2173, %v2172
        %v2201 = vpack.c.b16 %v2175, %v2174
        %v2202 = vpack.c.b16 %v2177, %v2176
        %v2203 = vpack.c.b16 %v2179, %v2178
        %v2204 = vpack.c.b16 %v2181, %v2180
        %v2205 = vpack.c.b16 %v2183, %v2182
        %v2206 = vpack.c.b16 %v2185, %v2184
        %v2207 = vpack.c.b16 %v2187, %v2186
        %v2208 = vpack.c.b16 %v2189, %v2188
        %v2209 = vpack.c.b16 %v2191, %v2190
        %v2210 = vpack.c.b16 %v2193, %v2192
        %v2211 = vpack.c.b16 %v2195, %v2194
        %2228 = vmatpush.bf16.msra.mxu0 %v2203
        %2229 = vmatpush.bf16.msra.mxu0 %v2202
        %2230 = vmatpush.bf16.msra.mxu0 %v2201
        %2231 = vmatpush.bf16.msra.mxu0 %v2200
        %2232 = vmatpush.bf16.msra.mxu0 %v2199
        %2233 = vmatpush.bf16.msra.mxu0 %v2198
        %2234 = vmatpush.bf16.msra.mxu0 %v2197
        %2235 = vmatpush.bf16.msra.mxu0 %v2196
        %2236 = vmatmul.bf16.gmra.mxu0 %v2094
        %v2237 = vpop.f32.mrf.mxu0
        %v2238 = vadd.f32 %v2130, %v2237
        %v2239 = vpop.f32.mrf.mxu0
        %v2240 = vadd.f32 %v2130, %v2239
        %2241 = vdwg.mxu0
        %2242 = vmatpush.bf16.msra.mxu0 %v2211
        %2243 = vmatpush.bf16.msra.mxu0 %v2210
        %2244 = vmatpush.bf16.msra.mxu0 %v2209
        %2245 = vmatpush.bf16.msra.mxu0 %v2208
        %2246 = vmatpush.bf16.msra.mxu0 %v2207
        %2247 = vmatpush.bf16.msra.mxu0 %v2206
        %2248 = vmatpush.bf16.msra.mxu0 %v2205
        %2249 = vmatpush.bf16.msra.mxu0 %v2204
        %2250 = vmatmul.bf16.gmra.mxu0 %v2095
        %v2251 = vpop.f32.mrf.mxu0
        %v2252 = vadd.f32 %v2238, %v2251
        %v2253 = vpop.f32.mrf.mxu0
        %v2254 = vadd.f32 %v2240, %v2253
        %2255 = vdwg.mxu0
        %v2256 = vsel %vm531, %v2252, -1e+30
        %v2257 = vsel %vm531, %v2254, -1e+30
        %2258 = vmax.xlane.f32.xlu0 %v2256
        %v2259 = vpop.xlane.xlu0 %2258
        %2260 = vmax.xlane.f32.xlu0 %v2257
        %v2261 = vpop.xlane.xlu0 %2260
        %v2262 = vsel %vm531, %v2259, 0.0
        %v2263 = vsel %vm531, %v2261, 0.0
        %v2264 = vsel %vm534, %v2252, -1e+30
        %v2265 = vsel %vm534, %v2254, -1e+30
        %2266 = vmax.xlane.f32.xlu0 %v2264
        %v2267 = vpop.xlane.xlu0 %2266
        %2268 = vmax.xlane.f32.xlu0 %v2265
        %v2269 = vpop.xlane.xlu0 %2268
        %v2270 = vsel %vm534, %v2267, %v2262
        %v2271 = vsel %vm534, %v2269, %v2263
        %v2272 = vsel %vm537, %v2252, -1e+30
        %v2273 = vsel %vm537, %v2254, -1e+30
        %2274 = vmax.xlane.f32.xlu0 %v2272
        %v2275 = vpop.xlane.xlu0 %2274
        %2276 = vmax.xlane.f32.xlu0 %v2273
        %v2277 = vpop.xlane.xlu0 %2276
        %v2278 = vsel %vm537, %v2275, %v2270
        %v2279 = vsel %vm537, %v2277, %v2271
        %v2280 = vsel %vm540, %v2252, -1e+30
        %v2281 = vsel %vm540, %v2254, -1e+30
        %2282 = vmax.xlane.f32.xlu0 %v2280
        %v2283 = vpop.xlane.xlu0 %2282
        %2284 = vmax.xlane.f32.xlu0 %v2281
        %v2285 = vpop.xlane.xlu0 %2284
        %v2286 = vsel %vm540, %v2283, %v2278
        %v2287 = vsel %vm540, %v2285, %v2279
        %v2288 = vsel %vm543, %v2252, -1e+30
        %v2289 = vsel %vm543, %v2254, -1e+30
        %2290 = vmax.xlane.f32.xlu0 %v2288
        %v2291 = vpop.xlane.xlu0 %2290
        %2292 = vmax.xlane.f32.xlu0 %v2289
        %v2293 = vpop.xlane.xlu0 %2292
        %v2294 = vsel %vm543, %v2291, %v2286
        %v2295 = vsel %vm543, %v2293, %v2287
        %v2296 = vsub.f32 %v2252, %v2294
        %v2297 = vsub.f32 %v2254, %v2295
        %v2298 = vmul.f32 %v2296, 1.442695
        %v2299 = vpow.pop %v2298
        %v2300 = vmul.f32 %v2297, 1.442695
        %v2301 = vpow.pop %v2300
        %v2302 = vsel %vm531, %v2299, 0.0
        %v2303 = vsel %vm531, %v2301, 0.0
        %2304 = vadd.xlane.f32.xlu0 %v2302
        %v2305 = vpop.xlane.xlu0 %2304
        %2306 = vadd.xlane.f32.xlu0 %v2303
        %v2307 = vpop.xlane.xlu0 %2306
        %v2308 = vsel %vm531, %v2305, 1.0
        %v2309 = vsel %vm531, %v2307, 1.0
        %v2310 = vsel %vm534, %v2299, 0.0
        %v2311 = vsel %vm534, %v2301, 0.0
        %2312 = vadd.xlane.f32.xlu0 %v2310
        %v2313 = vpop.xlane.xlu0 %2312
        %2314 = vadd.xlane.f32.xlu0 %v2311
        %v2315 = vpop.xlane.xlu0 %2314
        %v2316 = vsel %vm534, %v2313, %v2308
        %v2317 = vsel %vm534, %v2315, %v2309
        %v2318 = vsel %vm537, %v2299, 0.0
        %v2319 = vsel %vm537, %v2301, 0.0
        %2320 = vadd.xlane.f32.xlu0 %v2318
        %v2321 = vpop.xlane.xlu0 %2320
        %2322 = vadd.xlane.f32.xlu0 %v2319
        %v2323 = vpop.xlane.xlu0 %2322
        %v2324 = vsel %vm537, %v2321, %v2316
        %v2325 = vsel %vm537, %v2323, %v2317
        %v2326 = vsel %vm540, %v2299, 0.0
        %v2327 = vsel %vm540, %v2301, 0.0
        %2328 = vadd.xlane.f32.xlu0 %v2326
        %v2329 = vpop.xlane.xlu0 %2328
        %2330 = vadd.xlane.f32.xlu0 %v2327
        %v2331 = vpop.xlane.xlu0 %2330
        %v2332 = vsel %vm540, %v2329, %v2324
        %v2333 = vsel %vm540, %v2331, %v2325
        %v2334 = vsel %vm543, %v2299, 0.0
        %v2335 = vsel %vm543, %v2301, 0.0
        %2336 = vadd.xlane.f32.xlu0 %v2334
        %v2337 = vpop.xlane.xlu0 %2336
        %2338 = vadd.xlane.f32.xlu0 %v2335
        %v2339 = vpop.xlane.xlu0 %2338
        %v2340 = vsel %vm543, %v2337, %v2332
        %v2341 = vsel %vm543, %v2339, %v2333
        %v2342 = vrcp.pop %v2340
        %v2343 = vrcp.pop %v2341
        %v2344 = vmul.f32 %v2340, %v2342
        %v2345 = vmul.f32 %v2341, %v2343
        %v2346 = vsub.f32 2.0, %v2344
        %v2347 = vsub.f32 2.0, %v2345
        %v2348 = vmul.f32 %v2342, %v2346
        %v2349 = vmul.f32 %v2343, %v2347
        %v2350 = vmul.f32 %v2299, %v2348
        %v2351 = vmul.f32 %v2301, %v2349
        %2352 = vst [vmem:[%s525] sm:$0xff] %v2350
        %2353 = vst [vmem:[%s525 + $0x8] sm:$0xff] %v2351
        %v2354 = vld [vmem:[%s519 + $0x8] sm:$0xf]
        %v2355 = vld [vmem:[%s519 + $0xc] sm:$0xf]
        %v2356 = vld [vmem:[#allocation2] sm:$0xff]
        %v2357 = vld [vmem:[#allocation2 + $0x8] sm:$0xff]
        %v2358 = vld [vmem:[#allocation2 + $0x10] sm:$0xff]
        %v2359 = vld [vmem:[#allocation2 + $0x18] sm:$0xff]
        %v2360 = vld [vmem:[#allocation2 + $0x20] sm:$0xff]
        %v2361 = vld [vmem:[#allocation2 + $0x28] sm:$0xff]
        %v2362 = vld [vmem:[#allocation2 + $0x30] sm:$0xff]
        %v2363 = vld [vmem:[#allocation2 + $0x38] sm:$0xff]
        %v2364 = vld [vmem:[#allocation2 + $0x40] sm:$0xff]
        %v2365 = vld [vmem:[#allocation2 + $0x48] sm:$0xff]
        %v2366 = vld [vmem:[#allocation2 + $0x50] sm:$0xff]
        %v2367 = vld [vmem:[#allocation2 + $0x58] sm:$0xff]
        %v2368 = vld [vmem:[#allocation2 + $0x60] sm:$0xff]
        %v2369 = vld [vmem:[#allocation2 + $0x68] sm:$0xff]
        %v2370 = vld [vmem:[#allocation2 + $0x70] sm:$0xff]
        %v2371 = vld [vmem:[#allocation2 + $0x78] sm:$0xff]
        %v2372 = vld [vmem:[#allocation2 + $0x80] sm:$0xff]
        %v2373 = vld [vmem:[#allocation2 + $0x88] sm:$0xff]
        %v2374 = vld [vmem:[#allocation2 + $0x90] sm:$0xff]
        %v2375 = vld [vmem:[#allocation2 + $0x98] sm:$0xff]
        %v2376 = vld [vmem:[#allocation2 + $0xa0] sm:$0xff]
        %v2377 = vld [vmem:[#allocation2 + $0xa8] sm:$0xff]
        %v2378 = vld [vmem:[#allocation2 + $0xb0] sm:$0xff]
        %v2379 = vld [vmem:[#allocation2 + $0xb8] sm:$0xff]
        %v2380 = vld [vmem:[#allocation2 + $0xc0] sm:$0xff]
        %v2381 = vld [vmem:[#allocation2 + $0xc8] sm:$0xff]
        %v2382 = vld [vmem:[#allocation2 + $0xd0] sm:$0xff]
        %v2383 = vld [vmem:[#allocation2 + $0xd8] sm:$0xff]
        %v2384 = vld [vmem:[#allocation2 + $0xe0] sm:$0xff]
        %v2385 = vld [vmem:[#allocation2 + $0xe8] sm:$0xff]
        %v2386 = vld [vmem:[#allocation2 + $0xf0] sm:$0xff]
        %v2387 = vld [vmem:[#allocation2 + $0xf8] sm:$0xff]
        %v2388 = vld [vmem:[%s2] sm:$0xf]
        %v2390 = vperm.slane %v2388, 0
        %v2391 = vperm.slane %v2388, 1
        %v2392 = vperm.slane %v2388, 2
        %v2393 = vperm.slane %v2388, 3
        %v2400 = vunpack.c.l.b16 %v2354
        %v2401 = vunpack.c.l.b16 %v2355
        %v2402 = vpack.c.b16 %v2401, %v2400
        %v2436 = vunpack.c.l.b16 %v2356
        %v2437 = vunpack.c.h.b16 %v2356
        %v2438 = vunpack.c.l.b16 %v2357
        %v2439 = vunpack.c.h.b16 %v2357
        %v2440 = vunpack.c.l.b16 %v2358
        %v2441 = vunpack.c.h.b16 %v2358
        %v2442 = vunpack.c.l.b16 %v2359
        %v2443 = vunpack.c.h.b16 %v2359
        %v2444 = vunpack.c.l.b16 %v2360
        %v2445 = vunpack.c.h.b16 %v2360
        %v2446 = vunpack.c.l.b16 %v2361
        %v2447 = vunpack.c.h.b16 %v2361
        %v2448 = vunpack.c.l.b16 %v2362
        %v2449 = vunpack.c.h.b16 %v2362
        %v2450 = vunpack.c.l.b16 %v2363
        %v2451 = vunpack.c.h.b16 %v2363
        %v2452 = vunpack.c.l.b16 %v2364
        %v2453 = vunpack.c.h.b16 %v2364
        %v2454 = vunpack.c.l.b16 %v2365
        %v2455 = vunpack.c.h.b16 %v2365
        %v2456 = vunpack.c.l.b16 %v2366
        %v2457 = vunpack.c.h.b16 %v2366
        %v2458 = vunpack.c.l.b16 %v2367
        %v2459 = vunpack.c.h.b16 %v2367
        %v2460 = vunpack.c.l.b16 %v2368
        %v2461 = vunpack.c.h.b16 %v2368
        %v2462 = vunpack.c.l.b16 %v2369
        %v2463 = vunpack.c.h.b16 %v2369
        %v2464 = vunpack.c.l.b16 %v2370
        %v2465 = vunpack.c.h.b16 %v2370
        %v2466 = vunpack.c.l.b16 %v2371
        %v2467 = vunpack.c.h.b16 %v2371
        %v2468 = vunpack.c.l.b16 %v2372
        %v2469 = vunpack.c.h.b16 %v2372
        %v2470 = vunpack.c.l.b16 %v2373
        %v2471 = vunpack.c.h.b16 %v2373
        %v2472 = vunpack.c.l.b16 %v2374
        %v2473 = vunpack.c.h.b16 %v2374
        %v2474 = vunpack.c.l.b16 %v2375
        %v2475 = vunpack.c.h.b16 %v2375
        %v2476 = vunpack.c.l.b16 %v2376
        %v2477 = vunpack.c.h.b16 %v2376
        %v2478 = vunpack.c.l.b16 %v2377
        %v2479 = vunpack.c.h.b16 %v2377
        %v2480 = vunpack.c.l.b16 %v2378
        %v2481 = vunpack.c.h.b16 %v2378
        %v2482 = vunpack.c.l.b16 %v2379
        %v2483 = vunpack.c.h.b16 %v2379
        %v2484 = vunpack.c.l.b16 %v2380
        %v2485 = vunpack.c.h.b16 %v2380
        %v2486 = vunpack.c.l.b16 %v2381
        %v2487 = vunpack.c.h.b16 %v2381
        %v2488 = vunpack.c.l.b16 %v2382
        %v2489 = vunpack.c.h.b16 %v2382
        %v2490 = vunpack.c.l.b16 %v2383
        %v2491 = vunpack.c.h.b16 %v2383
        %v2492 = vunpack.c.l.b16 %v2384
        %v2493 = vunpack.c.h.b16 %v2384
        %v2494 = vunpack.c.l.b16 %v2385
        %v2495 = vunpack.c.h.b16 %v2385
        %v2496 = vunpack.c.l.b16 %v2386
        %v2497 = vunpack.c.h.b16 %v2386
        %v2498 = vunpack.c.l.b16 %v2387
        %v2499 = vunpack.c.h.b16 %v2387
        %v2500 = vpack.c.b16 %v2440, %v2436
        %v2501 = vpack.c.b16 %v2441, %v2437
        %v2502 = vpack.c.b16 %v2442, %v2438
        %v2503 = vpack.c.b16 %v2443, %v2439
        %v2504 = vpack.c.b16 %v2448, %v2444
        %v2505 = vpack.c.b16 %v2449, %v2445
        %v2506 = vpack.c.b16 %v2450, %v2446
        %v2507 = vpack.c.b16 %v2451, %v2447
        %v2508 = vpack.c.b16 %v2456, %v2452
        %v2509 = vpack.c.b16 %v2457, %v2453
        %v2510 = vpack.c.b16 %v2458, %v2454
        %v2511 = vpack.c.b16 %v2459, %v2455
        %v2512 = vpack.c.b16 %v2464, %v2460
        %v2513 = vpack.c.b16 %v2465, %v2461
        %v2514 = vpack.c.b16 %v2466, %v2462
        %v2515 = vpack.c.b16 %v2467, %v2463
        %v2516 = vpack.c.b16 %v2472, %v2468
        %v2517 = vpack.c.b16 %v2473, %v2469
        %v2518 = vpack.c.b16 %v2474, %v2470
        %v2519 = vpack.c.b16 %v2475, %v2471
        %v2520 = vpack.c.b16 %v2480, %v2476
        %v2521 = vpack.c.b16 %v2481, %v2477
        %v2522 = vpack.c.b16 %v2482, %v2478
        %v2523 = vpack.c.b16 %v2483, %v2479
        %v2524 = vpack.c.b16 %v2488, %v2484
        %v2525 = vpack.c.b16 %v2489, %v2485
        %v2526 = vpack.c.b16 %v2490, %v2486
        %v2527 = vpack.c.b16 %v2491, %v2487
        %v2528 = vpack.c.b16 %v2496, %v2492
        %v2529 = vpack.c.b16 %v2497, %v2493
        %v2530 = vpack.c.b16 %v2498, %v2494
        %v2531 = vpack.c.b16 %v2499, %v2495
        %2564 = vmatpush.bf16.msra.mxu0 %v2528
        %2565 = vmatpush.bf16.msra.mxu0 %v2524
        %2566 = vmatpush.bf16.msra.mxu0 %v2520
        %2567 = vmatpush.bf16.msra.mxu0 %v2516
        %2568 = vmatpush.bf16.msra.mxu0 %v2512
        %2569 = vmatpush.bf16.msra.mxu0 %v2508
        %2570 = vmatpush.bf16.msra.mxu0 %v2504
        %2571 = vmatpush.bf16.msra.mxu0 %v2500
        %2572 = vmatmul.bf16.gmra.mxu0 %v2402
        %v2573 = vpop.f32.mrf.mxu0
        %v2574 = vadd.f32 %v2390, %v2573
        %v2575 = vpop.f32.mrf.mxu0
        %v2576 = vadd.f32 %v2390, %v2575
        %2577 = vdwg.mxu0
        %2578 = vmatpush.bf16.msra.mxu0 %v2529
        %2579 = vmatpush.bf16.msra.mxu0 %v2525
        %2580 = vmatpush.bf16.msra.mxu0 %v2521
        %2581 = vmatpush.bf16.msra.mxu0 %v2517
        %2582 = vmatpush.bf16.msra.mxu0 %v2513
        %2583 = vmatpush.bf16.msra.mxu0 %v2509
        %2584 = vmatpush.bf16.msra.mxu0 %v2505
        %2585 = vmatpush.bf16.msra.mxu0 %v2501
        %2586 = vmatmul.bf16.gmra.mxu0 %v2402
        %v2587 = vpop.f32.mrf.mxu0
        %v2588 = vadd.f32 %v2391, %v2587
        %v2589 = vpop.f32.mrf.mxu0
        %v2590 = vadd.f32 %v2391, %v2589
        %2591 = vdwg.mxu0
        %2592 = vmatpush.bf16.msra.mxu0 %v2530
        %2593 = vmatpush.bf16.msra.mxu0 %v2526
        %2594 = vmatpush.bf16.msra.mxu0 %v2522
        %2595 = vmatpush.bf16.msra.mxu0 %v2518
        %2596 = vmatpush.bf16.msra.mxu0 %v2514
        %2597 = vmatpush.bf16.msra.mxu0 %v2510
        %2598 = vmatpush.bf16.msra.mxu0 %v2506
        %2599 = vmatpush.bf16.msra.mxu0 %v2502
        %2600 = vmatmul.bf16.gmra.mxu0 %v2402
        %v2601 = vpop.f32.mrf.mxu0
        %v2602 = vadd.f32 %v2392, %v2601
        %v2603 = vpop.f32.mrf.mxu0
        %v2604 = vadd.f32 %v2392, %v2603
        %2605 = vdwg.mxu0
        %2606 = vmatpush.bf16.msra.mxu0 %v2531
        %2607 = vmatpush.bf16.msra.mxu0 %v2527
        %2608 = vmatpush.bf16.msra.mxu0 %v2523
        %2609 = vmatpush.bf16.msra.mxu0 %v2519
        %2610 = vmatpush.bf16.msra.mxu0 %v2515
        %2611 = vmatpush.bf16.msra.mxu0 %v2511
        %2612 = vmatpush.bf16.msra.mxu0 %v2507
        %2613 = vmatpush.bf16.msra.mxu0 %v2503
        %2614 = vmatmul.bf16.gmra.mxu0 %v2402
        %v2615 = vpop.f32.mrf.mxu0
        %v2616 = vadd.f32 %v2393, %v2615
        %v2617 = vpop.f32.mrf.mxu0
        %v2618 = vadd.f32 %v2393, %v2617
        %2619 = vdwg.mxu0
        %v2620 = vmax.f32 %v2574, 0.0
        %v2621 = vmax.f32 %v2588, 0.0
        %v2622 = vmax.f32 %v2602, 0.0
        %v2623 = vmax.f32 %v2616, 0.0
        %v2624 = vmax.f32 %v2576, 0.0
        %v2625 = vmax.f32 %v2590, 0.0
        %v2626 = vmax.f32 %v2604, 0.0
        %v2627 = vmax.f32 %v2618, 0.0
        %v2628 = vpack.c.bf16 %v2624, %v2620
        %v2629 = vpack.c.bf16 %v2625, %v2621
        %v2630 = vpack.c.bf16 %v2626, %v2622
        %v2631 = vpack.c.bf16 %v2627, %v2623
        %v2632 = vld [vmem:[#allocation4] sm:$0xff]
        %v2633 = vld [vmem:[#allocation4 + $0x8] sm:$0xff]
        %v2634 = vld [vmem:[#allocation4 + $0x10] sm:$0xff]
        %v2635 = vld [vmem:[#allocation4 + $0x18] sm:$0xff]
        %v2636 = vld [vmem:[#allocation4 + $0x20] sm:$0xff]
        %v2637 = vld [vmem:[#allocation4 + $0x28] sm:$0xff]
        %v2638 = vld [vmem:[#allocation4 + $0x30] sm:$0xff]
        %v2639 = vld [vmem:[#allocation4 + $0x38] sm:$0xff]
        %v2640 = vld [vmem:[#allocation4 + $0x40] sm:$0xff]
        %v2641 = vld [vmem:[#allocation4 + $0x48] sm:$0xff]
        %v2642 = vld [vmem:[#allocation4 + $0x50] sm:$0xff]
        %v2643 = vld [vmem:[#allocation4 + $0x58] sm:$0xff]
        %v2644 = vld [vmem:[#allocation4 + $0x60] sm:$0xff]
        %v2645 = vld [vmem:[#allocation4 + $0x68] sm:$0xff]
        %v2646 = vld [vmem:[#allocation4 + $0x70] sm:$0xff]
        %v2647 = vld [vmem:[#allocation4 + $0x78] sm:$0xff]
        %v2648 = vld [vmem:[#allocation4 + $0x80] sm:$0xff]
        %v2649 = vld [vmem:[#allocation4 + $0x88] sm:$0xff]
        %v2650 = vld [vmem:[#allocation4 + $0x90] sm:$0xff]
        %v2651 = vld [vmem:[#allocation4 + $0x98] sm:$0xff]
        %v2652 = vld [vmem:[#allocation4 + $0xa0] sm:$0xff]
        %v2653 = vld [vmem:[#allocation4 + $0xa8] sm:$0xff]
        %v2654 = vld [vmem:[#allocation4 + $0xb0] sm:$0xff]
        %v2655 = vld [vmem:[#allocation4 + $0xb8] sm:$0xff]
        %v2656 = vld [vmem:[#allocation4 + $0xc0] sm:$0xff]
        %v2657 = vld [vmem:[#allocation4 + $0xc8] sm:$0xff]
        %v2658 = vld [vmem:[#allocation4 + $0xd0] sm:$0xff]
        %v2659 = vld [vmem:[#allocation4 + $0xd8] sm:$0xff]
        %v2660 = vld [vmem:[#allocation4 + $0xe0] sm:$0xff]
        %v2661 = vld [vmem:[#allocation4 + $0xe8] sm:$0xff]
        %v2662 = vld [vmem:[#allocation4 + $0xf0] sm:$0xff]
        %v2663 = vld [vmem:[#allocation4 + $0xf8] sm:$0xff]
        %v2664 = vld [vmem:[#allocation4 + $0x100] sm:$0xff]
        %v2665 = vld [vmem:[#allocation4 + $0x108] sm:$0xff]
        %v2666 = vld [vmem:[#allocation4 + $0x110] sm:$0xff]
        %v2667 = vld [vmem:[#allocation4 + $0x118] sm:$0xff]
        %v2668 = vld [vmem:[#allocation4 + $0x120] sm:$0xff]
        %v2669 = vld [vmem:[#allocation4 + $0x128] sm:$0xff]
        %v2670 = vld [vmem:[#allocation4 + $0x130] sm:$0xff]
        %v2671 = vld [vmem:[#allocation4 + $0x138] sm:$0xff]
        %v2672 = vld [vmem:[#allocation4 + $0x140] sm:$0xff]
        %v2673 = vld [vmem:[#allocation4 + $0x148] sm:$0xff]
        %v2674 = vld [vmem:[#allocation4 + $0x150] sm:$0xff]
        %v2675 = vld [vmem:[#allocation4 + $0x158] sm:$0xff]
        %v2676 = vld [vmem:[#allocation4 + $0x160] sm:$0xff]
        %v2677 = vld [vmem:[#allocation4 + $0x168] sm:$0xff]
        %v2678 = vld [vmem:[#allocation4 + $0x170] sm:$0xff]
        %v2679 = vld [vmem:[#allocation4 + $0x178] sm:$0xff]
        %v2680 = vld [vmem:[#allocation4 + $0x180] sm:$0xff]
        %v2681 = vld [vmem:[#allocation4 + $0x188] sm:$0xff]
        %v2682 = vld [vmem:[#allocation4 + $0x190] sm:$0xff]
        %v2683 = vld [vmem:[#allocation4 + $0x198] sm:$0xff]
        %v2684 = vld [vmem:[#allocation4 + $0x1a0] sm:$0xff]
        %v2685 = vld [vmem:[#allocation4 + $0x1a8] sm:$0xff]
        %v2686 = vld [vmem:[#allocation4 + $0x1b0] sm:$0xff]
        %v2687 = vld [vmem:[#allocation4 + $0x1b8] sm:$0xff]
        %v2688 = vld [vmem:[#allocation4 + $0x1c0] sm:$0xff]
        %v2689 = vld [vmem:[#allocation4 + $0x1c8] sm:$0xff]
        %v2690 = vld [vmem:[#allocation4 + $0x1d0] sm:$0xff]
        %v2691 = vld [vmem:[#allocation4 + $0x1d8] sm:$0xff]
        %v2692 = vld [vmem:[#allocation4 + $0x1e0] sm:$0xff]
        %v2693 = vld [vmem:[#allocation4 + $0x1e8] sm:$0xff]
        %v2694 = vld [vmem:[#allocation4 + $0x1f0] sm:$0xff]
        %v2695 = vld [vmem:[#allocation4 + $0x1f8] sm:$0xff]
        %v2696 = vld [vmem:[%s4] sm:$0x3]
        %v2698 = vperm.slane %v2696, 0
        %v2699 = vperm.slane %v2696, 1
        %v2766 = vunpack.c.l.b16 %v2632
        %v2767 = vunpack.c.h.b16 %v2632
        %v2768 = vunpack.c.l.b16 %v2633
        %v2769 = vunpack.c.h.b16 %v2633
        %v2770 = vunpack.c.l.b16 %v2634
        %v2771 = vunpack.c.h.b16 %v2634
        %v2772 = vunpack.c.l.b16 %v2635
        %v2773 = vunpack.c.h.b16 %v2635
        %v2774 = vunpack.c.l.b16 %v2636
        %v2775 = vunpack.c.h.b16 %v2636
        %v2776 = vunpack.c.l.b16 %v2637
        %v2777 = vunpack.c.h.b16 %v2637
        %v2778 = vunpack.c.l.b16 %v2638
        %v2779 = vunpack.c.h.b16 %v2638
        %v2780 = vunpack.c.l.b16 %v2639
        %v2781 = vunpack.c.h.b16 %v2639
        %v2782 = vunpack.c.l.b16 %v2640
        %v2783 = vunpack.c.h.b16 %v2640
        %v2784 = vunpack.c.l.b16 %v2641
        %v2785 = vunpack.c.h.b16 %v2641
        %v2786 = vunpack.c.l.b16 %v2642
        %v2787 = vunpack.c.h.b16 %v2642
        %v2788 = vunpack.c.l.b16 %v2643
        %v2789 = vunpack.c.h.b16 %v2643
        %v2790 = vunpack.c.l.b16 %v2644
        %v2791 = vunpack.c.h.b16 %v2644
        %v2792 = vunpack.c.l.b16 %v2645
        %v2793 = vunpack.c.h.b16 %v2645
        %v2794 = vunpack.c.l.b16 %v2646
        %v2795 = vunpack.c.h.b16 %v2646
        %v2796 = vunpack.c.l.b16 %v2647
        %v2797 = vunpack.c.h.b16 %v2647
        %v2798 = vunpack.c.l.b16 %v2648
        %v2799 = vunpack.c.h.b16 %v2648
        %v2800 = vunpack.c.l.b16 %v2649
        %v2801 = vunpack.c.h.b16 %v2649
        %v2802 = vunpack.c.l.b16 %v2650
        %v2803 = vunpack.c.h.b16 %v2650
        %v2804 = vunpack.c.l.b16 %v2651
        %v2805 = vunpack.c.h.b16 %v2651
        %v2806 = vunpack.c.l.b16 %v2652
        %v2807 = vunpack.c.h.b16 %v2652
        %v2808 = vunpack.c.l.b16 %v2653
        %v2809 = vunpack.c.h.b16 %v2653
        %v2810 = vunpack.c.l.b16 %v2654
        %v2811 = vunpack.c.h.b16 %v2654
        %v2812 = vunpack.c.l.b16 %v2655
        %v2813 = vunpack.c.h.b16 %v2655
        %v2814 = vunpack.c.l.b16 %v2656
        %v2815 = vunpack.c.h.b16 %v2656
        %v2816 = vunpack.c.l.b16 %v2657
        %v2817 = vunpack.c.h.b16 %v2657
        %v2818 = vunpack.c.l.b16 %v2658
        %v2819 = vunpack.c.h.b16 %v2658
        %v2820 = vunpack.c.l.b16 %v2659
        %v2821 = vunpack.c.h.b16 %v2659
        %v2822 = vunpack.c.l.b16 %v2660
        %v2823 = vunpack.c.h.b16 %v2660
        %v2824 = vunpack.c.l.b16 %v2661
        %v2825 = vunpack.c.h.b16 %v2661
        %v2826 = vunpack.c.l.b16 %v2662
        %v2827 = vunpack.c.h.b16 %v2662
        %v2828 = vunpack.c.l.b16 %v2663
        %v2829 = vunpack.c.h.b16 %v2663
        %v2830 = vunpack.c.l.b16 %v2664
        %v2831 = vunpack.c.h.b16 %v2664
        %v2832 = vunpack.c.l.b16 %v2665
        %v2833 = vunpack.c.h.b16 %v2665
        %v2834 = vunpack.c.l.b16 %v2666
        %v2835 = vunpack.c.h.b16 %v2666
        %v2836 = vunpack.c.l.b16 %v2667
        %v2837 = vunpack.c.h.b16 %v2667
        %v2838 = vunpack.c.l.b16 %v2668
        %v2839 = vunpack.c.h.b16 %v2668
        %v2840 = vunpack.c.l.b16 %v2669
        %v2841 = vunpack.c.h.b16 %v2669
        %v2842 = vunpack.c.l.b16 %v2670
        %v2843 = vunpack.c.h.b16 %v2670
        %v2844 = vunpack.c.l.b16 %v2671
        %v2845 = vunpack.c.h.b16 %v2671
        %v2846 = vunpack.c.l.b16 %v2672
        %v2847 = vunpack.c.h.b16 %v2672
        %v2848 = vunpack.c.l.b16 %v2673
        %v2849 = vunpack.c.h.b16 %v2673
        %v2850 = vunpack.c.l.b16 %v2674
        %v2851 = vunpack.c.h.b16 %v2674
        %v2852 = vunpack.c.l.b16 %v2675
        %v2853 = vunpack.c.h.b16 %v2675
        %v2854 = vunpack.c.l.b16 %v2676
        %v2855 = vunpack.c.h.b16 %v2676
        %v2856 = vunpack.c.l.b16 %v2677
        %v2857 = vunpack.c.h.b16 %v2677
        %v2858 = vunpack.c.l.b16 %v2678
        %v2859 = vunpack.c.h.b16 %v2678
        %v2860 = vunpack.c.l.b16 %v2679
        %v2861 = vunpack.c.h.b16 %v2679
        %v2862 = vunpack.c.l.b16 %v2680
        %v2863 = vunpack.c.h.b16 %v2680
        %v2864 = vunpack.c.l.b16 %v2681
        %v2865 = vunpack.c.h.b16 %v2681
        %v2866 = vunpack.c.l.b16 %v2682
        %v2867 = vunpack.c.h.b16 %v2682
        %v2868 = vunpack.c.l.b16 %v2683
        %v2869 = vunpack.c.h.b16 %v2683
        %v2870 = vunpack.c.l.b16 %v2684
        %v2871 = vunpack.c.h.b16 %v2684
        %v2872 = vunpack.c.l.b16 %v2685
        %v2873 = vunpack.c.h.b16 %v2685
        %v2874 = vunpack.c.l.b16 %v2686
        %v2875 = vunpack.c.h.b16 %v2686
        %v2876 = vunpack.c.l.b16 %v2687
        %v2877 = vunpack.c.h.b16 %v2687
        %v2878 = vunpack.c.l.b16 %v2688
        %v2879 = vunpack.c.h.b16 %v2688
        %v2880 = vunpack.c.l.b16 %v2689
        %v2881 = vunpack.c.h.b16 %v2689
        %v2882 = vunpack.c.l.b16 %v2690
        %v2883 = vunpack.c.h.b16 %v2690
        %v2884 = vunpack.c.l.b16 %v2691
        %v2885 = vunpack.c.h.b16 %v2691
        %v2886 = vunpack.c.l.b16 %v2692
        %v2887 = vunpack.c.h.b16 %v2692
        %v2888 = vunpack.c.l.b16 %v2693
        %v2889 = vunpack.c.h.b16 %v2693
        %v2890 = vunpack.c.l.b16 %v2694
        %v2891 = vunpack.c.h.b16 %v2694
        %v2892 = vunpack.c.l.b16 %v2695
        %v2893 = vunpack.c.h.b16 %v2695
        %v2894 = vpack.c.b16 %v2768, %v2766
        %v2895 = vpack.c.b16 %v2769, %v2767
        %v2896 = vpack.c.b16 %v2772, %v2770
        %v2897 = vpack.c.b16 %v2773, %v2771
        %v2898 = vpack.c.b16 %v2776, %v2774
        %v2899 = vpack.c.b16 %v2777, %v2775
        %v2900 = vpack.c.b16 %v2780, %v2778
        %v2901 = vpack.c.b16 %v2781, %v2779
        %v2902 = vpack.c.b16 %v2784, %v2782
        %v2903 = vpack.c.b16 %v2785, %v2783
        %v2904 = vpack.c.b16 %v2788, %v2786
        %v2905 = vpack.c.b16 %v2789, %v2787
        %v2906 = vpack.c.b16 %v2792, %v2790
        %v2907 = vpack.c.b16 %v2793, %v2791
        %v2908 = vpack.c.b16 %v2796, %v2794
        %v2909 = vpack.c.b16 %v2797, %v2795
        %v2910 = vpack.c.b16 %v2800, %v2798
        %v2911 = vpack.c.b16 %v2801, %v2799
        %v2912 = vpack.c.b16 %v2804, %v2802
        %v2913 = vpack.c.b16 %v2805, %v2803
        %v2914 = vpack.c.b16 %v2808, %v2806
        %v2915 = vpack.c.b16 %v2809, %v2807
        %v2916 = vpack.c.b16 %v2812, %v2810
        %v2917 = vpack.c.b16 %v2813, %v2811
        %v2918 = vpack.c.b16 %v2816, %v2814
        %v2919 = vpack.c.b16 %v2817, %v2815
        %v2920 = vpack.c.b16 %v2820, %v2818
        %v2921 = vpack.c.b16 %v2821, %v2819
        %v2922 = vpack.c.b16 %v2824, %v2822
        %v2923 = vpack.c.b16 %v2825, %v2823
        %v2924 = vpack.c.b16 %v2828, %v2826
        %v2925 = vpack.c.b16 %v2829, %v2827
        %v2926 = vpack.c.b16 %v2832, %v2830
        %v2927 = vpack.c.b16 %v2833, %v2831
        %v2928 = vpack.c.b16 %v2836, %v2834
        %v2929 = vpack.c.b16 %v2837, %v2835
        %v2930 = vpack.c.b16 %v2840, %v2838
        %v2931 = vpack.c.b16 %v2841, %v2839
        %v2932 = vpack.c.b16 %v2844, %v2842
        %v2933 = vpack.c.b16 %v2845, %v2843
        %v2934 = vpack.c.b16 %v2848, %v2846
        %v2935 = vpack.c.b16 %v2849, %v2847
        %v2936 = vpack.c.b16 %v2852, %v2850
        %v2937 = vpack.c.b16 %v2853, %v2851
        %v2938 = vpack.c.b16 %v2856, %v2854
        %v2939 = vpack.c.b16 %v2857, %v2855
        %v2940 = vpack.c.b16 %v2860, %v2858
        %v2941 = vpack.c.b16 %v2861, %v2859
        %v2942 = vpack.c.b16 %v2864, %v2862
        %v2943 = vpack.c.b16 %v2865, %v2863
        %v2944 = vpack.c.b16 %v2868, %v2866
        %v2945 = vpack.c.b16 %v2869, %v2867
        %v2946 = vpack.c.b16 %v2872, %v2870
        %v2947 = vpack.c.b16 %v2873, %v2871
        %v2948 = vpack.c.b16 %v2876, %v2874
        %v2949 = vpack.c.b16 %v2877, %v2875
        %v2950 = vpack.c.b16 %v2880, %v2878
        %v2951 = vpack.c.b16 %v2881, %v2879
        %v2952 = vpack.c.b16 %v2884, %v2882
        %v2953 = vpack.c.b16 %v2885, %v2883
        %v2954 = vpack.c.b16 %v2888, %v2886
        %v2955 = vpack.c.b16 %v2889, %v2887
        %v2956 = vpack.c.b16 %v2892, %v2890
        %v2957 = vpack.c.b16 %v2893, %v2891
        %3022 = vmatpush.bf16.msra.mxu0 %v2908
        %3023 = vmatpush.bf16.msra.mxu0 %v2906
        %3024 = vmatpush.bf16.msra.mxu0 %v2904
        %3025 = vmatpush.bf16.msra.mxu0 %v2902
        %3026 = vmatpush.bf16.msra.mxu0 %v2900
        %3027 = vmatpush.bf16.msra.mxu0 %v2898
        %3028 = vmatpush.bf16.msra.mxu0 %v2896
        %3029 = vmatpush.bf16.msra.mxu0 %v2894
        %3030 = vmatmul.bf16.gmra.mxu0 %v2628
        %v3031 = vpop.f32.mrf.mxu0
        %v3032 = vadd.f32 %v2698, %v3031
        %v3033 = vpop.f32.mrf.mxu0
        %v3034 = vadd.f32 %v2698, %v3033
        %3035 = vdwg.mxu0
        %3036 = vmatpush.bf16.msra.mxu0 %v2924
        %3037 = vmatpush.bf16.msra.mxu0 %v2922
        %3038 = vmatpush.bf16.msra.mxu0 %v2920
        %3039 = vmatpush.bf16.msra.mxu0 %v2918
        %3040 = vmatpush.bf16.msra.mxu0 %v2916
        %3041 = vmatpush.bf16.msra.mxu0 %v2914
        %3042 = vmatpush.bf16.msra.mxu0 %v2912
        %3043 = vmatpush.bf16.msra.mxu0 %v2910
        %3044 = vmatmul.bf16.gmra.mxu0 %v2629
        %v3045 = vpop.f32.mrf.mxu0
        %v3046 = vadd.f32 %v3032, %v3045
        %v3047 = vpop.f32.mrf.mxu0
        %v3048 = vadd.f32 %v3034, %v3047
        %3049 = vdwg.mxu0
        %3050 = vmatpush.bf16.msra.mxu0 %v2940
        %3051 = vmatpush.bf16.msra.mxu0 %v2938
        %3052 = vmatpush.bf16.msra.mxu0 %v2936
        %3053 = vmatpush.bf16.msra.mxu0 %v2934
        %3054 = vmatpush.bf16.msra.mxu0 %v2932
        %3055 = vmatpush.bf16.msra.mxu0 %v2930
        %3056 = vmatpush.bf16.msra.mxu0 %v2928
        %3057 = vmatpush.bf16.msra.mxu0 %v2926
        %3058 = vmatmul.bf16.gmra.mxu0 %v2630
        %v3059 = vpop.f32.mrf.mxu0
        %v3060 = vadd.f32 %v3046, %v3059
        %v3061 = vpop.f32.mrf.mxu0
        %v3062 = vadd.f32 %v3048, %v3061
        %3063 = vdwg.mxu0
        %3064 = vmatpush.bf16.msra.mxu0 %v2956
        %3065 = vmatpush.bf16.msra.mxu0 %v2954
        %3066 = vmatpush.bf16.msra.mxu0 %v2952
        %3067 = vmatpush.bf16.msra.mxu0 %v2950
        %3068 = vmatpush.bf16.msra.mxu0 %v2948
        %3069 = vmatpush.bf16.msra.mxu0 %v2946
        %3070 = vmatpush.bf16.msra.mxu0 %v2944
        %3071 = vmatpush.bf16.msra.mxu0 %v2942
        %3072 = vmatmul.bf16.gmra.mxu0 %v2631
        %v3073 = vpop.f32.mrf.mxu0
        %v3074 = vadd.f32 %v3060, %v3073
        %v3075 = vpop.f32.mrf.mxu0
        %v3076 = vadd.f32 %v3062, %v3075
        %3077 = vdwg.mxu0
        %3078 = vmatpush.bf16.msra.mxu0 %v2909
        %3079 = vmatpush.bf16.msra.mxu0 %v2907
        %3080 = vmatpush.bf16.msra.mxu0 %v2905
        %3081 = vmatpush.bf16.msra.mxu0 %v2903
        %3082 = vmatpush.bf16.msra.mxu0 %v2901
        %3083 = vmatpush.bf16.msra.mxu0 %v2899
        %3084 = vmatpush.bf16.msra.mxu0 %v2897
        %3085 = vmatpush.bf16.msra.mxu0 %v2895
        %3086 = vmatmul.bf16.gmra.mxu0 %v2628
        %v3087 = vpop.f32.mrf.mxu0
        %v3088 = vadd.f32 %v2699, %v3087
        %v3089 = vpop.f32.mrf.mxu0
        %v3090 = vadd.f32 %v2699, %v3089
        %3091 = vdwg.mxu0
        %3092 = vmatpush.bf16.msra.mxu0 %v2925
        %3093 = vmatpush.bf16.msra.mxu0 %v2923
        %3094 = vmatpush.bf16.msra.mxu0 %v2921
        %3095 = vmatpush.bf16.msra.mxu0 %v2919
        %3096 = vmatpush.bf16.msra.mxu0 %v2917
        %3097 = vmatpush.bf16.msra.mxu0 %v2915
        %3098 = vmatpush.bf16.msra.mxu0 %v2913
        %3099 = vmatpush.bf16.msra.mxu0 %v2911
        %3100 = vmatmul.bf16.gmra.mxu0 %v2629
        %v3101 = vpop.f32.mrf.mxu0
        %v3102 = vadd.f32 %v3088, %v3101
        %v3103 = vpop.f32.mrf.mxu0
        %v3104 = vadd.f32 %v3090, %v3103
        %3105 = vdwg.mxu0
        %3106 = vmatpush.bf16.msra.mxu0 %v2941
        %3107 = vmatpush.bf16.msra.mxu0 %v2939
        %3108 = vmatpush.bf16.msra.mxu0 %v2937
        %3109 = vmatpush.bf16.msra.mxu0 %v2935
        %3110 = vmatpush.bf16.msra.mxu0 %v2933
        %3111 = vmatpush.bf16.msra.mxu0 %v2931
        %3112 = vmatpush.bf16.msra.mxu0 %v2929
        %3113 = vmatpush.bf16.msra.mxu0 %v2927
        %3114 = vmatmul.bf16.gmra.mxu0 %v2630
        %v3115 = vpop.f32.mrf.mxu0
        %v3116 = vadd.f32 %v3102, %v3115
        %v3117 = vpop.f32.mrf.mxu0
        %v3118 = vadd.f32 %v3104, %v3117
        %3119 = vdwg.mxu0
        %3120 = vmatpush.bf16.msra.mxu0 %v2957
        %3121 = vmatpush.bf16.msra.mxu0 %v2955
        %3122 = vmatpush.bf16.msra.mxu0 %v2953
        %3123 = vmatpush.bf16.msra.mxu0 %v2951
        %3124 = vmatpush.bf16.msra.mxu0 %v2949
        %3125 = vmatpush.bf16.msra.mxu0 %v2947
        %3126 = vmatpush.bf16.msra.mxu0 %v2945
        %3127 = vmatpush.bf16.msra.mxu0 %v2943
        %3128 = vmatmul.bf16.gmra.mxu0 %v2631
        %v3129 = vpop.f32.mrf.mxu0
        %v3130 = vadd.f32 %v3116, %v3129
        %v3131 = vpop.f32.mrf.mxu0
        %v3132 = vadd.f32 %v3118, %v3131
        %3133 = vdwg.mxu0
        %v3134 = vmax.f32 %v3074, 0.0
        %v3135 = vmax.f32 %v3130, 0.0
        %v3136 = vmax.f32 %v3076, 0.0
        %v3137 = vmax.f32 %v3132, 0.0
        %v3138 = vpack.c.bf16 %v3136, %v3134
        %v3139 = vpack.c.bf16 %v3137, %v3135
        %v3140 = vld [vmem:[%s5] sm:$0xf]
        %v3141 = vld [vmem:[%s5 + $0x4] sm:$0xf]
        %v3142 = vld [vmem:[%s5 + $0x8] sm:$0xf]
        %v3143 = vld [vmem:[%s5 + $0xc] sm:$0xf]
        %v3144 = vld [vmem:[%s5 + $0x10] sm:$0xf]
        %v3145 = vld [vmem:[%s5 + $0x14] sm:$0xf]
        %v3146 = vld [vmem:[%s5 + $0x18] sm:$0xf]
        %v3147 = vld [vmem:[%s5 + $0x1c] sm:$0xf]
        %v3148 = vld [vmem:[%s5 + $0x20] sm:$0xf]
        %v3149 = vld [vmem:[%s5 + $0x24] sm:$0xf]
        %v3150 = vld [vmem:[%s5 + $0x28] sm:$0xf]
        %v3151 = vld [vmem:[%s5 + $0x2c] sm:$0xf]
        %v3152 = vld [vmem:[%s5 + $0x30] sm:$0xf]
        %v3153 = vld [vmem:[%s5 + $0x34] sm:$0xf]
        %v3154 = vld [vmem:[%s5 + $0x38] sm:$0xf]
        %v3155 = vld [vmem:[%s5 + $0x3c] sm:$0xf]
        %v3156 = vld [vmem:[%s5 + $0x40] sm:$0xf]
        %v3157 = vld [vmem:[%s5 + $0x44] sm:$0xf]
        %v3158 = vld [vmem:[%s5 + $0x48] sm:$0xf]
        %v3159 = vld [vmem:[%s5 + $0x4c] sm:$0xf]
        %v3160 = vld [vmem:[%s5 + $0x50] sm:$0xf]
        %v3161 = vld [vmem:[%s5 + $0x54] sm:$0xf]
        %v3162 = vld [vmem:[%s5 + $0x58] sm:$0xf]
        %v3163 = vld [vmem:[%s5 + $0x5c] sm:$0xf]
        %v3164 = vld [vmem:[%s5 + $0x60] sm:$0xf]
        %v3165 = vld [vmem:[%s5 + $0x64] sm:$0xf]
        %v3166 = vld [vmem:[%s5 + $0x68] sm:$0xf]
        %v3167 = vld [vmem:[%s5 + $0x6c] sm:$0xf]
        %v3168 = vld [vmem:[%s5 + $0x70] sm:$0xf]
        %v3169 = vld [vmem:[%s5 + $0x74] sm:$0xf]
        %v3170 = vld [vmem:[%s5 + $0x78] sm:$0xf]
        %v3171 = vld [vmem:[%s5 + $0x7c] sm:$0xf]
        %v3172 = vld [vmem:[%s6] sm:$0x1]
        %v3174 = vperm.slane %v3172, 0
        %v3208 = vunpack.c.l.b16 %v3140
        %v3209 = vunpack.c.l.b16 %v3141
        %v3210 = vunpack.c.l.b16 %v3142
        %v3211 = vunpack.c.l.b16 %v3143
        %v3212 = vunpack.c.l.b16 %v3144
        %v3213 = vunpack.c.l.b16 %v3145
        %v3214 = vunpack.c.l.b16 %v3146
        %v3215 = vunpack.c.l.b16 %v3147
        %v3216 = vunpack.c.l.b16 %v3148
        %v3217 = vunpack.c.l.b16 %v3149
        %v3218 = vunpack.c.l.b16 %v3150
        %v3219 = vunpack.c.l.b16 %v3151
        %v3220 = vunpack.c.l.b16 %v3152
        %v3221 = vunpack.c.l.b16 %v3153
        %v3222 = vunpack.c.l.b16 %v3154
        %v3223 = vunpack.c.l.b16 %v3155
        %v3224 = vunpack.c.l.b16 %v3156
        %v3225 = vunpack.c.l.b16 %v3157
        %v3226 = vunpack.c.l.b16 %v3158
        %v3227 = vunpack.c.l.b16 %v3159
        %v3228 = vunpack.c.l.b16 %v3160
        %v3229 = vunpack.c.l.b16 %v3161
        %v3230 = vunpack.c.l.b16 %v3162
        %v3231 = vunpack.c.l.b16 %v3163
        %v3232 = vunpack.c.l.b16 %v3164
        %v3233 = vunpack.c.l.b16 %v3165
        %v3234 = vunpack.c.l.b16 %v3166
        %v3235 = vunpack.c.l.b16 %v3167
        %v3236 = vunpack.c.l.b16 %v3168
        %v3237 = vunpack.c.l.b16 %v3169
        %v3238 = vunpack.c.l.b16 %v3170
        %v3239 = vunpack.c.l.b16 %v3171
        %v3240 = vpack.c.b16 %v3209, %v3208
        %v3241 = vpack.c.b16 %v3211, %v3210
        %v3242 = vpack.c.b16 %v3213, %v3212
        %v3243 = vpack.c.b16 %v3215, %v3214
        %v3244 = vpack.c.b16 %v3217, %v3216
        %v3245 = vpack.c.b16 %v3219, %v3218
        %v3246 = vpack.c.b16 %v3221, %v3220
        %v3247 = vpack.c.b16 %v3223, %v3222
        %v3248 = vpack.c.b16 %v3225, %v3224
        %v3249 = vpack.c.b16 %v3227, %v3226
        %v3250 = vpack.c.b16 %v3229, %v3228
        %v3251 = vpack.c.b16 %v3231, %v3230
        %v3252 = vpack.c.b16 %v3233, %v3232
        %v3253 = vpack.c.b16 %v3235, %v3234
        %v3254 = vpack.c.b16 %v3237, %v3236
        %v3255 = vpack.c.b16 %v3239, %v3238
        %3272 = vmatpush.bf16.msra.mxu0 %v3247
        %3273 = vmatpush.bf16.msra.mxu0 %v3246
        %3274 = vmatpush.bf16.msra.mxu0 %v3245
        %3275 = vmatpush.bf16.msra.mxu0 %v3244
        %3276 = vmatpush.bf16.msra.mxu0 %v3243
        %3277 = vmatpush.bf16.msra.mxu0 %v3242
        %3278 = vmatpush.bf16.msra.mxu0 %v3241
        %3279 = vmatpush.bf16.msra.mxu0 %v3240
        %3280 = vmatmul.bf16.gmra.mxu0 %v3138
        %v3281 = vpop.f32.mrf.mxu0
        %v3282 = vadd.f32 %v3174, %v3281
        %v3283 = vpop.f32.mrf.mxu0
        %v3284 = vadd.f32 %v3174, %v3283
        %3285 = vdwg.mxu0
        %3286 = vmatpush.bf16.msra.mxu0 %v3255
        %3287 = vmatpush.bf16.msra.mxu0 %v3254
        %3288 = vmatpush.bf16.msra.mxu0 %v3253
        %3289 = vmatpush.bf16.msra.mxu0 %v3252
        %3290 = vmatpush.bf16.msra.mxu0 %v3251
        %3291 = vmatpush.bf16.msra.mxu0 %v3250
        %3292 = vmatpush.bf16.msra.mxu0 %v3249
        %3293 = vmatpush.bf16.msra.mxu0 %v3248
        %3294 = vmatmul.bf16.gmra.mxu0 %v3139
        %v3295 = vpop.f32.mrf.mxu0
        %v3296 = vadd.f32 %v3282, %v3295
        %v3297 = vpop.f32.mrf.mxu0
        %v3298 = vadd.f32 %v3284, %v3297
        %3299 = vdwg.mxu0
        %v3300 = vmax.f32 %v3296, 0.0
        %v3301 = vmax.f32 %v3298, 0.0
        %v3302 = vpack.c.bf16 %v3301, %v3300
        %v3303 = vld [vmem:[#allocation6] sm:$0xff]
        %v3304 = vld [vmem:[#allocation6 + $0x8] sm:$0xf]
        %v3305 = vld [vmem:[#allocation6 + $0xc] sm:$0xff]
        %v3306 = vld [vmem:[#allocation6 + $0x14] sm:$0xf]
        %v3307 = vld [vmem:[#allocation6 + $0x18] sm:$0xff]
        %v3308 = vld [vmem:[#allocation6 + $0x20] sm:$0xf]
        %v3309 = vld [vmem:[#allocation6 + $0x24] sm:$0xff]
        %v3310 = vld [vmem:[#allocation6 + $0x2c] sm:$0xf]
        %v3311 = vld [vmem:[#allocation6 + $0x30] sm:$0xff]
        %v3312 = vld [vmem:[#allocation6 + $0x38] sm:$0xf]
        %v3313 = vld [vmem:[#allocation6 + $0x3c] sm:$0xff]
        %v3314 = vld [vmem:[#allocation6 + $0x44] sm:$0xf]
        %v3315 = vld [vmem:[#allocation6 + $0x48] sm:$0xff]
        %v3316 = vld [vmem:[#allocation6 + $0x50] sm:$0xf]
        %v3317 = vld [vmem:[#allocation6 + $0x54] sm:$0xff]
        %v3318 = vld [vmem:[#allocation6 + $0x5c] sm:$0xf]
        %v3319 = vld [vmem:[#allocation6 + $0x60] sm:$0xff]
        %v3320 = vld [vmem:[#allocation6 + $0x68] sm:$0xf]
        %v3321 = vld [vmem:[#allocation6 + $0x6c] sm:$0xff]
        %v3322 = vld [vmem:[#allocation6 + $0x74] sm:$0xf]
        %v3323 = vld [vmem:[#allocation6 + $0x78] sm:$0xff]
        %v3324 = vld [vmem:[#allocation6 + $0x80] sm:$0xf]
        %v3325 = vld [vmem:[#allocation6 + $0x84] sm:$0xff]
        %v3326 = vld [vmem:[#allocation6 + $0x8c] sm:$0xf]
        %v3327 = vld [vmem:[#allocation6 + $0x90] sm:$0xff]
        %v3328 = vld [vmem:[#allocation6 + $0x98] sm:$0xf]
        %v3329 = vld [vmem:[#allocation6 + $0x9c] sm:$0xff]
        %v3330 = vld [vmem:[#allocation6 + $0xa4] sm:$0xf]
        %v3331 = vld [vmem:[#allocation6 + $0xa8] sm:$0xff]
        %v3332 = vld [vmem:[#allocation6 + $0xb0] sm:$0xf]
        %v3333 = vld [vmem:[#allocation6 + $0xb4] sm:$0xff]
        %v3334 = vld [vmem:[#allocation6 + $0xbc] sm:$0xf]
        %v3335 = vld [vmem:[%s8] sm:$0x7]
        %v3337 = vperm.slane %v3335, 0
        %v3338 = vperm.slane %v3335, 1
        %v3339 = vperm.slane %v3335, 2
        %v3375 = vunpack.c.l.b16 %v3303
        %v3376 = vunpack.c.h.b16 %v3303
        %v3377 = vunpack.c.l.b16 %v3304
        %v3378 = vunpack.c.l.b16 %v3305
        %v3379 = vunpack.c.h.b16 %v3305
        %v3380 = vunpack.c.l.b16 %v3306
        %v3381 = vunpack.c.l.b16 %v3307
        %v3382 = vunpack.c.h.b16 %v3307
        %v3383 = vunpack.c.l.b16 %v3308
        %v3384 = vunpack.c.l.b16 %v3309
        %v3385 = vunpack.c.h.b16 %v3309
        %v3386 = vunpack.c.l.b16 %v3310
        %v3387 = vunpack.c.l.b16 %v3311
        %v3388 = vunpack.c.h.b16 %v3311
        %v3389 = vunpack.c.l.b16 %v3312
        %v3390 = vunpack.c.l.b16 %v3313
        %v3391 = vunpack.c.h.b16 %v3313
        %v3392 = vunpack.c.l.b16 %v3314
        %v3393 = vunpack.c.l.b16 %v3315
        %v3394 = vunpack.c.h.b16 %v3315
        %v3395 = vunpack.c.l.b16 %v3316
        %v3396 = vunpack.c.l.b16 %v3317
        %v3397 = vunpack.c.h.b16 %v3317
        %v3398 = vunpack.c.l.b16 %v3318
        %v3399 = vunpack.c.l.b16 %v3319
        %v3400 = vunpack.c.h.b16 %v3319
        %v3401 = vunpack.c.l.b16 %v3320
        %v3402 = vunpack.c.l.b16 %v3321
        %v3403 = vunpack.c.h.b16 %v3321
        %v3404 = vunpack.c.l.b16 %v3322
        %v3405 = vunpack.c.l.b16 %v3323
        %v3406 = vunpack.c.h.b16 %v3323
        %v3407 = vunpack.c.l.b16 %v3324
        %v3408 = vunpack.c.l.b16 %v3325
        %v3409 = vunpack.c.h.b16 %v3325
        %v3410 = vunpack.c.l.b16 %v3326
        %v3411 = vunpack.c.l.b16 %v3327
        %v3412 = vunpack.c.h.b16 %v3327
        %v3413 = vunpack.c.l.b16 %v3328
        %v3414 = vunpack.c.l.b16 %v3329
        %v3415 = vunpack.c.h.b16 %v3329
        %v3416 = vunpack.c.l.b16 %v3330
        %v3417 = vunpack.c.l.b16 %v3331
        %v3418 = vunpack.c.h.b16 %v3331
        %v3419 = vunpack.c.l.b16 %v3332
        %v3420 = vunpack.c.l.b16 %v3333
        %v3421 = vunpack.c.h.b16 %v3333
        %v3422 = vunpack.c.l.b16 %v3334
        %v3423 = vpack.c.b16 %v3378, %v3375
        %v3424 = vpack.c.b16 %v3379, %v3376
        %v3425 = vpack.c.b16 %v3380, %v3377
        %v3426 = vpack.c.b16 %v3384, %v3381
        %v3427 = vpack.c.b16 %v3385, %v3382
        %v3428 = vpack.c.b16 %v3386, %v3383
        %v3429 = vpack.c.b16 %v3390, %v3387
        %v3430 = vpack.c.b16 %v3391, %v3388
        %v3431 = vpack.c.b16 %v3392, %v3389
        %v3432 = vpack.c.b16 %v3396, %v3393
        %v3433 = vpack.c.b16 %v3397, %v3394
        %v3434 = vpack.c.b16 %v3398, %v3395
        %v3435 = vpack.c.b16 %v3402, %v3399
        %v3436 = vpack.c.b16 %v3403, %v3400
        %v3437 = vpack.c.b16 %v3404, %v3401
        %v3438 = vpack.c.b16 %v3408, %v3405
        %v3439 = vpack.c.b16 %v3409, %v3406
        %v3440 = vpack.c.b16 %v3410, %v3407
        %v3441 = vpack.c.b16 %v3414, %v3411
        %v3442 = vpack.c.b16 %v3415, %v3412
        %v3443 = vpack.c.b16 %v3416, %v3413
        %v3444 = vpack.c.b16 %v3420, %v3417
        %v3445 = vpack.c.b16 %v3421, %v3418
        %v3446 = vpack.c.b16 %v3422, %v3419
        %3471 = vmatpush.bf16.msra.mxu0 %v3444
        %3472 = vmatpush.bf16.msra.mxu0 %v3441
        %3473 = vmatpush.bf16.msra.mxu0 %v3438
        %3474 = vmatpush.bf16.msra.mxu0 %v3435
        %3475 = vmatpush.bf16.msra.mxu0 %v3432
        %3476 = vmatpush.bf16.msra.mxu0 %v3429
        %3477 = vmatpush.bf16.msra.mxu0 %v3426
        %3478 = vmatpush.bf16.msra.mxu0 %v3423
        %3479 = vmatmul.bf16.gmra.mxu0 %v3302
        %v3480 = vpop.f32.mrf.mxu0
        %v3481 = vadd.f32 %v3337, %v3480
        %v3482 = vpop.f32.mrf.mxu0
        %v3483 = vadd.f32 %v3337, %v3482
        %3484 = vdwg.mxu0
        %3485 = vmatpush.bf16.msra.mxu0 %v3445
        %3486 = vmatpush.bf16.msra.mxu0 %v3442
        %3487 = vmatpush.bf16.msra.mxu0 %v3439
        %3488 = vmatpush.bf16.msra.mxu0 %v3436
        %3489 = vmatpush.bf16.msra.mxu0 %v3433
        %3490 = vmatpush.bf16.msra.mxu0 %v3430
        %3491 = vmatpush.bf16.msra.mxu0 %v3427
        %3492 = vmatpush.bf16.msra.mxu0 %v3424
        %3493 = vmatmul.bf16.gmra.mxu0 %v3302
        %v3494 = vpop.f32.mrf.mxu0
        %v3495 = vadd.f32 %v3338, %v3494
        %v3496 = vpop.f32.mrf.mxu0
        %v3497 = vadd.f32 %v3338, %v3496
        %3498 = vdwg.mxu0
        %3499 = vmatpush.bf16.msra.mxu0 %v3446
        %3500 = vmatpush.bf16.msra.mxu0 %v3443
        %3501 = vmatpush.bf16.msra.mxu0 %v3440
        %3502 = vmatpush.bf16.msra.mxu0 %v3437
        %3503 = vmatpush.bf16.msra.mxu0 %v3434
        %3504 = vmatpush.bf16.msra.mxu0 %v3431
        %3505 = vmatpush.bf16.msra.mxu0 %v3428
        %3506 = vmatpush.bf16.msra.mxu0 %v3425
        %3507 = vmatmul.bf16.gmra.mxu0 %v3302
        %v3508 = vpop.f32.mrf.mxu0
        %v3509 = vadd.f32 %v3339, %v3508
        %v3510 = vpop.f32.mrf.mxu0
        %v3511 = vadd.f32 %v3339, %v3510
        %3512 = vdwg.mxu0
        %v3513 = vmax.f32 %v3481, 0.0
        %v3514 = vmax.f32 %v3495, 0.0
        %v3515 = vmax.f32 %v3509, 0.0
        %v3516 = vmax.f32 %v3483, 0.0
        %v3517 = vmax.f32 %v3497, 0.0
        %v3518 = vmax.f32 %v3511, 0.0
        %v3519 = vpack.c.bf16 %v3516, %v3513
        %v3520 = vpack.c.bf16 %v3517, %v3514
        %v3521 = vpack.c.bf16 %v3518, %v3515
        %v3522 = vld [vmem:[#allocation7] sm:$0xff]
        %v3523 = vld [vmem:[#allocation7 + $0x8] sm:$0xff]
        %v3524 = vld [vmem:[#allocation7 + $0x10] sm:$0xff]
        %v3525 = vld [vmem:[#allocation7 + $0x18] sm:$0xff]
        %v3526 = vld [vmem:[#allocation7 + $0x20] sm:$0xff]
        %v3527 = vld [vmem:[#allocation7 + $0x28] sm:$0xff]
        %v3528 = vld [vmem:[#allocation7 + $0x30] sm:$0xff]
        %v3529 = vld [vmem:[#allocation7 + $0x38] sm:$0xff]
        %v3530 = vld [vmem:[#allocation7 + $0x40] sm:$0xff]
        %v3531 = vld [vmem:[#allocation7 + $0x48] sm:$0xff]
        %v3532 = vld [vmem:[#allocation7 + $0x50] sm:$0xff]
        %v3533 = vld [vmem:[#allocation7 + $0x58] sm:$0xff]
        %v3534 = vld [vmem:[#allocation7 + $0x60] sm:$0xff]
        %v3535 = vld [vmem:[#allocation7 + $0x68] sm:$0xff]
        %v3536 = vld [vmem:[#allocation7 + $0x70] sm:$0xff]
        %v3537 = vld [vmem:[#allocation7 + $0x78] sm:$0xff]
        %v3538 = vld [vmem:[#allocation7 + $0x80] sm:$0xff]
        %v3539 = vld [vmem:[#allocation7 + $0x88] sm:$0xff]
        %v3540 = vld [vmem:[#allocation7 + $0x90] sm:$0xff]
        %v3541 = vld [vmem:[#allocation7 + $0x98] sm:$0xff]
        %v3542 = vld [vmem:[#allocation7 + $0xa0] sm:$0xff]
        %v3543 = vld [vmem:[#allocation7 + $0xa8] sm:$0xff]
        %v3544 = vld [vmem:[#allocation7 + $0xb0] sm:$0xff]
        %v3545 = vld [vmem:[#allocation7 + $0xb8] sm:$0xff]
        %v3546 = vld [vmem:[#allocation7 + $0xc0] sm:$0xff]
        %v3547 = vld [vmem:[#allocation7 + $0xc8] sm:$0xff]
        %v3548 = vld [vmem:[#allocation7 + $0xd0] sm:$0xff]
        %v3549 = vld [vmem:[#allocation7 + $0xd8] sm:$0xff]
        %v3550 = vld [vmem:[#allocation7 + $0xe0] sm:$0xff]
        %v3551 = vld [vmem:[#allocation7 + $0xe8] sm:$0xff]
        %v3552 = vld [vmem:[#allocation7 + $0xf0] sm:$0xff]
        %v3553 = vld [vmem:[#allocation7 + $0xf8] sm:$0xff]
        %v3554 = vld [vmem:[#allocation7 + $0x100] sm:$0xff]
        %v3555 = vld [vmem:[#allocation7 + $0x108] sm:$0xff]
        %v3556 = vld [vmem:[#allocation7 + $0x110] sm:$0xff]
        %v3557 = vld [vmem:[#allocation7 + $0x118] sm:$0xff]
        %v3558 = vld [vmem:[#allocation7 + $0x120] sm:$0xff]
        %v3559 = vld [vmem:[#allocation7 + $0x128] sm:$0xff]
        %v3560 = vld [vmem:[#allocation7 + $0x130] sm:$0xff]
        %v3561 = vld [vmem:[#allocation7 + $0x138] sm:$0xff]
        %v3562 = vld [vmem:[#allocation7 + $0x140] sm:$0xff]
        %v3563 = vld [vmem:[#allocation7 + $0x148] sm:$0xff]
        %v3564 = vld [vmem:[#allocation7 + $0x150] sm:$0xff]
        %v3565 = vld [vmem:[#allocation7 + $0x158] sm:$0xff]
        %v3566 = vld [vmem:[#allocation7 + $0x160] sm:$0xff]
        %v3567 = vld [vmem:[#allocation7 + $0x168] sm:$0xff]
        %v3568 = vld [vmem:[#allocation7 + $0x170] sm:$0xff]
        %v3569 = vld [vmem:[#allocation7 + $0x178] sm:$0xff]
        %v3570 = vld [vmem:[%s10] sm:$0x3]
        %v3572 = vperm.slane %v3570, 0
        %v3573 = vperm.slane %v3570, 1
        %v3624 = vunpack.c.l.b16 %v3522
        %v3625 = vunpack.c.h.b16 %v3522
        %v3626 = vunpack.c.l.b16 %v3523
        %v3627 = vunpack.c.h.b16 %v3523
        %v3628 = vunpack.c.l.b16 %v3524
        %v3629 = vunpack.c.h.b16 %v3524
        %v3630 = vunpack.c.l.b16 %v3525
        %v3631 = vunpack.c.h.b16 %v3525
        %v3632 = vunpack.c.l.b16 %v3526
        %v3633 = vunpack.c.h.b16 %v3526
        %v3634 = vunpack.c.l.b16 %v3527
        %v3635 = vunpack.c.h.b16 %v3527
        %v3636 = vunpack.c.l.b16 %v3528
        %v3637 = vunpack.c.h.b16 %v3528
        %v3638 = vunpack.c.l.b16 %v3529
        %v3639 = vunpack.c.h.b16 %v3529
        %v3640 = vunpack.c.l.b16 %v3530
        %v3641 = vunpack.c.h.b16 %v3530
        %v3642 = vunpack.c.l.b16 %v3531
        %v3643 = vunpack.c.h.b16 %v3531
        %v3644 = vunpack.c.l.b16 %v3532
        %v3645 = vunpack.c.h.b16 %v3532
        %v3646 = vunpack.c.l.b16 %v3533
        %v3647 = vunpack.c.h.b16 %v3533
        %v3648 = vunpack.c.l.b16 %v3534
        %v3649 = vunpack.c.h.b16 %v3534
        %v3650 = vunpack.c.l.b16 %v3535
        %v3651 = vunpack.c.h.b16 %v3535
        %v3652 = vunpack.c.l.b16 %v3536
        %v3653 = vunpack.c.h.b16 %v3536
        %v3654 = vunpack.c.l.b16 %v3537
        %v3655 = vunpack.c.h.b16 %v3537
        %v3656 = vunpack.c.l.b16 %v3538
        %v3657 = vunpack.c.h.b16 %v3538
        %v3658 = vunpack.c.l.b16 %v3539
        %v3659 = vunpack.c.h.b16 %v3539
        %v3660 = vunpack.c.l.b16 %v3540
        %v3661 = vunpack.c.h.b16 %v3540
        %v3662 = vunpack.c.l.b16 %v3541
        %v3663 = vunpack.c.h.b16 %v3541
        %v3664 = vunpack.c.l.b16 %v3542
        %v3665 = vunpack.c.h.b16 %v3542
        %v3666 = vunpack.c.l.b16 %v3543
        %v3667 = vunpack.c.h.b16 %v3543
        %v3668 = vunpack.c.l.b16 %v3544
        %v3669 = vunpack.c.h.b16 %v3544
        %v3670 = vunpack.c.l.b16 %v3545
        %v3671 = vunpack.c.h.b16 %v3545
        %v3672 = vunpack.c.l.b16 %v3546
        %v3673 = vunpack.c.h.b16 %v3546
        %v3674 = vunpack.c.l.b16 %v3547
        %v3675 = vunpack.c.h.b16 %v3547
        %v3676 = vunpack.c.l.b16 %v3548
        %v3677 = vunpack.c.h.b16 %v3548
        %v3678 = vunpack.c.l.b16 %v3549
        %v3679 = vunpack.c.h.b16 %v3549
        %v3680 = vunpack.c.l.b16 %v3550
        %v3681 = vunpack.c.h.b16 %v3550
        %v3682 = vunpack.c.l.b16 %v3551
        %v3683 = vunpack.c.h.b16 %v3551
        %v3684 = vunpack.c.l.b16 %v3552
        %v3685 = vunpack.c.h.b16 %v3552
        %v3686 = vunpack.c.l.b16 %v3553
        %v3687 = vunpack.c.h.b16 %v3553
        %v3688 = vunpack.c.l.b16 %v3554
        %v3689 = vunpack.c.h.b16 %v3554
        %v3690 = vunpack.c.l.b16 %v3555
        %v3691 = vunpack.c.h.b16 %v3555
        %v3692 = vunpack.c.l.b16 %v3556
        %v3693 = vunpack.c.h.b16 %v3556
        %v3694 = vunpack.c.l.b16 %v3557
        %v3695 = vunpack.c.h.b16 %v3557
        %v3696 = vunpack.c.l.b16 %v3558
        %v3697 = vunpack.c.h.b16 %v3558
        %v3698 = vunpack.c.l.b16 %v3559
        %v3699 = vunpack.c.h.b16 %v3559
        %v3700 = vunpack.c.l.b16 %v3560
        %v3701 = vunpack.c.h.b16 %v3560
        %v3702 = vunpack.c.l.b16 %v3561
        %v3703 = vunpack.c.h.b16 %v3561
        %v3704 = vunpack.c.l.b16 %v3562
        %v3705 = vunpack.c.h.b16 %v3562
        %v3706 = vunpack.c.l.b16 %v3563
        %v3707 = vunpack.c.h.b16 %v3563
        %v3708 = vunpack.c.l.b16 %v3564
        %v3709 = vunpack.c.h.b16 %v3564
        %v3710 = vunpack.c.l.b16 %v3565
        %v3711 = vunpack.c.h.b16 %v3565
        %v3712 = vunpack.c.l.b16 %v3566
        %v3713 = vunpack.c.h.b16 %v3566
        %v3714 = vunpack.c.l.b16 %v3567
        %v3715 = vunpack.c.h.b16 %v3567
        %v3716 = vunpack.c.l.b16 %v3568
        %v3717 = vunpack.c.h.b16 %v3568
        %v3718 = vunpack.c.l.b16 %v3569
        %v3719 = vunpack.c.h.b16 %v3569
        %v3720 = vpack.c.b16 %v3626, %v3624
        %v3721 = vpack.c.b16 %v3627, %v3625
        %v3722 = vpack.c.b16 %v3630, %v3628
        %v3723 = vpack.c.b16 %v3631, %v3629
        %v3724 = vpack.c.b16 %v3634, %v3632
        %v3725 = vpack.c.b16 %v3635, %v3633
        %v3726 = vpack.c.b16 %v3638, %v3636
        %v3727 = vpack.c.b16 %v3639, %v3637
        %v3728 = vpack.c.b16 %v3642, %v3640
        %v3729 = vpack.c.b16 %v3643, %v3641
        %v3730 = vpack.c.b16 %v3646, %v3644
        %v3731 = vpack.c.b16 %v3647, %v3645
        %v3732 = vpack.c.b16 %v3650, %v3648
        %v3733 = vpack.c.b16 %v3651, %v3649
        %v3734 = vpack.c.b16 %v3654, %v3652
        %v3735 = vpack.c.b16 %v3655, %v3653
        %v3736 = vpack.c.b16 %v3658, %v3656
        %v3737 = vpack.c.b16 %v3659, %v3657
        %v3738 = vpack.c.b16 %v3662, %v3660
        %v3739 = vpack.c.b16 %v3663, %v3661
        %v3740 = vpack.c.b16 %v3666, %v3664
        %v3741 = vpack.c.b16 %v3667, %v3665
        %v3742 = vpack.c.b16 %v3670, %v3668
        %v3743 = vpack.c.b16 %v3671, %v3669
        %v3744 = vpack.c.b16 %v3674, %v3672
        %v3745 = vpack.c.b16 %v3675, %v3673
        %v3746 = vpack.c.b16 %v3678, %v3676
        %v3747 = vpack.c.b16 %v3679, %v3677
        %v3748 = vpack.c.b16 %v3682, %v3680
        %v3749 = vpack.c.b16 %v3683, %v3681
        %v3750 = vpack.c.b16 %v3686, %v3684
        %v3751 = vpack.c.b16 %v3687, %v3685
        %v3752 = vpack.c.b16 %v3690, %v3688
        %v3753 = vpack.c.b16 %v3691, %v3689
        %v3754 = vpack.c.b16 %v3694, %v3692
        %v3755 = vpack.c.b16 %v3695, %v3693
        %v3756 = vpack.c.b16 %v3698, %v3696
        %v3757 = vpack.c.b16 %v3699, %v3697
        %v3758 = vpack.c.b16 %v3702, %v3700
        %v3759 = vpack.c.b16 %v3703, %v3701
        %v3760 = vpack.c.b16 %v3706, %v3704
        %v3761 = vpack.c.b16 %v3707, %v3705
        %v3762 = vpack.c.b16 %v3710, %v3708
        %v3763 = vpack.c.b16 %v3711, %v3709
        %v3764 = vpack.c.b16 %v3714, %v3712
        %v3765 = vpack.c.b16 %v3715, %v3713
        %v3766 = vpack.c.b16 %v3718, %v3716
        %v3767 = vpack.c.b16 %v3719, %v3717
        %3816 = vmatpush.bf16.msra.mxu0 %v3734
        %3817 = vmatpush.bf16.msra.mxu0 %v3732
        %3818 = vmatpush.bf16.msra.mxu0 %v3730
        %3819 = vmatpush.bf16.msra.mxu0 %v3728
        %3820 = vmatpush.bf16.msra.mxu0 %v3726
        %3821 = vmatpush.bf16.msra.mxu0 %v3724
        %3822 = vmatpush.bf16.msra.mxu0 %v3722
        %3823 = vmatpush.bf16.msra.mxu0 %v3720
        %3824 = vmatmul.bf16.gmra.mxu0 %v3519
        %v3825 = vpop.f32.mrf.mxu0
        %v3826 = vadd.f32 %v3572, %v3825
        %v3827 = vpop.f32.mrf.mxu0
        %v3828 = vadd.f32 %v3572, %v3827
        %3829 = vdwg.mxu0
        %3830 = vmatpush.bf16.msra.mxu0 %v3750
        %3831 = vmatpush.bf16.msra.mxu0 %v3748
        %3832 = vmatpush.bf16.msra.mxu0 %v3746
        %3833 = vmatpush.bf16.msra.mxu0 %v3744
        %3834 = vmatpush.bf16.msra.mxu0 %v3742
        %3835 = vmatpush.bf16.msra.mxu0 %v3740
        %3836 = vmatpush.bf16.msra.mxu0 %v3738
        %3837 = vmatpush.bf16.msra.mxu0 %v3736
        %3838 = vmatmul.bf16.gmra.mxu0 %v3520
        %v3839 = vpop.f32.mrf.mxu0
        %v3840 = vadd.f32 %v3826, %v3839
        %v3841 = vpop.f32.mrf.mxu0
        %v3842 = vadd.f32 %v3828, %v3841
        %3843 = vdwg.mxu0
        %3844 = vmatpush.bf16.msra.mxu0 %v3766
        %3845 = vmatpush.bf16.msra.mxu0 %v3764
        %3846 = vmatpush.bf16.msra.mxu0 %v3762
        %3847 = vmatpush.bf16.msra.mxu0 %v3760
        %3848 = vmatpush.bf16.msra.mxu0 %v3758
        %3849 = vmatpush.bf16.msra.mxu0 %v3756
        %3850 = vmatpush.bf16.msra.mxu0 %v3754
        %3851 = vmatpush.bf16.msra.mxu0 %v3752
        %3852 = vmatmul.bf16.gmra.mxu0 %v3521
        %v3853 = vpop.f32.mrf.mxu0
        %v3854 = vadd.f32 %v3840, %v3853
        %v3855 = vpop.f32.mrf.mxu0
        %v3856 = vadd.f32 %v3842, %v3855
        %3857 = vdwg.mxu0
        %3858 = vmatpush.bf16.msra.mxu0 %v3735
        %3859 = vmatpush.bf16.msra.mxu0 %v3733
        %3860 = vmatpush.bf16.msra.mxu0 %v3731
        %3861 = vmatpush.bf16.msra.mxu0 %v3729
        %3862 = vmatpush.bf16.msra.mxu0 %v3727
        %3863 = vmatpush.bf16.msra.mxu0 %v3725
        %3864 = vmatpush.bf16.msra.mxu0 %v3723
        %3865 = vmatpush.bf16.msra.mxu0 %v3721
        %3866 = vmatmul.bf16.gmra.mxu0 %v3519
        %v3867 = vpop.f32.mrf.mxu0
        %v3868 = vadd.f32 %v3573, %v3867
        %v3869 = vpop.f32.mrf.mxu0
        %v3870 = vadd.f32 %v3573, %v3869
        %3871 = vdwg.mxu0
        %3872 = vmatpush.bf16.msra.mxu0 %v3751
        %3873 = vmatpush.bf16.msra.mxu0 %v3749
        %3874 = vmatpush.bf16.msra.mxu0 %v3747
        %3875 = vmatpush.bf16.msra.mxu0 %v3745
        %3876 = vmatpush.bf16.msra.mxu0 %v3743
        %3877 = vmatpush.bf16.msra.mxu0 %v3741
        %3878 = vmatpush.bf16.msra.mxu0 %v3739
        %3879 = vmatpush.bf16.msra.mxu0 %v3737
        %3880 = vmatmul.bf16.gmra.mxu0 %v3520
        %v3881 = vpop.f32.mrf.mxu0
        %v3882 = vadd.f32 %v3868, %v3881
        %v3883 = vpop.f32.mrf.mxu0
        %v3884 = vadd.f32 %v3870, %v3883
        %3885 = vdwg.mxu0
        %3886 = vmatpush.bf16.msra.mxu0 %v3767
        %3887 = vmatpush.bf16.msra.mxu0 %v3765
        %3888 = vmatpush.bf16.msra.mxu0 %v3763
        %3889 = vmatpush.bf16.msra.mxu0 %v3761
        %3890 = vmatpush.bf16.msra.mxu0 %v3759
        %3891 = vmatpush.bf16.msra.mxu0 %v3757
        %3892 = vmatpush.bf16.msra.mxu0 %v3755
        %3893 = vmatpush.bf16.msra.mxu0 %v3753
        %3894 = vmatmul.bf16.gmra.mxu0 %v3521
        %v3895 = vpop.f32.mrf.mxu0
        %v3896 = vadd.f32 %v3882, %v3895
        %v3897 = vpop.f32.mrf.mxu0
        %v3898 = vadd.f32 %v3884, %v3897
        %3899 = vdwg.mxu0
        %v3900 = vmax.f32 %v3854, 0.0
        %v3901 = vmax.f32 %v3896, 0.0
        %v3902 = vmax.f32 %v3856, 0.0
        %v3903 = vmax.f32 %v3898, 0.0
        %v3904 = vpack.c.bf16 %v3902, %v3900
        %v3905 = vpack.c.bf16 %v3903, %v3901
        %v3906 = vld [vmem:[#allocation9] sm:$0xf]
        %v3907 = vld [vmem:[#allocation9 + $0x4] sm:$0xf]
        %v3908 = vld [vmem:[#allocation9 + $0x8] sm:$0xf]
        %v3909 = vld [vmem:[#allocation9 + $0xc] sm:$0xf]
        %v3910 = vld [vmem:[#allocation9 + $0x10] sm:$0xf]
        %v3911 = vld [vmem:[#allocation9 + $0x14] sm:$0xf]
        %v3912 = vld [vmem:[#allocation9 + $0x18] sm:$0xf]
        %v3913 = vld [vmem:[#allocation9 + $0x1c] sm:$0xf]
        %v3914 = vld [vmem:[#allocation9 + $0x20] sm:$0xf]
        %v3915 = vld [vmem:[#allocation9 + $0x24] sm:$0xf]
        %v3916 = vld [vmem:[#allocation9 + $0x28] sm:$0xf]
        %v3917 = vld [vmem:[#allocation9 + $0x2c] sm:$0xf]
        %v3918 = vld [vmem:[#allocation9 + $0x30] sm:$0xf]
        %v3919 = vld [vmem:[#allocation9 + $0x34] sm:$0xf]
        %v3920 = vld [vmem:[#allocation9 + $0x38] sm:$0xf]
        %v3921 = vld [vmem:[#allocation9 + $0x3c] sm:$0xf]
        %v3922 = vld [vmem:[#allocation9 + $0x40] sm:$0xf]
        %v3923 = vld [vmem:[#allocation9 + $0x44] sm:$0xf]
        %v3924 = vld [vmem:[#allocation9 + $0x48] sm:$0xf]
        %v3925 = vld [vmem:[#allocation9 + $0x4c] sm:$0xf]
        %v3926 = vld [vmem:[#allocation9 + $0x50] sm:$0xf]
        %v3927 = vld [vmem:[#allocation9 + $0x54] sm:$0xf]
        %v3928 = vld [vmem:[#allocation9 + $0x58] sm:$0xf]
        %v3929 = vld [vmem:[#allocation9 + $0x5c] sm:$0xf]
        %v3930 = vld [vmem:[#allocation9 + $0x60] sm:$0xf]
        %v3931 = vld [vmem:[#allocation9 + $0x64] sm:$0xf]
        %v3932 = vld [vmem:[#allocation9 + $0x68] sm:$0xf]
        %v3933 = vld [vmem:[#allocation9 + $0x6c] sm:$0xf]
        %v3934 = vld [vmem:[#allocation9 + $0x70] sm:$0xf]
        %v3935 = vld [vmem:[#allocation9 + $0x74] sm:$0xf]
        %v3936 = vld [vmem:[#allocation9 + $0x78] sm:$0xf]
        %v3937 = vld [vmem:[#allocation9 + $0x7c] sm:$0xf]
        %v3938 = vld [vmem:[%s12] sm:$0x1]
        %v3940 = vperm.slane %v3938, 0
        %v3974 = vunpack.c.l.b16 %v3906
        %v3975 = vunpack.c.l.b16 %v3907
        %v3976 = vunpack.c.l.b16 %v3908
        %v3977 = vunpack.c.l.b16 %v3909
        %v3978 = vunpack.c.l.b16 %v3910
        %v3979 = vunpack.c.l.b16 %v3911
        %v3980 = vunpack.c.l.b16 %v3912
        %v3981 = vunpack.c.l.b16 %v3913
        %v3982 = vunpack.c.l.b16 %v3914
        %v3983 = vunpack.c.l.b16 %v3915
        %v3984 = vunpack.c.l.b16 %v3916
        %v3985 = vunpack.c.l.b16 %v3917
        %v3986 = vunpack.c.l.b16 %v3918
        %v3987 = vunpack.c.l.b16 %v3919
        %v3988 = vunpack.c.l.b16 %v3920
        %v3989 = vunpack.c.l.b16 %v3921
        %v3990 = vunpack.c.l.b16 %v3922
        %v3991 = vunpack.c.l.b16 %v3923
        %v3992 = vunpack.c.l.b16 %v3924
        %v3993 = vunpack.c.l.b16 %v3925
        %v3994 = vunpack.c.l.b16 %v3926
        %v3995 = vunpack.c.l.b16 %v3927
        %v3996 = vunpack.c.l.b16 %v3928
        %v3997 = vunpack.c.l.b16 %v3929
        %v3998 = vunpack.c.l.b16 %v3930
        %v3999 = vunpack.c.l.b16 %v3931
        %v4000 = vunpack.c.l.b16 %v3932
        %v4001 = vunpack.c.l.b16 %v3933
        %v4002 = vunpack.c.l.b16 %v3934
        %v4003 = vunpack.c.l.b16 %v3935
        %v4004 = vunpack.c.l.b16 %v3936
        %v4005 = vunpack.c.l.b16 %v3937
        %v4006 = vpack.c.b16 %v3975, %v3974
        %v4007 = vpack.c.b16 %v3977, %v3976
        %v4008 = vpack.c.b16 %v3979, %v3978
        %v4009 = vpack.c.b16 %v3981, %v3980
        %v4010 = vpack.c.b16 %v3983, %v3982
        %v4011 = vpack.c.b16 %v3985, %v3984
        %v4012 = vpack.c.b16 %v3987, %v3986
        %v4013 = vpack.c.b16 %v3989, %v3988
        %v4014 = vpack.c.b16 %v3991, %v3990
        %v4015 = vpack.c.b16 %v3993, %v3992
        %v4016 = vpack.c.b16 %v3995, %v3994
        %v4017 = vpack.c.b16 %v3997, %v3996
        %v4018 = vpack.c.b16 %v3999, %v3998
        %v4019 = vpack.c.b16 %v4001, %v4000
        %v4020 = vpack.c.b16 %v4003, %v4002
        %v4021 = vpack.c.b16 %v4005, %v4004
        %4038 = vmatpush.bf16.msra.mxu0 %v4013
        %4039 = vmatpush.bf16.msra.mxu0 %v4012
        %4040 = vmatpush.bf16.msra.mxu0 %v4011
        %4041 = vmatpush.bf16.msra.mxu0 %v4010
        %4042 = vmatpush.bf16.msra.mxu0 %v4009
        %4043 = vmatpush.bf16.msra.mxu0 %v4008
        %4044 = vmatpush.bf16.msra.mxu0 %v4007
        %4045 = vmatpush.bf16.msra.mxu0 %v4006
        %4046 = vmatmul.bf16.gmra.mxu0 %v3904
        %v4047 = vpop.f32.mrf.mxu0
        %v4048 = vadd.f32 %v3940, %v4047
        %v4049 = vpop.f32.mrf.mxu0
        %v4050 = vadd.f32 %v3940, %v4049
        %4051 = vdwg.mxu0
        %4052 = vmatpush.bf16.msra.mxu0 %v4021
        %4053 = vmatpush.bf16.msra.mxu0 %v4020
        %4054 = vmatpush.bf16.msra.mxu0 %v4019
        %4055 = vmatpush.bf16.msra.mxu0 %v4018
        %4056 = vmatpush.bf16.msra.mxu0 %v4017
        %4057 = vmatpush.bf16.msra.mxu0 %v4016
        %4058 = vmatpush.bf16.msra.mxu0 %v4015
        %4059 = vmatpush.bf16.msra.mxu0 %v4014
        %4060 = vmatmul.bf16.gmra.mxu0 %v3905
        %v4061 = vpop.f32.mrf.mxu0
        %v4062 = vadd.f32 %v4048, %v4061
        %v4063 = vpop.f32.mrf.mxu0
        %v4064 = vadd.f32 %v4050, %v4063
        %4065 = vdwg.mxu0
        %v4066 = vsel %vm531, %v4062, -1e+30
        %v4067 = vsel %vm531, %v4064, -1e+30
        %4068 = vmax.xlane.f32.xlu0 %v4066
        %v4069 = vpop.xlane.xlu0 %4068
        %4070 = vmax.xlane.f32.xlu0 %v4067
        %v4071 = vpop.xlane.xlu0 %4070
        %v4072 = vsel %vm531, %v4069, 0.0
        %v4073 = vsel %vm531, %v4071, 0.0
        %v4074 = vsel %vm534, %v4062, -1e+30
        %v4075 = vsel %vm534, %v4064, -1e+30
        %4076 = vmax.xlane.f32.xlu0 %v4074
        %v4077 = vpop.xlane.xlu0 %4076
        %4078 = vmax.xlane.f32.xlu0 %v4075
        %v4079 = vpop.xlane.xlu0 %4078
        %v4080 = vsel %vm534, %v4077, %v4072
        %v4081 = vsel %vm534, %v4079, %v4073
        %v4082 = vsel %vm537, %v4062, -1e+30
        %v4083 = vsel %vm537, %v4064, -1e+30
        %4084 = vmax.xlane.f32.xlu0 %v4082
        %v4085 = vpop.xlane.xlu0 %4084
        %4086 = vmax.xlane.f32.xlu0 %v4083
        %v4087 = vpop.xlane.xlu0 %4086
        %v4088 = vsel %vm537, %v4085, %v4080
        %v4089 = vsel %vm537, %v4087, %v4081
        %v4090 = vsel %vm540, %v4062, -1e+30
        %v4091 = vsel %vm540, %v4064, -1e+30
        %4092 = vmax.xlane.f32.xlu0 %v4090
        %v4093 = vpop.xlane.xlu0 %4092
        %4094 = vmax.xlane.f32.xlu0 %v4091
        %v4095 = vpop.xlane.xlu0 %4094
        %v4096 = vsel %vm540, %v4093, %v4088
        %v4097 = vsel %vm540, %v4095, %v4089
        %v4098 = vsel %vm543, %v4062, -1e+30
        %v4099 = vsel %vm543, %v4064, -1e+30
        %4100 = vmax.xlane.f32.xlu0 %v4098
        %v4101 = vpop.xlane.xlu0 %4100
        %4102 = vmax.xlane.f32.xlu0 %v4099
        %v4103 = vpop.xlane.xlu0 %4102
        %v4104 = vsel %vm543, %v4101, %v4096
        %v4105 = vsel %vm543, %v4103, %v4097
        %v4106 = vsub.f32 %v4062, %v4104
        %v4107 = vsub.f32 %v4064, %v4105
        %v4108 = vmul.f32 %v4106, 1.442695
        %v4109 = vpow.pop %v4108
        %v4110 = vmul.f32 %v4107, 1.442695
        %v4111 = vpow.pop %v4110
        %v4112 = vsel %vm531, %v4109, 0.0
        %v4113 = vsel %vm531, %v4111, 0.0
        %4114 = vadd.xlane.f32.xlu0 %v4112
        %v4115 = vpop.xlane.xlu0 %4114
        %4116 = vadd.xlane.f32.xlu0 %v4113
        %v4117 = vpop.xlane.xlu0 %4116
        %v4118 = vsel %vm531, %v4115, 1.0
        %v4119 = vsel %vm531, %v4117, 1.0
        %v4120 = vsel %vm534, %v4109, 0.0
        %v4121 = vsel %vm534, %v4111, 0.0
        %4122 = vadd.xlane.f32.xlu0 %v4120
        %v4123 = vpop.xlane.xlu0 %4122
        %4124 = vadd.xlane.f32.xlu0 %v4121
        %v4125 = vpop.xlane.xlu0 %4124
        %v4126 = vsel %vm534, %v4123, %v4118
        %v4127 = vsel %vm534, %v4125, %v4119
        %v4128 = vsel %vm537, %v4109, 0.0
        %v4129 = vsel %vm537, %v4111, 0.0
        %4130 = vadd.xlane.f32.xlu0 %v4128
        %v4131 = vpop.xlane.xlu0 %4130
        %4132 = vadd.xlane.f32.xlu0 %v4129
        %v4133 = vpop.xlane.xlu0 %4132
        %v4134 = vsel %vm537, %v4131, %v4126
        %v4135 = vsel %vm537, %v4133, %v4127
        %v4136 = vsel %vm540, %v4109, 0.0
        %v4137 = vsel %vm540, %v4111, 0.0
        %4138 = vadd.xlane.f32.xlu0 %v4136
        %v4139 = vpop.xlane.xlu0 %4138
        %4140 = vadd.xlane.f32.xlu0 %v4137
        %v4141 = vpop.xlane.xlu0 %4140
        %v4142 = vsel %vm540, %v4139, %v4134
        %v4143 = vsel %vm540, %v4141, %v4135
        %v4144 = vsel %vm543, %v4109, 0.0
        %v4145 = vsel %vm543, %v4111, 0.0
        %4146 = vadd.xlane.f32.xlu0 %v4144
        %v4147 = vpop.xlane.xlu0 %4146
        %4148 = vadd.xlane.f32.xlu0 %v4145
        %v4149 = vpop.xlane.xlu0 %4148
        %v4150 = vsel %vm543, %v4147, %v4142
        %v4151 = vsel %vm543, %v4149, %v4143
        %v4152 = vrcp.pop %v4150
        %v4153 = vrcp.pop %v4151
        %v4154 = vmul.f32 %v4150, %v4152
        %v4155 = vmul.f32 %v4151, %v4153
        %v4156 = vsub.f32 2.0, %v4154
        %v4157 = vsub.f32 2.0, %v4155
        %v4158 = vmul.f32 %v4152, %v4156
        %v4159 = vmul.f32 %v4153, %v4157
        %v4160 = vmul.f32 %v4109, %v4158
        %v4161 = vmul.f32 %v4111, %v4159
        %4162 = vst [vmem:[%s525 + $0x10] sm:$0xff] %v4160
        %4163 = vst [vmem:[%s525 + $0x18] sm:$0xff] %v4161
        %s4164 = smul.u32 4, %s27
        %p4165 = scmp.lt.s32.totalorder %s4164, 7
        %s4166 = scalar_select %p4165, %s4164, 7
        %s4167 = smul.addr %s4166, 8
        %s4168 = scalar_lea.vmem %s13, %s4167
        // Predicated region
        $region93: #{_forward_impl.1} parent=71 // pred_check
          %p4169 = pneg %p323
        $region94: #{_forward_impl.1} parent=71 // pred_check_branch
          %4171 = sbr.rel (%p4169) target = $region96
        $region95: #{_forward_impl.1} parent=71 // pred_region
          %s4172 = smul.u32 4, %s27
        $region96: #{_forward_impl.1} parent=71 // pred_fallthru
          _
      $region72: #{_forward_impl.1} parent=5 // pred_fallthru
        _
      %p4173 = scmp.le.s32.totalorder 2, %s22
      // Predicated region
      $region97: #{_forward_impl.1} parent=5 // pred_check
        %p4174 = pneg %p4173
      $region98: #{_forward_impl.1} parent=5 // pred_check_branch
        %4176 = sbr.rel (%p4174) target = $region100
      $region99: #{_forward_impl.1} parent=5 // pred_region
        %s4177 = ssub.s32 %s22, 2
        // Predicated region
        $region101: #{_forward_impl.1} parent=99 // pred_check
          %p4178 = pneg %p329
        $region102: #{_forward_impl.1} parent=99 // pred_check_branch
          %4180 = sbr.rel (%p4178) target = $region104
        $region103: #{_forward_impl.1} parent=99 // pred_region
          %s4181 = smul.u32 4, %s28
          %p4182 = scmp.lt.s32.totalorder %s4181, 7
          %s4183 = scalar_select %p4182, %s4181, 7
          %s4184 = smul.addr %s4183, 8
          %s4185 = scalar_lea.vmem %s13, %s4184
        $region104: #{_forward_impl.1} parent=99 // pred_fallthru
          _
      $region100: #{_forward_impl.1} parent=5 // pred_fallthru
        _
    $region6: #{_forward_impl.1} parent=1 // loop_footer
      %s26 = sadd.s32 1, %s22
    $region7: #{_forward_impl.1} parent=1 // loop_footer_branch
      %21 = sbr.rel target = $region3
    $region8: #{_forward_impl.1} parent=1 // loop_exit
      _
    %4186 = vsyncpa [#allocation3], 1
    %s4187 = scalar_lea.sflag [#allocation3], 1
    %4188 = vsyncpa %s4187, 1
    %4189 = vsyncpa [#allocation5], 1
    %4190 = vsyncpa [#allocation8], 1

</llo_original>
